<compile_context>
chip_gen: v6e
topology: v6e:2x2x1
jax: 0.10.0
libtpu: 0.0.40
codegen_flags: <defaults>
</compile_context>

<pallas_src>
import jax
import jax.numpy as jnp
from jax.experimental import pallas as pl
from jax.experimental.pallas import tpu as pltpu


def _round_up(x, m):
    return (x + m - 1) // m * m


def _autoencoder_kernel(x_ref, w_enc_ref, b_enc_ref, w_dec_ref, b_dec_ref, o_ref):
    # ---- encoder: Linear + Sigmoid ----
    # x arrives as f32; cast to bf16 in-kernel for the MXU, accumulate in f32.
    x = x_ref[...].astype(jnp.bfloat16)                                 # (TB, D)
    h = jnp.dot(x, w_enc_ref[...],
                preferred_element_type=jnp.float32)                     # (TB, Hp)
    # sigmoid(z) = 1 / (1 + exp(-z)): exp + approx-reciprocal stay on the EUP.
    h = pl.reciprocal(1.0 + jnp.exp(-(h + b_enc_ref[...])), approx=True)

    # ---- decoder: Linear + Sigmoid ----
    y = jnp.dot(h.astype(jnp.bfloat16), w_dec_ref[...],
                preferred_element_type=jnp.float32)                     # (TB, D)
    y = pl.reciprocal(1.0 + jnp.exp(-(y + b_dec_ref[...])), approx=True)
    o_ref[...] = y.astype(o_ref.dtype)


def prepare_pretrained_params(w_enc, b_enc, w_dec, b_dec):
    """One-time (model-load) weight prep: pad hidden dim + cast to bf16.

    Padding invariant: padded hidden columns see bias 0 -> sigmoid(0)=0.5 in h,
    but the corresponding zero-padded rows of w_dec cancel them exactly, so the
    output for the real columns is unchanged.  Item dim D is NOT padded (the
    kernel uses full-extent blocks for it).
    """
    D, H = w_enc.shape
    Hp = _round_up(H, 256)   # full 256x256 MXU tiles on v6e/v7x, x2 of 128 on v5e
    w_enc_p = jnp.pad(jnp.asarray(w_enc, jnp.float32),
                      ((0, 0), (0, Hp - H))).astype(jnp.bfloat16)        # (D, Hp)
    b_enc_p = jnp.pad(jnp.asarray(b_enc, jnp.float32),
                      (0, Hp - H)).reshape(1, Hp)                        # (1, Hp) f32
    w_dec_p = jnp.pad(jnp.asarray(w_dec, jnp.float32),
                      ((0, Hp - H), (0, 0))).astype(jnp.bfloat16)        # (Hp, D)
    b_dec_p = jnp.asarray(b_dec, jnp.float32).reshape(1, D)              # (1, D) f32
    return w_enc_p, b_enc_p, w_dec_p, b_dec_p


def pretrained_forward(x, params, *, tb=128, out_dtype=jnp.float32,
                       single_buffer_weights=True):
    """Fused encoder->decoder forward pass.

    x:      (B, D) float32 (un-padded item dimension)
    params: output of prepare_pretrained_params (pre-padded, pre-cast)
    returns (B, D) out_dtype
    """
    w_enc_p, b_enc_p, w_dec_p, b_dec_p = params
    B, D = x.shape
    Hp = w_enc_p.shape[1]
    assert w_enc_p.shape[0] == D and w_dec_p.shape == (Hp, D)

    # Batch tile: multiple of 16 (bf16 packs two rows per sublane).
    TB = _round_up(min(tb, _round_up(B, 16)), 16)
    Bp = _round_up(B, TB)

    # Only the (rare) batch remainder is padded; no column pad, no dtype cast.
    xp = x if Bp == B else jnp.pad(x, ((0, Bp - B), (0, 0)))

    grid = (Bp // TB,)

    # Weights / biases: constant index_map -> resident in VMEM across all grid
    # iterations; single-buffered since they are never re-fetched.
    if single_buffer_weights:
        weight_kwargs = dict(pipeline_mode=pl.Buffered(1))
    else:
        weight_kwargs = {}

    in_specs = [
        # x tiles stream over the batch grid (full-width last dim == D).
        pl.BlockSpec((TB, D), lambda i: (i, 0)),
        pl.BlockSpec((D, Hp), lambda i: (0, 0), **weight_kwargs),
        pl.BlockSpec((1, Hp), lambda i: (0, 0), **weight_kwargs),
        pl.BlockSpec((Hp, D), lambda i: (0, 0), **weight_kwargs),
        pl.BlockSpec((1, D), lambda i: (0, 0), **weight_kwargs),
    ]

    # Advisory cost estimate (2 matmuls + 2 sigmoids per row).
    flops = 4 * Bp * D * Hp
    transcendentals = Bp * (D + Hp)
    bytes_accessed = (Bp * D * 4                       # x (f32 in)
                      + Bp * D * jnp.dtype(out_dtype).itemsize
                      + D * Hp * 2 + Hp * D * 2        # bf16 weights
                      + Hp * 4 + D * 4)                # f32 biases

    out = pl.pallas_call(
        _autoencoder_kernel,
        out_shape=jax.ShapeDtypeStruct((Bp, D), out_dtype),
        grid=grid,
        in_specs=in_specs,
        out_specs=pl.BlockSpec((TB, D), lambda i: (i, 0)),
        compiler_params=pltpu.CompilerParams(
            dimension_semantics=("parallel",),      # megacore sharding on v7x
            vmem_limit_bytes=32 * 1024 * 1024,      # headroom vs v5e default
        ),
        cost_estimate=pl.CostEstimate(
            flops=flops,
            transcendentals=transcendentals,
            bytes_accessed=bytes_accessed,
        ),
    )(xp, w_enc_p, b_enc_p, w_dec_p, b_dec_p)

    return out if Bp == B else out[:B]


def _reference_forward(x, w_enc, b_enc, w_dec, b_dec):
    h = jax.nn.sigmoid(x @ w_enc + b_enc)
    return jax.nn.sigmoid(h @ w_dec + b_dec)


if __name__ == "__main__":
    # ML-100k-style shapes: n_items = 1682 (un-padded in HBM), hidden
    # bottleneck = 200 (padded to 256 once at init).  A batch of 512 users with
    # TB = 128 gives a 4-step batch grid, so each v7x TensorCore runs >= 2
    # pipelined steps and v5e/v6e get fully overlapped x/out streaming.
    B, D, H = 512, 1682, 200

    key = jax.random.PRNGKey(0)
    kx, k1, k2, k3, k4 = jax.random.split(key, 5)

    x = jax.random.uniform(kx, (B, D), dtype=jnp.float32)          # rating-like input
    w_enc = jax.random.normal(k1, (D, H), dtype=jnp.float32) * 0.05
    b_enc = jax.random.normal(k2, (H,), dtype=jnp.float32) * 0.01
    w_dec = jax.random.normal(k3, (H, D), dtype=jnp.float32) * 0.05
    b_dec = jax.random.normal(k4, (D,), dtype=jnp.float32) * 0.01

    # One-time weight prep (model-load time), not on the per-call path.
    params = prepare_pretrained_params(w_enc, b_enc, w_dec, b_dec)
    params = tuple(jax.block_until_ready(p) for p in params)

    try:
        out = pretrained_forward(x, params, tb=128)
        out = jax.block_until_ready(out)
    except Exception:
        # Fallback if this JAX build rejects pipeline_mode=pl.Buffered(1)
        # (identical numerics, just double-buffered resident weights).
        out = pretrained_forward(x, params, tb=128, single_buffer_weights=False)
        out = jax.block_until_ready(out)

    ref = _reference_forward(x, w_enc, b_enc, w_dec, b_dec)
    assert out.shape == (B, D)
    # bf16 MXU operands + approx-reciprocal sigmoid -> relaxed tolerance.
    assert jnp.allclose(out, ref, atol=2e-2, rtol=2e-2)

    print("KERNEL_OK")
</pallas_src>

<mosaic_0001>
module attributes {stable_mosaic.version = 11 : i64} {
  func.func @_autoencoder_kernel(%arg0: i32, %arg1: memref<128x1682xf32, #tpu.memory_space<vmem>>, %arg2: memref<1682x256xbf16, #tpu.memory_space<vmem>>, %arg3: memref<1x256xf32, #tpu.memory_space<vmem>>, %arg4: memref<256x1682xbf16, #tpu.memory_space<vmem>>, %arg5: memref<1x1682xf32, #tpu.memory_space<vmem>>, %arg6: memref<128x1682xf32, #tpu.memory_space<vmem>>) attributes {dimension_semantics = [#tpu.dimension_semantics<parallel>], iteration_bounds = array<i64: 4>, scalar_prefetch = 0 : i64, scratch_operands = 0 : i64, tpu.core_type = #tpu.core_type<tc>, window_params = [{transform_indices = @transform_0, window_bounds = array<i64: 128, 1682>}, {pipeline_mode = #tpu.pipeline_mode<synchronous>, transform_indices = @transform_1, window_bounds = array<i64: 1682, 256>}, {pipeline_mode = #tpu.pipeline_mode<synchronous>, transform_indices = @transform_2, window_bounds = array<i64: 1, 256>}, {pipeline_mode = #tpu.pipeline_mode<synchronous>, transform_indices = @transform_3, window_bounds = array<i64: 256, 1682>}, {pipeline_mode = #tpu.pipeline_mode<synchronous>, transform_indices = @transform_4, window_bounds = array<i64: 1, 1682>}, {transform_indices = @transform_5, window_bounds = array<i64: 128, 1682>}]} {
    %c0 = arith.constant 0 : index
    %c0_0 = arith.constant 0 : index
    %0 = vector.load %arg1[%c0, %c0_0] : memref<128x1682xf32, #tpu.memory_space<vmem>>, vector<128x1682xf32>
    %1 = arith.truncf %0 : vector<128x1682xf32> to vector<128x1682xbf16>
    %c0_1 = arith.constant 0 : index
    %c0_2 = arith.constant 0 : index
    %2 = vector.load %arg2[%c0_1, %c0_2] : memref<1682x256xbf16, #tpu.memory_space<vmem>>, vector<1682x256xbf16>
    %cst = arith.constant dense<0.000000e+00> : vector<128x256xf32>
    %3 = tpu.matmul %1, %2, %cst {dimension_numbers = #tpu.dot_dimension_numbers<[1], [0], [0], [1], [0, 0, 1, 1], [], []>} : vector<128x1682xbf16>, vector<1682x256xbf16>, vector<128x256xf32> -> vector<128x256xf32>
    %c0_3 = arith.constant 0 : index
    %c0_4 = arith.constant 0 : index
    %4 = vector.load %arg3[%c0_3, %c0_4] : memref<1x256xf32, #tpu.memory_space<vmem>>, vector<1x256xf32>
    %5 = vector.broadcast %4 : vector<1x256xf32> to vector<128x256xf32>
    %6 = arith.addf %3, %5 : vector<128x256xf32>
    %cst_5 = arith.constant 0.000000e+00 : f32
    %7 = vector.broadcast %cst_5 : f32 to vector<128x256xf32>
    %8 = arith.subf %7, %6 : vector<128x256xf32>
    %9 = math.exp %8 : vector<128x256xf32>
    %cst_6 = arith.constant 1.000000e+00 : f32
    %10 = vector.broadcast %cst_6 : f32 to vector<128x256xf32>
    %11 = arith.addf %10, %9 : vector<128x256xf32>
    %12 = tpu.reciprocal %11 {approx = true} : vector<128x256xf32> -> vector<128x256xf32>
    %13 = arith.truncf %12 : vector<128x256xf32> to vector<128x256xbf16>
    %c0_7 = arith.constant 0 : index
    %c0_8 = arith.constant 0 : index
    %14 = vector.load %arg4[%c0_7, %c0_8] : memref<256x1682xbf16, #tpu.memory_space<vmem>>, vector<256x1682xbf16>
    %cst_9 = arith.constant dense<0.000000e+00> : vector<128x1682xf32>
    %15 = tpu.matmul %13, %14, %cst_9 {dimension_numbers = #tpu.dot_dimension_numbers<[1], [0], [0], [1], [0, 0, 1, 1], [], []>} : vector<128x256xbf16>, vector<256x1682xbf16>, vector<128x1682xf32> -> vector<128x1682xf32>
    %c0_10 = arith.constant 0 : index
    %c0_11 = arith.constant 0 : index
    %16 = vector.load %arg5[%c0_10, %c0_11] : memref<1x1682xf32, #tpu.memory_space<vmem>>, vector<1x1682xf32>
    %17 = vector.broadcast %16 : vector<1x1682xf32> to vector<128x1682xf32>
    %18 = arith.addf %15, %17 : vector<128x1682xf32>
    %cst_12 = arith.constant 0.000000e+00 : f32
    %19 = vector.broadcast %cst_12 : f32 to vector<128x1682xf32>
    %20 = arith.subf %19, %18 : vector<128x1682xf32>
    %21 = math.exp %20 : vector<128x1682xf32>
    %cst_13 = arith.constant 1.000000e+00 : f32
    %22 = vector.broadcast %cst_13 : f32 to vector<128x1682xf32>
    %23 = arith.addf %22, %21 : vector<128x1682xf32>
    %24 = tpu.reciprocal %23 {approx = true} : vector<128x1682xf32> -> vector<128x1682xf32>
    %c0_14 = arith.constant 0 : index
    %c0_15 = arith.constant 0 : index
    %25 = vector.load %arg6[%c0_14, %c0_15] : memref<128x1682xf32, #tpu.memory_space<vmem>>, vector<128x1682xf32>
    tpu.vector_store %arg6[%c0_14, %c0_15], %24 {strides = array<i32>} : memref<128x1682xf32, #tpu.memory_space<vmem>>, vector<128x1682xf32>,
    return
  }
  func.func @transform_0(%arg0: i32) -> (i32, i32) {
    %c0_i32 = arith.constant 0 : i32
    %c0_i32_0 = arith.constant 0 : i32
    return %arg0, %c0_i32 : i32, i32
  }
  func.func @transform_1(%arg0: i32) -> (i32, i32) {
    %c0_i32 = arith.constant 0 : i32
    %c0_i32_0 = arith.constant 0 : i32
    %c0_i32_1 = arith.constant 0 : i32
    return %c0_i32, %c0_i32_0 : i32, i32
  }
  func.func @transform_2(%arg0: i32) -> (i32, i32) {
    %c0_i32 = arith.constant 0 : i32
    %c0_i32_0 = arith.constant 0 : i32
    %c0_i32_1 = arith.constant 0 : i32
    return %c0_i32, %c0_i32_0 : i32, i32
  }
  func.func @transform_3(%arg0: i32) -> (i32, i32) {
    %c0_i32 = arith.constant 0 : i32
    %c0_i32_0 = arith.constant 0 : i32
    %c0_i32_1 = arith.constant 0 : i32
    return %c0_i32, %c0_i32_0 : i32, i32
  }
  func.func @transform_4(%arg0: i32) -> (i32, i32) {
    %c0_i32 = arith.constant 0 : i32
    %c0_i32_0 = arith.constant 0 : i32
    %c0_i32_1 = arith.constant 0 : i32
    return %c0_i32, %c0_i32_0 : i32, i32
  }
  func.func @transform_5(%arg0: i32) -> (i32, i32) {
    %c0_i32 = arith.constant 0 : i32
    %c0_i32_0 = arith.constant 0 : i32
    return %arg0, %c0_i32 : i32, i32
  }
}

module attributes {stable_mosaic.version = 11 : i64} {
  func.func @_autoencoder_kernel(%arg0: i32, %arg1: memref<128x1682xf32, #tpu.memory_space<vmem>>, %arg2: memref<1682x256xbf16, #tpu.memory_space<vmem>>, %arg3: memref<1x256xf32, #tpu.memory_space<vmem>>, %arg4: memref<256x1682xbf16, #tpu.memory_space<vmem>>, %arg5: memref<1x1682xf32, #tpu.memory_space<vmem>>, %arg6: memref<128x1682xf32, #tpu.memory_space<vmem>>) attributes {dimension_semantics = [#tpu.dimension_semantics<parallel>], iteration_bounds = array<i64: 4>, scalar_prefetch = 0 : i64, scratch_operands = 0 : i64, tpu.core_type = #tpu.core_type<tc>, window_params = [{transform_indices = @transform_0, window_bounds = array<i64: 128, 1682>}, {pipeline_mode = #tpu.pipeline_mode<synchronous>, transform_indices = @transform_1, window_bounds = array<i64: 1682, 256>}, {pipeline_mode = #tpu.pipeline_mode<synchronous>, transform_indices = @transform_2, window_bounds = array<i64: 1, 256>}, {pipeline_mode = #tpu.pipeline_mode<synchronous>, transform_indices = @transform_3, window_bounds = array<i64: 256, 1682>}, {pipeline_mode = #tpu.pipeline_mode<synchronous>, transform_indices = @transform_4, window_bounds = array<i64: 1, 1682>}, {transform_indices = @transform_5, window_bounds = array<i64: 128, 1682>}]} {
    %c0 = arith.constant 0 : index
    %c0_0 = arith.constant 0 : index
    %0 = vector.load %arg1[%c0, %c0_0] : memref<128x1682xf32, #tpu.memory_space<vmem>>, vector<128x1682xf32>
    %1 = arith.truncf %0 : vector<128x1682xf32> to vector<128x1682xbf16>
    %c0_1 = arith.constant 0 : index
    %c0_2 = arith.constant 0 : index
    %2 = vector.load %arg2[%c0_1, %c0_2] : memref<1682x256xbf16, #tpu.memory_space<vmem>>, vector<1682x256xbf16>
    %cst = arith.constant dense<0.000000e+00> : vector<128x256xf32>
    %3 = tpu.matmul %1, %2, %cst {dimension_numbers = #tpu.dot_dimension_numbers<[1], [0], [0], [1], [0, 0, 1, 1], [], []>} : vector<128x1682xbf16>, vector<1682x256xbf16>, vector<128x256xf32> -> vector<128x256xf32>
    %c0_3 = arith.constant 0 : index
    %c0_4 = arith.constant 0 : index
    %4 = vector.load %arg3[%c0_3, %c0_4] : memref<1x256xf32, #tpu.memory_space<vmem>>, vector<1x256xf32>
    %5 = vector.broadcast %4 : vector<1x256xf32> to vector<128x256xf32>
    %6 = arith.addf %3, %5 : vector<128x256xf32>
    %cst_5 = arith.constant 0.000000e+00 : f32
    %7 = vector.broadcast %cst_5 : f32 to vector<128x256xf32>
    %8 = arith.subf %7, %6 : vector<128x256xf32>
    %9 = math.exp %8 : vector<128x256xf32>
    %cst_6 = arith.constant 1.000000e+00 : f32
    %10 = vector.broadcast %cst_6 : f32 to vector<128x256xf32>
    %11 = arith.addf %10, %9 : vector<128x256xf32>
    %12 = tpu.reciprocal %11 {approx = true} : vector<128x256xf32> -> vector<128x256xf32>
    %13 = arith.truncf %12 : vector<128x256xf32> to vector<128x256xbf16>
    %c0_7 = arith.constant 0 : index
    %c0_8 = arith.constant 0 : index
    %14 = vector.load %arg4[%c0_7, %c0_8] : memref<256x1682xbf16, #tpu.memory_space<vmem>>, vector<256x1682xbf16>
    %cst_9 = arith.constant dense<0.000000e+00> : vector<128x1682xf32>
    %15 = tpu.matmul %13, %14, %cst_9 {dimension_numbers = #tpu.dot_dimension_numbers<[1], [0], [0], [1], [0, 0, 1, 1], [], []>} : vector<128x256xbf16>, vector<256x1682xbf16>, vector<128x1682xf32> -> vector<128x1682xf32>
    %c0_10 = arith.constant 0 : index
    %c0_11 = arith.constant 0 : index
    %16 = vector.load %arg5[%c0_10, %c0_11] : memref<1x1682xf32, #tpu.memory_space<vmem>>, vector<1x1682xf32>
    %17 = vector.broadcast %16 : vector<1x1682xf32> to vector<128x1682xf32>
    %18 = arith.addf %15, %17 : vector<128x1682xf32>
    %cst_12 = arith.constant 0.000000e+00 : f32
    %19 = vector.broadcast %cst_12 : f32 to vector<128x1682xf32>
    %20 = arith.subf %19, %18 : vector<128x1682xf32>
    %21 = math.exp %20 : vector<128x1682xf32>
    %cst_13 = arith.constant 1.000000e+00 : f32
    %22 = vector.broadcast %cst_13 : f32 to vector<128x1682xf32>
    %23 = arith.addf %22, %21 : vector<128x1682xf32>
    %24 = tpu.reciprocal %23 {approx = true} : vector<128x1682xf32> -> vector<128x1682xf32>
    %c0_14 = arith.constant 0 : index
    %c0_15 = arith.constant 0 : index
    %25 = vector.load %arg6[%c0_14, %c0_15] : memref<128x1682xf32, #tpu.memory_space<vmem>>, vector<128x1682xf32>
    tpu.vector_store %arg6[%c0_14, %c0_15], %24 {strides = array<i32>} : memref<128x1682xf32, #tpu.memory_space<vmem>>, vector<128x1682xf32>,
    return
  }
  func.func @transform_0(%arg0: i32) -> (i32, i32) {
    %c0_i32 = arith.constant 0 : i32
    %c0_i32_0 = arith.constant 0 : i32
    return %arg0, %c0_i32 : i32, i32
  }
  func.func @transform_1(%arg0: i32) -> (i32, i32) {
    %c0_i32 = arith.constant 0 : i32
    %c0_i32_0 = arith.constant 0 : i32
    %c0_i32_1 = arith.constant 0 : i32
    return %c0_i32, %c0_i32_0 : i32, i32
  }
  func.func @transform_2(%arg0: i32) -> (i32, i32) {
    %c0_i32 = arith.constant 0 : i32
    %c0_i32_0 = arith.constant 0 : i32
    %c0_i32_1 = arith.constant 0 : i32
    return %c0_i32, %c0_i32_0 : i32, i32
  }
  func.func @transform_3(%arg0: i32) -> (i32, i32) {
    %c0_i32 = arith.constant 0 : i32
    %c0_i32_0 = arith.constant 0 : i32
    %c0_i32_1 = arith.constant 0 : i32
    return %c0_i32, %c0_i32_0 : i32, i32
  }
  func.func @transform_4(%arg0: i32) -> (i32, i32) {
    %c0_i32 = arith.constant 0 : i32
    %c0_i32_0 = arith.constant 0 : i32
    %c0_i32_1 = arith.constant 0 : i32
    return %c0_i32, %c0_i32_0 : i32, i32
  }
  func.func @transform_5(%arg0: i32) -> (i32, i32) {
    %c0_i32 = arith.constant 0 : i32
    %c0_i32_0 = arith.constant 0 : i32
    return %arg0, %c0_i32 : i32, i32
  }
}

</mosaic_0001>

<llo_original>
// kernel: tpu_custom_call.1
$region0: #{tpu_custom_call.1}
  #allocation0 [shape = 'u32[]', space=smem, size = 0x4, offset = 0x4, fixed_abs, tag = 'smem constant byte address 0x4 - core index']
  #allocation1 [shape = 'u32[144,128]{1,0:T(1,128)}', space=vmem, size = 0x12000, scoped, tag = 'internal scratch']
  %s0 = inlined_call_operand.vmem [shape: f32[512,1682], index: 0, kind: input, shape index: {}]
  %s1 = inlined_call_operand.vmem [shape: bf16[1682,256], index: 1, kind: input, shape index: {}]
  %s2 = inlined_call_operand.vmem [shape: f32[1,256], index: 2, kind: input, shape index: {}]
  %s3 = inlined_call_operand.vmem [shape: bf16[256,1682], index: 3, kind: input, shape index: {}]
  %s4 = inlined_call_operand.vmem [shape: f32[1,1682], index: 4, kind: input, shape index: {}]
  %s5 = inlined_call_operand.vmem [shape: f32[512,1682], index: 5, kind: output, shape index: {}]
  %s6 = sld [smem:[#allocation0]]
  $region53: #{tpu_custom_call.1} parent=0
    _
  %s8 = ssub.s32 1, %s6
  %s9 = scalar_select 0, %s8, %s6
  loop: start=0, step=1, limit=6
  $region2: #{tpu_custom_call.1} parent=0 // loop_pre_header
    _
  $region3: #{tpu_custom_call.1} parent=0 // loop_header
    %s11 = sphi 0, %s15
    %p12 = scmp.ge.s32.totalorder %s11, 6
    %s21 = sphi 0, %s23
    %s24 = sphi 0, %s21
    %s25 = sphi 0, %s24
    %s41 = sphi 0, %s25
    %s45 = sphi 0, %s45
    %s47 = sphi 0, %s45
    %s48 = sphi 0, %s47
    %s62 = sphi 0, %s48
    %s66 = sphi 0, %s66
    %s68 = sphi 0, %s66
    %s69 = sphi 0, %s68
    %s83 = sphi 0, %s69
    %s87 = sphi 0, %s87
    %s89 = sphi 0, %s87
    %s90 = sphi 0, %s89
    %s104 = sphi 0, %s90
    %s108 = sphi 0, %s108
    %s110 = sphi 0, %s108
    %s111 = sphi 0, %s110
    %s125 = sphi 0, %s111
    %s131 = sphi 0, %s133
    %s134 = sphi 0, %s131
    %s135 = sphi 0, %s134
    %s151 = sphi 0, %s135
  $region4: #{tpu_custom_call.1} parent=0 // loop_header_branch
    %14 = sbr.rel (%p12) target = $region8
  $region5: #{tpu_custom_call.1} parent=0 // loop_body
    %s16 = ssub.s32 %s11, 1
    %s17 = ssub.s32 %s11, 2
    %s18 = sadd.s32 %s11, 1
    %s19 = ssub.s32 %s11, %s18
    %p20 = scmp.eq.s32.totalorder %s19, 0
    %s22 = sadd.s32 %s21, 1
    %s23 = scalar_select %p20, %s21, %s22
    %p26 = pneg %p20
    %p27 = scmp.eq.s32.totalorder %s11, 3
    %p28 = por %p26, %p27
    %p29 = scmp.ne.s32.totalorder %s21, %s24
    %p30 = scmp.eq.s32.totalorder %s11, 0
    %p31 = por %p29, %p30
    %p32 = scmp.ne.s32.totalorder %s21, %s24
    %p33 = scmp.eq.s32.totalorder %s16, 3
    %p34 = por %p32, %p33
    %p35 = scmp.ne.s32.totalorder %s24, %s25
    %p36 = scmp.eq.s32.totalorder %s16, 0
    %p37 = por %p35, %p36
    %p38 = scmp.ne.s32.totalorder %s24, %s25
    %p39 = scmp.eq.s32.totalorder %s17, 3
    %p40 = por %p38, %p39
    %p42 = scmp.ne.s32.totalorder %s25, %s41
    %p43 = scmp.eq.s32.totalorder %s17, 0
    %p44 = por %p42, %p43
    %s46 = sadd.s32 %s45, 1
    %p49 = scmp.eq.s32.totalorder %s11, 3
    %p50 = scmp.ne.s32.totalorder %s45, %s47
    %p51 = scmp.eq.s32.totalorder %s11, 0
    %p52 = por %p50, %p51
    %p53 = scmp.ne.s32.totalorder %s45, %s47
    %p54 = scmp.eq.s32.totalorder %s16, 3
    %p55 = por %p53, %p54
    %p56 = scmp.ne.s32.totalorder %s47, %s48
    %p57 = scmp.eq.s32.totalorder %s16, 0
    %p58 = por %p56, %p57
    %p59 = scmp.ne.s32.totalorder %s47, %s48
    %p60 = scmp.eq.s32.totalorder %s17, 3
    %p61 = por %p59, %p60
    %p63 = scmp.ne.s32.totalorder %s48, %s62
    %p64 = scmp.eq.s32.totalorder %s17, 0
    %p65 = por %p63, %p64
    %s67 = sadd.s32 %s66, 1
    %p70 = scmp.eq.s32.totalorder %s11, 3
    %p71 = scmp.ne.s32.totalorder %s66, %s68
    %p72 = scmp.eq.s32.totalorder %s11, 0
    %p73 = por %p71, %p72
    %p74 = scmp.ne.s32.totalorder %s66, %s68
    %p75 = scmp.eq.s32.totalorder %s16, 3
    %p76 = por %p74, %p75
    %p77 = scmp.ne.s32.totalorder %s68, %s69
    %p78 = scmp.eq.s32.totalorder %s16, 0
    %p79 = por %p77, %p78
    %p80 = scmp.ne.s32.totalorder %s68, %s69
    %p81 = scmp.eq.s32.totalorder %s17, 3
    %p82 = por %p80, %p81
    %p84 = scmp.ne.s32.totalorder %s69, %s83
    %p85 = scmp.eq.s32.totalorder %s17, 0
    %p86 = por %p84, %p85
    %s88 = sadd.s32 %s87, 1
    %p91 = scmp.eq.s32.totalorder %s11, 3
    %p92 = scmp.ne.s32.totalorder %s87, %s89
    %p93 = scmp.eq.s32.totalorder %s11, 0
    %p94 = por %p92, %p93
    %p95 = scmp.ne.s32.totalorder %s87, %s89
    %p96 = scmp.eq.s32.totalorder %s16, 3
    %p97 = por %p95, %p96
    %p98 = scmp.ne.s32.totalorder %s89, %s90
    %p99 = scmp.eq.s32.totalorder %s16, 0
    %p100 = por %p98, %p99
    %p101 = scmp.ne.s32.totalorder %s89, %s90
    %p102 = scmp.eq.s32.totalorder %s17, 3
    %p103 = por %p101, %p102
    %p105 = scmp.ne.s32.totalorder %s90, %s104
    %p106 = scmp.eq.s32.totalorder %s17, 0
    %p107 = por %p105, %p106
    %s109 = sadd.s32 %s108, 1
    %p112 = scmp.eq.s32.totalorder %s11, 3
    %p113 = scmp.ne.s32.totalorder %s108, %s110
    %p114 = scmp.eq.s32.totalorder %s11, 0
    %p115 = por %p113, %p114
    %p116 = scmp.ne.s32.totalorder %s108, %s110
    %p117 = scmp.eq.s32.totalorder %s16, 3
    %p118 = por %p116, %p117
    %p119 = scmp.ne.s32.totalorder %s110, %s111
    %p120 = scmp.eq.s32.totalorder %s16, 0
    %p121 = por %p119, %p120
    %p122 = scmp.ne.s32.totalorder %s110, %s111
    %p123 = scmp.eq.s32.totalorder %s17, 3
    %p124 = por %p122, %p123
    %p126 = scmp.ne.s32.totalorder %s111, %s125
    %p127 = scmp.eq.s32.totalorder %s17, 0
    %p128 = por %p126, %p127
    %s129 = ssub.s32 %s11, %s18
    %p130 = scmp.eq.s32.totalorder %s129, 0
    %s132 = sadd.s32 %s131, 1
    %s133 = scalar_select %p130, %s131, %s132
    %p136 = pneg %p130
    %p137 = scmp.eq.s32.totalorder %s11, 3
    %p138 = por %p136, %p137
    %p139 = scmp.ne.s32.totalorder %s131, %s134
    %p140 = scmp.eq.s32.totalorder %s11, 0
    %p141 = por %p139, %p140
    %p142 = scmp.ne.s32.totalorder %s131, %s134
    %p143 = scmp.eq.s32.totalorder %s16, 3
    %p144 = por %p142, %p143
    %p145 = scmp.ne.s32.totalorder %s134, %s135
    %p146 = scmp.eq.s32.totalorder %s16, 0
    %p147 = por %p145, %p146
    %p148 = scmp.ne.s32.totalorder %s134, %s135
    %p149 = scmp.eq.s32.totalorder %s17, 3
    %p150 = por %p148, %p149
    %p152 = scmp.ne.s32.totalorder %s135, %s151
    %p153 = scmp.eq.s32.totalorder %s17, 0
    %p154 = por %p152, %p153
    %p155 = scmp.le.s32.totalorder 1, %s11
    %p156 = scmp.lt.s32.totalorder %s11, 5
    %p157 = pnand %p155, %p156
    %p158 = pneg %p157
    // Predicated region
    $region9: #{tpu_custom_call.1} parent=5 // pred_check
      _
    $region10: #{tpu_custom_call.1} parent=5 // pred_check_branch
      %160 = sbr.rel (%p157) target = $region12
    $region11: #{tpu_custom_call.1} parent=5 // pred_region
      %s161 = ssub.s32 %s11, 1
      // Predicated region
      $region13: #{tpu_custom_call.1} parent=11 // pred_check
        %p162 = pneg %p58
      $region14: #{tpu_custom_call.1} parent=11 // pred_check_branch
        %164 = sbr.rel (%p162) target = $region16
      $region15: #{tpu_custom_call.1} parent=11 // pred_region
        _
      $region16: #{tpu_custom_call.1} parent=11 // pred_fallthru
        _
      // Predicated region
      $region17: #{tpu_custom_call.1} parent=11 // pred_check
        %p165 = pneg %p79
      $region18: #{tpu_custom_call.1} parent=11 // pred_check_branch
        %167 = sbr.rel (%p165) target = $region20
      $region19: #{tpu_custom_call.1} parent=11 // pred_region
        _
      $region20: #{tpu_custom_call.1} parent=11 // pred_fallthru
        _
      // Predicated region
      $region21: #{tpu_custom_call.1} parent=11 // pred_check
        %p168 = pneg %p100
      $region22: #{tpu_custom_call.1} parent=11 // pred_check_branch
        %170 = sbr.rel (%p168) target = $region24
      $region23: #{tpu_custom_call.1} parent=11 // pred_region
        _
      $region24: #{tpu_custom_call.1} parent=11 // pred_fallthru
        _
      // Predicated region
      $region25: #{tpu_custom_call.1} parent=11 // pred_check
        %p171 = pneg %p121
      $region26: #{tpu_custom_call.1} parent=11 // pred_check_branch
        %173 = sbr.rel (%p171) target = $region28
      $region27: #{tpu_custom_call.1} parent=11 // pred_region
        _
      $region28: #{tpu_custom_call.1} parent=11 // pred_fallthru
        _
    $region12: #{tpu_custom_call.1} parent=5 // pred_fallthru
      _
    %p174 = scmp.lt.s32.totalorder %s11, 4
    // Predicated region
    $region29: #{tpu_custom_call.1} parent=5 // pred_check
      %p175 = pneg %p174
    $region30: #{tpu_custom_call.1} parent=5 // pred_check_branch
      %177 = sbr.rel (%p175) target = $region32
    $region31: #{tpu_custom_call.1} parent=5 // pred_region
      // Predicated region
      $region33: #{tpu_custom_call.1} parent=31 // pred_check
        %p178 = pneg %p31
      $region34: #{tpu_custom_call.1} parent=31 // pred_check_branch
        %180 = sbr.rel (%p178) target = $region36
      $region35: #{tpu_custom_call.1} parent=31 // pred_region
        %s181 = smul.u32 16, %s11
        %p182 = scmp.lt.s32.totalorder %s181, 63
        %s183 = scalar_select %p182, %s181, 63
        %s184 = smul.addr %s183, 14
        %s185 = smul.addr %s184, 8
        %s186 = scalar_lea.vmem %s0, %s185
        %s187 = smul.u32 16, %s11
      $region36: #{tpu_custom_call.1} parent=31 // pred_fallthru
        _
    $region32: #{tpu_custom_call.1} parent=5 // pred_fallthru
      _
    %p188 = scmp.le.s32.totalorder 1, %s11
    %p189 = scmp.lt.s32.totalorder %s11, 5
    %p190 = pnand %p188, %p189
    %p191 = pneg %p190
    // Predicated region
    $region37: #{tpu_custom_call.1} parent=5 // pred_check
      _
    $region38: #{tpu_custom_call.1} parent=5 // pred_check_branch
      %193 = sbr.rel (%p190) target = $region40
    $region39: #{tpu_custom_call.1} parent=5 // pred_region
      %s194 = ssub.s32 %s11, 1
      %s195 = smul.u32 16, %s16
      %p196 = scmp.lt.s32.totalorder %s195, 63
      %s197 = scalar_select %p196, %s195, 63
      %s198 = smul.addr %s197, 14
      %s199 = smul.addr %s198, 8
      %s200 = scalar_lea.vmem %s0, %s199
      %p201 = pneg %p37
      %p202 = pneg %p34
      %p203 = pneg %p58
      %p204 = pneg %p55
      %p205 = pneg %p79
      %p206 = pneg %p76
      %p207 = pneg %p100
      %p208 = pneg %p97
      %p209 = pneg %p121
      %p210 = pneg %p118
      %p211 = pneg %p147
      %p212 = pneg %p144
      %s213 = smul.u32 16, %s16
      %p214 = scmp.lt.s32.totalorder %s213, 63
      %s215 = scalar_select %p214, %s213, 63
      %s216 = smul.addr %s215, 14
      %s217 = smul.addr %s216, 8
      %s218 = scalar_lea.vmem %s5, %s217
      %s219 = smul.u32 16, %s16
      %p220 = scmp.lt.s32.totalorder %s219, 63
      %s221 = scalar_select %p220, %s219, 63
      %s222 = smul.addr %s221, 14
      %s223 = smul.addr %s222, 8
      %s224 = scalar_lea.vmem %s0, %s223
      %s225 = smul.u32 16, %s16
      %s226 = smul.u32 16, %s16
      %p227 = scmp.lt.s32.totalorder %s226, 63
      %s228 = scalar_select %p227, %s226, 63
      %s229 = smul.addr %s228, 14
      %s230 = smul.addr %s229, 8
      %s231 = scalar_lea.vmem %s5, %s230
      %s232 = smul.u32 16, %s16
      %v234 = vld [vmem:[%s224] sm:$0xff]
      %v235 = vld [vmem:[%s224 + $0x8] sm:$0xff]
      %v236 = vld [vmem:[%s224 + $0x10] sm:$0xff]
      %v237 = vld [vmem:[%s224 + $0x18] sm:$0xff]
      %v238 = vld [vmem:[%s224 + $0x20] sm:$0xff]
      %v239 = vld [vmem:[%s224 + $0x28] sm:$0xff]
      %v240 = vld [vmem:[%s224 + $0x30] sm:$0xff]
      %v241 = vld [vmem:[%s224 + $0x38] sm:$0xff]
      %v242 = vld [vmem:[%s224 + $0x40] sm:$0xff]
      %v243 = vld [vmem:[%s224 + $0x48] sm:$0xff]
      %v244 = vld [vmem:[%s224 + $0x50] sm:$0xff]
      %v245 = vld [vmem:[%s224 + $0x58] sm:$0xff]
      %v246 = vld [vmem:[%s224 + $0x60] sm:$0xff]
      %v247 = vld [vmem:[%s224 + $0x68] sm:$0xff]
      %v248 = vld [vmem:[%s224 + $0x70] sm:$0xff]
      %v249 = vld [vmem:[%s224 + $0x78] sm:$0xff]
      %v250 = vld [vmem:[%s224 + $0x80] sm:$0xff]
      %v251 = vld [vmem:[%s224 + $0x88] sm:$0xff]
      %v252 = vld [vmem:[%s224 + $0x90] sm:$0xff]
      %v253 = vld [vmem:[%s224 + $0x98] sm:$0xff]
      %v254 = vld [vmem:[%s224 + $0xa0] sm:$0xff]
      %v255 = vld [vmem:[%s224 + $0xa8] sm:$0xff]
      %v256 = vld [vmem:[%s224 + $0xb0] sm:$0xff]
      %v257 = vld [vmem:[%s224 + $0xb8] sm:$0xff]
      %v258 = vld [vmem:[%s224 + $0xc0] sm:$0xff]
      %v259 = vld [vmem:[%s224 + $0xc8] sm:$0xff]
      %v260 = vld [vmem:[%s224 + $0xd0] sm:$0xff]
      %v261 = vld [vmem:[%s224 + $0xd8] sm:$0xff]
      %v262 = vld [vmem:[%s224 + $0xe0] sm:$0xff]
      %v263 = vld [vmem:[%s224 + $0xe8] sm:$0xff]
      %v264 = vld [vmem:[%s224 + $0xf0] sm:$0xff]
      %v265 = vld [vmem:[%s224 + $0xf8] sm:$0xff]
      %v266 = vld [vmem:[%s224 + $0x100] sm:$0xff]
      %v267 = vld [vmem:[%s224 + $0x108] sm:$0xff]
      %v268 = vld [vmem:[%s224 + $0x110] sm:$0xff]
      %v269 = vld [vmem:[%s224 + $0x118] sm:$0xff]
      %v270 = vld [vmem:[%s224 + $0x120] sm:$0xff]
      %v271 = vld [vmem:[%s224 + $0x128] sm:$0xff]
      %v272 = vld [vmem:[%s224 + $0x130] sm:$0xff]
      %v273 = vld [vmem:[%s224 + $0x138] sm:$0xff]
      %v274 = vld [vmem:[%s224 + $0x140] sm:$0xff]
      %v275 = vld [vmem:[%s224 + $0x148] sm:$0xff]
      %v276 = vld [vmem:[%s224 + $0x150] sm:$0xff]
      %v277 = vld [vmem:[%s224 + $0x158] sm:$0xff]
      %v278 = vld [vmem:[%s224 + $0x160] sm:$0xff]
      %v279 = vld [vmem:[%s224 + $0x168] sm:$0xff]
      %v280 = vld [vmem:[%s224 + $0x170] sm:$0xff]
      %v281 = vld [vmem:[%s224 + $0x178] sm:$0xff]
      %v282 = vld [vmem:[%s224 + $0x180] sm:$0xff]
      %v283 = vld [vmem:[%s224 + $0x188] sm:$0xff]
      %v284 = vld [vmem:[%s224 + $0x190] sm:$0xff]
      %v285 = vld [vmem:[%s224 + $0x198] sm:$0xff]
      %v286 = vld [vmem:[%s224 + $0x1a0] sm:$0xff]
      %v287 = vld [vmem:[%s224 + $0x1a8] sm:$0xff]
      %v288 = vld [vmem:[%s224 + $0x1b0] sm:$0xff]
      %v289 = vld [vmem:[%s224 + $0x1b8] sm:$0xff]
      %v290 = vld [vmem:[%s224 + $0x1c0] sm:$0xff]
      %v291 = vld [vmem:[%s224 + $0x1c8] sm:$0xff]
      %v292 = vld [vmem:[%s224 + $0x1d0] sm:$0xff]
      %v293 = vld [vmem:[%s224 + $0x1d8] sm:$0xff]
      %v294 = vld [vmem:[%s224 + $0x1e0] sm:$0xff]
      %v295 = vld [vmem:[%s224 + $0x1e8] sm:$0xff]
      %v296 = vld [vmem:[%s224 + $0x1f0] sm:$0xff]
      %v297 = vld [vmem:[%s224 + $0x1f8] sm:$0xff]
      %v298 = vld [vmem:[%s224 + $0x200] sm:$0xff]
      %v299 = vld [vmem:[%s224 + $0x208] sm:$0xff]
      %v300 = vld [vmem:[%s224 + $0x210] sm:$0xff]
      %v301 = vld [vmem:[%s224 + $0x218] sm:$0xff]
      %v302 = vld [vmem:[%s224 + $0x220] sm:$0xff]
      %v303 = vld [vmem:[%s224 + $0x228] sm:$0xff]
      %v304 = vld [vmem:[%s224 + $0x230] sm:$0xff]
      %v305 = vld [vmem:[%s224 + $0x238] sm:$0xff]
      %v306 = vld [vmem:[%s224 + $0x240] sm:$0xff]
      %v307 = vld [vmem:[%s224 + $0x248] sm:$0xff]
      %v308 = vld [vmem:[%s224 + $0x250] sm:$0xff]
      %v309 = vld [vmem:[%s224 + $0x258] sm:$0xff]
      %v310 = vld [vmem:[%s224 + $0x260] sm:$0xff]
      %v311 = vld [vmem:[%s224 + $0x268] sm:$0xff]
      %v312 = vld [vmem:[%s224 + $0x270] sm:$0xff]
      %v313 = vld [vmem:[%s224 + $0x278] sm:$0xff]
      %v314 = vld [vmem:[%s224 + $0x280] sm:$0xff]
      %v315 = vld [vmem:[%s224 + $0x288] sm:$0xff]
      %v316 = vld [vmem:[%s224 + $0x290] sm:$0xff]
      %v317 = vld [vmem:[%s224 + $0x298] sm:$0xff]
      %v318 = vld [vmem:[%s224 + $0x2a0] sm:$0xff]
      %v319 = vld [vmem:[%s224 + $0x2a8] sm:$0xff]
      %v320 = vld [vmem:[%s224 + $0x2b0] sm:$0xff]
      %v321 = vld [vmem:[%s224 + $0x2b8] sm:$0xff]
      %v322 = vld [vmem:[%s224 + $0x2c0] sm:$0xff]
      %v323 = vld [vmem:[%s224 + $0x2c8] sm:$0xff]
      %v324 = vld [vmem:[%s224 + $0x2d0] sm:$0xff]
      %v325 = vld [vmem:[%s224 + $0x2d8] sm:$0xff]
      %v326 = vld [vmem:[%s224 + $0x2e0] sm:$0xff]
      %v327 = vld [vmem:[%s224 + $0x2e8] sm:$0xff]
      %v328 = vld [vmem:[%s224 + $0x2f0] sm:$0xff]
      %v329 = vld [vmem:[%s224 + $0x2f8] sm:$0xff]
      %v330 = vld [vmem:[%s224 + $0x300] sm:$0xff]
      %v331 = vld [vmem:[%s224 + $0x308] sm:$0xff]
      %v332 = vld [vmem:[%s224 + $0x310] sm:$0xff]
      %v333 = vld [vmem:[%s224 + $0x318] sm:$0xff]
      %v334 = vld [vmem:[%s224 + $0x320] sm:$0xff]
      %v335 = vld [vmem:[%s224 + $0x328] sm:$0xff]
      %v336 = vld [vmem:[%s224 + $0x330] sm:$0xff]
      %v337 = vld [vmem:[%s224 + $0x338] sm:$0xff]
      %v338 = vld [vmem:[%s224 + $0x340] sm:$0xff]
      %v339 = vld [vmem:[%s224 + $0x348] sm:$0xff]
      %v340 = vld [vmem:[%s224 + $0x350] sm:$0xff]
      %v341 = vld [vmem:[%s224 + $0x358] sm:$0xff]
      %v342 = vld [vmem:[%s224 + $0x360] sm:$0xff]
      %v343 = vld [vmem:[%s224 + $0x368] sm:$0xff]
      %v344 = vld [vmem:[%s224 + $0x370] sm:$0xff]
      %v345 = vld [vmem:[%s224 + $0x378] sm:$0xff]
      %v346 = vld [vmem:[%s224 + $0x380] sm:$0xff]
      %v347 = vld [vmem:[%s224 + $0x388] sm:$0xff]
      %v348 = vld [vmem:[%s224 + $0x390] sm:$0xff]
      %v349 = vld [vmem:[%s224 + $0x398] sm:$0xff]
      %v350 = vld [vmem:[%s224 + $0x3a0] sm:$0xff]
      %v351 = vld [vmem:[%s224 + $0x3a8] sm:$0xff]
      %v352 = vld [vmem:[%s224 + $0x3b0] sm:$0xff]
      %v353 = vld [vmem:[%s224 + $0x3b8] sm:$0xff]
      %v354 = vld [vmem:[%s224 + $0x3c0] sm:$0xff]
      %v355 = vld [vmem:[%s224 + $0x3c8] sm:$0xff]
      %v356 = vld [vmem:[%s224 + $0x3d0] sm:$0xff]
      %v357 = vld [vmem:[%s224 + $0x3d8] sm:$0xff]
      %v358 = vld [vmem:[%s224 + $0x3e0] sm:$0xff]
      %v359 = vld [vmem:[%s224 + $0x3e8] sm:$0xff]
      %v360 = vld [vmem:[%s224 + $0x3f0] sm:$0xff]
      %v361 = vld [vmem:[%s224 + $0x3f8] sm:$0xff]
      %v362 = vld [vmem:[%s224 + $0x400] sm:$0xff]
      %v363 = vld [vmem:[%s224 + $0x408] sm:$0xff]
      %v364 = vld [vmem:[%s224 + $0x410] sm:$0xff]
      %v365 = vld [vmem:[%s224 + $0x418] sm:$0xff]
      %v366 = vld [vmem:[%s224 + $0x420] sm:$0xff]
      %v367 = vld [vmem:[%s224 + $0x428] sm:$0xff]
      %v368 = vld [vmem:[%s224 + $0x430] sm:$0xff]
      %v369 = vld [vmem:[%s224 + $0x438] sm:$0xff]
      %v370 = vld [vmem:[%s224 + $0x440] sm:$0xff]
      %v371 = vld [vmem:[%s224 + $0x448] sm:$0xff]
      %v372 = vld [vmem:[%s224 + $0x450] sm:$0xff]
      %v373 = vld [vmem:[%s224 + $0x458] sm:$0xff]
      %v374 = vld [vmem:[%s224 + $0x460] sm:$0xff]
      %v375 = vld [vmem:[%s224 + $0x468] sm:$0xff]
      %v376 = vld [vmem:[%s224 + $0x470] sm:$0xff]
      %v377 = vld [vmem:[%s224 + $0x478] sm:$0xff]
      %v378 = vld [vmem:[%s224 + $0x480] sm:$0xff]
      %v379 = vld [vmem:[%s224 + $0x488] sm:$0xff]
      %v380 = vld [vmem:[%s224 + $0x490] sm:$0xff]
      %v381 = vld [vmem:[%s224 + $0x498] sm:$0xff]
      %v382 = vld [vmem:[%s224 + $0x4a0] sm:$0xff]
      %v383 = vld [vmem:[%s224 + $0x4a8] sm:$0xff]
      %v384 = vld [vmem:[%s224 + $0x4b0] sm:$0xff]
      %v385 = vld [vmem:[%s224 + $0x4b8] sm:$0xff]
      %v386 = vld [vmem:[%s224 + $0x4c0] sm:$0xff]
      %v387 = vld [vmem:[%s224 + $0x4c8] sm:$0xff]
      %v388 = vld [vmem:[%s224 + $0x4d0] sm:$0xff]
      %v389 = vld [vmem:[%s224 + $0x4d8] sm:$0xff]
      %v390 = vld [vmem:[%s224 + $0x4e0] sm:$0xff]
      %v391 = vld [vmem:[%s224 + $0x4e8] sm:$0xff]
      %v392 = vld [vmem:[%s224 + $0x4f0] sm:$0xff]
      %v393 = vld [vmem:[%s224 + $0x4f8] sm:$0xff]
      %v394 = vld [vmem:[%s224 + $0x500] sm:$0xff]
      %v395 = vld [vmem:[%s224 + $0x508] sm:$0xff]
      %v396 = vld [vmem:[%s224 + $0x510] sm:$0xff]
      %v397 = vld [vmem:[%s224 + $0x518] sm:$0xff]
      %v398 = vld [vmem:[%s224 + $0x520] sm:$0xff]
      %v399 = vld [vmem:[%s224 + $0x528] sm:$0xff]
      %v400 = vld [vmem:[%s224 + $0x530] sm:$0xff]
      %v401 = vld [vmem:[%s224 + $0x538] sm:$0xff]
      %v402 = vld [vmem:[%s224 + $0x540] sm:$0xff]
      %v403 = vld [vmem:[%s224 + $0x548] sm:$0xff]
      %v404 = vld [vmem:[%s224 + $0x550] sm:$0xff]
      %v405 = vld [vmem:[%s224 + $0x558] sm:$0xff]
      %v406 = vld [vmem:[%s224 + $0x560] sm:$0xff]
      %v407 = vld [vmem:[%s224 + $0x568] sm:$0xff]
      %v408 = vld [vmem:[%s224 + $0x570] sm:$0xff]
      %v409 = vld [vmem:[%s224 + $0x578] sm:$0xff]
      %v410 = vld [vmem:[%s224 + $0x580] sm:$0xff]
      %v411 = vld [vmem:[%s224 + $0x588] sm:$0xff]
      %v412 = vld [vmem:[%s224 + $0x590] sm:$0xff]
      %v413 = vld [vmem:[%s224 + $0x598] sm:$0xff]
      %v414 = vld [vmem:[%s224 + $0x5a0] sm:$0xff]
      %v415 = vld [vmem:[%s224 + $0x5a8] sm:$0xff]
      %v416 = vld [vmem:[%s224 + $0x5b0] sm:$0xff]
      %v417 = vld [vmem:[%s224 + $0x5b8] sm:$0xff]
      %v418 = vld [vmem:[%s224 + $0x5c0] sm:$0xff]
      %v419 = vld [vmem:[%s224 + $0x5c8] sm:$0xff]
      %v420 = vld [vmem:[%s224 + $0x5d0] sm:$0xff]
      %v421 = vld [vmem:[%s224 + $0x5d8] sm:$0xff]
      %v422 = vld [vmem:[%s224 + $0x5e0] sm:$0xff]
      %v423 = vld [vmem:[%s224 + $0x5e8] sm:$0xff]
      %v424 = vld [vmem:[%s224 + $0x5f0] sm:$0xff]
      %v425 = vld [vmem:[%s224 + $0x5f8] sm:$0xff]
      %v426 = vld [vmem:[%s224 + $0x600] sm:$0xff]
      %v427 = vld [vmem:[%s224 + $0x608] sm:$0xff]
      %v428 = vld [vmem:[%s224 + $0x610] sm:$0xff]
      %v429 = vld [vmem:[%s224 + $0x618] sm:$0xff]
      %v430 = vld [vmem:[%s224 + $0x620] sm:$0xff]
      %v431 = vld [vmem:[%s224 + $0x628] sm:$0xff]
      %v432 = vld [vmem:[%s224 + $0x630] sm:$0xff]
      %v433 = vld [vmem:[%s224 + $0x638] sm:$0xff]
      %v434 = vld [vmem:[%s224 + $0x640] sm:$0xff]
      %v435 = vld [vmem:[%s224 + $0x648] sm:$0xff]
      %v436 = vld [vmem:[%s224 + $0x650] sm:$0xff]
      %v437 = vld [vmem:[%s224 + $0x658] sm:$0xff]
      %v438 = vld [vmem:[%s224 + $0x660] sm:$0xff]
      %v439 = vld [vmem:[%s224 + $0x668] sm:$0xff]
      %v440 = vld [vmem:[%s224 + $0x670] sm:$0xff]
      %v441 = vld [vmem:[%s224 + $0x678] sm:$0xff]
      %v442 = vld [vmem:[%s224 + $0x680] sm:$0xff]
      %v443 = vld [vmem:[%s224 + $0x688] sm:$0xff]
      %v444 = vld [vmem:[%s224 + $0x690] sm:$0xff]
      %v445 = vld [vmem:[%s224 + $0x698] sm:$0xff]
      %v446 = vld [vmem:[%s224 + $0x6a0] sm:$0xff]
      %v447 = vld [vmem:[%s224 + $0x6a8] sm:$0xff]
      %v448 = vld [vmem:[%s224 + $0x6b0] sm:$0xff]
      %v449 = vld [vmem:[%s224 + $0x6b8] sm:$0xff]
      %v450 = vld [vmem:[%s224 + $0x6c0] sm:$0xff]
      %v451 = vld [vmem:[%s224 + $0x6c8] sm:$0xff]
      %v452 = vld [vmem:[%s224 + $0x6d0] sm:$0xff]
      %v453 = vld [vmem:[%s224 + $0x6d8] sm:$0xff]
      %v454 = vld [vmem:[%s224 + $0x6e0] sm:$0xff]
      %v455 = vld [vmem:[%s224 + $0x6e8] sm:$0xff]
      %v456 = vld [vmem:[%s224 + $0x6f0] sm:$0xff]
      %v457 = vld [vmem:[%s224 + $0x6f8] sm:$0xff]
      %v458 = vpack.c.bf16 %v248, %v234
      %v459 = vpack.c.bf16 %v249, %v235
      %v460 = vpack.c.bf16 %v250, %v236
      %v461 = vpack.c.bf16 %v251, %v237
      %v462 = vpack.c.bf16 %v252, %v238
      %v463 = vpack.c.bf16 %v253, %v239
      %v464 = vpack.c.bf16 %v254, %v240
      %v465 = vpack.c.bf16 %v255, %v241
      %v466 = vpack.c.bf16 %v256, %v242
      %v467 = vpack.c.bf16 %v257, %v243
      %v468 = vpack.c.bf16 %v258, %v244
      %v469 = vpack.c.bf16 %v259, %v245
      %v470 = vpack.c.bf16 %v260, %v246
      %v471 = vpack.c.bf16 %v261, %v247
      %v472 = vpack.c.bf16 %v276, %v262
      %v473 = vpack.c.bf16 %v277, %v263
      %v474 = vpack.c.bf16 %v278, %v264
      %v475 = vpack.c.bf16 %v279, %v265
      %v476 = vpack.c.bf16 %v280, %v266
      %v477 = vpack.c.bf16 %v281, %v267
      %v478 = vpack.c.bf16 %v282, %v268
      %v479 = vpack.c.bf16 %v283, %v269
      %v480 = vpack.c.bf16 %v284, %v270
      %v481 = vpack.c.bf16 %v285, %v271
      %v482 = vpack.c.bf16 %v286, %v272
      %v483 = vpack.c.bf16 %v287, %v273
      %v484 = vpack.c.bf16 %v288, %v274
      %v485 = vpack.c.bf16 %v289, %v275
      %v486 = vpack.c.bf16 %v304, %v290
      %v487 = vpack.c.bf16 %v305, %v291
      %v488 = vpack.c.bf16 %v306, %v292
      %v489 = vpack.c.bf16 %v307, %v293
      %v490 = vpack.c.bf16 %v308, %v294
      %v491 = vpack.c.bf16 %v309, %v295
      %v492 = vpack.c.bf16 %v310, %v296
      %v493 = vpack.c.bf16 %v311, %v297
      %v494 = vpack.c.bf16 %v312, %v298
      %v495 = vpack.c.bf16 %v313, %v299
      %v496 = vpack.c.bf16 %v314, %v300
      %v497 = vpack.c.bf16 %v315, %v301
      %v498 = vpack.c.bf16 %v316, %v302
      %v499 = vpack.c.bf16 %v317, %v303
      %v500 = vpack.c.bf16 %v332, %v318
      %v501 = vpack.c.bf16 %v333, %v319
      %v502 = vpack.c.bf16 %v334, %v320
      %v503 = vpack.c.bf16 %v335, %v321
      %v504 = vpack.c.bf16 %v336, %v322
      %v505 = vpack.c.bf16 %v337, %v323
      %v506 = vpack.c.bf16 %v338, %v324
      %v507 = vpack.c.bf16 %v339, %v325
      %v508 = vpack.c.bf16 %v340, %v326
      %v509 = vpack.c.bf16 %v341, %v327
      %v510 = vpack.c.bf16 %v342, %v328
      %v511 = vpack.c.bf16 %v343, %v329
      %v512 = vpack.c.bf16 %v344, %v330
      %v513 = vpack.c.bf16 %v345, %v331
      %v514 = vpack.c.bf16 %v360, %v346
      %v515 = vpack.c.bf16 %v361, %v347
      %v516 = vpack.c.bf16 %v362, %v348
      %v517 = vpack.c.bf16 %v363, %v349
      %v518 = vpack.c.bf16 %v364, %v350
      %v519 = vpack.c.bf16 %v365, %v351
      %v520 = vpack.c.bf16 %v366, %v352
      %v521 = vpack.c.bf16 %v367, %v353
      %v522 = vpack.c.bf16 %v368, %v354
      %v523 = vpack.c.bf16 %v369, %v355
      %v524 = vpack.c.bf16 %v370, %v356
      %v525 = vpack.c.bf16 %v371, %v357
      %v526 = vpack.c.bf16 %v372, %v358
      %v527 = vpack.c.bf16 %v373, %v359
      %v528 = vpack.c.bf16 %v388, %v374
      %v529 = vpack.c.bf16 %v389, %v375
      %v530 = vpack.c.bf16 %v390, %v376
      %v531 = vpack.c.bf16 %v391, %v377
      %v532 = vpack.c.bf16 %v392, %v378
      %v533 = vpack.c.bf16 %v393, %v379
      %v534 = vpack.c.bf16 %v394, %v380
      %v535 = vpack.c.bf16 %v395, %v381
      %v536 = vpack.c.bf16 %v396, %v382
      %v537 = vpack.c.bf16 %v397, %v383
      %v538 = vpack.c.bf16 %v398, %v384
      %v539 = vpack.c.bf16 %v399, %v385
      %v540 = vpack.c.bf16 %v400, %v386
      %v541 = vpack.c.bf16 %v401, %v387
      %v542 = vpack.c.bf16 %v416, %v402
      %v543 = vpack.c.bf16 %v417, %v403
      %v544 = vpack.c.bf16 %v418, %v404
      %v545 = vpack.c.bf16 %v419, %v405
      %v546 = vpack.c.bf16 %v420, %v406
      %v547 = vpack.c.bf16 %v421, %v407
      %v548 = vpack.c.bf16 %v422, %v408
      %v549 = vpack.c.bf16 %v423, %v409
      %v550 = vpack.c.bf16 %v424, %v410
      %v551 = vpack.c.bf16 %v425, %v411
      %v552 = vpack.c.bf16 %v426, %v412
      %v553 = vpack.c.bf16 %v427, %v413
      %v554 = vpack.c.bf16 %v428, %v414
      %v555 = vpack.c.bf16 %v429, %v415
      %v556 = vpack.c.bf16 %v444, %v430
      %v557 = vpack.c.bf16 %v445, %v431
      %v558 = vpack.c.bf16 %v446, %v432
      %v559 = vpack.c.bf16 %v447, %v433
      %v560 = vpack.c.bf16 %v448, %v434
      %v561 = vpack.c.bf16 %v449, %v435
      %v562 = vpack.c.bf16 %v450, %v436
      %v563 = vpack.c.bf16 %v451, %v437
      %v564 = vpack.c.bf16 %v452, %v438
      %v565 = vpack.c.bf16 %v453, %v439
      %v566 = vpack.c.bf16 %v454, %v440
      %v567 = vpack.c.bf16 %v455, %v441
      %v568 = vpack.c.bf16 %v456, %v442
      %v569 = vpack.c.bf16 %v457, %v443
      %v570 = vld [vmem:[%s1] sm:$0xff]
      %v571 = vld [vmem:[%s1 + $0x8] sm:$0xff]
      %v572 = vld [vmem:[%s1 + $0x10] sm:$0xff]
      %v573 = vld [vmem:[%s1 + $0x18] sm:$0xff]
      %v574 = vld [vmem:[%s1 + $0x20] sm:$0xff]
      %v575 = vld [vmem:[%s1 + $0x28] sm:$0xff]
      %v576 = vld [vmem:[%s1 + $0x30] sm:$0xff]
      %v577 = vld [vmem:[%s1 + $0x38] sm:$0xff]
      %v578 = vld [vmem:[%s1 + $0x40] sm:$0xff]
      %v579 = vld [vmem:[%s1 + $0x48] sm:$0xff]
      %v580 = vld [vmem:[%s1 + $0x50] sm:$0xff]
      %v581 = vld [vmem:[%s1 + $0x58] sm:$0xff]
      %v582 = vld [vmem:[%s1 + $0x60] sm:$0xff]
      %v583 = vld [vmem:[%s1 + $0x68] sm:$0xff]
      %v584 = vld [vmem:[%s1 + $0x70] sm:$0xff]
      %v585 = vld [vmem:[%s1 + $0x78] sm:$0xff]
      %v586 = vld [vmem:[%s1 + $0x80] sm:$0xff]
      %v587 = vld [vmem:[%s1 + $0x88] sm:$0xff]
      %v588 = vld [vmem:[%s1 + $0x90] sm:$0xff]
      %v589 = vld [vmem:[%s1 + $0x98] sm:$0xff]
      %v590 = vld [vmem:[%s1 + $0xa0] sm:$0xff]
      %v591 = vld [vmem:[%s1 + $0xa8] sm:$0xff]
      %v592 = vld [vmem:[%s1 + $0xb0] sm:$0xff]
      %v593 = vld [vmem:[%s1 + $0xb8] sm:$0xff]
      %v594 = vld [vmem:[%s1 + $0xc0] sm:$0xff]
      %v595 = vld [vmem:[%s1 + $0xc8] sm:$0xff]
      %v596 = vld [vmem:[%s1 + $0xd0] sm:$0xff]
      %v597 = vld [vmem:[%s1 + $0xd8] sm:$0xff]
      %v598 = vld [vmem:[%s1 + $0xe0] sm:$0xff]
      %v599 = vld [vmem:[%s1 + $0xe8] sm:$0xff]
      %v600 = vld [vmem:[%s1 + $0xf0] sm:$0xff]
      %v601 = vld [vmem:[%s1 + $0xf8] sm:$0xff]
      %v602 = vld [vmem:[%s1 + $0x100] sm:$0xff]
      %v603 = vld [vmem:[%s1 + $0x108] sm:$0xff]
      %v604 = vld [vmem:[%s1 + $0x110] sm:$0xff]
      %v605 = vld [vmem:[%s1 + $0x118] sm:$0xff]
      %v606 = vld [vmem:[%s1 + $0x120] sm:$0xff]
      %v607 = vld [vmem:[%s1 + $0x128] sm:$0xff]
      %v608 = vld [vmem:[%s1 + $0x130] sm:$0xff]
      %v609 = vld [vmem:[%s1 + $0x138] sm:$0xff]
      %v610 = vld [vmem:[%s1 + $0x140] sm:$0xff]
      %v611 = vld [vmem:[%s1 + $0x148] sm:$0xff]
      %v612 = vld [vmem:[%s1 + $0x150] sm:$0xff]
      %v613 = vld [vmem:[%s1 + $0x158] sm:$0xff]
      %v614 = vld [vmem:[%s1 + $0x160] sm:$0xff]
      %v615 = vld [vmem:[%s1 + $0x168] sm:$0xff]
      %v616 = vld [vmem:[%s1 + $0x170] sm:$0xff]
      %v617 = vld [vmem:[%s1 + $0x178] sm:$0xff]
      %v618 = vld [vmem:[%s1 + $0x180] sm:$0xff]
      %v619 = vld [vmem:[%s1 + $0x188] sm:$0xff]
      %v620 = vld [vmem:[%s1 + $0x190] sm:$0xff]
      %v621 = vld [vmem:[%s1 + $0x198] sm:$0xff]
      %v622 = vld [vmem:[%s1 + $0x1a0] sm:$0xff]
      %v623 = vld [vmem:[%s1 + $0x1a8] sm:$0xff]
      %v624 = vld [vmem:[%s1 + $0x1b0] sm:$0xff]
      %v625 = vld [vmem:[%s1 + $0x1b8] sm:$0xff]
      %v626 = vld [vmem:[%s1 + $0x1c0] sm:$0xff]
      %v627 = vld [vmem:[%s1 + $0x1c8] sm:$0xff]
      %v628 = vld [vmem:[%s1 + $0x1d0] sm:$0xff]
      %v629 = vld [vmem:[%s1 + $0x1d8] sm:$0xff]
      %v630 = vld [vmem:[%s1 + $0x1e0] sm:$0xff]
      %v631 = vld [vmem:[%s1 + $0x1e8] sm:$0xff]
      %v632 = vld [vmem:[%s1 + $0x1f0] sm:$0xff]
      %v633 = vld [vmem:[%s1 + $0x1f8] sm:$0xff]
      %v634 = vld [vmem:[%s1 + $0x200] sm:$0xff]
      %v635 = vld [vmem:[%s1 + $0x208] sm:$0xff]
      %v636 = vld [vmem:[%s1 + $0x210] sm:$0xff]
      %v637 = vld [vmem:[%s1 + $0x218] sm:$0xff]
      %v638 = vld [vmem:[%s1 + $0x220] sm:$0xff]
      %v639 = vld [vmem:[%s1 + $0x228] sm:$0xff]
      %v640 = vld [vmem:[%s1 + $0x230] sm:$0xff]
      %v641 = vld [vmem:[%s1 + $0x238] sm:$0xff]
      %v642 = vld [vmem:[%s1 + $0x240] sm:$0xff]
      %v643 = vld [vmem:[%s1 + $0x248] sm:$0xff]
      %v644 = vld [vmem:[%s1 + $0x250] sm:$0xff]
      %v645 = vld [vmem:[%s1 + $0x258] sm:$0xff]
      %v646 = vld [vmem:[%s1 + $0x260] sm:$0xff]
      %v647 = vld [vmem:[%s1 + $0x268] sm:$0xff]
      %v648 = vld [vmem:[%s1 + $0x270] sm:$0xff]
      %v649 = vld [vmem:[%s1 + $0x278] sm:$0xff]
      %v650 = vld [vmem:[%s1 + $0x280] sm:$0xff]
      %v651 = vld [vmem:[%s1 + $0x288] sm:$0xff]
      %v652 = vld [vmem:[%s1 + $0x290] sm:$0xff]
      %v653 = vld [vmem:[%s1 + $0x298] sm:$0xff]
      %v654 = vld [vmem:[%s1 + $0x2a0] sm:$0xff]
      %v655 = vld [vmem:[%s1 + $0x2a8] sm:$0xff]
      %v656 = vld [vmem:[%s1 + $0x2b0] sm:$0xff]
      %v657 = vld [vmem:[%s1 + $0x2b8] sm:$0xff]
      %v658 = vld [vmem:[%s1 + $0x2c0] sm:$0xff]
      %v659 = vld [vmem:[%s1 + $0x2c8] sm:$0xff]
      %v660 = vld [vmem:[%s1 + $0x2d0] sm:$0xff]
      %v661 = vld [vmem:[%s1 + $0x2d8] sm:$0xff]
      %v662 = vld [vmem:[%s1 + $0x2e0] sm:$0xff]
      %v663 = vld [vmem:[%s1 + $0x2e8] sm:$0xff]
      %v664 = vld [vmem:[%s1 + $0x2f0] sm:$0xff]
      %v665 = vld [vmem:[%s1 + $0x2f8] sm:$0xff]
      %v666 = vld [vmem:[%s1 + $0x300] sm:$0xff]
      %v667 = vld [vmem:[%s1 + $0x308] sm:$0xff]
      %v668 = vld [vmem:[%s1 + $0x310] sm:$0xff]
      %v669 = vld [vmem:[%s1 + $0x318] sm:$0xff]
      %v670 = vld [vmem:[%s1 + $0x320] sm:$0xff]
      %v671 = vld [vmem:[%s1 + $0x328] sm:$0xff]
      %v672 = vld [vmem:[%s1 + $0x330] sm:$0xff]
      %v673 = vld [vmem:[%s1 + $0x338] sm:$0xff]
      %v674 = vld [vmem:[%s1 + $0x340] sm:$0xff]
      %v675 = vld [vmem:[%s1 + $0x348] sm:$0xff]
      %v676 = vld [vmem:[%s1 + $0x350] sm:$0xff]
      %v677 = vld [vmem:[%s1 + $0x358] sm:$0xff]
      %v678 = vld [vmem:[%s1 + $0x360] sm:$0xff]
      %v679 = vld [vmem:[%s1 + $0x368] sm:$0xff]
      %v680 = vld [vmem:[%s1 + $0x370] sm:$0xff]
      %v681 = vld [vmem:[%s1 + $0x378] sm:$0xff]
      %v682 = vld [vmem:[%s1 + $0x380] sm:$0xff]
      %v683 = vld [vmem:[%s1 + $0x388] sm:$0xff]
      %v684 = vld [vmem:[%s1 + $0x390] sm:$0xff]
      %v685 = vld [vmem:[%s1 + $0x398] sm:$0xff]
      %v686 = vld [vmem:[%s1 + $0x3a0] sm:$0xff]
      %v687 = vld [vmem:[%s1 + $0x3a8] sm:$0xff]
      %v688 = vld [vmem:[%s1 + $0x3b0] sm:$0xff]
      %v689 = vld [vmem:[%s1 + $0x3b8] sm:$0xff]
      %v690 = vld [vmem:[%s1 + $0x3c0] sm:$0xff]
      %v691 = vld [vmem:[%s1 + $0x3c8] sm:$0xff]
      %v692 = vld [vmem:[%s1 + $0x3d0] sm:$0xff]
      %v693 = vld [vmem:[%s1 + $0x3d8] sm:$0xff]
      %v694 = vld [vmem:[%s1 + $0x3e0] sm:$0xff]
      %v695 = vld [vmem:[%s1 + $0x3e8] sm:$0xff]
      %v696 = vld [vmem:[%s1 + $0x3f0] sm:$0xff]
      %v697 = vld [vmem:[%s1 + $0x3f8] sm:$0xff]
      %v698 = vld [vmem:[%s1 + $0x400] sm:$0xff]
      %v699 = vld [vmem:[%s1 + $0x408] sm:$0xff]
      %v700 = vld [vmem:[%s1 + $0x410] sm:$0xff]
      %v701 = vld [vmem:[%s1 + $0x418] sm:$0xff]
      %v702 = vld [vmem:[%s1 + $0x420] sm:$0xff]
      %v703 = vld [vmem:[%s1 + $0x428] sm:$0xff]
      %v704 = vld [vmem:[%s1 + $0x430] sm:$0xff]
      %v705 = vld [vmem:[%s1 + $0x438] sm:$0xff]
      %v706 = vld [vmem:[%s1 + $0x440] sm:$0xff]
      %v707 = vld [vmem:[%s1 + $0x448] sm:$0xff]
      %v708 = vld [vmem:[%s1 + $0x450] sm:$0xff]
      %v709 = vld [vmem:[%s1 + $0x458] sm:$0xff]
      %v710 = vld [vmem:[%s1 + $0x460] sm:$0xff]
      %v711 = vld [vmem:[%s1 + $0x468] sm:$0xff]
      %v712 = vld [vmem:[%s1 + $0x470] sm:$0xff]
      %v713 = vld [vmem:[%s1 + $0x478] sm:$0xff]
      %v714 = vld [vmem:[%s1 + $0x480] sm:$0xff]
      %v715 = vld [vmem:[%s1 + $0x488] sm:$0xff]
      %v716 = vld [vmem:[%s1 + $0x490] sm:$0xff]
      %v717 = vld [vmem:[%s1 + $0x498] sm:$0xff]
      %v718 = vld [vmem:[%s1 + $0x4a0] sm:$0xff]
      %v719 = vld [vmem:[%s1 + $0x4a8] sm:$0xff]
      %v720 = vld [vmem:[%s1 + $0x4b0] sm:$0xff]
      %v721 = vld [vmem:[%s1 + $0x4b8] sm:$0xff]
      %v722 = vld [vmem:[%s1 + $0x4c0] sm:$0xff]
      %v723 = vld [vmem:[%s1 + $0x4c8] sm:$0xff]
      %v724 = vld [vmem:[%s1 + $0x4d0] sm:$0xff]
      %v725 = vld [vmem:[%s1 + $0x4d8] sm:$0xff]
      %v726 = vld [vmem:[%s1 + $0x4e0] sm:$0xff]
      %v727 = vld [vmem:[%s1 + $0x4e8] sm:$0xff]
      %v728 = vld [vmem:[%s1 + $0x4f0] sm:$0xff]
      %v729 = vld [vmem:[%s1 + $0x4f8] sm:$0xff]
      %v730 = vld [vmem:[%s1 + $0x500] sm:$0xff]
      %v731 = vld [vmem:[%s1 + $0x508] sm:$0xff]
      %v732 = vld [vmem:[%s1 + $0x510] sm:$0xff]
      %v733 = vld [vmem:[%s1 + $0x518] sm:$0xff]
      %v734 = vld [vmem:[%s1 + $0x520] sm:$0xff]
      %v735 = vld [vmem:[%s1 + $0x528] sm:$0xff]
      %v736 = vld [vmem:[%s1 + $0x530] sm:$0xff]
      %v737 = vld [vmem:[%s1 + $0x538] sm:$0xff]
      %v738 = vld [vmem:[%s1 + $0x540] sm:$0xff]
      %v739 = vld [vmem:[%s1 + $0x548] sm:$0xff]
      %v740 = vld [vmem:[%s1 + $0x550] sm:$0xff]
      %v741 = vld [vmem:[%s1 + $0x558] sm:$0xff]
      %v742 = vld [vmem:[%s1 + $0x560] sm:$0xff]
      %v743 = vld [vmem:[%s1 + $0x568] sm:$0xff]
      %v744 = vld [vmem:[%s1 + $0x570] sm:$0xff]
      %v745 = vld [vmem:[%s1 + $0x578] sm:$0xff]
      %v746 = vld [vmem:[%s1 + $0x580] sm:$0xff]
      %v747 = vld [vmem:[%s1 + $0x588] sm:$0xff]
      %v748 = vld [vmem:[%s1 + $0x590] sm:$0xff]
      %v749 = vld [vmem:[%s1 + $0x598] sm:$0xff]
      %v750 = vld [vmem:[%s1 + $0x5a0] sm:$0xff]
      %v751 = vld [vmem:[%s1 + $0x5a8] sm:$0xff]
      %v752 = vld [vmem:[%s1 + $0x5b0] sm:$0xff]
      %v753 = vld [vmem:[%s1 + $0x5b8] sm:$0xff]
      %v754 = vld [vmem:[%s1 + $0x5c0] sm:$0xff]
      %v755 = vld [vmem:[%s1 + $0x5c8] sm:$0xff]
      %v756 = vld [vmem:[%s1 + $0x5d0] sm:$0xff]
      %v757 = vld [vmem:[%s1 + $0x5d8] sm:$0xff]
      %v758 = vld [vmem:[%s1 + $0x5e0] sm:$0xff]
      %v759 = vld [vmem:[%s1 + $0x5e8] sm:$0xff]
      %v760 = vld [vmem:[%s1 + $0x5f0] sm:$0xff]
      %v761 = vld [vmem:[%s1 + $0x5f8] sm:$0xff]
      %v762 = vld [vmem:[%s1 + $0x600] sm:$0xff]
      %v763 = vld [vmem:[%s1 + $0x608] sm:$0xff]
      %v764 = vld [vmem:[%s1 + $0x610] sm:$0xff]
      %v765 = vld [vmem:[%s1 + $0x618] sm:$0xff]
      %v766 = vld [vmem:[%s1 + $0x620] sm:$0xff]
      %v767 = vld [vmem:[%s1 + $0x628] sm:$0xff]
      %v768 = vld [vmem:[%s1 + $0x630] sm:$0xff]
      %v769 = vld [vmem:[%s1 + $0x638] sm:$0xff]
      %v770 = vld [vmem:[%s1 + $0x640] sm:$0xff]
      %v771 = vld [vmem:[%s1 + $0x648] sm:$0xff]
      %v772 = vld [vmem:[%s1 + $0x650] sm:$0xff]
      %v773 = vld [vmem:[%s1 + $0x658] sm:$0xff]
      %v774 = vld [vmem:[%s1 + $0x660] sm:$0xff]
      %v775 = vld [vmem:[%s1 + $0x668] sm:$0xff]
      %v776 = vld [vmem:[%s1 + $0x670] sm:$0xff]
      %v777 = vld [vmem:[%s1 + $0x678] sm:$0xff]
      %v778 = vld [vmem:[%s1 + $0x680] sm:$0xff]
      %v779 = vld [vmem:[%s1 + $0x688] sm:$0xff]
      %v780 = vld [vmem:[%s1 + $0x690] sm:$0x11]
      %v781 = vld [vmem:[%s2] sm:$0x3]
      %v783 = vlaneseq
      %v784 = vshrl.u32 %v783, 7
      %v785 = vsub.s32 0, %v784
      %v786 = vrot.slane %v781, %v785
      %v787 = vlaneseq
      %v788 = vshrl.u32 %v787, 7
      %v789 = vsub.s32 1, %v788
      %v790 = vrot.slane %v781, %v789
      %v1004 = vunpack.c.l.b16 %v570
      %v1005 = vunpack.c.h.b16 %v570
      %v1006 = vunpack.c.l.b16 %v571
      %v1007 = vunpack.c.h.b16 %v571
      %v1008 = vunpack.c.l.b16 %v572
      %v1009 = vunpack.c.h.b16 %v572
      %v1010 = vunpack.c.l.b16 %v573
      %v1011 = vunpack.c.h.b16 %v573
      %v1012 = vunpack.c.l.b16 %v574
      %v1013 = vunpack.c.h.b16 %v574
      %v1014 = vunpack.c.l.b16 %v575
      %v1015 = vunpack.c.h.b16 %v575
      %v1016 = vunpack.c.l.b16 %v576
      %v1017 = vunpack.c.h.b16 %v576
      %v1018 = vunpack.c.l.b16 %v577
      %v1019 = vunpack.c.h.b16 %v577
      %v1020 = vunpack.c.l.b16 %v578
      %v1021 = vunpack.c.h.b16 %v578
      %v1022 = vunpack.c.l.b16 %v579
      %v1023 = vunpack.c.h.b16 %v579
      %v1024 = vunpack.c.l.b16 %v580
      %v1025 = vunpack.c.h.b16 %v580
      %v1026 = vunpack.c.l.b16 %v581
      %v1027 = vunpack.c.h.b16 %v581
      %v1028 = vunpack.c.l.b16 %v582
      %v1029 = vunpack.c.h.b16 %v582
      %v1030 = vunpack.c.l.b16 %v583
      %v1031 = vunpack.c.h.b16 %v583
      %v1032 = vunpack.c.l.b16 %v584
      %v1033 = vunpack.c.h.b16 %v584
      %v1034 = vunpack.c.l.b16 %v585
      %v1035 = vunpack.c.h.b16 %v585
      %v1036 = vunpack.c.l.b16 %v586
      %v1037 = vunpack.c.h.b16 %v586
      %v1038 = vunpack.c.l.b16 %v587
      %v1039 = vunpack.c.h.b16 %v587
      %v1040 = vunpack.c.l.b16 %v588
      %v1041 = vunpack.c.h.b16 %v588
      %v1042 = vunpack.c.l.b16 %v589
      %v1043 = vunpack.c.h.b16 %v589
      %v1044 = vunpack.c.l.b16 %v590
      %v1045 = vunpack.c.h.b16 %v590
      %v1046 = vunpack.c.l.b16 %v591
      %v1047 = vunpack.c.h.b16 %v591
      %v1048 = vunpack.c.l.b16 %v592
      %v1049 = vunpack.c.h.b16 %v592
      %v1050 = vunpack.c.l.b16 %v593
      %v1051 = vunpack.c.h.b16 %v593
      %v1052 = vunpack.c.l.b16 %v594
      %v1053 = vunpack.c.h.b16 %v594
      %v1054 = vunpack.c.l.b16 %v595
      %v1055 = vunpack.c.h.b16 %v595
      %v1056 = vunpack.c.l.b16 %v596
      %v1057 = vunpack.c.h.b16 %v596
      %v1058 = vunpack.c.l.b16 %v597
      %v1059 = vunpack.c.h.b16 %v597
      %v1060 = vunpack.c.l.b16 %v598
      %v1061 = vunpack.c.h.b16 %v598
      %v1062 = vunpack.c.l.b16 %v599
      %v1063 = vunpack.c.h.b16 %v599
      %v1064 = vunpack.c.l.b16 %v600
      %v1065 = vunpack.c.h.b16 %v600
      %v1066 = vunpack.c.l.b16 %v601
      %v1067 = vunpack.c.h.b16 %v601
      %v1068 = vunpack.c.l.b16 %v602
      %v1069 = vunpack.c.h.b16 %v602
      %v1070 = vunpack.c.l.b16 %v603
      %v1071 = vunpack.c.h.b16 %v603
      %v1072 = vunpack.c.l.b16 %v604
      %v1073 = vunpack.c.h.b16 %v604
      %v1074 = vunpack.c.l.b16 %v605
      %v1075 = vunpack.c.h.b16 %v605
      %v1076 = vunpack.c.l.b16 %v606
      %v1077 = vunpack.c.h.b16 %v606
      %v1078 = vunpack.c.l.b16 %v607
      %v1079 = vunpack.c.h.b16 %v607
      %v1080 = vunpack.c.l.b16 %v608
      %v1081 = vunpack.c.h.b16 %v608
      %v1082 = vunpack.c.l.b16 %v609
      %v1083 = vunpack.c.h.b16 %v609
      %v1084 = vunpack.c.l.b16 %v610
      %v1085 = vunpack.c.h.b16 %v610
      %v1086 = vunpack.c.l.b16 %v611
      %v1087 = vunpack.c.h.b16 %v611
      %v1088 = vunpack.c.l.b16 %v612
      %v1089 = vunpack.c.h.b16 %v612
      %v1090 = vunpack.c.l.b16 %v613
      %v1091 = vunpack.c.h.b16 %v613
      %v1092 = vunpack.c.l.b16 %v614
      %v1093 = vunpack.c.h.b16 %v614
      %v1094 = vunpack.c.l.b16 %v615
      %v1095 = vunpack.c.h.b16 %v615
      %v1096 = vunpack.c.l.b16 %v616
      %v1097 = vunpack.c.h.b16 %v616
      %v1098 = vunpack.c.l.b16 %v617
      %v1099 = vunpack.c.h.b16 %v617
      %v1100 = vunpack.c.l.b16 %v618
      %v1101 = vunpack.c.h.b16 %v618
      %v1102 = vunpack.c.l.b16 %v619
      %v1103 = vunpack.c.h.b16 %v619
      %v1104 = vunpack.c.l.b16 %v620
      %v1105 = vunpack.c.h.b16 %v620
      %v1106 = vunpack.c.l.b16 %v621
      %v1107 = vunpack.c.h.b16 %v621
      %v1108 = vunpack.c.l.b16 %v622
      %v1109 = vunpack.c.h.b16 %v622
      %v1110 = vunpack.c.l.b16 %v623
      %v1111 = vunpack.c.h.b16 %v623
      %v1112 = vunpack.c.l.b16 %v624
      %v1113 = vunpack.c.h.b16 %v624
      %v1114 = vunpack.c.l.b16 %v625
      %v1115 = vunpack.c.h.b16 %v625
      %v1116 = vunpack.c.l.b16 %v626
      %v1117 = vunpack.c.h.b16 %v626
      %v1118 = vunpack.c.l.b16 %v627
      %v1119 = vunpack.c.h.b16 %v627
      %v1120 = vunpack.c.l.b16 %v628
      %v1121 = vunpack.c.h.b16 %v628
      %v1122 = vunpack.c.l.b16 %v629
      %v1123 = vunpack.c.h.b16 %v629
      %v1124 = vunpack.c.l.b16 %v630
      %v1125 = vunpack.c.h.b16 %v630
      %v1126 = vunpack.c.l.b16 %v631
      %v1127 = vunpack.c.h.b16 %v631
      %v1128 = vunpack.c.l.b16 %v632
      %v1129 = vunpack.c.h.b16 %v632
      %v1130 = vunpack.c.l.b16 %v633
      %v1131 = vunpack.c.h.b16 %v633
      %v1132 = vunpack.c.l.b16 %v634
      %v1133 = vunpack.c.h.b16 %v634
      %v1134 = vunpack.c.l.b16 %v635
      %v1135 = vunpack.c.h.b16 %v635
      %v1136 = vunpack.c.l.b16 %v636
      %v1137 = vunpack.c.h.b16 %v636
      %v1138 = vunpack.c.l.b16 %v637
      %v1139 = vunpack.c.h.b16 %v637
      %v1140 = vunpack.c.l.b16 %v638
      %v1141 = vunpack.c.h.b16 %v638
      %v1142 = vunpack.c.l.b16 %v639
      %v1143 = vunpack.c.h.b16 %v639
      %v1144 = vunpack.c.l.b16 %v640
      %v1145 = vunpack.c.h.b16 %v640
      %v1146 = vunpack.c.l.b16 %v641
      %v1147 = vunpack.c.h.b16 %v641
      %v1148 = vunpack.c.l.b16 %v642
      %v1149 = vunpack.c.h.b16 %v642
      %v1150 = vunpack.c.l.b16 %v643
      %v1151 = vunpack.c.h.b16 %v643
      %v1152 = vunpack.c.l.b16 %v644
      %v1153 = vunpack.c.h.b16 %v644
      %v1154 = vunpack.c.l.b16 %v645
      %v1155 = vunpack.c.h.b16 %v645
      %v1156 = vunpack.c.l.b16 %v646
      %v1157 = vunpack.c.h.b16 %v646
      %v1158 = vunpack.c.l.b16 %v647
      %v1159 = vunpack.c.h.b16 %v647
      %v1160 = vunpack.c.l.b16 %v648
      %v1161 = vunpack.c.h.b16 %v648
      %v1162 = vunpack.c.l.b16 %v649
      %v1163 = vunpack.c.h.b16 %v649
      %v1164 = vunpack.c.l.b16 %v650
      %v1165 = vunpack.c.h.b16 %v650
      %v1166 = vunpack.c.l.b16 %v651
      %v1167 = vunpack.c.h.b16 %v651
      %v1168 = vunpack.c.l.b16 %v652
      %v1169 = vunpack.c.h.b16 %v652
      %v1170 = vunpack.c.l.b16 %v653
      %v1171 = vunpack.c.h.b16 %v653
      %v1172 = vunpack.c.l.b16 %v654
      %v1173 = vunpack.c.h.b16 %v654
      %v1174 = vunpack.c.l.b16 %v655
      %v1175 = vunpack.c.h.b16 %v655
      %v1176 = vunpack.c.l.b16 %v656
      %v1177 = vunpack.c.h.b16 %v656
      %v1178 = vunpack.c.l.b16 %v657
      %v1179 = vunpack.c.h.b16 %v657
      %v1180 = vunpack.c.l.b16 %v658
      %v1181 = vunpack.c.h.b16 %v658
      %v1182 = vunpack.c.l.b16 %v659
      %v1183 = vunpack.c.h.b16 %v659
      %v1184 = vunpack.c.l.b16 %v660
      %v1185 = vunpack.c.h.b16 %v660
      %v1186 = vunpack.c.l.b16 %v661
      %v1187 = vunpack.c.h.b16 %v661
      %v1188 = vunpack.c.l.b16 %v662
      %v1189 = vunpack.c.h.b16 %v662
      %v1190 = vunpack.c.l.b16 %v663
      %v1191 = vunpack.c.h.b16 %v663
      %v1192 = vunpack.c.l.b16 %v664
      %v1193 = vunpack.c.h.b16 %v664
      %v1194 = vunpack.c.l.b16 %v665
      %v1195 = vunpack.c.h.b16 %v665
      %v1196 = vunpack.c.l.b16 %v666
      %v1197 = vunpack.c.h.b16 %v666
      %v1198 = vunpack.c.l.b16 %v667
      %v1199 = vunpack.c.h.b16 %v667
      %v1200 = vunpack.c.l.b16 %v668
      %v1201 = vunpack.c.h.b16 %v668
      %v1202 = vunpack.c.l.b16 %v669
      %v1203 = vunpack.c.h.b16 %v669
      %v1204 = vunpack.c.l.b16 %v670
      %v1205 = vunpack.c.h.b16 %v670
      %v1206 = vunpack.c.l.b16 %v671
      %v1207 = vunpack.c.h.b16 %v671
      %v1208 = vunpack.c.l.b16 %v672
      %v1209 = vunpack.c.h.b16 %v672
      %v1210 = vunpack.c.l.b16 %v673
      %v1211 = vunpack.c.h.b16 %v673
      %v1212 = vunpack.c.l.b16 %v674
      %v1213 = vunpack.c.h.b16 %v674
      %v1214 = vunpack.c.l.b16 %v675
      %v1215 = vunpack.c.h.b16 %v675
      %v1216 = vunpack.c.l.b16 %v676
      %v1217 = vunpack.c.h.b16 %v676
      %v1218 = vunpack.c.l.b16 %v677
      %v1219 = vunpack.c.h.b16 %v677
      %v1220 = vunpack.c.l.b16 %v678
      %v1221 = vunpack.c.h.b16 %v678
      %v1222 = vunpack.c.l.b16 %v679
      %v1223 = vunpack.c.h.b16 %v679
      %v1224 = vunpack.c.l.b16 %v680
      %v1225 = vunpack.c.h.b16 %v680
      %v1226 = vunpack.c.l.b16 %v681
      %v1227 = vunpack.c.h.b16 %v681
      %v1228 = vunpack.c.l.b16 %v682
      %v1229 = vunpack.c.h.b16 %v682
      %v1230 = vunpack.c.l.b16 %v683
      %v1231 = vunpack.c.h.b16 %v683
      %v1232 = vunpack.c.l.b16 %v684
      %v1233 = vunpack.c.h.b16 %v684
      %v1234 = vunpack.c.l.b16 %v685
      %v1235 = vunpack.c.h.b16 %v685
      %v1236 = vunpack.c.l.b16 %v686
      %v1237 = vunpack.c.h.b16 %v686
      %v1238 = vunpack.c.l.b16 %v687
      %v1239 = vunpack.c.h.b16 %v687
      %v1240 = vunpack.c.l.b16 %v688
      %v1241 = vunpack.c.h.b16 %v688
      %v1242 = vunpack.c.l.b16 %v689
      %v1243 = vunpack.c.h.b16 %v689
      %v1244 = vunpack.c.l.b16 %v690
      %v1245 = vunpack.c.h.b16 %v690
      %v1246 = vunpack.c.l.b16 %v691
      %v1247 = vunpack.c.h.b16 %v691
      %v1248 = vunpack.c.l.b16 %v692
      %v1249 = vunpack.c.h.b16 %v692
      %v1250 = vunpack.c.l.b16 %v693
      %v1251 = vunpack.c.h.b16 %v693
      %v1252 = vunpack.c.l.b16 %v694
      %v1253 = vunpack.c.h.b16 %v694
      %v1254 = vunpack.c.l.b16 %v695
      %v1255 = vunpack.c.h.b16 %v695
      %v1256 = vunpack.c.l.b16 %v696
      %v1257 = vunpack.c.h.b16 %v696
      %v1258 = vunpack.c.l.b16 %v697
      %v1259 = vunpack.c.h.b16 %v697
      %v1260 = vunpack.c.l.b16 %v698
      %v1261 = vunpack.c.h.b16 %v698
      %v1262 = vunpack.c.l.b16 %v699
      %v1263 = vunpack.c.h.b16 %v699
      %v1264 = vunpack.c.l.b16 %v700
      %v1265 = vunpack.c.h.b16 %v700
      %v1266 = vunpack.c.l.b16 %v701
      %v1267 = vunpack.c.h.b16 %v701
      %v1268 = vunpack.c.l.b16 %v702
      %v1269 = vunpack.c.h.b16 %v702
      %v1270 = vunpack.c.l.b16 %v703
      %v1271 = vunpack.c.h.b16 %v703
      %v1272 = vunpack.c.l.b16 %v704
      %v1273 = vunpack.c.h.b16 %v704
      %v1274 = vunpack.c.l.b16 %v705
      %v1275 = vunpack.c.h.b16 %v705
      %v1276 = vunpack.c.l.b16 %v706
      %v1277 = vunpack.c.h.b16 %v706
      %v1278 = vunpack.c.l.b16 %v707
      %v1279 = vunpack.c.h.b16 %v707
      %v1280 = vunpack.c.l.b16 %v708
      %v1281 = vunpack.c.h.b16 %v708
      %v1282 = vunpack.c.l.b16 %v709
      %v1283 = vunpack.c.h.b16 %v709
      %v1284 = vunpack.c.l.b16 %v710
      %v1285 = vunpack.c.h.b16 %v710
      %v1286 = vunpack.c.l.b16 %v711
      %v1287 = vunpack.c.h.b16 %v711
      %v1288 = vunpack.c.l.b16 %v712
      %v1289 = vunpack.c.h.b16 %v712
      %v1290 = vunpack.c.l.b16 %v713
      %v1291 = vunpack.c.h.b16 %v713
      %v1292 = vunpack.c.l.b16 %v714
      %v1293 = vunpack.c.h.b16 %v714
      %v1294 = vunpack.c.l.b16 %v715
      %v1295 = vunpack.c.h.b16 %v715
      %v1296 = vunpack.c.l.b16 %v716
      %v1297 = vunpack.c.h.b16 %v716
      %v1298 = vunpack.c.l.b16 %v717
      %v1299 = vunpack.c.h.b16 %v717
      %v1300 = vunpack.c.l.b16 %v718
      %v1301 = vunpack.c.h.b16 %v718
      %v1302 = vunpack.c.l.b16 %v719
      %v1303 = vunpack.c.h.b16 %v719
      %v1304 = vunpack.c.l.b16 %v720
      %v1305 = vunpack.c.h.b16 %v720
      %v1306 = vunpack.c.l.b16 %v721
      %v1307 = vunpack.c.h.b16 %v721
      %v1308 = vunpack.c.l.b16 %v722
      %v1309 = vunpack.c.h.b16 %v722
      %v1310 = vunpack.c.l.b16 %v723
      %v1311 = vunpack.c.h.b16 %v723
      %v1312 = vunpack.c.l.b16 %v724
      %v1313 = vunpack.c.h.b16 %v724
      %v1314 = vunpack.c.l.b16 %v725
      %v1315 = vunpack.c.h.b16 %v725
      %v1316 = vunpack.c.l.b16 %v726
      %v1317 = vunpack.c.h.b16 %v726
      %v1318 = vunpack.c.l.b16 %v727
      %v1319 = vunpack.c.h.b16 %v727
      %v1320 = vunpack.c.l.b16 %v728
      %v1321 = vunpack.c.h.b16 %v728
      %v1322 = vunpack.c.l.b16 %v729
      %v1323 = vunpack.c.h.b16 %v729
      %v1324 = vunpack.c.l.b16 %v730
      %v1325 = vunpack.c.h.b16 %v730
      %v1326 = vunpack.c.l.b16 %v731
      %v1327 = vunpack.c.h.b16 %v731
      %v1328 = vunpack.c.l.b16 %v732
      %v1329 = vunpack.c.h.b16 %v732
      %v1330 = vunpack.c.l.b16 %v733
      %v1331 = vunpack.c.h.b16 %v733
      %v1332 = vunpack.c.l.b16 %v734
      %v1333 = vunpack.c.h.b16 %v734
      %v1334 = vunpack.c.l.b16 %v735
      %v1335 = vunpack.c.h.b16 %v735
      %v1336 = vunpack.c.l.b16 %v736
      %v1337 = vunpack.c.h.b16 %v736
      %v1338 = vunpack.c.l.b16 %v737
      %v1339 = vunpack.c.h.b16 %v737
      %v1340 = vunpack.c.l.b16 %v738
      %v1341 = vunpack.c.h.b16 %v738
      %v1342 = vunpack.c.l.b16 %v739
      %v1343 = vunpack.c.h.b16 %v739
      %v1344 = vunpack.c.l.b16 %v740
      %v1345 = vunpack.c.h.b16 %v740
      %v1346 = vunpack.c.l.b16 %v741
      %v1347 = vunpack.c.h.b16 %v741
      %v1348 = vunpack.c.l.b16 %v742
      %v1349 = vunpack.c.h.b16 %v742
      %v1350 = vunpack.c.l.b16 %v743
      %v1351 = vunpack.c.h.b16 %v743
      %v1352 = vunpack.c.l.b16 %v744
      %v1353 = vunpack.c.h.b16 %v744
      %v1354 = vunpack.c.l.b16 %v745
      %v1355 = vunpack.c.h.b16 %v745
      %v1356 = vunpack.c.l.b16 %v746
      %v1357 = vunpack.c.h.b16 %v746
      %v1358 = vunpack.c.l.b16 %v747
      %v1359 = vunpack.c.h.b16 %v747
      %v1360 = vunpack.c.l.b16 %v748
      %v1361 = vunpack.c.h.b16 %v748
      %v1362 = vunpack.c.l.b16 %v749
      %v1363 = vunpack.c.h.b16 %v749
      %v1364 = vunpack.c.l.b16 %v750
      %v1365 = vunpack.c.h.b16 %v750
      %v1366 = vunpack.c.l.b16 %v751
      %v1367 = vunpack.c.h.b16 %v751
      %v1368 = vunpack.c.l.b16 %v752
      %v1369 = vunpack.c.h.b16 %v752
      %v1370 = vunpack.c.l.b16 %v753
      %v1371 = vunpack.c.h.b16 %v753
      %v1372 = vunpack.c.l.b16 %v754
      %v1373 = vunpack.c.h.b16 %v754
      %v1374 = vunpack.c.l.b16 %v755
      %v1375 = vunpack.c.h.b16 %v755
      %v1376 = vunpack.c.l.b16 %v756
      %v1377 = vunpack.c.h.b16 %v756
      %v1378 = vunpack.c.l.b16 %v757
      %v1379 = vunpack.c.h.b16 %v757
      %v1380 = vunpack.c.l.b16 %v758
      %v1381 = vunpack.c.h.b16 %v758
      %v1382 = vunpack.c.l.b16 %v759
      %v1383 = vunpack.c.h.b16 %v759
      %v1384 = vunpack.c.l.b16 %v760
      %v1385 = vunpack.c.h.b16 %v760
      %v1386 = vunpack.c.l.b16 %v761
      %v1387 = vunpack.c.h.b16 %v761
      %v1388 = vunpack.c.l.b16 %v762
      %v1389 = vunpack.c.h.b16 %v762
      %v1390 = vunpack.c.l.b16 %v763
      %v1391 = vunpack.c.h.b16 %v763
      %v1392 = vunpack.c.l.b16 %v764
      %v1393 = vunpack.c.h.b16 %v764
      %v1394 = vunpack.c.l.b16 %v765
      %v1395 = vunpack.c.h.b16 %v765
      %v1396 = vunpack.c.l.b16 %v766
      %v1397 = vunpack.c.h.b16 %v766
      %v1398 = vunpack.c.l.b16 %v767
      %v1399 = vunpack.c.h.b16 %v767
      %v1400 = vunpack.c.l.b16 %v768
      %v1401 = vunpack.c.h.b16 %v768
      %v1402 = vunpack.c.l.b16 %v769
      %v1403 = vunpack.c.h.b16 %v769
      %v1404 = vunpack.c.l.b16 %v770
      %v1405 = vunpack.c.h.b16 %v770
      %v1406 = vunpack.c.l.b16 %v771
      %v1407 = vunpack.c.h.b16 %v771
      %v1408 = vunpack.c.l.b16 %v772
      %v1409 = vunpack.c.h.b16 %v772
      %v1410 = vunpack.c.l.b16 %v773
      %v1411 = vunpack.c.h.b16 %v773
      %v1412 = vunpack.c.l.b16 %v774
      %v1413 = vunpack.c.h.b16 %v774
      %v1414 = vunpack.c.l.b16 %v775
      %v1415 = vunpack.c.h.b16 %v775
      %v1416 = vunpack.c.l.b16 %v776
      %v1417 = vunpack.c.h.b16 %v776
      %v1418 = vunpack.c.l.b16 %v777
      %v1419 = vunpack.c.h.b16 %v777
      %v1420 = vunpack.c.l.b16 %v778
      %v1421 = vunpack.c.h.b16 %v778
      %v1422 = vunpack.c.l.b16 %v779
      %v1423 = vunpack.c.h.b16 %v779
      %v1424 = vunpack.c.l.b16 %v780
      %v1425 = vunpack.c.h.b16 %v780
      %v1426 = vpack.c.b16 %v1006, %v1004
      %v1427 = vpack.c.b16 %v1007, %v1005
      %v1428 = vpack.c.b16 %v1010, %v1008
      %v1429 = vpack.c.b16 %v1011, %v1009
      %v1430 = vpack.c.b16 %v1014, %v1012
      %v1431 = vpack.c.b16 %v1015, %v1013
      %v1432 = vpack.c.b16 %v1018, %v1016
      %v1433 = vpack.c.b16 %v1019, %v1017
      %v1434 = vpack.c.b16 %v1022, %v1020
      %v1435 = vpack.c.b16 %v1023, %v1021
      %v1436 = vpack.c.b16 %v1026, %v1024
      %v1437 = vpack.c.b16 %v1027, %v1025
      %v1438 = vpack.c.b16 %v1030, %v1028
      %v1439 = vpack.c.b16 %v1031, %v1029
      %v1440 = vpack.c.b16 %v1034, %v1032
      %v1441 = vpack.c.b16 %v1035, %v1033
      %v1442 = vpack.c.b16 %v1038, %v1036
      %v1443 = vpack.c.b16 %v1039, %v1037
      %v1444 = vpack.c.b16 %v1042, %v1040
      %v1445 = vpack.c.b16 %v1043, %v1041
      %v1446 = vpack.c.b16 %v1046, %v1044
      %v1447 = vpack.c.b16 %v1047, %v1045
      %v1448 = vpack.c.b16 %v1050, %v1048
      %v1449 = vpack.c.b16 %v1051, %v1049
      %v1450 = vpack.c.b16 %v1054, %v1052
      %v1451 = vpack.c.b16 %v1055, %v1053
      %v1452 = vpack.c.b16 %v1058, %v1056
      %v1453 = vpack.c.b16 %v1059, %v1057
      %v1454 = vpack.c.b16 %v1062, %v1060
      %v1455 = vpack.c.b16 %v1063, %v1061
      %v1456 = vpack.c.b16 %v1066, %v1064
      %v1457 = vpack.c.b16 %v1067, %v1065
      %v1458 = vpack.c.b16 %v1070, %v1068
      %v1459 = vpack.c.b16 %v1071, %v1069
      %v1460 = vpack.c.b16 %v1074, %v1072
      %v1461 = vpack.c.b16 %v1075, %v1073
      %v1462 = vpack.c.b16 %v1078, %v1076
      %v1463 = vpack.c.b16 %v1079, %v1077
      %v1464 = vpack.c.b16 %v1082, %v1080
      %v1465 = vpack.c.b16 %v1083, %v1081
      %v1466 = vpack.c.b16 %v1086, %v1084
      %v1467 = vpack.c.b16 %v1087, %v1085
      %v1468 = vpack.c.b16 %v1090, %v1088
      %v1469 = vpack.c.b16 %v1091, %v1089
      %v1470 = vpack.c.b16 %v1094, %v1092
      %v1471 = vpack.c.b16 %v1095, %v1093
      %v1472 = vpack.c.b16 %v1098, %v1096
      %v1473 = vpack.c.b16 %v1099, %v1097
      %v1474 = vpack.c.b16 %v1102, %v1100
      %v1475 = vpack.c.b16 %v1103, %v1101
      %v1476 = vpack.c.b16 %v1106, %v1104
      %v1477 = vpack.c.b16 %v1107, %v1105
      %v1478 = vpack.c.b16 %v1110, %v1108
      %v1479 = vpack.c.b16 %v1111, %v1109
      %v1480 = vpack.c.b16 %v1114, %v1112
      %v1481 = vpack.c.b16 %v1115, %v1113
      %v1482 = vpack.c.b16 %v1118, %v1116
      %v1483 = vpack.c.b16 %v1119, %v1117
      %v1484 = vpack.c.b16 %v1122, %v1120
      %v1485 = vpack.c.b16 %v1123, %v1121
      %v1486 = vpack.c.b16 %v1126, %v1124
      %v1487 = vpack.c.b16 %v1127, %v1125
      %v1488 = vpack.c.b16 %v1130, %v1128
      %v1489 = vpack.c.b16 %v1131, %v1129
      %v1490 = vpack.c.b16 %v1134, %v1132
      %v1491 = vpack.c.b16 %v1135, %v1133
      %v1492 = vpack.c.b16 %v1138, %v1136
      %v1493 = vpack.c.b16 %v1139, %v1137
      %v1494 = vpack.c.b16 %v1142, %v1140
      %v1495 = vpack.c.b16 %v1143, %v1141
      %v1496 = vpack.c.b16 %v1146, %v1144
      %v1497 = vpack.c.b16 %v1147, %v1145
      %v1498 = vpack.c.b16 %v1150, %v1148
      %v1499 = vpack.c.b16 %v1151, %v1149
      %v1500 = vpack.c.b16 %v1154, %v1152
      %v1501 = vpack.c.b16 %v1155, %v1153
      %v1502 = vpack.c.b16 %v1158, %v1156
      %v1503 = vpack.c.b16 %v1159, %v1157
      %v1504 = vpack.c.b16 %v1162, %v1160
      %v1505 = vpack.c.b16 %v1163, %v1161
      %v1506 = vpack.c.b16 %v1166, %v1164
      %v1507 = vpack.c.b16 %v1167, %v1165
      %v1508 = vpack.c.b16 %v1170, %v1168
      %v1509 = vpack.c.b16 %v1171, %v1169
      %v1510 = vpack.c.b16 %v1174, %v1172
      %v1511 = vpack.c.b16 %v1175, %v1173
      %v1512 = vpack.c.b16 %v1178, %v1176
      %v1513 = vpack.c.b16 %v1179, %v1177
      %v1514 = vpack.c.b16 %v1182, %v1180
      %v1515 = vpack.c.b16 %v1183, %v1181
      %v1516 = vpack.c.b16 %v1186, %v1184
      %v1517 = vpack.c.b16 %v1187, %v1185
      %v1518 = vpack.c.b16 %v1190, %v1188
      %v1519 = vpack.c.b16 %v1191, %v1189
      %v1520 = vpack.c.b16 %v1194, %v1192
      %v1521 = vpack.c.b16 %v1195, %v1193
      %v1522 = vpack.c.b16 %v1198, %v1196
      %v1523 = vpack.c.b16 %v1199, %v1197
      %v1524 = vpack.c.b16 %v1202, %v1200
      %v1525 = vpack.c.b16 %v1203, %v1201
      %v1526 = vpack.c.b16 %v1206, %v1204
      %v1527 = vpack.c.b16 %v1207, %v1205
      %v1528 = vpack.c.b16 %v1210, %v1208
      %v1529 = vpack.c.b16 %v1211, %v1209
      %v1530 = vpack.c.b16 %v1214, %v1212
      %v1531 = vpack.c.b16 %v1215, %v1213
      %v1532 = vpack.c.b16 %v1218, %v1216
      %v1533 = vpack.c.b16 %v1219, %v1217
      %v1534 = vpack.c.b16 %v1222, %v1220
      %v1535 = vpack.c.b16 %v1223, %v1221
      %v1536 = vpack.c.b16 %v1226, %v1224
      %v1537 = vpack.c.b16 %v1227, %v1225
      %v1538 = vpack.c.b16 %v1230, %v1228
      %v1539 = vpack.c.b16 %v1231, %v1229
      %v1540 = vpack.c.b16 %v1234, %v1232
      %v1541 = vpack.c.b16 %v1235, %v1233
      %v1542 = vpack.c.b16 %v1238, %v1236
      %v1543 = vpack.c.b16 %v1239, %v1237
      %v1544 = vpack.c.b16 %v1242, %v1240
      %v1545 = vpack.c.b16 %v1243, %v1241
      %v1546 = vpack.c.b16 %v1246, %v1244
      %v1547 = vpack.c.b16 %v1247, %v1245
      %v1548 = vpack.c.b16 %v1250, %v1248
      %v1549 = vpack.c.b16 %v1251, %v1249
      %v1550 = vpack.c.b16 %v1254, %v1252
      %v1551 = vpack.c.b16 %v1255, %v1253
      %v1552 = vpack.c.b16 %v1258, %v1256
      %v1553 = vpack.c.b16 %v1259, %v1257
      %v1554 = vpack.c.b16 %v1262, %v1260
      %v1555 = vpack.c.b16 %v1263, %v1261
      %v1556 = vpack.c.b16 %v1266, %v1264
      %v1557 = vpack.c.b16 %v1267, %v1265
      %v1558 = vpack.c.b16 %v1270, %v1268
      %v1559 = vpack.c.b16 %v1271, %v1269
      %v1560 = vpack.c.b16 %v1274, %v1272
      %v1561 = vpack.c.b16 %v1275, %v1273
      %v1562 = vpack.c.b16 %v1278, %v1276
      %v1563 = vpack.c.b16 %v1279, %v1277
      %v1564 = vpack.c.b16 %v1282, %v1280
      %v1565 = vpack.c.b16 %v1283, %v1281
      %v1566 = vpack.c.b16 %v1286, %v1284
      %v1567 = vpack.c.b16 %v1287, %v1285
      %v1568 = vpack.c.b16 %v1290, %v1288
      %v1569 = vpack.c.b16 %v1291, %v1289
      %v1570 = vpack.c.b16 %v1294, %v1292
      %v1571 = vpack.c.b16 %v1295, %v1293
      %v1572 = vpack.c.b16 %v1298, %v1296
      %v1573 = vpack.c.b16 %v1299, %v1297
      %v1574 = vpack.c.b16 %v1302, %v1300
      %v1575 = vpack.c.b16 %v1303, %v1301
      %v1576 = vpack.c.b16 %v1306, %v1304
      %v1577 = vpack.c.b16 %v1307, %v1305
      %v1578 = vpack.c.b16 %v1310, %v1308
      %v1579 = vpack.c.b16 %v1311, %v1309
      %v1580 = vpack.c.b16 %v1314, %v1312
      %v1581 = vpack.c.b16 %v1315, %v1313
      %v1582 = vpack.c.b16 %v1318, %v1316
      %v1583 = vpack.c.b16 %v1319, %v1317
      %v1584 = vpack.c.b16 %v1322, %v1320
      %v1585 = vpack.c.b16 %v1323, %v1321
      %v1586 = vpack.c.b16 %v1326, %v1324
      %v1587 = vpack.c.b16 %v1327, %v1325
      %v1588 = vpack.c.b16 %v1330, %v1328
      %v1589 = vpack.c.b16 %v1331, %v1329
      %v1590 = vpack.c.b16 %v1334, %v1332
      %v1591 = vpack.c.b16 %v1335, %v1333
      %v1592 = vpack.c.b16 %v1338, %v1336
      %v1593 = vpack.c.b16 %v1339, %v1337
      %v1594 = vpack.c.b16 %v1342, %v1340
      %v1595 = vpack.c.b16 %v1343, %v1341
      %v1596 = vpack.c.b16 %v1346, %v1344
      %v1597 = vpack.c.b16 %v1347, %v1345
      %v1598 = vpack.c.b16 %v1350, %v1348
      %v1599 = vpack.c.b16 %v1351, %v1349
      %v1600 = vpack.c.b16 %v1354, %v1352
      %v1601 = vpack.c.b16 %v1355, %v1353
      %v1602 = vpack.c.b16 %v1358, %v1356
      %v1603 = vpack.c.b16 %v1359, %v1357
      %v1604 = vpack.c.b16 %v1362, %v1360
      %v1605 = vpack.c.b16 %v1363, %v1361
      %v1606 = vpack.c.b16 %v1366, %v1364
      %v1607 = vpack.c.b16 %v1367, %v1365
      %v1608 = vpack.c.b16 %v1370, %v1368
      %v1609 = vpack.c.b16 %v1371, %v1369
      %v1610 = vpack.c.b16 %v1374, %v1372
      %v1611 = vpack.c.b16 %v1375, %v1373
      %v1612 = vpack.c.b16 %v1378, %v1376
      %v1613 = vpack.c.b16 %v1379, %v1377
      %v1614 = vpack.c.b16 %v1382, %v1380
      %v1615 = vpack.c.b16 %v1383, %v1381
      %v1616 = vpack.c.b16 %v1386, %v1384
      %v1617 = vpack.c.b16 %v1387, %v1385
      %v1618 = vpack.c.b16 %v1390, %v1388
      %v1619 = vpack.c.b16 %v1391, %v1389
      %v1620 = vpack.c.b16 %v1394, %v1392
      %v1621 = vpack.c.b16 %v1395, %v1393
      %v1622 = vpack.c.b16 %v1398, %v1396
      %v1623 = vpack.c.b16 %v1399, %v1397
      %v1624 = vpack.c.b16 %v1402, %v1400
      %v1625 = vpack.c.b16 %v1403, %v1401
      %v1626 = vpack.c.b16 %v1406, %v1404
      %v1627 = vpack.c.b16 %v1407, %v1405
      %v1628 = vpack.c.b16 %v1410, %v1408
      %v1629 = vpack.c.b16 %v1411, %v1409
      %v1630 = vpack.c.b16 %v1414, %v1412
      %v1631 = vpack.c.b16 %v1415, %v1413
      %v1632 = vpack.c.b16 %v1418, %v1416
      %v1633 = vpack.c.b16 %v1419, %v1417
      %v1634 = vpack.c.b16 %v1422, %v1420
      %v1635 = vpack.c.b16 %v1423, %v1421
      %v1636 = vpack.c.b16 %v1424, %v1424
      %v1637 = vpack.c.b16 %v1425, %v1425
      %vm1848 = vcmask 146432
      %v1850 = vsel %vm1848, %v471, 0
      %v1853 = vsel %vm1848, %v485, 0
      %v1856 = vsel %vm1848, %v499, 0
      %v1859 = vsel %vm1848, %v513, 0
      %v1862 = vsel %vm1848, %v527, 0
      %v1865 = vsel %vm1848, %v541, 0
      %v1868 = vsel %vm1848, %v555, 0
      %v1871 = vsel %vm1848, %v569, 0
      %vm1873 = vcmask 1040384
      %v1875 = vsel %vm1873, %v1636, 0
      %v1878 = vsel %vm1873, %v1637, 0
      %1880 = vmatprep.subr.bf16.mxu0 %v1441
      %1881 = vmatpush1.bf16.msra.mxu0 %v1440
      %1882 = vmatprep.subr.bf16.mxu0 %v1439
      %1883 = vmatpush1.bf16.msra.mxu0 %v1438
      %1884 = vmatprep.subr.bf16.mxu0 %v1437
      %1885 = vmatpush1.bf16.msra.mxu0 %v1436
      %1886 = vmatprep.subr.bf16.mxu0 %v1435
      %1887 = vmatpush1.bf16.msra.mxu0 %v1434
      %1888 = vmatprep.subr.bf16.mxu0 %v1433
      %1889 = vmatpush1.bf16.msra.mxu0 %v1432
      %1890 = vmatprep.subr.bf16.mxu0 %v1431
      %1891 = vmatpush1.bf16.msra.mxu0 %v1430
      %1892 = vmatprep.subr.bf16.mxu0 %v1429
      %1893 = vmatpush1.bf16.msra.mxu0 %v1428
      %1894 = vmatprep.subr.bf16.mxu0 %v1427
      %1895 = vmatpush1.bf16.msra.mxu0 %v1426
      %1896 = vmatprep.subr.bf16.mxu0 %v1457
      %1897 = vmatpush2.bf16.msra.mxu0 %v1456
      %1898 = vmatprep.subr.bf16.mxu0 %v1455
      %1899 = vmatpush2.bf16.msra.mxu0 %v1454
      %1900 = vmatprep.subr.bf16.mxu0 %v1453
      %1901 = vmatpush2.bf16.msra.mxu0 %v1452
      %1902 = vmatprep.subr.bf16.mxu0 %v1451
      %1903 = vmatpush2.bf16.msra.mxu0 %v1450
      %1904 = vmatprep.subr.bf16.mxu0 %v1449
      %1905 = vmatpush2.bf16.msra.mxu0 %v1448
      %1906 = vmatprep.subr.bf16.mxu0 %v1447
      %1907 = vmatpush2.bf16.msra.mxu0 %v1446
      %1908 = vmatprep.subr.bf16.mxu0 %v1445
      %1909 = vmatpush2.bf16.msra.mxu0 %v1444
      %1910 = vmatprep.subr.bf16.mxu0 %v1443
      %1911 = vmatpush2.bf16.msra.mxu0 %v1442
      %1912 = vmatprep.mubr.bf16.mxu0 %v459
      %1913 = vmatmul.mubr.bf16.gmra.mxu0 %v458
      %v1914 = vpop.f32.mrf.mxu0
      %v1915 = vadd.f32 %v786, %v1914
      %v1916 = vpop.f32.mrf.mxu0
      %v1917 = vadd.f32 %v790, %v1916
      %v1918 = vpop.f32.mrf.mxu0
      %v1919 = vadd.f32 %v786, %v1918
      %v1920 = vpop.f32.mrf.mxu0
      %v1921 = vadd.f32 %v790, %v1920
      %1922 = vmatprep.mubr.bf16.mxu0 %v473
      %1923 = vmatmul.mubr.bf16.gmra.mxu0 %v472
      %v1924 = vpop.f32.mrf.mxu0
      %v1925 = vadd.f32 %v786, %v1924
      %v1926 = vpop.f32.mrf.mxu0
      %v1927 = vadd.f32 %v790, %v1926
      %v1928 = vpop.f32.mrf.mxu0
      %v1929 = vadd.f32 %v786, %v1928
      %v1930 = vpop.f32.mrf.mxu0
      %v1931 = vadd.f32 %v790, %v1930
      %1932 = vmatprep.mubr.bf16.mxu0 %v487
      %1933 = vmatmul.mubr.bf16.gmra.mxu0 %v486
      %v1934 = vpop.f32.mrf.mxu0
      %v1935 = vadd.f32 %v786, %v1934
      %v1936 = vpop.f32.mrf.mxu0
      %v1937 = vadd.f32 %v790, %v1936
      %v1938 = vpop.f32.mrf.mxu0
      %v1939 = vadd.f32 %v786, %v1938
      %v1940 = vpop.f32.mrf.mxu0
      %v1941 = vadd.f32 %v790, %v1940
      %1942 = vmatprep.mubr.bf16.mxu0 %v501
      %1943 = vmatmul.mubr.bf16.gmra.mxu0 %v500
      %v1944 = vpop.f32.mrf.mxu0
      %v1945 = vadd.f32 %v786, %v1944
      %v1946 = vpop.f32.mrf.mxu0
      %v1947 = vadd.f32 %v790, %v1946
      %v1948 = vpop.f32.mrf.mxu0
      %v1949 = vadd.f32 %v786, %v1948
      %v1950 = vpop.f32.mrf.mxu0
      %v1951 = vadd.f32 %v790, %v1950
      %1952 = vmatprep.mubr.bf16.mxu0 %v515
      %1953 = vmatmul.mubr.bf16.gmra.mxu0 %v514
      %v1954 = vpop.f32.mrf.mxu0
      %v1955 = vadd.f32 %v786, %v1954
      %v1956 = vpop.f32.mrf.mxu0
      %v1957 = vadd.f32 %v790, %v1956
      %v1958 = vpop.f32.mrf.mxu0
      %v1959 = vadd.f32 %v786, %v1958
      %v1960 = vpop.f32.mrf.mxu0
      %v1961 = vadd.f32 %v790, %v1960
      %1962 = vmatprep.mubr.bf16.mxu0 %v529
      %1963 = vmatmul.mubr.bf16.gmra.mxu0 %v528
      %v1964 = vpop.f32.mrf.mxu0
      %v1965 = vadd.f32 %v786, %v1964
      %v1966 = vpop.f32.mrf.mxu0
      %v1967 = vadd.f32 %v790, %v1966
      %v1968 = vpop.f32.mrf.mxu0
      %v1969 = vadd.f32 %v786, %v1968
      %v1970 = vpop.f32.mrf.mxu0
      %v1971 = vadd.f32 %v790, %v1970
      %1972 = vmatprep.mubr.bf16.mxu0 %v543
      %1973 = vmatmul.mubr.bf16.gmra.mxu0 %v542
      %v1974 = vpop.f32.mrf.mxu0
      %v1975 = vadd.f32 %v786, %v1974
      %v1976 = vpop.f32.mrf.mxu0
      %v1977 = vadd.f32 %v790, %v1976
      %v1978 = vpop.f32.mrf.mxu0
      %v1979 = vadd.f32 %v786, %v1978
      %v1980 = vpop.f32.mrf.mxu0
      %v1981 = vadd.f32 %v790, %v1980
      %1982 = vmatprep.mubr.bf16.mxu0 %v557
      %1983 = vmatmul.mubr.bf16.gmra.mxu0 %v556
      %v1984 = vpop.f32.mrf.mxu0
      %v1985 = vadd.f32 %v786, %v1984
      %v1986 = vpop.f32.mrf.mxu0
      %v1987 = vadd.f32 %v790, %v1986
      %v1988 = vpop.f32.mrf.mxu0
      %v1989 = vadd.f32 %v786, %v1988
      %v1990 = vpop.f32.mrf.mxu0
      %v1991 = vadd.f32 %v790, %v1990
      %1992 = vdwg.mxu0
      %1993 = vmatprep.subr.bf16.mxu0 %v1473
      %1994 = vmatpush1.bf16.msra.mxu0 %v1472
      %1995 = vmatprep.subr.bf16.mxu0 %v1471
      %1996 = vmatpush1.bf16.msra.mxu0 %v1470
      %1997 = vmatprep.subr.bf16.mxu0 %v1469
      %1998 = vmatpush1.bf16.msra.mxu0 %v1468
      %1999 = vmatprep.subr.bf16.mxu0 %v1467
      %2000 = vmatpush1.bf16.msra.mxu0 %v1466
      %2001 = vmatprep.subr.bf16.mxu0 %v1465
      %2002 = vmatpush1.bf16.msra.mxu0 %v1464
      %2003 = vmatprep.subr.bf16.mxu0 %v1463
      %2004 = vmatpush1.bf16.msra.mxu0 %v1462
      %2005 = vmatprep.subr.bf16.mxu0 %v1461
      %2006 = vmatpush1.bf16.msra.mxu0 %v1460
      %2007 = vmatprep.subr.bf16.mxu0 %v1459
      %2008 = vmatpush1.bf16.msra.mxu0 %v1458
      %2009 = vmatprep.subr.bf16.mxu0 %v1489
      %2010 = vmatpush2.bf16.msra.mxu0 %v1488
      %2011 = vmatprep.subr.bf16.mxu0 %v1487
      %2012 = vmatpush2.bf16.msra.mxu0 %v1486
      %2013 = vmatprep.subr.bf16.mxu0 %v1485
      %2014 = vmatpush2.bf16.msra.mxu0 %v1484
      %2015 = vmatprep.subr.bf16.mxu0 %v1483
      %2016 = vmatpush2.bf16.msra.mxu0 %v1482
      %2017 = vmatprep.subr.bf16.mxu0 %v1481
      %2018 = vmatpush2.bf16.msra.mxu0 %v1480
      %2019 = vmatprep.subr.bf16.mxu0 %v1479
      %2020 = vmatpush2.bf16.msra.mxu0 %v1478
      %2021 = vmatprep.subr.bf16.mxu0 %v1477
      %2022 = vmatpush2.bf16.msra.mxu0 %v1476
      %2023 = vmatprep.subr.bf16.mxu0 %v1475
      %2024 = vmatpush2.bf16.msra.mxu0 %v1474
      %2025 = vmatprep.mubr.bf16.mxu0 %v461
      %2026 = vmatmul.mubr.bf16.gmra.mxu0 %v460
      %v2027 = vpop.f32.mrf.mxu0
      %v2028 = vadd.f32 %v1915, %v2027
      %v2029 = vpop.f32.mrf.mxu0
      %v2030 = vadd.f32 %v1917, %v2029
      %v2031 = vpop.f32.mrf.mxu0
      %v2032 = vadd.f32 %v1919, %v2031
      %v2033 = vpop.f32.mrf.mxu0
      %v2034 = vadd.f32 %v1921, %v2033
      %2035 = vmatprep.mubr.bf16.mxu0 %v475
      %2036 = vmatmul.mubr.bf16.gmra.mxu0 %v474
      %v2037 = vpop.f32.mrf.mxu0
      %v2038 = vadd.f32 %v1925, %v2037
      %v2039 = vpop.f32.mrf.mxu0
      %v2040 = vadd.f32 %v1927, %v2039
      %v2041 = vpop.f32.mrf.mxu0
      %v2042 = vadd.f32 %v1929, %v2041
      %v2043 = vpop.f32.mrf.mxu0
      %v2044 = vadd.f32 %v1931, %v2043
      %2045 = vmatprep.mubr.bf16.mxu0 %v489
      %2046 = vmatmul.mubr.bf16.gmra.mxu0 %v488
      %v2047 = vpop.f32.mrf.mxu0
      %v2048 = vadd.f32 %v1935, %v2047
      %v2049 = vpop.f32.mrf.mxu0
      %v2050 = vadd.f32 %v1937, %v2049
      %v2051 = vpop.f32.mrf.mxu0
      %v2052 = vadd.f32 %v1939, %v2051
      %v2053 = vpop.f32.mrf.mxu0
      %v2054 = vadd.f32 %v1941, %v2053
      %2055 = vmatprep.mubr.bf16.mxu0 %v503
      %2056 = vmatmul.mubr.bf16.gmra.mxu0 %v502
      %v2057 = vpop.f32.mrf.mxu0
      %v2058 = vadd.f32 %v1945, %v2057
      %v2059 = vpop.f32.mrf.mxu0
      %v2060 = vadd.f32 %v1947, %v2059
      %v2061 = vpop.f32.mrf.mxu0
      %v2062 = vadd.f32 %v1949, %v2061
      %v2063 = vpop.f32.mrf.mxu0
      %v2064 = vadd.f32 %v1951, %v2063
      %2065 = vmatprep.mubr.bf16.mxu0 %v517
      %2066 = vmatmul.mubr.bf16.gmra.mxu0 %v516
      %v2067 = vpop.f32.mrf.mxu0
      %v2068 = vadd.f32 %v1955, %v2067
      %v2069 = vpop.f32.mrf.mxu0
      %v2070 = vadd.f32 %v1957, %v2069
      %v2071 = vpop.f32.mrf.mxu0
      %v2072 = vadd.f32 %v1959, %v2071
      %v2073 = vpop.f32.mrf.mxu0
      %v2074 = vadd.f32 %v1961, %v2073
      %2075 = vmatprep.mubr.bf16.mxu0 %v531
      %2076 = vmatmul.mubr.bf16.gmra.mxu0 %v530
      %v2077 = vpop.f32.mrf.mxu0
      %v2078 = vadd.f32 %v1965, %v2077
      %v2079 = vpop.f32.mrf.mxu0
      %v2080 = vadd.f32 %v1967, %v2079
      %v2081 = vpop.f32.mrf.mxu0
      %v2082 = vadd.f32 %v1969, %v2081
      %v2083 = vpop.f32.mrf.mxu0
      %v2084 = vadd.f32 %v1971, %v2083
      %2085 = vmatprep.mubr.bf16.mxu0 %v545
      %2086 = vmatmul.mubr.bf16.gmra.mxu0 %v544
      %v2087 = vpop.f32.mrf.mxu0
      %v2088 = vadd.f32 %v1975, %v2087
      %v2089 = vpop.f32.mrf.mxu0
      %v2090 = vadd.f32 %v1977, %v2089
      %v2091 = vpop.f32.mrf.mxu0
      %v2092 = vadd.f32 %v1979, %v2091
      %v2093 = vpop.f32.mrf.mxu0
      %v2094 = vadd.f32 %v1981, %v2093
      %2095 = vmatprep.mubr.bf16.mxu0 %v559
      %2096 = vmatmul.mubr.bf16.gmra.mxu0 %v558
      %v2097 = vpop.f32.mrf.mxu0
      %v2098 = vadd.f32 %v1985, %v2097
      %v2099 = vpop.f32.mrf.mxu0
      %v2100 = vadd.f32 %v1987, %v2099
      %v2101 = vpop.f32.mrf.mxu0
      %v2102 = vadd.f32 %v1989, %v2101
      %v2103 = vpop.f32.mrf.mxu0
      %v2104 = vadd.f32 %v1991, %v2103
      %2105 = vdwg.mxu0
      %2106 = vmatprep.subr.bf16.mxu0 %v1505
      %2107 = vmatpush1.bf16.msra.mxu0 %v1504
      %2108 = vmatprep.subr.bf16.mxu0 %v1503
      %2109 = vmatpush1.bf16.msra.mxu0 %v1502
      %2110 = vmatprep.subr.bf16.mxu0 %v1501
      %2111 = vmatpush1.bf16.msra.mxu0 %v1500
      %2112 = vmatprep.subr.bf16.mxu0 %v1499
      %2113 = vmatpush1.bf16.msra.mxu0 %v1498
      %2114 = vmatprep.subr.bf16.mxu0 %v1497
      %2115 = vmatpush1.bf16.msra.mxu0 %v1496
      %2116 = vmatprep.subr.bf16.mxu0 %v1495
      %2117 = vmatpush1.bf16.msra.mxu0 %v1494
      %2118 = vmatprep.subr.bf16.mxu0 %v1493
      %2119 = vmatpush1.bf16.msra.mxu0 %v1492
      %2120 = vmatprep.subr.bf16.mxu0 %v1491
      %2121 = vmatpush1.bf16.msra.mxu0 %v1490
      %2122 = vmatprep.subr.bf16.mxu0 %v1521
      %2123 = vmatpush2.bf16.msra.mxu0 %v1520
      %2124 = vmatprep.subr.bf16.mxu0 %v1519
      %2125 = vmatpush2.bf16.msra.mxu0 %v1518
      %2126 = vmatprep.subr.bf16.mxu0 %v1517
      %2127 = vmatpush2.bf16.msra.mxu0 %v1516
      %2128 = vmatprep.subr.bf16.mxu0 %v1515
      %2129 = vmatpush2.bf16.msra.mxu0 %v1514
      %2130 = vmatprep.subr.bf16.mxu0 %v1513
      %2131 = vmatpush2.bf16.msra.mxu0 %v1512
      %2132 = vmatprep.subr.bf16.mxu0 %v1511
      %2133 = vmatpush2.bf16.msra.mxu0 %v1510
      %2134 = vmatprep.subr.bf16.mxu0 %v1509
      %2135 = vmatpush2.bf16.msra.mxu0 %v1508
      %2136 = vmatprep.subr.bf16.mxu0 %v1507
      %2137 = vmatpush2.bf16.msra.mxu0 %v1506
      %2138 = vmatprep.mubr.bf16.mxu0 %v463
      %2139 = vmatmul.mubr.bf16.gmra.mxu0 %v462
      %v2140 = vpop.f32.mrf.mxu0
      %v2141 = vadd.f32 %v2028, %v2140
      %v2142 = vpop.f32.mrf.mxu0
      %v2143 = vadd.f32 %v2030, %v2142
      %v2144 = vpop.f32.mrf.mxu0
      %v2145 = vadd.f32 %v2032, %v2144
      %v2146 = vpop.f32.mrf.mxu0
      %v2147 = vadd.f32 %v2034, %v2146
      %2148 = vmatprep.mubr.bf16.mxu0 %v477
      %2149 = vmatmul.mubr.bf16.gmra.mxu0 %v476
      %v2150 = vpop.f32.mrf.mxu0
      %v2151 = vadd.f32 %v2038, %v2150
      %v2152 = vpop.f32.mrf.mxu0
      %v2153 = vadd.f32 %v2040, %v2152
      %v2154 = vpop.f32.mrf.mxu0
      %v2155 = vadd.f32 %v2042, %v2154
      %v2156 = vpop.f32.mrf.mxu0
      %v2157 = vadd.f32 %v2044, %v2156
      %2158 = vmatprep.mubr.bf16.mxu0 %v491
      %2159 = vmatmul.mubr.bf16.gmra.mxu0 %v490
      %v2160 = vpop.f32.mrf.mxu0
      %v2161 = vadd.f32 %v2048, %v2160
      %v2162 = vpop.f32.mrf.mxu0
      %v2163 = vadd.f32 %v2050, %v2162
      %v2164 = vpop.f32.mrf.mxu0
      %v2165 = vadd.f32 %v2052, %v2164
      %v2166 = vpop.f32.mrf.mxu0
      %v2167 = vadd.f32 %v2054, %v2166
      %2168 = vmatprep.mubr.bf16.mxu0 %v505
      %2169 = vmatmul.mubr.bf16.gmra.mxu0 %v504
      %v2170 = vpop.f32.mrf.mxu0
      %v2171 = vadd.f32 %v2058, %v2170
      %v2172 = vpop.f32.mrf.mxu0
      %v2173 = vadd.f32 %v2060, %v2172
      %v2174 = vpop.f32.mrf.mxu0
      %v2175 = vadd.f32 %v2062, %v2174
      %v2176 = vpop.f32.mrf.mxu0
      %v2177 = vadd.f32 %v2064, %v2176
      %2178 = vmatprep.mubr.bf16.mxu0 %v519
      %2179 = vmatmul.mubr.bf16.gmra.mxu0 %v518
      %v2180 = vpop.f32.mrf.mxu0
      %v2181 = vadd.f32 %v2068, %v2180
      %v2182 = vpop.f32.mrf.mxu0
      %v2183 = vadd.f32 %v2070, %v2182
      %v2184 = vpop.f32.mrf.mxu0
      %v2185 = vadd.f32 %v2072, %v2184
      %v2186 = vpop.f32.mrf.mxu0
      %v2187 = vadd.f32 %v2074, %v2186
      %2188 = vmatprep.mubr.bf16.mxu0 %v533
      %2189 = vmatmul.mubr.bf16.gmra.mxu0 %v532
      %v2190 = vpop.f32.mrf.mxu0
      %v2191 = vadd.f32 %v2078, %v2190
      %v2192 = vpop.f32.mrf.mxu0
      %v2193 = vadd.f32 %v2080, %v2192
      %v2194 = vpop.f32.mrf.mxu0
      %v2195 = vadd.f32 %v2082, %v2194
      %v2196 = vpop.f32.mrf.mxu0
      %v2197 = vadd.f32 %v2084, %v2196
      %2198 = vmatprep.mubr.bf16.mxu0 %v547
      %2199 = vmatmul.mubr.bf16.gmra.mxu0 %v546
      %v2200 = vpop.f32.mrf.mxu0
      %v2201 = vadd.f32 %v2088, %v2200
      %v2202 = vpop.f32.mrf.mxu0
      %v2203 = vadd.f32 %v2090, %v2202
      %v2204 = vpop.f32.mrf.mxu0
      %v2205 = vadd.f32 %v2092, %v2204
      %v2206 = vpop.f32.mrf.mxu0
      %v2207 = vadd.f32 %v2094, %v2206
      %2208 = vmatprep.mubr.bf16.mxu0 %v561
      %2209 = vmatmul.mubr.bf16.gmra.mxu0 %v560
      %v2210 = vpop.f32.mrf.mxu0
      %v2211 = vadd.f32 %v2098, %v2210
      %v2212 = vpop.f32.mrf.mxu0
      %v2213 = vadd.f32 %v2100, %v2212
      %v2214 = vpop.f32.mrf.mxu0
      %v2215 = vadd.f32 %v2102, %v2214
      %v2216 = vpop.f32.mrf.mxu0
      %v2217 = vadd.f32 %v2104, %v2216
      %2218 = vdwg.mxu0
      %2219 = vmatprep.subr.bf16.mxu0 %v1537
      %2220 = vmatpush1.bf16.msra.mxu0 %v1536
      %2221 = vmatprep.subr.bf16.mxu0 %v1535
      %2222 = vmatpush1.bf16.msra.mxu0 %v1534
      %2223 = vmatprep.subr.bf16.mxu0 %v1533
      %2224 = vmatpush1.bf16.msra.mxu0 %v1532
      %2225 = vmatprep.subr.bf16.mxu0 %v1531
      %2226 = vmatpush1.bf16.msra.mxu0 %v1530
      %2227 = vmatprep.subr.bf16.mxu0 %v1529
      %2228 = vmatpush1.bf16.msra.mxu0 %v1528
      %2229 = vmatprep.subr.bf16.mxu0 %v1527
      %2230 = vmatpush1.bf16.msra.mxu0 %v1526
      %2231 = vmatprep.subr.bf16.mxu0 %v1525
      %2232 = vmatpush1.bf16.msra.mxu0 %v1524
      %2233 = vmatprep.subr.bf16.mxu0 %v1523
      %2234 = vmatpush1.bf16.msra.mxu0 %v1522
      %2235 = vmatprep.subr.bf16.mxu0 %v1553
      %2236 = vmatpush2.bf16.msra.mxu0 %v1552
      %2237 = vmatprep.subr.bf16.mxu0 %v1551
      %2238 = vmatpush2.bf16.msra.mxu0 %v1550
      %2239 = vmatprep.subr.bf16.mxu0 %v1549
      %2240 = vmatpush2.bf16.msra.mxu0 %v1548
      %2241 = vmatprep.subr.bf16.mxu0 %v1547
      %2242 = vmatpush2.bf16.msra.mxu0 %v1546
      %2243 = vmatprep.subr.bf16.mxu0 %v1545
      %2244 = vmatpush2.bf16.msra.mxu0 %v1544
      %2245 = vmatprep.subr.bf16.mxu0 %v1543
      %2246 = vmatpush2.bf16.msra.mxu0 %v1542
      %2247 = vmatprep.subr.bf16.mxu0 %v1541
      %2248 = vmatpush2.bf16.msra.mxu0 %v1540
      %2249 = vmatprep.subr.bf16.mxu0 %v1539
      %2250 = vmatpush2.bf16.msra.mxu0 %v1538
      %2251 = vmatprep.mubr.bf16.mxu0 %v465
      %2252 = vmatmul.mubr.bf16.gmra.mxu0 %v464
      %v2253 = vpop.f32.mrf.mxu0
      %v2254 = vadd.f32 %v2141, %v2253
      %v2255 = vpop.f32.mrf.mxu0
      %v2256 = vadd.f32 %v2143, %v2255
      %v2257 = vpop.f32.mrf.mxu0
      %v2258 = vadd.f32 %v2145, %v2257
      %v2259 = vpop.f32.mrf.mxu0
      %v2260 = vadd.f32 %v2147, %v2259
      %2261 = vmatprep.mubr.bf16.mxu0 %v479
      %2262 = vmatmul.mubr.bf16.gmra.mxu0 %v478
      %v2263 = vpop.f32.mrf.mxu0
      %v2264 = vadd.f32 %v2151, %v2263
      %v2265 = vpop.f32.mrf.mxu0
      %v2266 = vadd.f32 %v2153, %v2265
      %v2267 = vpop.f32.mrf.mxu0
      %v2268 = vadd.f32 %v2155, %v2267
      %v2269 = vpop.f32.mrf.mxu0
      %v2270 = vadd.f32 %v2157, %v2269
      %2271 = vmatprep.mubr.bf16.mxu0 %v493
      %2272 = vmatmul.mubr.bf16.gmra.mxu0 %v492
      %v2273 = vpop.f32.mrf.mxu0
      %v2274 = vadd.f32 %v2161, %v2273
      %v2275 = vpop.f32.mrf.mxu0
      %v2276 = vadd.f32 %v2163, %v2275
      %v2277 = vpop.f32.mrf.mxu0
      %v2278 = vadd.f32 %v2165, %v2277
      %v2279 = vpop.f32.mrf.mxu0
      %v2280 = vadd.f32 %v2167, %v2279
      %2281 = vmatprep.mubr.bf16.mxu0 %v507
      %2282 = vmatmul.mubr.bf16.gmra.mxu0 %v506
      %v2283 = vpop.f32.mrf.mxu0
      %v2284 = vadd.f32 %v2171, %v2283
      %v2285 = vpop.f32.mrf.mxu0
      %v2286 = vadd.f32 %v2173, %v2285
      %v2287 = vpop.f32.mrf.mxu0
      %v2288 = vadd.f32 %v2175, %v2287
      %v2289 = vpop.f32.mrf.mxu0
      %v2290 = vadd.f32 %v2177, %v2289
      %2291 = vmatprep.mubr.bf16.mxu0 %v521
      %2292 = vmatmul.mubr.bf16.gmra.mxu0 %v520
      %v2293 = vpop.f32.mrf.mxu0
      %v2294 = vadd.f32 %v2181, %v2293
      %v2295 = vpop.f32.mrf.mxu0
      %v2296 = vadd.f32 %v2183, %v2295
      %v2297 = vpop.f32.mrf.mxu0
      %v2298 = vadd.f32 %v2185, %v2297
      %v2299 = vpop.f32.mrf.mxu0
      %v2300 = vadd.f32 %v2187, %v2299
      %2301 = vmatprep.mubr.bf16.mxu0 %v535
      %2302 = vmatmul.mubr.bf16.gmra.mxu0 %v534
      %v2303 = vpop.f32.mrf.mxu0
      %v2304 = vadd.f32 %v2191, %v2303
      %v2305 = vpop.f32.mrf.mxu0
      %v2306 = vadd.f32 %v2193, %v2305
      %v2307 = vpop.f32.mrf.mxu0
      %v2308 = vadd.f32 %v2195, %v2307
      %v2309 = vpop.f32.mrf.mxu0
      %v2310 = vadd.f32 %v2197, %v2309
      %2311 = vmatprep.mubr.bf16.mxu0 %v549
      %2312 = vmatmul.mubr.bf16.gmra.mxu0 %v548
      %v2313 = vpop.f32.mrf.mxu0
      %v2314 = vadd.f32 %v2201, %v2313
      %v2315 = vpop.f32.mrf.mxu0
      %v2316 = vadd.f32 %v2203, %v2315
      %v2317 = vpop.f32.mrf.mxu0
      %v2318 = vadd.f32 %v2205, %v2317
      %v2319 = vpop.f32.mrf.mxu0
      %v2320 = vadd.f32 %v2207, %v2319
      %2321 = vmatprep.mubr.bf16.mxu0 %v563
      %2322 = vmatmul.mubr.bf16.gmra.mxu0 %v562
      %v2323 = vpop.f32.mrf.mxu0
      %v2324 = vadd.f32 %v2211, %v2323
      %v2325 = vpop.f32.mrf.mxu0
      %v2326 = vadd.f32 %v2213, %v2325
      %v2327 = vpop.f32.mrf.mxu0
      %v2328 = vadd.f32 %v2215, %v2327
      %v2329 = vpop.f32.mrf.mxu0
      %v2330 = vadd.f32 %v2217, %v2329
      %2331 = vdwg.mxu0
      %2332 = vmatprep.subr.bf16.mxu0 %v1569
      %2333 = vmatpush1.bf16.msra.mxu0 %v1568
      %2334 = vmatprep.subr.bf16.mxu0 %v1567
      %2335 = vmatpush1.bf16.msra.mxu0 %v1566
      %2336 = vmatprep.subr.bf16.mxu0 %v1565
      %2337 = vmatpush1.bf16.msra.mxu0 %v1564
      %2338 = vmatprep.subr.bf16.mxu0 %v1563
      %2339 = vmatpush1.bf16.msra.mxu0 %v1562
      %2340 = vmatprep.subr.bf16.mxu0 %v1561
      %2341 = vmatpush1.bf16.msra.mxu0 %v1560
      %2342 = vmatprep.subr.bf16.mxu0 %v1559
      %2343 = vmatpush1.bf16.msra.mxu0 %v1558
      %2344 = vmatprep.subr.bf16.mxu0 %v1557
      %2345 = vmatpush1.bf16.msra.mxu0 %v1556
      %2346 = vmatprep.subr.bf16.mxu0 %v1555
      %2347 = vmatpush1.bf16.msra.mxu0 %v1554
      %2348 = vmatprep.subr.bf16.mxu0 %v1585
      %2349 = vmatpush2.bf16.msra.mxu0 %v1584
      %2350 = vmatprep.subr.bf16.mxu0 %v1583
      %2351 = vmatpush2.bf16.msra.mxu0 %v1582
      %2352 = vmatprep.subr.bf16.mxu0 %v1581
      %2353 = vmatpush2.bf16.msra.mxu0 %v1580
      %2354 = vmatprep.subr.bf16.mxu0 %v1579
      %2355 = vmatpush2.bf16.msra.mxu0 %v1578
      %2356 = vmatprep.subr.bf16.mxu0 %v1577
      %2357 = vmatpush2.bf16.msra.mxu0 %v1576
      %2358 = vmatprep.subr.bf16.mxu0 %v1575
      %2359 = vmatpush2.bf16.msra.mxu0 %v1574
      %2360 = vmatprep.subr.bf16.mxu0 %v1573
      %2361 = vmatpush2.bf16.msra.mxu0 %v1572
      %2362 = vmatprep.subr.bf16.mxu0 %v1571
      %2363 = vmatpush2.bf16.msra.mxu0 %v1570
      %2364 = vmatprep.mubr.bf16.mxu0 %v467
      %2365 = vmatmul.mubr.bf16.gmra.mxu0 %v466
      %v2366 = vpop.f32.mrf.mxu0
      %v2367 = vadd.f32 %v2254, %v2366
      %v2368 = vpop.f32.mrf.mxu0
      %v2369 = vadd.f32 %v2256, %v2368
      %v2370 = vpop.f32.mrf.mxu0
      %v2371 = vadd.f32 %v2258, %v2370
      %v2372 = vpop.f32.mrf.mxu0
      %v2373 = vadd.f32 %v2260, %v2372
      %2374 = vmatprep.mubr.bf16.mxu0 %v481
      %2375 = vmatmul.mubr.bf16.gmra.mxu0 %v480
      %v2376 = vpop.f32.mrf.mxu0
      %v2377 = vadd.f32 %v2264, %v2376
      %v2378 = vpop.f32.mrf.mxu0
      %v2379 = vadd.f32 %v2266, %v2378
      %v2380 = vpop.f32.mrf.mxu0
      %v2381 = vadd.f32 %v2268, %v2380
      %v2382 = vpop.f32.mrf.mxu0
      %v2383 = vadd.f32 %v2270, %v2382
      %2384 = vmatprep.mubr.bf16.mxu0 %v495
      %2385 = vmatmul.mubr.bf16.gmra.mxu0 %v494
      %v2386 = vpop.f32.mrf.mxu0
      %v2387 = vadd.f32 %v2274, %v2386
      %v2388 = vpop.f32.mrf.mxu0
      %v2389 = vadd.f32 %v2276, %v2388
      %v2390 = vpop.f32.mrf.mxu0
      %v2391 = vadd.f32 %v2278, %v2390
      %v2392 = vpop.f32.mrf.mxu0
      %v2393 = vadd.f32 %v2280, %v2392
      %2394 = vmatprep.mubr.bf16.mxu0 %v509
      %2395 = vmatmul.mubr.bf16.gmra.mxu0 %v508
      %v2396 = vpop.f32.mrf.mxu0
      %v2397 = vadd.f32 %v2284, %v2396
      %v2398 = vpop.f32.mrf.mxu0
      %v2399 = vadd.f32 %v2286, %v2398
      %v2400 = vpop.f32.mrf.mxu0
      %v2401 = vadd.f32 %v2288, %v2400
      %v2402 = vpop.f32.mrf.mxu0
      %v2403 = vadd.f32 %v2290, %v2402
      %2404 = vmatprep.mubr.bf16.mxu0 %v523
      %2405 = vmatmul.mubr.bf16.gmra.mxu0 %v522
      %v2406 = vpop.f32.mrf.mxu0
      %v2407 = vadd.f32 %v2294, %v2406
      %v2408 = vpop.f32.mrf.mxu0
      %v2409 = vadd.f32 %v2296, %v2408
      %v2410 = vpop.f32.mrf.mxu0
      %v2411 = vadd.f32 %v2298, %v2410
      %v2412 = vpop.f32.mrf.mxu0
      %v2413 = vadd.f32 %v2300, %v2412
      %2414 = vmatprep.mubr.bf16.mxu0 %v537
      %2415 = vmatmul.mubr.bf16.gmra.mxu0 %v536
      %v2416 = vpop.f32.mrf.mxu0
      %v2417 = vadd.f32 %v2304, %v2416
      %v2418 = vpop.f32.mrf.mxu0
      %v2419 = vadd.f32 %v2306, %v2418
      %v2420 = vpop.f32.mrf.mxu0
      %v2421 = vadd.f32 %v2308, %v2420
      %v2422 = vpop.f32.mrf.mxu0
      %v2423 = vadd.f32 %v2310, %v2422
      %2424 = vmatprep.mubr.bf16.mxu0 %v551
      %2425 = vmatmul.mubr.bf16.gmra.mxu0 %v550
      %v2426 = vpop.f32.mrf.mxu0
      %v2427 = vadd.f32 %v2314, %v2426
      %v2428 = vpop.f32.mrf.mxu0
      %v2429 = vadd.f32 %v2316, %v2428
      %v2430 = vpop.f32.mrf.mxu0
      %v2431 = vadd.f32 %v2318, %v2430
      %v2432 = vpop.f32.mrf.mxu0
      %v2433 = vadd.f32 %v2320, %v2432
      %2434 = vmatprep.mubr.bf16.mxu0 %v565
      %2435 = vmatmul.mubr.bf16.gmra.mxu0 %v564
      %v2436 = vpop.f32.mrf.mxu0
      %v2437 = vadd.f32 %v2324, %v2436
      %v2438 = vpop.f32.mrf.mxu0
      %v2439 = vadd.f32 %v2326, %v2438
      %v2440 = vpop.f32.mrf.mxu0
      %v2441 = vadd.f32 %v2328, %v2440
      %v2442 = vpop.f32.mrf.mxu0
      %v2443 = vadd.f32 %v2330, %v2442
      %2444 = vdwg.mxu0
      %2445 = vmatprep.subr.bf16.mxu0 %v1601
      %2446 = vmatpush1.bf16.msra.mxu0 %v1600
      %2447 = vmatprep.subr.bf16.mxu0 %v1599
      %2448 = vmatpush1.bf16.msra.mxu0 %v1598
      %2449 = vmatprep.subr.bf16.mxu0 %v1597
      %2450 = vmatpush1.bf16.msra.mxu0 %v1596
      %2451 = vmatprep.subr.bf16.mxu0 %v1595
      %2452 = vmatpush1.bf16.msra.mxu0 %v1594
      %2453 = vmatprep.subr.bf16.mxu0 %v1593
      %2454 = vmatpush1.bf16.msra.mxu0 %v1592
      %2455 = vmatprep.subr.bf16.mxu0 %v1591
      %2456 = vmatpush1.bf16.msra.mxu0 %v1590
      %2457 = vmatprep.subr.bf16.mxu0 %v1589
      %2458 = vmatpush1.bf16.msra.mxu0 %v1588
      %2459 = vmatprep.subr.bf16.mxu0 %v1587
      %2460 = vmatpush1.bf16.msra.mxu0 %v1586
      %2461 = vmatprep.subr.bf16.mxu0 %v1617
      %2462 = vmatpush2.bf16.msra.mxu0 %v1616
      %2463 = vmatprep.subr.bf16.mxu0 %v1615
      %2464 = vmatpush2.bf16.msra.mxu0 %v1614
      %2465 = vmatprep.subr.bf16.mxu0 %v1613
      %2466 = vmatpush2.bf16.msra.mxu0 %v1612
      %2467 = vmatprep.subr.bf16.mxu0 %v1611
      %2468 = vmatpush2.bf16.msra.mxu0 %v1610
      %2469 = vmatprep.subr.bf16.mxu0 %v1609
      %2470 = vmatpush2.bf16.msra.mxu0 %v1608
      %2471 = vmatprep.subr.bf16.mxu0 %v1607
      %2472 = vmatpush2.bf16.msra.mxu0 %v1606
      %2473 = vmatprep.subr.bf16.mxu0 %v1605
      %2474 = vmatpush2.bf16.msra.mxu0 %v1604
      %2475 = vmatprep.subr.bf16.mxu0 %v1603
      %2476 = vmatpush2.bf16.msra.mxu0 %v1602
      %2477 = vmatprep.mubr.bf16.mxu0 %v469
      %2478 = vmatmul.mubr.bf16.gmra.mxu0 %v468
      %v2479 = vpop.f32.mrf.mxu0
      %v2480 = vadd.f32 %v2367, %v2479
      %v2481 = vpop.f32.mrf.mxu0
      %v2482 = vadd.f32 %v2369, %v2481
      %v2483 = vpop.f32.mrf.mxu0
      %v2484 = vadd.f32 %v2371, %v2483
      %v2485 = vpop.f32.mrf.mxu0
      %v2486 = vadd.f32 %v2373, %v2485
      %2487 = vmatprep.mubr.bf16.mxu0 %v483
      %2488 = vmatmul.mubr.bf16.gmra.mxu0 %v482
      %v2489 = vpop.f32.mrf.mxu0
      %v2490 = vadd.f32 %v2377, %v2489
      %v2491 = vpop.f32.mrf.mxu0
      %v2492 = vadd.f32 %v2379, %v2491
      %v2493 = vpop.f32.mrf.mxu0
      %v2494 = vadd.f32 %v2381, %v2493
      %v2495 = vpop.f32.mrf.mxu0
      %v2496 = vadd.f32 %v2383, %v2495
      %2497 = vmatprep.mubr.bf16.mxu0 %v497
      %2498 = vmatmul.mubr.bf16.gmra.mxu0 %v496
      %v2499 = vpop.f32.mrf.mxu0
      %v2500 = vadd.f32 %v2387, %v2499
      %v2501 = vpop.f32.mrf.mxu0
      %v2502 = vadd.f32 %v2389, %v2501
      %v2503 = vpop.f32.mrf.mxu0
      %v2504 = vadd.f32 %v2391, %v2503
      %v2505 = vpop.f32.mrf.mxu0
      %v2506 = vadd.f32 %v2393, %v2505
      %2507 = vmatprep.mubr.bf16.mxu0 %v511
      %2508 = vmatmul.mubr.bf16.gmra.mxu0 %v510
      %v2509 = vpop.f32.mrf.mxu0
      %v2510 = vadd.f32 %v2397, %v2509
      %v2511 = vpop.f32.mrf.mxu0
      %v2512 = vadd.f32 %v2399, %v2511
      %v2513 = vpop.f32.mrf.mxu0
      %v2514 = vadd.f32 %v2401, %v2513
      %v2515 = vpop.f32.mrf.mxu0
      %v2516 = vadd.f32 %v2403, %v2515
      %2517 = vmatprep.mubr.bf16.mxu0 %v525
      %2518 = vmatmul.mubr.bf16.gmra.mxu0 %v524
      %v2519 = vpop.f32.mrf.mxu0
      %v2520 = vadd.f32 %v2407, %v2519
      %v2521 = vpop.f32.mrf.mxu0
      %v2522 = vadd.f32 %v2409, %v2521
      %v2523 = vpop.f32.mrf.mxu0
      %v2524 = vadd.f32 %v2411, %v2523
      %v2525 = vpop.f32.mrf.mxu0
      %v2526 = vadd.f32 %v2413, %v2525
      %2527 = vmatprep.mubr.bf16.mxu0 %v539
      %2528 = vmatmul.mubr.bf16.gmra.mxu0 %v538
      %v2529 = vpop.f32.mrf.mxu0
      %v2530 = vadd.f32 %v2417, %v2529
      %v2531 = vpop.f32.mrf.mxu0
      %v2532 = vadd.f32 %v2419, %v2531
      %v2533 = vpop.f32.mrf.mxu0
      %v2534 = vadd.f32 %v2421, %v2533
      %v2535 = vpop.f32.mrf.mxu0
      %v2536 = vadd.f32 %v2423, %v2535
      %2537 = vmatprep.mubr.bf16.mxu0 %v553
      %2538 = vmatmul.mubr.bf16.gmra.mxu0 %v552
      %v2539 = vpop.f32.mrf.mxu0
      %v2540 = vadd.f32 %v2427, %v2539
      %v2541 = vpop.f32.mrf.mxu0
      %v2542 = vadd.f32 %v2429, %v2541
      %v2543 = vpop.f32.mrf.mxu0
      %v2544 = vadd.f32 %v2431, %v2543
      %v2545 = vpop.f32.mrf.mxu0
      %v2546 = vadd.f32 %v2433, %v2545
      %2547 = vmatprep.mubr.bf16.mxu0 %v567
      %2548 = vmatmul.mubr.bf16.gmra.mxu0 %v566
      %v2549 = vpop.f32.mrf.mxu0
      %v2550 = vadd.f32 %v2437, %v2549
      %v2551 = vpop.f32.mrf.mxu0
      %v2552 = vadd.f32 %v2439, %v2551
      %v2553 = vpop.f32.mrf.mxu0
      %v2554 = vadd.f32 %v2441, %v2553
      %v2555 = vpop.f32.mrf.mxu0
      %v2556 = vadd.f32 %v2443, %v2555
      %2557 = vdwg.mxu0
      %2558 = vmatprep.subr.bf16.mxu0 %v1633
      %2559 = vmatpush1.bf16.msra.mxu0 %v1632
      %2560 = vmatprep.subr.bf16.mxu0 %v1631
      %2561 = vmatpush1.bf16.msra.mxu0 %v1630
      %2562 = vmatprep.subr.bf16.mxu0 %v1629
      %2563 = vmatpush1.bf16.msra.mxu0 %v1628
      %2564 = vmatprep.subr.bf16.mxu0 %v1627
      %2565 = vmatpush1.bf16.msra.mxu0 %v1626
      %2566 = vmatprep.subr.bf16.mxu0 %v1625
      %2567 = vmatpush1.bf16.msra.mxu0 %v1624
      %2568 = vmatprep.subr.bf16.mxu0 %v1623
      %2569 = vmatpush1.bf16.msra.mxu0 %v1622
      %2570 = vmatprep.subr.bf16.mxu0 %v1621
      %2571 = vmatpush1.bf16.msra.mxu0 %v1620
      %2572 = vmatprep.subr.bf16.mxu0 %v1619
      %2573 = vmatpush1.bf16.msra.mxu0 %v1618
      %2574 = vmatprep.subr.bf16.mxu0 0
      %2575 = vmatpush2.bf16.msra.mxu0 0
      %2576 = vmatprep.subr.bf16.mxu0 0
      %2577 = vmatpush2.bf16.msra.mxu0 0
      %2578 = vmatprep.subr.bf16.mxu0 0
      %2579 = vmatpush2.bf16.msra.mxu0 0
      %2580 = vmatprep.subr.bf16.mxu0 0
      %2581 = vmatpush2.bf16.msra.mxu0 0
      %2582 = vmatprep.subr.bf16.mxu0 0
      %2583 = vmatpush2.bf16.msra.mxu0 0
      %2584 = vmatprep.subr.bf16.mxu0 0
      %2585 = vmatpush2.bf16.msra.mxu0 0
      %2586 = vmatprep.subr.bf16.mxu0 %v1878
      %2587 = vmatpush2.bf16.msra.mxu0 %v1875
      %2588 = vmatprep.subr.bf16.mxu0 %v1635
      %2589 = vmatpush2.bf16.msra.mxu0 %v1634
      %2590 = vmatprep.mubr.bf16.mxu0 %v1850
      %2591 = vmatmul.mubr.bf16.gmra.mxu0 %v470
      %v2592 = vpop.f32.mrf.mxu0
      %v2593 = vadd.f32 %v2480, %v2592
      %v2594 = vpop.f32.mrf.mxu0
      %v2595 = vadd.f32 %v2482, %v2594
      %v2596 = vpop.f32.mrf.mxu0
      %v2597 = vadd.f32 %v2484, %v2596
      %v2598 = vpop.f32.mrf.mxu0
      %v2599 = vadd.f32 %v2486, %v2598
      %2600 = vmatprep.mubr.bf16.mxu0 %v1853
      %2601 = vmatmul.mubr.bf16.gmra.mxu0 %v484
      %v2602 = vpop.f32.mrf.mxu0
      %v2603 = vadd.f32 %v2490, %v2602
      %v2604 = vpop.f32.mrf.mxu0
      %v2605 = vadd.f32 %v2492, %v2604
      %v2606 = vpop.f32.mrf.mxu0
      %v2607 = vadd.f32 %v2494, %v2606
      %v2608 = vpop.f32.mrf.mxu0
      %v2609 = vadd.f32 %v2496, %v2608
      %2610 = vmatprep.mubr.bf16.mxu0 %v1856
      %2611 = vmatmul.mubr.bf16.gmra.mxu0 %v498
      %v2612 = vpop.f32.mrf.mxu0
      %v2613 = vadd.f32 %v2500, %v2612
      %v2614 = vpop.f32.mrf.mxu0
      %v2615 = vadd.f32 %v2502, %v2614
      %v2616 = vpop.f32.mrf.mxu0
      %v2617 = vadd.f32 %v2504, %v2616
      %v2618 = vpop.f32.mrf.mxu0
      %v2619 = vadd.f32 %v2506, %v2618
      %2620 = vmatprep.mubr.bf16.mxu0 %v1859
      %2621 = vmatmul.mubr.bf16.gmra.mxu0 %v512
      %v2622 = vpop.f32.mrf.mxu0
      %v2623 = vadd.f32 %v2510, %v2622
      %v2624 = vpop.f32.mrf.mxu0
      %v2625 = vadd.f32 %v2512, %v2624
      %v2626 = vpop.f32.mrf.mxu0
      %v2627 = vadd.f32 %v2514, %v2626
      %v2628 = vpop.f32.mrf.mxu0
      %v2629 = vadd.f32 %v2516, %v2628
      %2630 = vmatprep.mubr.bf16.mxu0 %v1862
      %2631 = vmatmul.mubr.bf16.gmra.mxu0 %v526
      %v2632 = vpop.f32.mrf.mxu0
      %v2633 = vadd.f32 %v2520, %v2632
      %v2634 = vpop.f32.mrf.mxu0
      %v2635 = vadd.f32 %v2522, %v2634
      %v2636 = vpop.f32.mrf.mxu0
      %v2637 = vadd.f32 %v2524, %v2636
      %v2638 = vpop.f32.mrf.mxu0
      %v2639 = vadd.f32 %v2526, %v2638
      %2640 = vmatprep.mubr.bf16.mxu0 %v1865
      %2641 = vmatmul.mubr.bf16.gmra.mxu0 %v540
      %v2642 = vpop.f32.mrf.mxu0
      %v2643 = vadd.f32 %v2530, %v2642
      %v2644 = vpop.f32.mrf.mxu0
      %v2645 = vadd.f32 %v2532, %v2644
      %v2646 = vpop.f32.mrf.mxu0
      %v2647 = vadd.f32 %v2534, %v2646
      %v2648 = vpop.f32.mrf.mxu0
      %v2649 = vadd.f32 %v2536, %v2648
      %2650 = vmatprep.mubr.bf16.mxu0 %v1868
      %2651 = vmatmul.mubr.bf16.gmra.mxu0 %v554
      %v2652 = vpop.f32.mrf.mxu0
      %v2653 = vadd.f32 %v2540, %v2652
      %v2654 = vpop.f32.mrf.mxu0
      %v2655 = vadd.f32 %v2542, %v2654
      %v2656 = vpop.f32.mrf.mxu0
      %v2657 = vadd.f32 %v2544, %v2656
      %v2658 = vpop.f32.mrf.mxu0
      %v2659 = vadd.f32 %v2546, %v2658
      %2660 = vmatprep.mubr.bf16.mxu0 %v1871
      %2661 = vmatmul.mubr.bf16.gmra.mxu0 %v568
      %v2662 = vpop.f32.mrf.mxu0
      %v2663 = vadd.f32 %v2550, %v2662
      %v2664 = vpop.f32.mrf.mxu0
      %v2665 = vadd.f32 %v2552, %v2664
      %v2666 = vpop.f32.mrf.mxu0
      %v2667 = vadd.f32 %v2554, %v2666
      %v2668 = vpop.f32.mrf.mxu0
      %v2669 = vadd.f32 %v2556, %v2668
      %2670 = vdwg.mxu0
      %v2671 = vsub.f32 0.0, %v2593
      %v2672 = vsub.f32 0.0, %v2595
      %v2673 = vsub.f32 0.0, %v2597
      %v2674 = vsub.f32 0.0, %v2599
      %v2675 = vsub.f32 0.0, %v2603
      %v2676 = vsub.f32 0.0, %v2605
      %v2677 = vsub.f32 0.0, %v2607
      %v2678 = vsub.f32 0.0, %v2609
      %v2679 = vsub.f32 0.0, %v2613
      %v2680 = vsub.f32 0.0, %v2615
      %v2681 = vsub.f32 0.0, %v2617
      %v2682 = vsub.f32 0.0, %v2619
      %v2683 = vsub.f32 0.0, %v2623
      %v2684 = vsub.f32 0.0, %v2625
      %v2685 = vsub.f32 0.0, %v2627
      %v2686 = vsub.f32 0.0, %v2629
      %v2687 = vsub.f32 0.0, %v2633
      %v2688 = vsub.f32 0.0, %v2635
      %v2689 = vsub.f32 0.0, %v2637
      %v2690 = vsub.f32 0.0, %v2639
      %v2691 = vsub.f32 0.0, %v2643
      %v2692 = vsub.f32 0.0, %v2645
      %v2693 = vsub.f32 0.0, %v2647
      %v2694 = vsub.f32 0.0, %v2649
      %v2695 = vsub.f32 0.0, %v2653
      %v2696 = vsub.f32 0.0, %v2655
      %v2697 = vsub.f32 0.0, %v2657
      %v2698 = vsub.f32 0.0, %v2659
      %v2699 = vsub.f32 0.0, %v2663
      %v2700 = vsub.f32 0.0, %v2665
      %v2701 = vsub.f32 0.0, %v2667
      %v2702 = vsub.f32 0.0, %v2669
      %v2703 = vmul.f32 %v2671, 1.442695
      %v2704 = vpow.pop %v2703
      %v2705 = vmul.f32 %v2672, 1.442695
      %v2706 = vpow.pop %v2705
      %v2707 = vmul.f32 %v2673, 1.442695
      %v2708 = vpow.pop %v2707
      %v2709 = vmul.f32 %v2674, 1.442695
      %v2710 = vpow.pop %v2709
      %v2711 = vmul.f32 %v2675, 1.442695
      %v2712 = vpow.pop %v2711
      %v2713 = vmul.f32 %v2676, 1.442695
      %v2714 = vpow.pop %v2713
      %v2715 = vmul.f32 %v2677, 1.442695
      %v2716 = vpow.pop %v2715
      %v2717 = vmul.f32 %v2678, 1.442695
      %v2718 = vpow.pop %v2717
      %v2719 = vmul.f32 %v2679, 1.442695
      %v2720 = vpow.pop %v2719
      %v2721 = vmul.f32 %v2680, 1.442695
      %v2722 = vpow.pop %v2721
      %v2723 = vmul.f32 %v2681, 1.442695
      %v2724 = vpow.pop %v2723
      %v2725 = vmul.f32 %v2682, 1.442695
      %v2726 = vpow.pop %v2725
      %v2727 = vmul.f32 %v2683, 1.442695
      %v2728 = vpow.pop %v2727
      %v2729 = vmul.f32 %v2684, 1.442695
      %v2730 = vpow.pop %v2729
      %v2731 = vmul.f32 %v2685, 1.442695
      %v2732 = vpow.pop %v2731
      %v2733 = vmul.f32 %v2686, 1.442695
      %v2734 = vpow.pop %v2733
      %v2735 = vmul.f32 %v2687, 1.442695
      %v2736 = vpow.pop %v2735
      %v2737 = vmul.f32 %v2688, 1.442695
      %v2738 = vpow.pop %v2737
      %v2739 = vmul.f32 %v2689, 1.442695
      %v2740 = vpow.pop %v2739
      %v2741 = vmul.f32 %v2690, 1.442695
      %v2742 = vpow.pop %v2741
      %v2743 = vmul.f32 %v2691, 1.442695
      %v2744 = vpow.pop %v2743
      %v2745 = vmul.f32 %v2692, 1.442695
      %v2746 = vpow.pop %v2745
      %v2747 = vmul.f32 %v2693, 1.442695
      %v2748 = vpow.pop %v2747
      %v2749 = vmul.f32 %v2694, 1.442695
      %v2750 = vpow.pop %v2749
      %v2751 = vmul.f32 %v2695, 1.442695
      %v2752 = vpow.pop %v2751
      %v2753 = vmul.f32 %v2696, 1.442695
      %v2754 = vpow.pop %v2753
      %v2755 = vmul.f32 %v2697, 1.442695
      %v2756 = vpow.pop %v2755
      %v2757 = vmul.f32 %v2698, 1.442695
      %v2758 = vpow.pop %v2757
      %v2759 = vmul.f32 %v2699, 1.442695
      %v2760 = vpow.pop %v2759
      %v2761 = vmul.f32 %v2700, 1.442695
      %v2762 = vpow.pop %v2761
      %v2763 = vmul.f32 %v2701, 1.442695
      %v2764 = vpow.pop %v2763
      %v2765 = vmul.f32 %v2702, 1.442695
      %v2766 = vpow.pop %v2765
      %v2767 = vadd.f32 %v2704, 1.0
      %v2768 = vadd.f32 %v2706, 1.0
      %v2769 = vadd.f32 %v2708, 1.0
      %v2770 = vadd.f32 %v2710, 1.0
      %v2771 = vadd.f32 %v2712, 1.0
      %v2772 = vadd.f32 %v2714, 1.0
      %v2773 = vadd.f32 %v2716, 1.0
      %v2774 = vadd.f32 %v2718, 1.0
      %v2775 = vadd.f32 %v2720, 1.0
      %v2776 = vadd.f32 %v2722, 1.0
      %v2777 = vadd.f32 %v2724, 1.0
      %v2778 = vadd.f32 %v2726, 1.0
      %v2779 = vadd.f32 %v2728, 1.0
      %v2780 = vadd.f32 %v2730, 1.0
      %v2781 = vadd.f32 %v2732, 1.0
      %v2782 = vadd.f32 %v2734, 1.0
      %v2783 = vadd.f32 %v2736, 1.0
      %v2784 = vadd.f32 %v2738, 1.0
      %v2785 = vadd.f32 %v2740, 1.0
      %v2786 = vadd.f32 %v2742, 1.0
      %v2787 = vadd.f32 %v2744, 1.0
      %v2788 = vadd.f32 %v2746, 1.0
      %v2789 = vadd.f32 %v2748, 1.0
      %v2790 = vadd.f32 %v2750, 1.0
      %v2791 = vadd.f32 %v2752, 1.0
      %v2792 = vadd.f32 %v2754, 1.0
      %v2793 = vadd.f32 %v2756, 1.0
      %v2794 = vadd.f32 %v2758, 1.0
      %v2795 = vadd.f32 %v2760, 1.0
      %v2796 = vadd.f32 %v2762, 1.0
      %v2797 = vadd.f32 %v2764, 1.0
      %v2798 = vadd.f32 %v2766, 1.0
      %v2799 = vrcp.pop %v2767
      %v2800 = vrcp.pop %v2768
      %v2801 = vrcp.pop %v2769
      %v2802 = vrcp.pop %v2770
      %v2803 = vrcp.pop %v2771
      %v2804 = vrcp.pop %v2772
      %v2805 = vrcp.pop %v2773
      %v2806 = vrcp.pop %v2774
      %v2807 = vrcp.pop %v2775
      %v2808 = vrcp.pop %v2776
      %v2809 = vrcp.pop %v2777
      %v2810 = vrcp.pop %v2778
      %v2811 = vrcp.pop %v2779
      %v2812 = vrcp.pop %v2780
      %v2813 = vrcp.pop %v2781
      %v2814 = vrcp.pop %v2782
      %v2815 = vrcp.pop %v2783
      %v2816 = vrcp.pop %v2784
      %v2817 = vrcp.pop %v2785
      %v2818 = vrcp.pop %v2786
      %v2819 = vrcp.pop %v2787
      %v2820 = vrcp.pop %v2788
      %v2821 = vrcp.pop %v2789
      %v2822 = vrcp.pop %v2790
      %v2823 = vrcp.pop %v2791
      %v2824 = vrcp.pop %v2792
      %v2825 = vrcp.pop %v2793
      %v2826 = vrcp.pop %v2794
      %v2827 = vrcp.pop %v2795
      %v2828 = vrcp.pop %v2796
      %v2829 = vrcp.pop %v2797
      %v2830 = vrcp.pop %v2798
      %v2831 = vpack.c.bf16 %v2801, %v2799
      %v2832 = vpack.c.bf16 %v2802, %v2800
      %v2833 = vpack.c.bf16 %v2805, %v2803
      %v2834 = vpack.c.bf16 %v2806, %v2804
      %v2835 = vpack.c.bf16 %v2809, %v2807
      %v2836 = vpack.c.bf16 %v2810, %v2808
      %v2837 = vpack.c.bf16 %v2813, %v2811
      %v2838 = vpack.c.bf16 %v2814, %v2812
      %v2839 = vpack.c.bf16 %v2817, %v2815
      %v2840 = vpack.c.bf16 %v2818, %v2816
      %v2841 = vpack.c.bf16 %v2821, %v2819
      %v2842 = vpack.c.bf16 %v2822, %v2820
      %v2843 = vpack.c.bf16 %v2825, %v2823
      %v2844 = vpack.c.bf16 %v2826, %v2824
      %v2845 = vpack.c.bf16 %v2829, %v2827
      %v2846 = vpack.c.bf16 %v2830, %v2828
      %v2847 = vld [vmem:[%s3] sm:$0xff]
      %v2848 = vld [vmem:[%s3 + $0x8] sm:$0xff]
      %v2849 = vld [vmem:[%s3 + $0x10] sm:$0xff]
      %v2850 = vld [vmem:[%s3 + $0x18] sm:$0xff]
      %v2851 = vld [vmem:[%s3 + $0x20] sm:$0xff]
      %v2852 = vld [vmem:[%s3 + $0x28] sm:$0xff]
      %v2853 = vld [vmem:[%s3 + $0x30] sm:$0xff]
      %v2854 = vld [vmem:[%s3 + $0x38] sm:$0xff]
      %v2855 = vld [vmem:[%s3 + $0x40] sm:$0xff]
      %v2856 = vld [vmem:[%s3 + $0x48] sm:$0xff]
      %v2857 = vld [vmem:[%s3 + $0x50] sm:$0xff]
      %v2858 = vld [vmem:[%s3 + $0x58] sm:$0xff]
      %v2859 = vld [vmem:[%s3 + $0x60] sm:$0xff]
      %v2860 = vld [vmem:[%s3 + $0x68] sm:$0xff]
      %v2861 = vld [vmem:[%s3 + $0x70] sm:$0xff]
      %v2862 = vld [vmem:[%s3 + $0x78] sm:$0xff]
      %v2863 = vld [vmem:[%s3 + $0x80] sm:$0xff]
      %v2864 = vld [vmem:[%s3 + $0x88] sm:$0xff]
      %v2865 = vld [vmem:[%s3 + $0x90] sm:$0xff]
      %v2866 = vld [vmem:[%s3 + $0x98] sm:$0xff]
      %v2867 = vld [vmem:[%s3 + $0xa0] sm:$0xff]
      %v2868 = vld [vmem:[%s3 + $0xa8] sm:$0xff]
      %v2869 = vld [vmem:[%s3 + $0xb0] sm:$0xff]
      %v2870 = vld [vmem:[%s3 + $0xb8] sm:$0xff]
      %v2871 = vld [vmem:[%s3 + $0xc0] sm:$0xff]
      %v2872 = vld [vmem:[%s3 + $0xc8] sm:$0xff]
      %v2873 = vld [vmem:[%s3 + $0xd0] sm:$0xff]
      %v2874 = vld [vmem:[%s3 + $0xd8] sm:$0xff]
      %v2875 = vld [vmem:[%s3 + $0xe0] sm:$0xff]
      %v2876 = vld [vmem:[%s3 + $0xe8] sm:$0xff]
      %v2877 = vld [vmem:[%s3 + $0xf0] sm:$0xff]
      %v2878 = vld [vmem:[%s3 + $0xf8] sm:$0xff]
      %v2879 = vld [vmem:[%s3 + $0x100] sm:$0xff]
      %v2880 = vld [vmem:[%s3 + $0x108] sm:$0xff]
      %v2881 = vld [vmem:[%s3 + $0x110] sm:$0xff]
      %v2882 = vld [vmem:[%s3 + $0x118] sm:$0xff]
      %v2883 = vld [vmem:[%s3 + $0x120] sm:$0xff]
      %v2884 = vld [vmem:[%s3 + $0x128] sm:$0xff]
      %v2885 = vld [vmem:[%s3 + $0x130] sm:$0xff]
      %v2886 = vld [vmem:[%s3 + $0x138] sm:$0xff]
      %v2887 = vld [vmem:[%s3 + $0x140] sm:$0xff]
      %v2888 = vld [vmem:[%s3 + $0x148] sm:$0xff]
      %v2889 = vld [vmem:[%s3 + $0x150] sm:$0xff]
      %v2890 = vld [vmem:[%s3 + $0x158] sm:$0xff]
      %v2891 = vld [vmem:[%s3 + $0x160] sm:$0xff]
      %v2892 = vld [vmem:[%s3 + $0x168] sm:$0xff]
      %v2893 = vld [vmem:[%s3 + $0x170] sm:$0xff]
      %v2894 = vld [vmem:[%s3 + $0x178] sm:$0xff]
      %v2895 = vld [vmem:[%s3 + $0x180] sm:$0xff]
      %v2896 = vld [vmem:[%s3 + $0x188] sm:$0xff]
      %v2897 = vld [vmem:[%s3 + $0x190] sm:$0xff]
      %v2898 = vld [vmem:[%s3 + $0x198] sm:$0xff]
      %v2899 = vld [vmem:[%s3 + $0x1a0] sm:$0xff]
      %v2900 = vld [vmem:[%s3 + $0x1a8] sm:$0xff]
      %v2901 = vld [vmem:[%s3 + $0x1b0] sm:$0xff]
      %v2902 = vld [vmem:[%s3 + $0x1b8] sm:$0xff]
      %v2903 = vld [vmem:[%s3 + $0x1c0] sm:$0xff]
      %v2904 = vld [vmem:[%s3 + $0x1c8] sm:$0xff]
      %v2905 = vld [vmem:[%s3 + $0x1d0] sm:$0xff]
      %v2906 = vld [vmem:[%s3 + $0x1d8] sm:$0xff]
      %v2907 = vld [vmem:[%s3 + $0x1e0] sm:$0xff]
      %v2908 = vld [vmem:[%s3 + $0x1e8] sm:$0xff]
      %v2909 = vld [vmem:[%s3 + $0x1f0] sm:$0xff]
      %v2910 = vld [vmem:[%s3 + $0x1f8] sm:$0xff]
      %v2911 = vld [vmem:[%s3 + $0x200] sm:$0xff]
      %v2912 = vld [vmem:[%s3 + $0x208] sm:$0xff]
      %v2913 = vld [vmem:[%s3 + $0x210] sm:$0xff]
      %v2914 = vld [vmem:[%s3 + $0x218] sm:$0xff]
      %v2915 = vld [vmem:[%s3 + $0x220] sm:$0xff]
      %v2916 = vld [vmem:[%s3 + $0x228] sm:$0xff]
      %v2917 = vld [vmem:[%s3 + $0x230] sm:$0xff]
      %v2918 = vld [vmem:[%s3 + $0x238] sm:$0xff]
      %v2919 = vld [vmem:[%s3 + $0x240] sm:$0xff]
      %v2920 = vld [vmem:[%s3 + $0x248] sm:$0xff]
      %v2921 = vld [vmem:[%s3 + $0x250] sm:$0xff]
      %v2922 = vld [vmem:[%s3 + $0x258] sm:$0xff]
      %v2923 = vld [vmem:[%s3 + $0x260] sm:$0xff]
      %v2924 = vld [vmem:[%s3 + $0x268] sm:$0xff]
      %v2925 = vld [vmem:[%s3 + $0x270] sm:$0xff]
      %v2926 = vld [vmem:[%s3 + $0x278] sm:$0xff]
      %v2927 = vld [vmem:[%s3 + $0x280] sm:$0xff]
      %v2928 = vld [vmem:[%s3 + $0x288] sm:$0xff]
      %v2929 = vld [vmem:[%s3 + $0x290] sm:$0xff]
      %v2930 = vld [vmem:[%s3 + $0x298] sm:$0xff]
      %v2931 = vld [vmem:[%s3 + $0x2a0] sm:$0xff]
      %v2932 = vld [vmem:[%s3 + $0x2a8] sm:$0xff]
      %v2933 = vld [vmem:[%s3 + $0x2b0] sm:$0xff]
      %v2934 = vld [vmem:[%s3 + $0x2b8] sm:$0xff]
      %v2935 = vld [vmem:[%s3 + $0x2c0] sm:$0xff]
      %v2936 = vld [vmem:[%s3 + $0x2c8] sm:$0xff]
      %v2937 = vld [vmem:[%s3 + $0x2d0] sm:$0xff]
      %v2938 = vld [vmem:[%s3 + $0x2d8] sm:$0xff]
      %v2939 = vld [vmem:[%s3 + $0x2e0] sm:$0xff]
      %v2940 = vld [vmem:[%s3 + $0x2e8] sm:$0xff]
      %v2941 = vld [vmem:[%s3 + $0x2f0] sm:$0xff]
      %v2942 = vld [vmem:[%s3 + $0x2f8] sm:$0xff]
      %v2943 = vld [vmem:[%s3 + $0x300] sm:$0xff]
      %v2944 = vld [vmem:[%s3 + $0x308] sm:$0xff]
      %v2945 = vld [vmem:[%s3 + $0x310] sm:$0xff]
      %v2946 = vld [vmem:[%s3 + $0x318] sm:$0xff]
      %v2947 = vld [vmem:[%s3 + $0x320] sm:$0xff]
      %v2948 = vld [vmem:[%s3 + $0x328] sm:$0xff]
      %v2949 = vld [vmem:[%s3 + $0x330] sm:$0xff]
      %v2950 = vld [vmem:[%s3 + $0x338] sm:$0xff]
      %v2951 = vld [vmem:[%s3 + $0x340] sm:$0xff]
      %v2952 = vld [vmem:[%s3 + $0x348] sm:$0xff]
      %v2953 = vld [vmem:[%s3 + $0x350] sm:$0xff]
      %v2954 = vld [vmem:[%s3 + $0x358] sm:$0xff]
      %v2955 = vld [vmem:[%s3 + $0x360] sm:$0xff]
      %v2956 = vld [vmem:[%s3 + $0x368] sm:$0xff]
      %v2957 = vld [vmem:[%s3 + $0x370] sm:$0xff]
      %v2958 = vld [vmem:[%s3 + $0x378] sm:$0xff]
      %v2959 = vld [vmem:[%s3 + $0x380] sm:$0xff]
      %v2960 = vld [vmem:[%s3 + $0x388] sm:$0xff]
      %v2961 = vld [vmem:[%s3 + $0x390] sm:$0xff]
      %v2962 = vld [vmem:[%s3 + $0x398] sm:$0xff]
      %v2963 = vld [vmem:[%s3 + $0x3a0] sm:$0xff]
      %v2964 = vld [vmem:[%s3 + $0x3a8] sm:$0xff]
      %v2965 = vld [vmem:[%s3 + $0x3b0] sm:$0xff]
      %v2966 = vld [vmem:[%s3 + $0x3b8] sm:$0xff]
      %v2967 = vld [vmem:[%s3 + $0x3c0] sm:$0xff]
      %v2968 = vld [vmem:[%s3 + $0x3c8] sm:$0xff]
      %v2969 = vld [vmem:[%s3 + $0x3d0] sm:$0xff]
      %v2970 = vld [vmem:[%s3 + $0x3d8] sm:$0xff]
      %v2971 = vld [vmem:[%s3 + $0x3e0] sm:$0xff]
      %v2972 = vld [vmem:[%s3 + $0x3e8] sm:$0xff]
      %v2973 = vld [vmem:[%s3 + $0x3f0] sm:$0xff]
      %v2974 = vld [vmem:[%s3 + $0x3f8] sm:$0xff]
      %v2975 = vld [vmem:[%s3 + $0x400] sm:$0xff]
      %v2976 = vld [vmem:[%s3 + $0x408] sm:$0xff]
      %v2977 = vld [vmem:[%s3 + $0x410] sm:$0xff]
      %v2978 = vld [vmem:[%s3 + $0x418] sm:$0xff]
      %v2979 = vld [vmem:[%s3 + $0x420] sm:$0xff]
      %v2980 = vld [vmem:[%s3 + $0x428] sm:$0xff]
      %v2981 = vld [vmem:[%s3 + $0x430] sm:$0xff]
      %v2982 = vld [vmem:[%s3 + $0x438] sm:$0xff]
      %v2983 = vld [vmem:[%s3 + $0x440] sm:$0xff]
      %v2984 = vld [vmem:[%s3 + $0x448] sm:$0xff]
      %v2985 = vld [vmem:[%s3 + $0x450] sm:$0xff]
      %v2986 = vld [vmem:[%s3 + $0x458] sm:$0xff]
      %v2987 = vld [vmem:[%s3 + $0x460] sm:$0xff]
      %v2988 = vld [vmem:[%s3 + $0x468] sm:$0xff]
      %v2989 = vld [vmem:[%s3 + $0x470] sm:$0xff]
      %v2990 = vld [vmem:[%s3 + $0x478] sm:$0xff]
      %v2991 = vld [vmem:[%s3 + $0x480] sm:$0xff]
      %v2992 = vld [vmem:[%s3 + $0x488] sm:$0xff]
      %v2993 = vld [vmem:[%s3 + $0x490] sm:$0xff]
      %v2994 = vld [vmem:[%s3 + $0x498] sm:$0xff]
      %v2995 = vld [vmem:[%s3 + $0x4a0] sm:$0xff]
      %v2996 = vld [vmem:[%s3 + $0x4a8] sm:$0xff]
      %v2997 = vld [vmem:[%s3 + $0x4b0] sm:$0xff]
      %v2998 = vld [vmem:[%s3 + $0x4b8] sm:$0xff]
      %v2999 = vld [vmem:[%s3 + $0x4c0] sm:$0xff]
      %v3000 = vld [vmem:[%s3 + $0x4c8] sm:$0xff]
      %v3001 = vld [vmem:[%s3 + $0x4d0] sm:$0xff]
      %v3002 = vld [vmem:[%s3 + $0x4d8] sm:$0xff]
      %v3003 = vld [vmem:[%s3 + $0x4e0] sm:$0xff]
      %v3004 = vld [vmem:[%s3 + $0x4e8] sm:$0xff]
      %v3005 = vld [vmem:[%s3 + $0x4f0] sm:$0xff]
      %v3006 = vld [vmem:[%s3 + $0x4f8] sm:$0xff]
      %v3007 = vld [vmem:[%s3 + $0x500] sm:$0xff]
      %v3008 = vld [vmem:[%s3 + $0x508] sm:$0xff]
      %v3009 = vld [vmem:[%s3 + $0x510] sm:$0xff]
      %v3010 = vld [vmem:[%s3 + $0x518] sm:$0xff]
      %v3011 = vld [vmem:[%s3 + $0x520] sm:$0xff]
      %v3012 = vld [vmem:[%s3 + $0x528] sm:$0xff]
      %v3013 = vld [vmem:[%s3 + $0x530] sm:$0xff]
      %v3014 = vld [vmem:[%s3 + $0x538] sm:$0xff]
      %v3015 = vld [vmem:[%s3 + $0x540] sm:$0xff]
      %v3016 = vld [vmem:[%s3 + $0x548] sm:$0xff]
      %v3017 = vld [vmem:[%s3 + $0x550] sm:$0xff]
      %v3018 = vld [vmem:[%s3 + $0x558] sm:$0xff]
      %v3019 = vld [vmem:[%s3 + $0x560] sm:$0xff]
      %v3020 = vld [vmem:[%s3 + $0x568] sm:$0xff]
      %v3021 = vld [vmem:[%s3 + $0x570] sm:$0xff]
      %v3022 = vld [vmem:[%s3 + $0x578] sm:$0xff]
      %v3023 = vld [vmem:[%s3 + $0x580] sm:$0xff]
      %v3024 = vld [vmem:[%s3 + $0x588] sm:$0xff]
      %v3025 = vld [vmem:[%s3 + $0x590] sm:$0xff]
      %v3026 = vld [vmem:[%s3 + $0x598] sm:$0xff]
      %v3027 = vld [vmem:[%s3 + $0x5a0] sm:$0xff]
      %v3028 = vld [vmem:[%s3 + $0x5a8] sm:$0xff]
      %v3029 = vld [vmem:[%s3 + $0x5b0] sm:$0xff]
      %v3030 = vld [vmem:[%s3 + $0x5b8] sm:$0xff]
      %v3031 = vld [vmem:[%s3 + $0x5c0] sm:$0xff]
      %v3032 = vld [vmem:[%s3 + $0x5c8] sm:$0xff]
      %v3033 = vld [vmem:[%s3 + $0x5d0] sm:$0xff]
      %v3034 = vld [vmem:[%s3 + $0x5d8] sm:$0xff]
      %v3035 = vld [vmem:[%s3 + $0x5e0] sm:$0xff]
      %v3036 = vld [vmem:[%s3 + $0x5e8] sm:$0xff]
      %v3037 = vld [vmem:[%s3 + $0x5f0] sm:$0xff]
      %v3038 = vld [vmem:[%s3 + $0x5f8] sm:$0xff]
      %v3039 = vld [vmem:[%s3 + $0x600] sm:$0xff]
      %v3040 = vld [vmem:[%s3 + $0x608] sm:$0xff]
      %v3041 = vld [vmem:[%s3 + $0x610] sm:$0xff]
      %v3042 = vld [vmem:[%s3 + $0x618] sm:$0xff]
      %v3043 = vld [vmem:[%s3 + $0x620] sm:$0xff]
      %v3044 = vld [vmem:[%s3 + $0x628] sm:$0xff]
      %v3045 = vld [vmem:[%s3 + $0x630] sm:$0xff]
      %v3046 = vld [vmem:[%s3 + $0x638] sm:$0xff]
      %v3047 = vld [vmem:[%s3 + $0x640] sm:$0xff]
      %v3048 = vld [vmem:[%s3 + $0x648] sm:$0xff]
      %v3049 = vld [vmem:[%s3 + $0x650] sm:$0xff]
      %v3050 = vld [vmem:[%s3 + $0x658] sm:$0xff]
      %v3051 = vld [vmem:[%s3 + $0x660] sm:$0xff]
      %v3052 = vld [vmem:[%s3 + $0x668] sm:$0xff]
      %v3053 = vld [vmem:[%s3 + $0x670] sm:$0xff]
      %v3054 = vld [vmem:[%s3 + $0x678] sm:$0xff]
      %v3055 = vld [vmem:[%s3 + $0x680] sm:$0xff]
      %v3056 = vld [vmem:[%s3 + $0x688] sm:$0xff]
      %v3057 = vld [vmem:[%s3 + $0x690] sm:$0xff]
      %v3058 = vld [vmem:[%s3 + $0x698] sm:$0xff]
      %v3059 = vld [vmem:[%s3 + $0x6a0] sm:$0xff]
      %v3060 = vld [vmem:[%s3 + $0x6a8] sm:$0xff]
      %v3061 = vld [vmem:[%s3 + $0x6b0] sm:$0xff]
      %v3062 = vld [vmem:[%s3 + $0x6b8] sm:$0xff]
      %v3063 = vld [vmem:[%s3 + $0x6c0] sm:$0xff]
      %v3064 = vld [vmem:[%s3 + $0x6c8] sm:$0xff]
      %v3065 = vld [vmem:[%s3 + $0x6d0] sm:$0xff]
      %v3066 = vld [vmem:[%s3 + $0x6d8] sm:$0xff]
      %v3067 = vld [vmem:[%s3 + $0x6e0] sm:$0xff]
      %v3068 = vld [vmem:[%s3 + $0x6e8] sm:$0xff]
      %v3069 = vld [vmem:[%s3 + $0x6f0] sm:$0xff]
      %v3070 = vld [vmem:[%s3 + $0x6f8] sm:$0xff]
      %v3071 = vld [vmem:[%s4] sm:$0xff]
      %v3072 = vld [vmem:[%s4 + $0x8] sm:$0x3f]
      %v3075 = vlaneseq
      %v3076 = vshrl.u32 %v3075, 7
      %v3077 = vsub.s32 0, %v3076
      %v3078 = vrot.slane %v3071, %v3077
      %v3079 = vlaneseq
      %v3080 = vshrl.u32 %v3079, 7
      %v3081 = vsub.s32 1, %v3080
      %v3082 = vrot.slane %v3071, %v3081
      %v3083 = vlaneseq
      %v3084 = vshrl.u32 %v3083, 7
      %v3085 = vsub.s32 2, %v3084
      %v3086 = vrot.slane %v3071, %v3085
      %v3087 = vlaneseq
      %v3088 = vshrl.u32 %v3087, 7
      %v3089 = vsub.s32 3, %v3088
      %v3090 = vrot.slane %v3071, %v3089
      %v3091 = vlaneseq
      %v3092 = vshrl.u32 %v3091, 7
      %v3093 = vsub.s32 4, %v3092
      %v3094 = vrot.slane %v3071, %v3093
      %v3095 = vlaneseq
      %v3096 = vshrl.u32 %v3095, 7
      %v3097 = vsub.s32 5, %v3096
      %v3098 = vrot.slane %v3071, %v3097
      %v3099 = vlaneseq
      %v3100 = vshrl.u32 %v3099, 7
      %v3101 = vsub.s32 6, %v3100
      %v3102 = vrot.slane %v3071, %v3101
      %v3103 = vlaneseq
      %v3104 = vshrl.u32 %v3103, 7
      %v3105 = vsub.s32 7, %v3104
      %v3106 = vrot.slane %v3071, %v3105
      %v3107 = vlaneseq
      %v3108 = vshrl.u32 %v3107, 7
      %v3109 = vsub.s32 0, %v3108
      %v3110 = vrot.slane %v3072, %v3109
      %v3111 = vlaneseq
      %v3112 = vshrl.u32 %v3111, 7
      %v3113 = vsub.s32 1, %v3112
      %v3114 = vrot.slane %v3072, %v3113
      %v3115 = vlaneseq
      %v3116 = vshrl.u32 %v3115, 7
      %v3117 = vsub.s32 2, %v3116
      %v3118 = vrot.slane %v3072, %v3117
      %v3119 = vlaneseq
      %v3120 = vshrl.u32 %v3119, 7
      %v3121 = vsub.s32 3, %v3120
      %v3122 = vrot.slane %v3072, %v3121
      %v3123 = vlaneseq
      %v3124 = vshrl.u32 %v3123, 7
      %v3125 = vsub.s32 4, %v3124
      %v3126 = vrot.slane %v3072, %v3125
      %v3127 = vlaneseq
      %v3128 = vshrl.u32 %v3127, 7
      %v3129 = vsub.s32 5, %v3128
      %v3130 = vrot.slane %v3072, %v3129
      %v3369 = vunpack.c.l.b16 %v2847
      %v3370 = vunpack.c.h.b16 %v2847
      %v3371 = vunpack.c.l.b16 %v2848
      %v3372 = vunpack.c.h.b16 %v2848
      %v3373 = vunpack.c.l.b16 %v2849
      %v3374 = vunpack.c.h.b16 %v2849
      %v3375 = vunpack.c.l.b16 %v2850
      %v3376 = vunpack.c.h.b16 %v2850
      %v3377 = vunpack.c.l.b16 %v2851
      %v3378 = vunpack.c.h.b16 %v2851
      %v3379 = vunpack.c.l.b16 %v2852
      %v3380 = vunpack.c.h.b16 %v2852
      %v3381 = vunpack.c.l.b16 %v2853
      %v3382 = vunpack.c.h.b16 %v2853
      %v3383 = vunpack.c.l.b16 %v2854
      %v3384 = vunpack.c.h.b16 %v2854
      %v3385 = vunpack.c.l.b16 %v2855
      %v3386 = vunpack.c.h.b16 %v2855
      %v3387 = vunpack.c.l.b16 %v2856
      %v3388 = vunpack.c.h.b16 %v2856
      %v3389 = vunpack.c.l.b16 %v2857
      %v3390 = vunpack.c.h.b16 %v2857
      %v3391 = vunpack.c.l.b16 %v2858
      %v3392 = vunpack.c.h.b16 %v2858
      %v3393 = vunpack.c.l.b16 %v2859
      %v3394 = vunpack.c.h.b16 %v2859
      %v3395 = vunpack.c.l.b16 %v2860
      %v3396 = vunpack.c.h.b16 %v2860
      %v3397 = vunpack.c.l.b16 %v2861
      %v3398 = vunpack.c.h.b16 %v2861
      %v3399 = vunpack.c.l.b16 %v2862
      %v3400 = vunpack.c.h.b16 %v2862
      %v3401 = vunpack.c.l.b16 %v2863
      %v3402 = vunpack.c.h.b16 %v2863
      %v3403 = vunpack.c.l.b16 %v2864
      %v3404 = vunpack.c.h.b16 %v2864
      %v3405 = vunpack.c.l.b16 %v2865
      %v3406 = vunpack.c.h.b16 %v2865
      %v3407 = vunpack.c.l.b16 %v2866
      %v3408 = vunpack.c.h.b16 %v2866
      %v3409 = vunpack.c.l.b16 %v2867
      %v3410 = vunpack.c.h.b16 %v2867
      %v3411 = vunpack.c.l.b16 %v2868
      %v3412 = vunpack.c.h.b16 %v2868
      %v3413 = vunpack.c.l.b16 %v2869
      %v3414 = vunpack.c.h.b16 %v2869
      %v3415 = vunpack.c.l.b16 %v2870
      %v3416 = vunpack.c.h.b16 %v2870
      %v3417 = vunpack.c.l.b16 %v2871
      %v3418 = vunpack.c.h.b16 %v2871
      %v3419 = vunpack.c.l.b16 %v2872
      %v3420 = vunpack.c.h.b16 %v2872
      %v3421 = vunpack.c.l.b16 %v2873
      %v3422 = vunpack.c.h.b16 %v2873
      %v3423 = vunpack.c.l.b16 %v2874
      %v3424 = vunpack.c.h.b16 %v2874
      %v3425 = vunpack.c.l.b16 %v2875
      %v3426 = vunpack.c.h.b16 %v2875
      %v3427 = vunpack.c.l.b16 %v2876
      %v3428 = vunpack.c.h.b16 %v2876
      %v3429 = vunpack.c.l.b16 %v2877
      %v3430 = vunpack.c.h.b16 %v2877
      %v3431 = vunpack.c.l.b16 %v2878
      %v3432 = vunpack.c.h.b16 %v2878
      %v3433 = vunpack.c.l.b16 %v2879
      %v3434 = vunpack.c.h.b16 %v2879
      %v3435 = vunpack.c.l.b16 %v2880
      %v3436 = vunpack.c.h.b16 %v2880
      %v3437 = vunpack.c.l.b16 %v2881
      %v3438 = vunpack.c.h.b16 %v2881
      %v3439 = vunpack.c.l.b16 %v2882
      %v3440 = vunpack.c.h.b16 %v2882
      %v3441 = vunpack.c.l.b16 %v2883
      %v3442 = vunpack.c.h.b16 %v2883
      %v3443 = vunpack.c.l.b16 %v2884
      %v3444 = vunpack.c.h.b16 %v2884
      %v3445 = vunpack.c.l.b16 %v2885
      %v3446 = vunpack.c.h.b16 %v2885
      %v3447 = vunpack.c.l.b16 %v2886
      %v3448 = vunpack.c.h.b16 %v2886
      %v3449 = vunpack.c.l.b16 %v2887
      %v3450 = vunpack.c.h.b16 %v2887
      %v3451 = vunpack.c.l.b16 %v2888
      %v3452 = vunpack.c.h.b16 %v2888
      %v3453 = vunpack.c.l.b16 %v2889
      %v3454 = vunpack.c.h.b16 %v2889
      %v3455 = vunpack.c.l.b16 %v2890
      %v3456 = vunpack.c.h.b16 %v2890
      %v3457 = vunpack.c.l.b16 %v2891
      %v3458 = vunpack.c.h.b16 %v2891
      %v3459 = vunpack.c.l.b16 %v2892
      %v3460 = vunpack.c.h.b16 %v2892
      %v3461 = vunpack.c.l.b16 %v2893
      %v3462 = vunpack.c.h.b16 %v2893
      %v3463 = vunpack.c.l.b16 %v2894
      %v3464 = vunpack.c.h.b16 %v2894
      %v3465 = vunpack.c.l.b16 %v2895
      %v3466 = vunpack.c.h.b16 %v2895
      %v3467 = vunpack.c.l.b16 %v2896
      %v3468 = vunpack.c.h.b16 %v2896
      %v3469 = vunpack.c.l.b16 %v2897
      %v3470 = vunpack.c.h.b16 %v2897
      %v3471 = vunpack.c.l.b16 %v2898
      %v3472 = vunpack.c.h.b16 %v2898
      %v3473 = vunpack.c.l.b16 %v2899
      %v3474 = vunpack.c.h.b16 %v2899
      %v3475 = vunpack.c.l.b16 %v2900
      %v3476 = vunpack.c.h.b16 %v2900
      %v3477 = vunpack.c.l.b16 %v2901
      %v3478 = vunpack.c.h.b16 %v2901
      %v3479 = vunpack.c.l.b16 %v2902
      %v3480 = vunpack.c.h.b16 %v2902
      %v3481 = vunpack.c.l.b16 %v2903
      %v3482 = vunpack.c.h.b16 %v2903
      %v3483 = vunpack.c.l.b16 %v2904
      %v3484 = vunpack.c.h.b16 %v2904
      %v3485 = vunpack.c.l.b16 %v2905
      %v3486 = vunpack.c.h.b16 %v2905
      %v3487 = vunpack.c.l.b16 %v2906
      %v3488 = vunpack.c.h.b16 %v2906
      %v3489 = vunpack.c.l.b16 %v2907
      %v3490 = vunpack.c.h.b16 %v2907
      %v3491 = vunpack.c.l.b16 %v2908
      %v3492 = vunpack.c.h.b16 %v2908
      %v3493 = vunpack.c.l.b16 %v2909
      %v3494 = vunpack.c.h.b16 %v2909
      %v3495 = vunpack.c.l.b16 %v2910
      %v3496 = vunpack.c.h.b16 %v2910
      %v3497 = vunpack.c.l.b16 %v2911
      %v3498 = vunpack.c.h.b16 %v2911
      %v3499 = vunpack.c.l.b16 %v2912
      %v3500 = vunpack.c.h.b16 %v2912
      %v3501 = vunpack.c.l.b16 %v2913
      %v3502 = vunpack.c.h.b16 %v2913
      %v3503 = vunpack.c.l.b16 %v2914
      %v3504 = vunpack.c.h.b16 %v2914
      %v3505 = vunpack.c.l.b16 %v2915
      %v3506 = vunpack.c.h.b16 %v2915
      %v3507 = vunpack.c.l.b16 %v2916
      %v3508 = vunpack.c.h.b16 %v2916
      %v3509 = vunpack.c.l.b16 %v2917
      %v3510 = vunpack.c.h.b16 %v2917
      %v3511 = vunpack.c.l.b16 %v2918
      %v3512 = vunpack.c.h.b16 %v2918
      %v3513 = vunpack.c.l.b16 %v2919
      %v3514 = vunpack.c.h.b16 %v2919
      %v3515 = vunpack.c.l.b16 %v2920
      %v3516 = vunpack.c.h.b16 %v2920
      %v3517 = vunpack.c.l.b16 %v2921
      %v3518 = vunpack.c.h.b16 %v2921
      %v3519 = vunpack.c.l.b16 %v2922
      %v3520 = vunpack.c.h.b16 %v2922
      %v3521 = vunpack.c.l.b16 %v2923
      %v3522 = vunpack.c.h.b16 %v2923
      %v3523 = vunpack.c.l.b16 %v2924
      %v3524 = vunpack.c.h.b16 %v2924
      %v3525 = vunpack.c.l.b16 %v2925
      %v3526 = vunpack.c.h.b16 %v2925
      %v3527 = vunpack.c.l.b16 %v2926
      %v3528 = vunpack.c.h.b16 %v2926
      %v3529 = vunpack.c.l.b16 %v2927
      %v3530 = vunpack.c.h.b16 %v2927
      %v3531 = vunpack.c.l.b16 %v2928
      %v3532 = vunpack.c.h.b16 %v2928
      %v3533 = vunpack.c.l.b16 %v2929
      %v3534 = vunpack.c.h.b16 %v2929
      %v3535 = vunpack.c.l.b16 %v2930
      %v3536 = vunpack.c.h.b16 %v2930
      %v3537 = vunpack.c.l.b16 %v2931
      %v3538 = vunpack.c.h.b16 %v2931
      %v3539 = vunpack.c.l.b16 %v2932
      %v3540 = vunpack.c.h.b16 %v2932
      %v3541 = vunpack.c.l.b16 %v2933
      %v3542 = vunpack.c.h.b16 %v2933
      %v3543 = vunpack.c.l.b16 %v2934
      %v3544 = vunpack.c.h.b16 %v2934
      %v3545 = vunpack.c.l.b16 %v2935
      %v3546 = vunpack.c.h.b16 %v2935
      %v3547 = vunpack.c.l.b16 %v2936
      %v3548 = vunpack.c.h.b16 %v2936
      %v3549 = vunpack.c.l.b16 %v2937
      %v3550 = vunpack.c.h.b16 %v2937
      %v3551 = vunpack.c.l.b16 %v2938
      %v3552 = vunpack.c.h.b16 %v2938
      %v3553 = vunpack.c.l.b16 %v2939
      %v3554 = vunpack.c.h.b16 %v2939
      %v3555 = vunpack.c.l.b16 %v2940
      %v3556 = vunpack.c.h.b16 %v2940
      %v3557 = vunpack.c.l.b16 %v2941
      %v3558 = vunpack.c.h.b16 %v2941
      %v3559 = vunpack.c.l.b16 %v2942
      %v3560 = vunpack.c.h.b16 %v2942
      %v3561 = vunpack.c.l.b16 %v2943
      %v3562 = vunpack.c.h.b16 %v2943
      %v3563 = vunpack.c.l.b16 %v2944
      %v3564 = vunpack.c.h.b16 %v2944
      %v3565 = vunpack.c.l.b16 %v2945
      %v3566 = vunpack.c.h.b16 %v2945
      %v3567 = vunpack.c.l.b16 %v2946
      %v3568 = vunpack.c.h.b16 %v2946
      %v3569 = vunpack.c.l.b16 %v2947
      %v3570 = vunpack.c.h.b16 %v2947
      %v3571 = vunpack.c.l.b16 %v2948
      %v3572 = vunpack.c.h.b16 %v2948
      %v3573 = vunpack.c.l.b16 %v2949
      %v3574 = vunpack.c.h.b16 %v2949
      %v3575 = vunpack.c.l.b16 %v2950
      %v3576 = vunpack.c.h.b16 %v2950
      %v3577 = vunpack.c.l.b16 %v2951
      %v3578 = vunpack.c.h.b16 %v2951
      %v3579 = vunpack.c.l.b16 %v2952
      %v3580 = vunpack.c.h.b16 %v2952
      %v3581 = vunpack.c.l.b16 %v2953
      %v3582 = vunpack.c.h.b16 %v2953
      %v3583 = vunpack.c.l.b16 %v2954
      %v3584 = vunpack.c.h.b16 %v2954
      %v3585 = vunpack.c.l.b16 %v2955
      %v3586 = vunpack.c.h.b16 %v2955
      %v3587 = vunpack.c.l.b16 %v2956
      %v3588 = vunpack.c.h.b16 %v2956
      %v3589 = vunpack.c.l.b16 %v2957
      %v3590 = vunpack.c.h.b16 %v2957
      %v3591 = vunpack.c.l.b16 %v2958
      %v3592 = vunpack.c.h.b16 %v2958
      %v3593 = vunpack.c.l.b16 %v2959
      %v3594 = vunpack.c.h.b16 %v2959
      %v3595 = vunpack.c.l.b16 %v2960
      %v3596 = vunpack.c.h.b16 %v2960
      %v3597 = vunpack.c.l.b16 %v2961
      %v3598 = vunpack.c.h.b16 %v2961
      %v3599 = vunpack.c.l.b16 %v2962
      %v3600 = vunpack.c.h.b16 %v2962
      %v3601 = vunpack.c.l.b16 %v2963
      %v3602 = vunpack.c.h.b16 %v2963
      %v3603 = vunpack.c.l.b16 %v2964
      %v3604 = vunpack.c.h.b16 %v2964
      %v3605 = vunpack.c.l.b16 %v2965
      %v3606 = vunpack.c.h.b16 %v2965
      %v3607 = vunpack.c.l.b16 %v2966
      %v3608 = vunpack.c.h.b16 %v2966
      %v3609 = vunpack.c.l.b16 %v2967
      %v3610 = vunpack.c.h.b16 %v2967
      %v3611 = vunpack.c.l.b16 %v2968
      %v3612 = vunpack.c.h.b16 %v2968
      %v3613 = vunpack.c.l.b16 %v2969
      %v3614 = vunpack.c.h.b16 %v2969
      %v3615 = vunpack.c.l.b16 %v2970
      %v3616 = vunpack.c.h.b16 %v2970
      %v3617 = vunpack.c.l.b16 %v2971
      %v3618 = vunpack.c.h.b16 %v2971
      %v3619 = vunpack.c.l.b16 %v2972
      %v3620 = vunpack.c.h.b16 %v2972
      %v3621 = vunpack.c.l.b16 %v2973
      %v3622 = vunpack.c.h.b16 %v2973
      %v3623 = vunpack.c.l.b16 %v2974
      %v3624 = vunpack.c.h.b16 %v2974
      %v3625 = vunpack.c.l.b16 %v2975
      %v3626 = vunpack.c.h.b16 %v2975
      %v3627 = vunpack.c.l.b16 %v2976
      %v3628 = vunpack.c.h.b16 %v2976
      %v3629 = vunpack.c.l.b16 %v2977
      %v3630 = vunpack.c.h.b16 %v2977
      %v3631 = vunpack.c.l.b16 %v2978
      %v3632 = vunpack.c.h.b16 %v2978
      %v3633 = vunpack.c.l.b16 %v2979
      %v3634 = vunpack.c.h.b16 %v2979
      %v3635 = vunpack.c.l.b16 %v2980
      %v3636 = vunpack.c.h.b16 %v2980
      %v3637 = vunpack.c.l.b16 %v2981
      %v3638 = vunpack.c.h.b16 %v2981
      %v3639 = vunpack.c.l.b16 %v2982
      %v3640 = vunpack.c.h.b16 %v2982
      %v3641 = vunpack.c.l.b16 %v2983
      %v3642 = vunpack.c.h.b16 %v2983
      %v3643 = vunpack.c.l.b16 %v2984
      %v3644 = vunpack.c.h.b16 %v2984
      %v3645 = vunpack.c.l.b16 %v2985
      %v3646 = vunpack.c.h.b16 %v2985
      %v3647 = vunpack.c.l.b16 %v2986
      %v3648 = vunpack.c.h.b16 %v2986
      %v3649 = vunpack.c.l.b16 %v2987
      %v3650 = vunpack.c.h.b16 %v2987
      %v3651 = vunpack.c.l.b16 %v2988
      %v3652 = vunpack.c.h.b16 %v2988
      %v3653 = vunpack.c.l.b16 %v2989
      %v3654 = vunpack.c.h.b16 %v2989
      %v3655 = vunpack.c.l.b16 %v2990
      %v3656 = vunpack.c.h.b16 %v2990
      %v3657 = vunpack.c.l.b16 %v2991
      %v3658 = vunpack.c.h.b16 %v2991
      %v3659 = vunpack.c.l.b16 %v2992
      %v3660 = vunpack.c.h.b16 %v2992
      %v3661 = vunpack.c.l.b16 %v2993
      %v3662 = vunpack.c.h.b16 %v2993
      %v3663 = vunpack.c.l.b16 %v2994
      %v3664 = vunpack.c.h.b16 %v2994
      %v3665 = vunpack.c.l.b16 %v2995
      %v3666 = vunpack.c.h.b16 %v2995
      %v3667 = vunpack.c.l.b16 %v2996
      %v3668 = vunpack.c.h.b16 %v2996
      %v3669 = vunpack.c.l.b16 %v2997
      %v3670 = vunpack.c.h.b16 %v2997
      %v3671 = vunpack.c.l.b16 %v2998
      %v3672 = vunpack.c.h.b16 %v2998
      %v3673 = vunpack.c.l.b16 %v2999
      %v3674 = vunpack.c.h.b16 %v2999
      %v3675 = vunpack.c.l.b16 %v3000
      %v3676 = vunpack.c.h.b16 %v3000
      %v3677 = vunpack.c.l.b16 %v3001
      %v3678 = vunpack.c.h.b16 %v3001
      %v3679 = vunpack.c.l.b16 %v3002
      %v3680 = vunpack.c.h.b16 %v3002
      %v3681 = vunpack.c.l.b16 %v3003
      %v3682 = vunpack.c.h.b16 %v3003
      %v3683 = vunpack.c.l.b16 %v3004
      %v3684 = vunpack.c.h.b16 %v3004
      %v3685 = vunpack.c.l.b16 %v3005
      %v3686 = vunpack.c.h.b16 %v3005
      %v3687 = vunpack.c.l.b16 %v3006
      %v3688 = vunpack.c.h.b16 %v3006
      %v3689 = vunpack.c.l.b16 %v3007
      %v3690 = vunpack.c.h.b16 %v3007
      %v3691 = vunpack.c.l.b16 %v3008
      %v3692 = vunpack.c.h.b16 %v3008
      %v3693 = vunpack.c.l.b16 %v3009
      %v3694 = vunpack.c.h.b16 %v3009
      %v3695 = vunpack.c.l.b16 %v3010
      %v3696 = vunpack.c.h.b16 %v3010
      %v3697 = vunpack.c.l.b16 %v3011
      %v3698 = vunpack.c.h.b16 %v3011
      %v3699 = vunpack.c.l.b16 %v3012
      %v3700 = vunpack.c.h.b16 %v3012
      %v3701 = vunpack.c.l.b16 %v3013
      %v3702 = vunpack.c.h.b16 %v3013
      %v3703 = vunpack.c.l.b16 %v3014
      %v3704 = vunpack.c.h.b16 %v3014
      %v3705 = vunpack.c.l.b16 %v3015
      %v3706 = vunpack.c.h.b16 %v3015
      %v3707 = vunpack.c.l.b16 %v3016
      %v3708 = vunpack.c.h.b16 %v3016
      %v3709 = vunpack.c.l.b16 %v3017
      %v3710 = vunpack.c.h.b16 %v3017
      %v3711 = vunpack.c.l.b16 %v3018
      %v3712 = vunpack.c.h.b16 %v3018
      %v3713 = vunpack.c.l.b16 %v3019
      %v3714 = vunpack.c.h.b16 %v3019
      %v3715 = vunpack.c.l.b16 %v3020
      %v3716 = vunpack.c.h.b16 %v3020
      %v3717 = vunpack.c.l.b16 %v3021
      %v3718 = vunpack.c.h.b16 %v3021
      %v3719 = vunpack.c.l.b16 %v3022
      %v3720 = vunpack.c.h.b16 %v3022
      %v3721 = vunpack.c.l.b16 %v3023
      %v3722 = vunpack.c.h.b16 %v3023
      %v3723 = vunpack.c.l.b16 %v3024
      %v3724 = vunpack.c.h.b16 %v3024
      %v3725 = vunpack.c.l.b16 %v3025
      %v3726 = vunpack.c.h.b16 %v3025
      %v3727 = vunpack.c.l.b16 %v3026
      %v3728 = vunpack.c.h.b16 %v3026
      %v3729 = vunpack.c.l.b16 %v3027
      %v3730 = vunpack.c.h.b16 %v3027
      %v3731 = vunpack.c.l.b16 %v3028
      %v3732 = vunpack.c.h.b16 %v3028
      %v3733 = vunpack.c.l.b16 %v3029
      %v3734 = vunpack.c.h.b16 %v3029
      %v3735 = vunpack.c.l.b16 %v3030
      %v3736 = vunpack.c.h.b16 %v3030
      %v3737 = vunpack.c.l.b16 %v3031
      %v3738 = vunpack.c.h.b16 %v3031
      %v3739 = vunpack.c.l.b16 %v3032
      %v3740 = vunpack.c.h.b16 %v3032
      %v3741 = vunpack.c.l.b16 %v3033
      %v3742 = vunpack.c.h.b16 %v3033
      %v3743 = vunpack.c.l.b16 %v3034
      %v3744 = vunpack.c.h.b16 %v3034
      %v3745 = vunpack.c.l.b16 %v3035
      %v3746 = vunpack.c.h.b16 %v3035
      %v3747 = vunpack.c.l.b16 %v3036
      %v3748 = vunpack.c.h.b16 %v3036
      %v3749 = vunpack.c.l.b16 %v3037
      %v3750 = vunpack.c.h.b16 %v3037
      %v3751 = vunpack.c.l.b16 %v3038
      %v3752 = vunpack.c.h.b16 %v3038
      %v3753 = vunpack.c.l.b16 %v3039
      %v3754 = vunpack.c.h.b16 %v3039
      %v3755 = vunpack.c.l.b16 %v3040
      %v3756 = vunpack.c.h.b16 %v3040
      %v3757 = vunpack.c.l.b16 %v3041
      %v3758 = vunpack.c.h.b16 %v3041
      %v3759 = vunpack.c.l.b16 %v3042
      %v3760 = vunpack.c.h.b16 %v3042
      %v3761 = vunpack.c.l.b16 %v3043
      %v3762 = vunpack.c.h.b16 %v3043
      %v3763 = vunpack.c.l.b16 %v3044
      %v3764 = vunpack.c.h.b16 %v3044
      %v3765 = vunpack.c.l.b16 %v3045
      %v3766 = vunpack.c.h.b16 %v3045
      %v3767 = vunpack.c.l.b16 %v3046
      %v3768 = vunpack.c.h.b16 %v3046
      %v3769 = vunpack.c.l.b16 %v3047
      %v3770 = vunpack.c.h.b16 %v3047
      %v3771 = vunpack.c.l.b16 %v3048
      %v3772 = vunpack.c.h.b16 %v3048
      %v3773 = vunpack.c.l.b16 %v3049
      %v3774 = vunpack.c.h.b16 %v3049
      %v3775 = vunpack.c.l.b16 %v3050
      %v3776 = vunpack.c.h.b16 %v3050
      %v3777 = vunpack.c.l.b16 %v3051
      %v3778 = vunpack.c.h.b16 %v3051
      %v3779 = vunpack.c.l.b16 %v3052
      %v3780 = vunpack.c.h.b16 %v3052
      %v3781 = vunpack.c.l.b16 %v3053
      %v3782 = vunpack.c.h.b16 %v3053
      %v3783 = vunpack.c.l.b16 %v3054
      %v3784 = vunpack.c.h.b16 %v3054
      %v3785 = vunpack.c.l.b16 %v3055
      %v3786 = vunpack.c.h.b16 %v3055
      %v3787 = vunpack.c.l.b16 %v3056
      %v3788 = vunpack.c.h.b16 %v3056
      %v3789 = vunpack.c.l.b16 %v3057
      %v3790 = vunpack.c.h.b16 %v3057
      %v3791 = vunpack.c.l.b16 %v3058
      %v3792 = vunpack.c.h.b16 %v3058
      %v3793 = vunpack.c.l.b16 %v3059
      %v3794 = vunpack.c.h.b16 %v3059
      %v3795 = vunpack.c.l.b16 %v3060
      %v3796 = vunpack.c.h.b16 %v3060
      %v3797 = vunpack.c.l.b16 %v3061
      %v3798 = vunpack.c.h.b16 %v3061
      %v3799 = vunpack.c.l.b16 %v3062
      %v3800 = vunpack.c.h.b16 %v3062
      %v3801 = vunpack.c.l.b16 %v3063
      %v3802 = vunpack.c.h.b16 %v3063
      %v3803 = vunpack.c.l.b16 %v3064
      %v3804 = vunpack.c.h.b16 %v3064
      %v3805 = vunpack.c.l.b16 %v3065
      %v3806 = vunpack.c.h.b16 %v3065
      %v3807 = vunpack.c.l.b16 %v3066
      %v3808 = vunpack.c.h.b16 %v3066
      %v3809 = vunpack.c.l.b16 %v3067
      %v3810 = vunpack.c.h.b16 %v3067
      %v3811 = vunpack.c.l.b16 %v3068
      %v3812 = vunpack.c.h.b16 %v3068
      %v3813 = vunpack.c.l.b16 %v3069
      %v3814 = vunpack.c.h.b16 %v3069
      %v3815 = vunpack.c.l.b16 %v3070
      %v3816 = vunpack.c.h.b16 %v3070
      %v3817 = vpack.c.b16 %v3383, %v3369
      %v3818 = vpack.c.b16 %v3384, %v3370
      %v3819 = vpack.c.b16 %v3385, %v3371
      %v3820 = vpack.c.b16 %v3386, %v3372
      %v3821 = vpack.c.b16 %v3387, %v3373
      %v3822 = vpack.c.b16 %v3388, %v3374
      %v3823 = vpack.c.b16 %v3389, %v3375
      %v3824 = vpack.c.b16 %v3390, %v3376
      %v3825 = vpack.c.b16 %v3391, %v3377
      %v3826 = vpack.c.b16 %v3392, %v3378
      %v3827 = vpack.c.b16 %v3393, %v3379
      %v3828 = vpack.c.b16 %v3394, %v3380
      %v3829 = vpack.c.b16 %v3395, %v3381
      %v3830 = vpack.c.b16 %v3396, %v3382
      %v3831 = vpack.c.b16 %v3411, %v3397
      %v3832 = vpack.c.b16 %v3412, %v3398
      %v3833 = vpack.c.b16 %v3413, %v3399
      %v3834 = vpack.c.b16 %v3414, %v3400
      %v3835 = vpack.c.b16 %v3415, %v3401
      %v3836 = vpack.c.b16 %v3416, %v3402
      %v3837 = vpack.c.b16 %v3417, %v3403
      %v3838 = vpack.c.b16 %v3418, %v3404
      %v3839 = vpack.c.b16 %v3419, %v3405
      %v3840 = vpack.c.b16 %v3420, %v3406
      %v3841 = vpack.c.b16 %v3421, %v3407
      %v3842 = vpack.c.b16 %v3422, %v3408
      %v3843 = vpack.c.b16 %v3423, %v3409
      %v3844 = vpack.c.b16 %v3424, %v3410
      %v3845 = vpack.c.b16 %v3439, %v3425
      %v3846 = vpack.c.b16 %v3440, %v3426
      %v3847 = vpack.c.b16 %v3441, %v3427
      %v3848 = vpack.c.b16 %v3442, %v3428
      %v3849 = vpack.c.b16 %v3443, %v3429
      %v3850 = vpack.c.b16 %v3444, %v3430
      %v3851 = vpack.c.b16 %v3445, %v3431
      %v3852 = vpack.c.b16 %v3446, %v3432
      %v3853 = vpack.c.b16 %v3447, %v3433
      %v3854 = vpack.c.b16 %v3448, %v3434
      %v3855 = vpack.c.b16 %v3449, %v3435
      %v3856 = vpack.c.b16 %v3450, %v3436
      %v3857 = vpack.c.b16 %v3451, %v3437
      %v3858 = vpack.c.b16 %v3452, %v3438
      %v3859 = vpack.c.b16 %v3467, %v3453
      %v3860 = vpack.c.b16 %v3468, %v3454
      %v3861 = vpack.c.b16 %v3469, %v3455
      %v3862 = vpack.c.b16 %v3470, %v3456
      %v3863 = vpack.c.b16 %v3471, %v3457
      %v3864 = vpack.c.b16 %v3472, %v3458
      %v3865 = vpack.c.b16 %v3473, %v3459
      %v3866 = vpack.c.b16 %v3474, %v3460
      %v3867 = vpack.c.b16 %v3475, %v3461
      %v3868 = vpack.c.b16 %v3476, %v3462
      %v3869 = vpack.c.b16 %v3477, %v3463
      %v3870 = vpack.c.b16 %v3478, %v3464
      %v3871 = vpack.c.b16 %v3479, %v3465
      %v3872 = vpack.c.b16 %v3480, %v3466
      %v3873 = vpack.c.b16 %v3495, %v3481
      %v3874 = vpack.c.b16 %v3496, %v3482
      %v3875 = vpack.c.b16 %v3497, %v3483
      %v3876 = vpack.c.b16 %v3498, %v3484
      %v3877 = vpack.c.b16 %v3499, %v3485
      %v3878 = vpack.c.b16 %v3500, %v3486
      %v3879 = vpack.c.b16 %v3501, %v3487
      %v3880 = vpack.c.b16 %v3502, %v3488
      %v3881 = vpack.c.b16 %v3503, %v3489
      %v3882 = vpack.c.b16 %v3504, %v3490
      %v3883 = vpack.c.b16 %v3505, %v3491
      %v3884 = vpack.c.b16 %v3506, %v3492
      %v3885 = vpack.c.b16 %v3507, %v3493
      %v3886 = vpack.c.b16 %v3508, %v3494
      %v3887 = vpack.c.b16 %v3523, %v3509
      %v3888 = vpack.c.b16 %v3524, %v3510
      %v3889 = vpack.c.b16 %v3525, %v3511
      %v3890 = vpack.c.b16 %v3526, %v3512
      %v3891 = vpack.c.b16 %v3527, %v3513
      %v3892 = vpack.c.b16 %v3528, %v3514
      %v3893 = vpack.c.b16 %v3529, %v3515
      %v3894 = vpack.c.b16 %v3530, %v3516
      %v3895 = vpack.c.b16 %v3531, %v3517
      %v3896 = vpack.c.b16 %v3532, %v3518
      %v3897 = vpack.c.b16 %v3533, %v3519
      %v3898 = vpack.c.b16 %v3534, %v3520
      %v3899 = vpack.c.b16 %v3535, %v3521
      %v3900 = vpack.c.b16 %v3536, %v3522
      %v3901 = vpack.c.b16 %v3551, %v3537
      %v3902 = vpack.c.b16 %v3552, %v3538
      %v3903 = vpack.c.b16 %v3553, %v3539
      %v3904 = vpack.c.b16 %v3554, %v3540
      %v3905 = vpack.c.b16 %v3555, %v3541
      %v3906 = vpack.c.b16 %v3556, %v3542
      %v3907 = vpack.c.b16 %v3557, %v3543
      %v3908 = vpack.c.b16 %v3558, %v3544
      %v3909 = vpack.c.b16 %v3559, %v3545
      %v3910 = vpack.c.b16 %v3560, %v3546
      %v3911 = vpack.c.b16 %v3561, %v3547
      %v3912 = vpack.c.b16 %v3562, %v3548
      %v3913 = vpack.c.b16 %v3563, %v3549
      %v3914 = vpack.c.b16 %v3564, %v3550
      %v3915 = vpack.c.b16 %v3579, %v3565
      %v3916 = vpack.c.b16 %v3580, %v3566
      %v3917 = vpack.c.b16 %v3581, %v3567
      %v3918 = vpack.c.b16 %v3582, %v3568
      %v3919 = vpack.c.b16 %v3583, %v3569
      %v3920 = vpack.c.b16 %v3584, %v3570
      %v3921 = vpack.c.b16 %v3585, %v3571
      %v3922 = vpack.c.b16 %v3586, %v3572
      %v3923 = vpack.c.b16 %v3587, %v3573
      %v3924 = vpack.c.b16 %v3588, %v3574
      %v3925 = vpack.c.b16 %v3589, %v3575
      %v3926 = vpack.c.b16 %v3590, %v3576
      %v3927 = vpack.c.b16 %v3591, %v3577
      %v3928 = vpack.c.b16 %v3592, %v3578
      %v3929 = vpack.c.b16 %v3607, %v3593
      %v3930 = vpack.c.b16 %v3608, %v3594
      %v3931 = vpack.c.b16 %v3609, %v3595
      %v3932 = vpack.c.b16 %v3610, %v3596
      %v3933 = vpack.c.b16 %v3611, %v3597
      %v3934 = vpack.c.b16 %v3612, %v3598
      %v3935 = vpack.c.b16 %v3613, %v3599
      %v3936 = vpack.c.b16 %v3614, %v3600
      %v3937 = vpack.c.b16 %v3615, %v3601
      %v3938 = vpack.c.b16 %v3616, %v3602
      %v3939 = vpack.c.b16 %v3617, %v3603
      %v3940 = vpack.c.b16 %v3618, %v3604
      %v3941 = vpack.c.b16 %v3619, %v3605
      %v3942 = vpack.c.b16 %v3620, %v3606
      %v3943 = vpack.c.b16 %v3635, %v3621
      %v3944 = vpack.c.b16 %v3636, %v3622
      %v3945 = vpack.c.b16 %v3637, %v3623
      %v3946 = vpack.c.b16 %v3638, %v3624
      %v3947 = vpack.c.b16 %v3639, %v3625
      %v3948 = vpack.c.b16 %v3640, %v3626
      %v3949 = vpack.c.b16 %v3641, %v3627
      %v3950 = vpack.c.b16 %v3642, %v3628
      %v3951 = vpack.c.b16 %v3643, %v3629
      %v3952 = vpack.c.b16 %v3644, %v3630
      %v3953 = vpack.c.b16 %v3645, %v3631
      %v3954 = vpack.c.b16 %v3646, %v3632
      %v3955 = vpack.c.b16 %v3647, %v3633
      %v3956 = vpack.c.b16 %v3648, %v3634
      %v3957 = vpack.c.b16 %v3663, %v3649
      %v3958 = vpack.c.b16 %v3664, %v3650
      %v3959 = vpack.c.b16 %v3665, %v3651
      %v3960 = vpack.c.b16 %v3666, %v3652
      %v3961 = vpack.c.b16 %v3667, %v3653
      %v3962 = vpack.c.b16 %v3668, %v3654
      %v3963 = vpack.c.b16 %v3669, %v3655
      %v3964 = vpack.c.b16 %v3670, %v3656
      %v3965 = vpack.c.b16 %v3671, %v3657
      %v3966 = vpack.c.b16 %v3672, %v3658
      %v3967 = vpack.c.b16 %v3673, %v3659
      %v3968 = vpack.c.b16 %v3674, %v3660
      %v3969 = vpack.c.b16 %v3675, %v3661
      %v3970 = vpack.c.b16 %v3676, %v3662
      %v3971 = vpack.c.b16 %v3691, %v3677
      %v3972 = vpack.c.b16 %v3692, %v3678
      %v3973 = vpack.c.b16 %v3693, %v3679
      %v3974 = vpack.c.b16 %v3694, %v3680
      %v3975 = vpack.c.b16 %v3695, %v3681
      %v3976 = vpack.c.b16 %v3696, %v3682
      %v3977 = vpack.c.b16 %v3697, %v3683
      %v3978 = vpack.c.b16 %v3698, %v3684
      %v3979 = vpack.c.b16 %v3699, %v3685
      %v3980 = vpack.c.b16 %v3700, %v3686
      %v3981 = vpack.c.b16 %v3701, %v3687
      %v3982 = vpack.c.b16 %v3702, %v3688
      %v3983 = vpack.c.b16 %v3703, %v3689
      %v3984 = vpack.c.b16 %v3704, %v3690
      %v3985 = vpack.c.b16 %v3719, %v3705
      %v3986 = vpack.c.b16 %v3720, %v3706
      %v3987 = vpack.c.b16 %v3721, %v3707
      %v3988 = vpack.c.b16 %v3722, %v3708
      %v3989 = vpack.c.b16 %v3723, %v3709
      %v3990 = vpack.c.b16 %v3724, %v3710
      %v3991 = vpack.c.b16 %v3725, %v3711
      %v3992 = vpack.c.b16 %v3726, %v3712
      %v3993 = vpack.c.b16 %v3727, %v3713
      %v3994 = vpack.c.b16 %v3728, %v3714
      %v3995 = vpack.c.b16 %v3729, %v3715
      %v3996 = vpack.c.b16 %v3730, %v3716
      %v3997 = vpack.c.b16 %v3731, %v3717
      %v3998 = vpack.c.b16 %v3732, %v3718
      %v3999 = vpack.c.b16 %v3747, %v3733
      %v4000 = vpack.c.b16 %v3748, %v3734
      %v4001 = vpack.c.b16 %v3749, %v3735
      %v4002 = vpack.c.b16 %v3750, %v3736
      %v4003 = vpack.c.b16 %v3751, %v3737
      %v4004 = vpack.c.b16 %v3752, %v3738
      %v4005 = vpack.c.b16 %v3753, %v3739
      %v4006 = vpack.c.b16 %v3754, %v3740
      %v4007 = vpack.c.b16 %v3755, %v3741
      %v4008 = vpack.c.b16 %v3756, %v3742
      %v4009 = vpack.c.b16 %v3757, %v3743
      %v4010 = vpack.c.b16 %v3758, %v3744
      %v4011 = vpack.c.b16 %v3759, %v3745
      %v4012 = vpack.c.b16 %v3760, %v3746
      %v4013 = vpack.c.b16 %v3775, %v3761
      %v4014 = vpack.c.b16 %v3776, %v3762
      %v4015 = vpack.c.b16 %v3777, %v3763
      %v4016 = vpack.c.b16 %v3778, %v3764
      %v4017 = vpack.c.b16 %v3779, %v3765
      %v4018 = vpack.c.b16 %v3780, %v3766
      %v4019 = vpack.c.b16 %v3781, %v3767
      %v4020 = vpack.c.b16 %v3782, %v3768
      %v4021 = vpack.c.b16 %v3783, %v3769
      %v4022 = vpack.c.b16 %v3784, %v3770
      %v4023 = vpack.c.b16 %v3785, %v3771
      %v4024 = vpack.c.b16 %v3786, %v3772
      %v4025 = vpack.c.b16 %v3787, %v3773
      %v4026 = vpack.c.b16 %v3788, %v3774
      %v4027 = vpack.c.b16 %v3803, %v3789
      %v4028 = vpack.c.b16 %v3804, %v3790
      %v4029 = vpack.c.b16 %v3805, %v3791
      %v4030 = vpack.c.b16 %v3806, %v3792
      %v4031 = vpack.c.b16 %v3807, %v3793
      %v4032 = vpack.c.b16 %v3808, %v3794
      %v4033 = vpack.c.b16 %v3809, %v3795
      %v4034 = vpack.c.b16 %v3810, %v3796
      %v4035 = vpack.c.b16 %v3811, %v3797
      %v4036 = vpack.c.b16 %v3812, %v3798
      %v4037 = vpack.c.b16 %v3813, %v3799
      %v4038 = vpack.c.b16 %v3814, %v3800
      %v4039 = vpack.c.b16 %v3815, %v3801
      %v4040 = vpack.c.b16 %v3816, %v3802
      %4265 = vmatprep.subr.bf16.mxu0 %v3916
      %4266 = vmatpush1.bf16.msra.mxu0 %v3915
      %4267 = vmatprep.subr.bf16.mxu0 %v3902
      %4268 = vmatpush1.bf16.msra.mxu0 %v3901
      %4269 = vmatprep.subr.bf16.mxu0 %v3888
      %4270 = vmatpush1.bf16.msra.mxu0 %v3887
      %4271 = vmatprep.subr.bf16.mxu0 %v3874
      %4272 = vmatpush1.bf16.msra.mxu0 %v3873
      %4273 = vmatprep.subr.bf16.mxu0 %v3860
      %4274 = vmatpush1.bf16.msra.mxu0 %v3859
      %4275 = vmatprep.subr.bf16.mxu0 %v3846
      %4276 = vmatpush1.bf16.msra.mxu0 %v3845
      %4277 = vmatprep.subr.bf16.mxu0 %v3832
      %4278 = vmatpush1.bf16.msra.mxu0 %v3831
      %4279 = vmatprep.subr.bf16.mxu0 %v3818
      %4280 = vmatpush1.bf16.msra.mxu0 %v3817
      %4281 = vmatprep.subr.bf16.mxu0 %v4028
      %4282 = vmatpush2.bf16.msra.mxu0 %v4027
      %4283 = vmatprep.subr.bf16.mxu0 %v4014
      %4284 = vmatpush2.bf16.msra.mxu0 %v4013
      %4285 = vmatprep.subr.bf16.mxu0 %v4000
      %4286 = vmatpush2.bf16.msra.mxu0 %v3999
      %4287 = vmatprep.subr.bf16.mxu0 %v3986
      %4288 = vmatpush2.bf16.msra.mxu0 %v3985
      %4289 = vmatprep.subr.bf16.mxu0 %v3972
      %4290 = vmatpush2.bf16.msra.mxu0 %v3971
      %4291 = vmatprep.subr.bf16.mxu0 %v3958
      %4292 = vmatpush2.bf16.msra.mxu0 %v3957
      %4293 = vmatprep.subr.bf16.mxu0 %v3944
      %4294 = vmatpush2.bf16.msra.mxu0 %v3943
      %4295 = vmatprep.subr.bf16.mxu0 %v3930
      %4296 = vmatpush2.bf16.msra.mxu0 %v3929
      %4297 = vmatprep.mubr.bf16.mxu0 %v2832
      %4298 = vmatmul.mubr.bf16.gmra.mxu0 %v2831
      %v4299 = vpop.f32.mrf.mxu0
      %v4300 = vadd.f32 %v3078, %v4299
      %v4301 = vpop.f32.mrf.mxu0
      %v4302 = vadd.f32 %v3082, %v4301
      %v4303 = vpop.f32.mrf.mxu0
      %v4304 = vadd.f32 %v3078, %v4303
      %v4305 = vpop.f32.mrf.mxu0
      %v4306 = vadd.f32 %v3082, %v4305
      %4307 = vmatprep.mubr.bf16.mxu0 %v2834
      %4308 = vmatmul.mubr.bf16.gmra.mxu0 %v2833
      %v4309 = vpop.f32.mrf.mxu0
      %v4310 = vadd.f32 %v3078, %v4309
      %v4311 = vpop.f32.mrf.mxu0
      %v4312 = vadd.f32 %v3082, %v4311
      %v4313 = vpop.f32.mrf.mxu0
      %v4314 = vadd.f32 %v3078, %v4313
      %v4315 = vpop.f32.mrf.mxu0
      %v4316 = vadd.f32 %v3082, %v4315
      %4317 = vmatprep.mubr.bf16.mxu0 %v2836
      %4318 = vmatmul.mubr.bf16.gmra.mxu0 %v2835
      %v4319 = vpop.f32.mrf.mxu0
      %v4320 = vadd.f32 %v3078, %v4319
      %v4321 = vpop.f32.mrf.mxu0
      %v4322 = vadd.f32 %v3082, %v4321
      %v4323 = vpop.f32.mrf.mxu0
      %v4324 = vadd.f32 %v3078, %v4323
      %v4325 = vpop.f32.mrf.mxu0
      %v4326 = vadd.f32 %v3082, %v4325
      %4327 = vmatprep.mubr.bf16.mxu0 %v2838
      %4328 = vmatmul.mubr.bf16.gmra.mxu0 %v2837
      %v4329 = vpop.f32.mrf.mxu0
      %v4330 = vadd.f32 %v3078, %v4329
      %v4331 = vpop.f32.mrf.mxu0
      %v4332 = vadd.f32 %v3082, %v4331
      %v4333 = vpop.f32.mrf.mxu0
      %v4334 = vadd.f32 %v3078, %v4333
      %v4335 = vpop.f32.mrf.mxu0
      %v4336 = vadd.f32 %v3082, %v4335
      %4337 = vmatprep.mubr.bf16.mxu0 %v2840
      %4338 = vmatmul.mubr.bf16.gmra.mxu0 %v2839
      %v4339 = vpop.f32.mrf.mxu0
      %v4340 = vadd.f32 %v3078, %v4339
      %v4341 = vpop.f32.mrf.mxu0
      %v4342 = vadd.f32 %v3082, %v4341
      %v4343 = vpop.f32.mrf.mxu0
      %v4344 = vadd.f32 %v3078, %v4343
      %v4345 = vpop.f32.mrf.mxu0
      %v4346 = vadd.f32 %v3082, %v4345
      %4347 = vmatprep.mubr.bf16.mxu0 %v2842
      %4348 = vmatmul.mubr.bf16.gmra.mxu0 %v2841
      %v4349 = vpop.f32.mrf.mxu0
      %v4350 = vadd.f32 %v3078, %v4349
      %v4351 = vpop.f32.mrf.mxu0
      %v4352 = vadd.f32 %v3082, %v4351
      %v4353 = vpop.f32.mrf.mxu0
      %v4354 = vadd.f32 %v3078, %v4353
      %v4355 = vpop.f32.mrf.mxu0
      %v4356 = vadd.f32 %v3082, %v4355
      %4357 = vmatprep.mubr.bf16.mxu0 %v2844
      %4358 = vmatmul.mubr.bf16.gmra.mxu0 %v2843
      %v4359 = vpop.f32.mrf.mxu0
      %v4360 = vadd.f32 %v3078, %v4359
      %v4361 = vpop.f32.mrf.mxu0
      %v4362 = vadd.f32 %v3082, %v4361
      %v4363 = vpop.f32.mrf.mxu0
      %v4364 = vadd.f32 %v3078, %v4363
      %v4365 = vpop.f32.mrf.mxu0
      %v4366 = vadd.f32 %v3082, %v4365
      %4367 = vmatprep.mubr.bf16.mxu0 %v2846
      %4368 = vmatmul.mubr.bf16.gmra.mxu0 %v2845
      %v4369 = vpop.f32.mrf.mxu0
      %v4370 = vadd.f32 %v3078, %v4369
      %v4371 = vpop.f32.mrf.mxu0
      %v4372 = vadd.f32 %v3082, %v4371
      %v4373 = vpop.f32.mrf.mxu0
      %v4374 = vadd.f32 %v3078, %v4373
      %v4375 = vpop.f32.mrf.mxu0
      %v4376 = vadd.f32 %v3082, %v4375
      %4377 = vdwg.mxu0
      %4378 = vmatprep.subr.bf16.mxu0 %v3918
      %4379 = vmatpush1.bf16.msra.mxu0 %v3917
      %4380 = vmatprep.subr.bf16.mxu0 %v3904
      %4381 = vmatpush1.bf16.msra.mxu0 %v3903
      %4382 = vmatprep.subr.bf16.mxu0 %v3890
      %4383 = vmatpush1.bf16.msra.mxu0 %v3889
      %4384 = vmatprep.subr.bf16.mxu0 %v3876
      %4385 = vmatpush1.bf16.msra.mxu0 %v3875
      %4386 = vmatprep.subr.bf16.mxu0 %v3862
      %4387 = vmatpush1.bf16.msra.mxu0 %v3861
      %4388 = vmatprep.subr.bf16.mxu0 %v3848
      %4389 = vmatpush1.bf16.msra.mxu0 %v3847
      %4390 = vmatprep.subr.bf16.mxu0 %v3834
      %4391 = vmatpush1.bf16.msra.mxu0 %v3833
      %4392 = vmatprep.subr.bf16.mxu0 %v3820
      %4393 = vmatpush1.bf16.msra.mxu0 %v3819
      %4394 = vmatprep.subr.bf16.mxu0 %v4030
      %4395 = vmatpush2.bf16.msra.mxu0 %v4029
      %4396 = vmatprep.subr.bf16.mxu0 %v4016
      %4397 = vmatpush2.bf16.msra.mxu0 %v4015
      %4398 = vmatprep.subr.bf16.mxu0 %v4002
      %4399 = vmatpush2.bf16.msra.mxu0 %v4001
      %4400 = vmatprep.subr.bf16.mxu0 %v3988
      %4401 = vmatpush2.bf16.msra.mxu0 %v3987
      %4402 = vmatprep.subr.bf16.mxu0 %v3974
      %4403 = vmatpush2.bf16.msra.mxu0 %v3973
      %4404 = vmatprep.subr.bf16.mxu0 %v3960
      %4405 = vmatpush2.bf16.msra.mxu0 %v3959
      %4406 = vmatprep.subr.bf16.mxu0 %v3946
      %4407 = vmatpush2.bf16.msra.mxu0 %v3945
      %4408 = vmatprep.subr.bf16.mxu0 %v3932
      %4409 = vmatpush2.bf16.msra.mxu0 %v3931
      %4410 = vmatprep.mubr.bf16.mxu0 %v2832
      %4411 = vmatmul.mubr.bf16.gmra.mxu0 %v2831
      %v4412 = vpop.f32.mrf.mxu0
      %v4413 = vadd.f32 %v3086, %v4412
      %v4414 = vpop.f32.mrf.mxu0
      %v4415 = vadd.f32 %v3090, %v4414
      %v4416 = vpop.f32.mrf.mxu0
      %v4417 = vadd.f32 %v3086, %v4416
      %v4418 = vpop.f32.mrf.mxu0
      %v4419 = vadd.f32 %v3090, %v4418
      %4420 = vmatprep.mubr.bf16.mxu0 %v2834
      %4421 = vmatmul.mubr.bf16.gmra.mxu0 %v2833
      %v4422 = vpop.f32.mrf.mxu0
      %v4423 = vadd.f32 %v3086, %v4422
      %v4424 = vpop.f32.mrf.mxu0
      %v4425 = vadd.f32 %v3090, %v4424
      %v4426 = vpop.f32.mrf.mxu0
      %v4427 = vadd.f32 %v3086, %v4426
      %v4428 = vpop.f32.mrf.mxu0
      %v4429 = vadd.f32 %v3090, %v4428
      %4430 = vmatprep.mubr.bf16.mxu0 %v2836
      %4431 = vmatmul.mubr.bf16.gmra.mxu0 %v2835
      %v4432 = vpop.f32.mrf.mxu0
      %v4433 = vadd.f32 %v3086, %v4432
      %v4434 = vpop.f32.mrf.mxu0
      %v4435 = vadd.f32 %v3090, %v4434
      %v4436 = vpop.f32.mrf.mxu0
      %v4437 = vadd.f32 %v3086, %v4436
      %v4438 = vpop.f32.mrf.mxu0
      %v4439 = vadd.f32 %v3090, %v4438
      %4440 = vmatprep.mubr.bf16.mxu0 %v2838
      %4441 = vmatmul.mubr.bf16.gmra.mxu0 %v2837
      %v4442 = vpop.f32.mrf.mxu0
      %v4443 = vadd.f32 %v3086, %v4442
      %v4444 = vpop.f32.mrf.mxu0
      %v4445 = vadd.f32 %v3090, %v4444
      %v4446 = vpop.f32.mrf.mxu0
      %v4447 = vadd.f32 %v3086, %v4446
      %v4448 = vpop.f32.mrf.mxu0
      %v4449 = vadd.f32 %v3090, %v4448
      %4450 = vmatprep.mubr.bf16.mxu0 %v2840
      %4451 = vmatmul.mubr.bf16.gmra.mxu0 %v2839
      %v4452 = vpop.f32.mrf.mxu0
      %v4453 = vadd.f32 %v3086, %v4452
      %v4454 = vpop.f32.mrf.mxu0
      %v4455 = vadd.f32 %v3090, %v4454
      %v4456 = vpop.f32.mrf.mxu0
      %v4457 = vadd.f32 %v3086, %v4456
      %v4458 = vpop.f32.mrf.mxu0
      %v4459 = vadd.f32 %v3090, %v4458
      %4460 = vmatprep.mubr.bf16.mxu0 %v2842
      %4461 = vmatmul.mubr.bf16.gmra.mxu0 %v2841
      %v4462 = vpop.f32.mrf.mxu0
      %v4463 = vadd.f32 %v3086, %v4462
      %v4464 = vpop.f32.mrf.mxu0
      %v4465 = vadd.f32 %v3090, %v4464
      %v4466 = vpop.f32.mrf.mxu0
      %v4467 = vadd.f32 %v3086, %v4466
      %v4468 = vpop.f32.mrf.mxu0
      %v4469 = vadd.f32 %v3090, %v4468
      %4470 = vmatprep.mubr.bf16.mxu0 %v2844
      %4471 = vmatmul.mubr.bf16.gmra.mxu0 %v2843
      %v4472 = vpop.f32.mrf.mxu0
      %v4473 = vadd.f32 %v3086, %v4472
      %v4474 = vpop.f32.mrf.mxu0
      %v4475 = vadd.f32 %v3090, %v4474
      %v4476 = vpop.f32.mrf.mxu0
      %v4477 = vadd.f32 %v3086, %v4476
      %v4478 = vpop.f32.mrf.mxu0
      %v4479 = vadd.f32 %v3090, %v4478
      %4480 = vmatprep.mubr.bf16.mxu0 %v2846
      %4481 = vmatmul.mubr.bf16.gmra.mxu0 %v2845
      %v4482 = vpop.f32.mrf.mxu0
      %v4483 = vadd.f32 %v3086, %v4482
      %v4484 = vpop.f32.mrf.mxu0
      %v4485 = vadd.f32 %v3090, %v4484
      %v4486 = vpop.f32.mrf.mxu0
      %v4487 = vadd.f32 %v3086, %v4486
      %v4488 = vpop.f32.mrf.mxu0
      %v4489 = vadd.f32 %v3090, %v4488
      %4490 = vdwg.mxu0
      %4491 = vmatprep.subr.bf16.mxu0 %v3920
      %4492 = vmatpush1.bf16.msra.mxu0 %v3919
      %4493 = vmatprep.subr.bf16.mxu0 %v3906
      %4494 = vmatpush1.bf16.msra.mxu0 %v3905
      %4495 = vmatprep.subr.bf16.mxu0 %v3892
      %4496 = vmatpush1.bf16.msra.mxu0 %v3891
      %4497 = vmatprep.subr.bf16.mxu0 %v3878
      %4498 = vmatpush1.bf16.msra.mxu0 %v3877
      %4499 = vmatprep.subr.bf16.mxu0 %v3864
      %4500 = vmatpush1.bf16.msra.mxu0 %v3863
      %4501 = vmatprep.subr.bf16.mxu0 %v3850
      %4502 = vmatpush1.bf16.msra.mxu0 %v3849
      %4503 = vmatprep.subr.bf16.mxu0 %v3836
      %4504 = vmatpush1.bf16.msra.mxu0 %v3835
      %4505 = vmatprep.subr.bf16.mxu0 %v3822
      %4506 = vmatpush1.bf16.msra.mxu0 %v3821
      %4507 = vmatprep.subr.bf16.mxu0 %v4032
      %4508 = vmatpush2.bf16.msra.mxu0 %v4031
      %4509 = vmatprep.subr.bf16.mxu0 %v4018
      %4510 = vmatpush2.bf16.msra.mxu0 %v4017
      %4511 = vmatprep.subr.bf16.mxu0 %v4004
      %4512 = vmatpush2.bf16.msra.mxu0 %v4003
      %4513 = vmatprep.subr.bf16.mxu0 %v3990
      %4514 = vmatpush2.bf16.msra.mxu0 %v3989
      %4515 = vmatprep.subr.bf16.mxu0 %v3976
      %4516 = vmatpush2.bf16.msra.mxu0 %v3975
      %4517 = vmatprep.subr.bf16.mxu0 %v3962
      %4518 = vmatpush2.bf16.msra.mxu0 %v3961
      %4519 = vmatprep.subr.bf16.mxu0 %v3948
      %4520 = vmatpush2.bf16.msra.mxu0 %v3947
      %4521 = vmatprep.subr.bf16.mxu0 %v3934
      %4522 = vmatpush2.bf16.msra.mxu0 %v3933
      %4523 = vmatprep.mubr.bf16.mxu0 %v2832
      %4524 = vmatmul.mubr.bf16.gmra.mxu0 %v2831
      %v4525 = vpop.f32.mrf.mxu0
      %v4526 = vadd.f32 %v3094, %v4525
      %v4527 = vpop.f32.mrf.mxu0
      %v4528 = vadd.f32 %v3098, %v4527
      %v4529 = vpop.f32.mrf.mxu0
      %v4530 = vadd.f32 %v3094, %v4529
      %v4531 = vpop.f32.mrf.mxu0
      %v4532 = vadd.f32 %v3098, %v4531
      %4533 = vmatprep.mubr.bf16.mxu0 %v2834
      %4534 = vmatmul.mubr.bf16.gmra.mxu0 %v2833
      %v4535 = vpop.f32.mrf.mxu0
      %v4536 = vadd.f32 %v3094, %v4535
      %v4537 = vpop.f32.mrf.mxu0
      %v4538 = vadd.f32 %v3098, %v4537
      %v4539 = vpop.f32.mrf.mxu0
      %v4540 = vadd.f32 %v3094, %v4539
      %v4541 = vpop.f32.mrf.mxu0
      %v4542 = vadd.f32 %v3098, %v4541
      %4543 = vmatprep.mubr.bf16.mxu0 %v2836
      %4544 = vmatmul.mubr.bf16.gmra.mxu0 %v2835
      %v4545 = vpop.f32.mrf.mxu0
      %v4546 = vadd.f32 %v3094, %v4545
      %v4547 = vpop.f32.mrf.mxu0
      %v4548 = vadd.f32 %v3098, %v4547
      %v4549 = vpop.f32.mrf.mxu0
      %v4550 = vadd.f32 %v3094, %v4549
      %v4551 = vpop.f32.mrf.mxu0
      %v4552 = vadd.f32 %v3098, %v4551
      %4553 = vmatprep.mubr.bf16.mxu0 %v2838
      %4554 = vmatmul.mubr.bf16.gmra.mxu0 %v2837
      %v4555 = vpop.f32.mrf.mxu0
      %v4556 = vadd.f32 %v3094, %v4555
      %v4557 = vpop.f32.mrf.mxu0
      %v4558 = vadd.f32 %v3098, %v4557
      %v4559 = vpop.f32.mrf.mxu0
      %v4560 = vadd.f32 %v3094, %v4559
      %v4561 = vpop.f32.mrf.mxu0
      %v4562 = vadd.f32 %v3098, %v4561
      %4563 = vmatprep.mubr.bf16.mxu0 %v2840
      %4564 = vmatmul.mubr.bf16.gmra.mxu0 %v2839
      %v4565 = vpop.f32.mrf.mxu0
      %v4566 = vadd.f32 %v3094, %v4565
      %v4567 = vpop.f32.mrf.mxu0
      %v4568 = vadd.f32 %v3098, %v4567
      %v4569 = vpop.f32.mrf.mxu0
      %v4570 = vadd.f32 %v3094, %v4569
      %v4571 = vpop.f32.mrf.mxu0
      %v4572 = vadd.f32 %v3098, %v4571
      %4573 = vmatprep.mubr.bf16.mxu0 %v2842
      %4574 = vmatmul.mubr.bf16.gmra.mxu0 %v2841
      %v4575 = vpop.f32.mrf.mxu0
      %v4576 = vadd.f32 %v3094, %v4575
      %v4577 = vpop.f32.mrf.mxu0
      %v4578 = vadd.f32 %v3098, %v4577
      %v4579 = vpop.f32.mrf.mxu0
      %v4580 = vadd.f32 %v3094, %v4579
      %v4581 = vpop.f32.mrf.mxu0
      %v4582 = vadd.f32 %v3098, %v4581
      %4583 = vmatprep.mubr.bf16.mxu0 %v2844
      %4584 = vmatmul.mubr.bf16.gmra.mxu0 %v2843
      %v4585 = vpop.f32.mrf.mxu0
      %v4586 = vadd.f32 %v3094, %v4585
      %v4587 = vpop.f32.mrf.mxu0
      %v4588 = vadd.f32 %v3098, %v4587
      %v4589 = vpop.f32.mrf.mxu0
      %v4590 = vadd.f32 %v3094, %v4589
      %v4591 = vpop.f32.mrf.mxu0
      %v4592 = vadd.f32 %v3098, %v4591
      %4593 = vmatprep.mubr.bf16.mxu0 %v2846
      %4594 = vmatmul.mubr.bf16.gmra.mxu0 %v2845
      %v4595 = vpop.f32.mrf.mxu0
      %v4596 = vadd.f32 %v3094, %v4595
      %v4597 = vpop.f32.mrf.mxu0
      %v4598 = vadd.f32 %v3098, %v4597
      %v4599 = vpop.f32.mrf.mxu0
      %v4600 = vadd.f32 %v3094, %v4599
      %v4601 = vpop.f32.mrf.mxu0
      %v4602 = vadd.f32 %v3098, %v4601
      %4603 = vdwg.mxu0
      %4604 = vmatprep.subr.bf16.mxu0 %v3922
      %4605 = vmatpush1.bf16.msra.mxu0 %v3921
      %4606 = vmatprep.subr.bf16.mxu0 %v3908
      %4607 = vmatpush1.bf16.msra.mxu0 %v3907
      %4608 = vmatprep.subr.bf16.mxu0 %v3894
      %4609 = vmatpush1.bf16.msra.mxu0 %v3893
      %4610 = vmatprep.subr.bf16.mxu0 %v3880
      %4611 = vmatpush1.bf16.msra.mxu0 %v3879
      %4612 = vmatprep.subr.bf16.mxu0 %v3866
      %4613 = vmatpush1.bf16.msra.mxu0 %v3865
      %4614 = vmatprep.subr.bf16.mxu0 %v3852
      %4615 = vmatpush1.bf16.msra.mxu0 %v3851
      %4616 = vmatprep.subr.bf16.mxu0 %v3838
      %4617 = vmatpush1.bf16.msra.mxu0 %v3837
      %4618 = vmatprep.subr.bf16.mxu0 %v3824
      %4619 = vmatpush1.bf16.msra.mxu0 %v3823
      %4620 = vmatprep.subr.bf16.mxu0 %v4034
      %4621 = vmatpush2.bf16.msra.mxu0 %v4033
      %4622 = vmatprep.subr.bf16.mxu0 %v4020
      %4623 = vmatpush2.bf16.msra.mxu0 %v4019
      %4624 = vmatprep.subr.bf16.mxu0 %v4006
      %4625 = vmatpush2.bf16.msra.mxu0 %v4005
      %4626 = vmatprep.subr.bf16.mxu0 %v3992
      %4627 = vmatpush2.bf16.msra.mxu0 %v3991
      %4628 = vmatprep.subr.bf16.mxu0 %v3978
      %4629 = vmatpush2.bf16.msra.mxu0 %v3977
      %4630 = vmatprep.subr.bf16.mxu0 %v3964
      %4631 = vmatpush2.bf16.msra.mxu0 %v3963
      %4632 = vmatprep.subr.bf16.mxu0 %v3950
      %4633 = vmatpush2.bf16.msra.mxu0 %v3949
      %4634 = vmatprep.subr.bf16.mxu0 %v3936
      %4635 = vmatpush2.bf16.msra.mxu0 %v3935
      %4636 = vmatprep.mubr.bf16.mxu0 %v2832
      %4637 = vmatmul.mubr.bf16.gmra.mxu0 %v2831
      %v4638 = vpop.f32.mrf.mxu0
      %v4639 = vadd.f32 %v3102, %v4638
      %v4640 = vpop.f32.mrf.mxu0
      %v4641 = vadd.f32 %v3106, %v4640
      %v4642 = vpop.f32.mrf.mxu0
      %v4643 = vadd.f32 %v3102, %v4642
      %v4644 = vpop.f32.mrf.mxu0
      %v4645 = vadd.f32 %v3106, %v4644
      %4646 = vmatprep.mubr.bf16.mxu0 %v2834
      %4647 = vmatmul.mubr.bf16.gmra.mxu0 %v2833
      %v4648 = vpop.f32.mrf.mxu0
      %v4649 = vadd.f32 %v3102, %v4648
      %v4650 = vpop.f32.mrf.mxu0
      %v4651 = vadd.f32 %v3106, %v4650
      %v4652 = vpop.f32.mrf.mxu0
      %v4653 = vadd.f32 %v3102, %v4652
      %v4654 = vpop.f32.mrf.mxu0
      %v4655 = vadd.f32 %v3106, %v4654
      %4656 = vmatprep.mubr.bf16.mxu0 %v2836
      %4657 = vmatmul.mubr.bf16.gmra.mxu0 %v2835
      %v4658 = vpop.f32.mrf.mxu0
      %v4659 = vadd.f32 %v3102, %v4658
      %v4660 = vpop.f32.mrf.mxu0
      %v4661 = vadd.f32 %v3106, %v4660
      %v4662 = vpop.f32.mrf.mxu0
      %v4663 = vadd.f32 %v3102, %v4662
      %v4664 = vpop.f32.mrf.mxu0
      %v4665 = vadd.f32 %v3106, %v4664
      %4666 = vmatprep.mubr.bf16.mxu0 %v2838
      %4667 = vmatmul.mubr.bf16.gmra.mxu0 %v2837
      %v4668 = vpop.f32.mrf.mxu0
      %v4669 = vadd.f32 %v3102, %v4668
      %v4670 = vpop.f32.mrf.mxu0
      %v4671 = vadd.f32 %v3106, %v4670
      %v4672 = vpop.f32.mrf.mxu0
      %v4673 = vadd.f32 %v3102, %v4672
      %v4674 = vpop.f32.mrf.mxu0
      %v4675 = vadd.f32 %v3106, %v4674
      %4676 = vmatprep.mubr.bf16.mxu0 %v2840
      %4677 = vmatmul.mubr.bf16.gmra.mxu0 %v2839
      %v4678 = vpop.f32.mrf.mxu0
      %v4679 = vadd.f32 %v3102, %v4678
      %v4680 = vpop.f32.mrf.mxu0
      %v4681 = vadd.f32 %v3106, %v4680
      %v4682 = vpop.f32.mrf.mxu0
      %v4683 = vadd.f32 %v3102, %v4682
      %v4684 = vpop.f32.mrf.mxu0
      %v4685 = vadd.f32 %v3106, %v4684
      %4686 = vmatprep.mubr.bf16.mxu0 %v2842
      %4687 = vmatmul.mubr.bf16.gmra.mxu0 %v2841
      %v4688 = vpop.f32.mrf.mxu0
      %v4689 = vadd.f32 %v3102, %v4688
      %v4690 = vpop.f32.mrf.mxu0
      %v4691 = vadd.f32 %v3106, %v4690
      %v4692 = vpop.f32.mrf.mxu0
      %v4693 = vadd.f32 %v3102, %v4692
      %v4694 = vpop.f32.mrf.mxu0
      %v4695 = vadd.f32 %v3106, %v4694
      %4696 = vmatprep.mubr.bf16.mxu0 %v2844
      %4697 = vmatmul.mubr.bf16.gmra.mxu0 %v2843
      %v4698 = vpop.f32.mrf.mxu0
      %v4699 = vadd.f32 %v3102, %v4698
      %v4700 = vpop.f32.mrf.mxu0
      %v4701 = vadd.f32 %v3106, %v4700
      %v4702 = vpop.f32.mrf.mxu0
      %v4703 = vadd.f32 %v3102, %v4702
      %v4704 = vpop.f32.mrf.mxu0
      %v4705 = vadd.f32 %v3106, %v4704
      %4706 = vmatprep.mubr.bf16.mxu0 %v2846
      %4707 = vmatmul.mubr.bf16.gmra.mxu0 %v2845
      %v4708 = vpop.f32.mrf.mxu0
      %v4709 = vadd.f32 %v3102, %v4708
      %v4710 = vpop.f32.mrf.mxu0
      %v4711 = vadd.f32 %v3106, %v4710
      %v4712 = vpop.f32.mrf.mxu0
      %v4713 = vadd.f32 %v3102, %v4712
      %v4714 = vpop.f32.mrf.mxu0
      %v4715 = vadd.f32 %v3106, %v4714
      %4716 = vdwg.mxu0
      %4717 = vmatprep.subr.bf16.mxu0 %v3924
      %4718 = vmatpush1.bf16.msra.mxu0 %v3923
      %4719 = vmatprep.subr.bf16.mxu0 %v3910
      %4720 = vmatpush1.bf16.msra.mxu0 %v3909
      %4721 = vmatprep.subr.bf16.mxu0 %v3896
      %4722 = vmatpush1.bf16.msra.mxu0 %v3895
      %4723 = vmatprep.subr.bf16.mxu0 %v3882
      %4724 = vmatpush1.bf16.msra.mxu0 %v3881
      %4725 = vmatprep.subr.bf16.mxu0 %v3868
      %4726 = vmatpush1.bf16.msra.mxu0 %v3867
      %4727 = vmatprep.subr.bf16.mxu0 %v3854
      %4728 = vmatpush1.bf16.msra.mxu0 %v3853
      %4729 = vmatprep.subr.bf16.mxu0 %v3840
      %4730 = vmatpush1.bf16.msra.mxu0 %v3839
      %4731 = vmatprep.subr.bf16.mxu0 %v3826
      %4732 = vmatpush1.bf16.msra.mxu0 %v3825
      %4733 = vmatprep.subr.bf16.mxu0 %v4036
      %4734 = vmatpush2.bf16.msra.mxu0 %v4035
      %4735 = vmatprep.subr.bf16.mxu0 %v4022
      %4736 = vmatpush2.bf16.msra.mxu0 %v4021
      %4737 = vmatprep.subr.bf16.mxu0 %v4008
      %4738 = vmatpush2.bf16.msra.mxu0 %v4007
      %4739 = vmatprep.subr.bf16.mxu0 %v3994
      %4740 = vmatpush2.bf16.msra.mxu0 %v3993
      %4741 = vmatprep.subr.bf16.mxu0 %v3980
      %4742 = vmatpush2.bf16.msra.mxu0 %v3979
      %4743 = vmatprep.subr.bf16.mxu0 %v3966
      %4744 = vmatpush2.bf16.msra.mxu0 %v3965
      %4745 = vmatprep.subr.bf16.mxu0 %v3952
      %4746 = vmatpush2.bf16.msra.mxu0 %v3951
      %4747 = vmatprep.subr.bf16.mxu0 %v3938
      %4748 = vmatpush2.bf16.msra.mxu0 %v3937
      %4749 = vmatprep.mubr.bf16.mxu0 %v2832
      %4750 = vmatmul.mubr.bf16.gmra.mxu0 %v2831
      %v4751 = vpop.f32.mrf.mxu0
      %v4752 = vadd.f32 %v3110, %v4751
      %v4753 = vpop.f32.mrf.mxu0
      %v4754 = vadd.f32 %v3114, %v4753
      %v4755 = vpop.f32.mrf.mxu0
      %v4756 = vadd.f32 %v3110, %v4755
      %v4757 = vpop.f32.mrf.mxu0
      %v4758 = vadd.f32 %v3114, %v4757
      %4759 = vmatprep.mubr.bf16.mxu0 %v2834
      %4760 = vmatmul.mubr.bf16.gmra.mxu0 %v2833
      %v4761 = vpop.f32.mrf.mxu0
      %v4762 = vadd.f32 %v3110, %v4761
      %v4763 = vpop.f32.mrf.mxu0
      %v4764 = vadd.f32 %v3114, %v4763
      %v4765 = vpop.f32.mrf.mxu0
      %v4766 = vadd.f32 %v3110, %v4765
      %v4767 = vpop.f32.mrf.mxu0
      %v4768 = vadd.f32 %v3114, %v4767
      %4769 = vmatprep.mubr.bf16.mxu0 %v2836
      %4770 = vmatmul.mubr.bf16.gmra.mxu0 %v2835
      %v4771 = vpop.f32.mrf.mxu0
      %v4772 = vadd.f32 %v3110, %v4771
      %v4773 = vpop.f32.mrf.mxu0
      %v4774 = vadd.f32 %v3114, %v4773
      %v4775 = vpop.f32.mrf.mxu0
      %v4776 = vadd.f32 %v3110, %v4775
      %v4777 = vpop.f32.mrf.mxu0
      %v4778 = vadd.f32 %v3114, %v4777
      %4779 = vmatprep.mubr.bf16.mxu0 %v2838
      %4780 = vmatmul.mubr.bf16.gmra.mxu0 %v2837
      %v4781 = vpop.f32.mrf.mxu0
      %v4782 = vadd.f32 %v3110, %v4781
      %v4783 = vpop.f32.mrf.mxu0
      %v4784 = vadd.f32 %v3114, %v4783
      %v4785 = vpop.f32.mrf.mxu0
      %v4786 = vadd.f32 %v3110, %v4785
      %v4787 = vpop.f32.mrf.mxu0
      %v4788 = vadd.f32 %v3114, %v4787
      %4789 = vmatprep.mubr.bf16.mxu0 %v2840
      %4790 = vmatmul.mubr.bf16.gmra.mxu0 %v2839
      %v4791 = vpop.f32.mrf.mxu0
      %v4792 = vadd.f32 %v3110, %v4791
      %v4793 = vpop.f32.mrf.mxu0
      %v4794 = vadd.f32 %v3114, %v4793
      %v4795 = vpop.f32.mrf.mxu0
      %v4796 = vadd.f32 %v3110, %v4795
      %v4797 = vpop.f32.mrf.mxu0
      %v4798 = vadd.f32 %v3114, %v4797
      %4799 = vmatprep.mubr.bf16.mxu0 %v2842
      %4800 = vmatmul.mubr.bf16.gmra.mxu0 %v2841
      %v4801 = vpop.f32.mrf.mxu0
      %v4802 = vadd.f32 %v3110, %v4801
      %v4803 = vpop.f32.mrf.mxu0
      %v4804 = vadd.f32 %v3114, %v4803
      %v4805 = vpop.f32.mrf.mxu0
      %v4806 = vadd.f32 %v3110, %v4805
      %v4807 = vpop.f32.mrf.mxu0
      %v4808 = vadd.f32 %v3114, %v4807
      %4809 = vmatprep.mubr.bf16.mxu0 %v2844
      %4810 = vmatmul.mubr.bf16.gmra.mxu0 %v2843
      %v4811 = vpop.f32.mrf.mxu0
      %v4812 = vadd.f32 %v3110, %v4811
      %v4813 = vpop.f32.mrf.mxu0
      %v4814 = vadd.f32 %v3114, %v4813
      %v4815 = vpop.f32.mrf.mxu0
      %v4816 = vadd.f32 %v3110, %v4815
      %v4817 = vpop.f32.mrf.mxu0
      %v4818 = vadd.f32 %v3114, %v4817
      %4819 = vmatprep.mubr.bf16.mxu0 %v2846
      %4820 = vmatmul.mubr.bf16.gmra.mxu0 %v2845
      %v4821 = vpop.f32.mrf.mxu0
      %v4822 = vadd.f32 %v3110, %v4821
      %v4823 = vpop.f32.mrf.mxu0
      %v4824 = vadd.f32 %v3114, %v4823
      %v4825 = vpop.f32.mrf.mxu0
      %v4826 = vadd.f32 %v3110, %v4825
      %v4827 = vpop.f32.mrf.mxu0
      %v4828 = vadd.f32 %v3114, %v4827
      %4829 = vdwg.mxu0
      %4830 = vmatprep.subr.bf16.mxu0 %v3926
      %4831 = vmatpush1.bf16.msra.mxu0 %v3925
      %4832 = vmatprep.subr.bf16.mxu0 %v3912
      %4833 = vmatpush1.bf16.msra.mxu0 %v3911
      %4834 = vmatprep.subr.bf16.mxu0 %v3898
      %4835 = vmatpush1.bf16.msra.mxu0 %v3897
      %4836 = vmatprep.subr.bf16.mxu0 %v3884
      %4837 = vmatpush1.bf16.msra.mxu0 %v3883
      %4838 = vmatprep.subr.bf16.mxu0 %v3870
      %4839 = vmatpush1.bf16.msra.mxu0 %v3869
      %4840 = vmatprep.subr.bf16.mxu0 %v3856
      %4841 = vmatpush1.bf16.msra.mxu0 %v3855
      %4842 = vmatprep.subr.bf16.mxu0 %v3842
      %4843 = vmatpush1.bf16.msra.mxu0 %v3841
      %4844 = vmatprep.subr.bf16.mxu0 %v3828
      %4845 = vmatpush1.bf16.msra.mxu0 %v3827
      %4846 = vmatprep.subr.bf16.mxu0 %v4038
      %4847 = vmatpush2.bf16.msra.mxu0 %v4037
      %4848 = vmatprep.subr.bf16.mxu0 %v4024
      %4849 = vmatpush2.bf16.msra.mxu0 %v4023
      %4850 = vmatprep.subr.bf16.mxu0 %v4010
      %4851 = vmatpush2.bf16.msra.mxu0 %v4009
      %4852 = vmatprep.subr.bf16.mxu0 %v3996
      %4853 = vmatpush2.bf16.msra.mxu0 %v3995
      %4854 = vmatprep.subr.bf16.mxu0 %v3982
      %4855 = vmatpush2.bf16.msra.mxu0 %v3981
      %4856 = vmatprep.subr.bf16.mxu0 %v3968
      %4857 = vmatpush2.bf16.msra.mxu0 %v3967
      %4858 = vmatprep.subr.bf16.mxu0 %v3954
      %4859 = vmatpush2.bf16.msra.mxu0 %v3953
      %4860 = vmatprep.subr.bf16.mxu0 %v3940
      %4861 = vmatpush2.bf16.msra.mxu0 %v3939
      %4862 = vmatprep.mubr.bf16.mxu0 %v2832
      %4863 = vmatmul.mubr.bf16.gmra.mxu0 %v2831
      %v4864 = vpop.f32.mrf.mxu0
      %v4865 = vadd.f32 %v3118, %v4864
      %v4866 = vpop.f32.mrf.mxu0
      %v4867 = vadd.f32 %v3122, %v4866
      %v4868 = vpop.f32.mrf.mxu0
      %v4869 = vadd.f32 %v3118, %v4868
      %v4870 = vpop.f32.mrf.mxu0
      %v4871 = vadd.f32 %v3122, %v4870
      %4872 = vmatprep.mubr.bf16.mxu0 %v2834
      %4873 = vmatmul.mubr.bf16.gmra.mxu0 %v2833
      %v4874 = vpop.f32.mrf.mxu0
      %v4875 = vadd.f32 %v3118, %v4874
      %v4876 = vpop.f32.mrf.mxu0
      %v4877 = vadd.f32 %v3122, %v4876
      %v4878 = vpop.f32.mrf.mxu0
      %v4879 = vadd.f32 %v3118, %v4878
      %v4880 = vpop.f32.mrf.mxu0
      %v4881 = vadd.f32 %v3122, %v4880
      %4882 = vmatprep.mubr.bf16.mxu0 %v2836
      %4883 = vmatmul.mubr.bf16.gmra.mxu0 %v2835
      %v4884 = vpop.f32.mrf.mxu0
      %v4885 = vadd.f32 %v3118, %v4884
      %v4886 = vpop.f32.mrf.mxu0
      %v4887 = vadd.f32 %v3122, %v4886
      %v4888 = vpop.f32.mrf.mxu0
      %v4889 = vadd.f32 %v3118, %v4888
      %v4890 = vpop.f32.mrf.mxu0
      %v4891 = vadd.f32 %v3122, %v4890
      %4892 = vmatprep.mubr.bf16.mxu0 %v2838
      %4893 = vmatmul.mubr.bf16.gmra.mxu0 %v2837
      %v4894 = vpop.f32.mrf.mxu0
      %v4895 = vadd.f32 %v3118, %v4894
      %v4896 = vpop.f32.mrf.mxu0
      %v4897 = vadd.f32 %v3122, %v4896
      %v4898 = vpop.f32.mrf.mxu0
      %v4899 = vadd.f32 %v3118, %v4898
      %v4900 = vpop.f32.mrf.mxu0
      %v4901 = vadd.f32 %v3122, %v4900
      %4902 = vmatprep.mubr.bf16.mxu0 %v2840
      %4903 = vmatmul.mubr.bf16.gmra.mxu0 %v2839
      %v4904 = vpop.f32.mrf.mxu0
      %v4905 = vadd.f32 %v3118, %v4904
      %v4906 = vpop.f32.mrf.mxu0
      %v4907 = vadd.f32 %v3122, %v4906
      %v4908 = vpop.f32.mrf.mxu0
      %v4909 = vadd.f32 %v3118, %v4908
      %v4910 = vpop.f32.mrf.mxu0
      %v4911 = vadd.f32 %v3122, %v4910
      %4912 = vmatprep.mubr.bf16.mxu0 %v2842
      %4913 = vmatmul.mubr.bf16.gmra.mxu0 %v2841
      %v4914 = vpop.f32.mrf.mxu0
      %v4915 = vadd.f32 %v3118, %v4914
      %v4916 = vpop.f32.mrf.mxu0
      %v4917 = vadd.f32 %v3122, %v4916
      %v4918 = vpop.f32.mrf.mxu0
      %v4919 = vadd.f32 %v3118, %v4918
      %v4920 = vpop.f32.mrf.mxu0
      %v4921 = vadd.f32 %v3122, %v4920
      %4922 = vmatprep.mubr.bf16.mxu0 %v2844
      %4923 = vmatmul.mubr.bf16.gmra.mxu0 %v2843
      %v4924 = vpop.f32.mrf.mxu0
      %v4925 = vadd.f32 %v3118, %v4924
      %v4926 = vpop.f32.mrf.mxu0
      %v4927 = vadd.f32 %v3122, %v4926
      %v4928 = vpop.f32.mrf.mxu0
      %v4929 = vadd.f32 %v3118, %v4928
      %v4930 = vpop.f32.mrf.mxu0
      %v4931 = vadd.f32 %v3122, %v4930
      %4932 = vmatprep.mubr.bf16.mxu0 %v2846
      %4933 = vmatmul.mubr.bf16.gmra.mxu0 %v2845
      %v4934 = vpop.f32.mrf.mxu0
      %v4935 = vadd.f32 %v3118, %v4934
      %v4936 = vpop.f32.mrf.mxu0
      %v4937 = vadd.f32 %v3122, %v4936
      %v4938 = vpop.f32.mrf.mxu0
      %v4939 = vadd.f32 %v3118, %v4938
      %v4940 = vpop.f32.mrf.mxu0
      %v4941 = vadd.f32 %v3122, %v4940
      %4942 = vdwg.mxu0
      %4943 = vmatprep.subr.bf16.mxu0 %v3928
      %4944 = vmatpush1.bf16.msra.mxu0 %v3927
      %4945 = vmatprep.subr.bf16.mxu0 %v3914
      %4946 = vmatpush1.bf16.msra.mxu0 %v3913
      %4947 = vmatprep.subr.bf16.mxu0 %v3900
      %4948 = vmatpush1.bf16.msra.mxu0 %v3899
      %4949 = vmatprep.subr.bf16.mxu0 %v3886
      %4950 = vmatpush1.bf16.msra.mxu0 %v3885
      %4951 = vmatprep.subr.bf16.mxu0 %v3872
      %4952 = vmatpush1.bf16.msra.mxu0 %v3871
      %4953 = vmatprep.subr.bf16.mxu0 %v3858
      %4954 = vmatpush1.bf16.msra.mxu0 %v3857
      %4955 = vmatprep.subr.bf16.mxu0 %v3844
      %4956 = vmatpush1.bf16.msra.mxu0 %v3843
      %4957 = vmatprep.subr.bf16.mxu0 %v3830
      %4958 = vmatpush1.bf16.msra.mxu0 %v3829
      %4959 = vmatprep.subr.bf16.mxu0 %v4040
      %4960 = vmatpush2.bf16.msra.mxu0 %v4039
      %4961 = vmatprep.subr.bf16.mxu0 %v4026
      %4962 = vmatpush2.bf16.msra.mxu0 %v4025
      %4963 = vmatprep.subr.bf16.mxu0 %v4012
      %4964 = vmatpush2.bf16.msra.mxu0 %v4011
      %4965 = vmatprep.subr.bf16.mxu0 %v3998
      %4966 = vmatpush2.bf16.msra.mxu0 %v3997
      %4967 = vmatprep.subr.bf16.mxu0 %v3984
      %4968 = vmatpush2.bf16.msra.mxu0 %v3983
      %4969 = vmatprep.subr.bf16.mxu0 %v3970
      %4970 = vmatpush2.bf16.msra.mxu0 %v3969
      %4971 = vmatprep.subr.bf16.mxu0 %v3956
      %4972 = vmatpush2.bf16.msra.mxu0 %v3955
      %4973 = vmatprep.subr.bf16.mxu0 %v3942
      %4974 = vmatpush2.bf16.msra.mxu0 %v3941
      %4975 = vmatprep.mubr.bf16.mxu0 %v2832
      %4976 = vmatmul.mubr.bf16.gmra.mxu0 %v2831
      %v4977 = vpop.f32.mrf.mxu0
      %v4978 = vadd.f32 %v3126, %v4977
      %v4979 = vpop.f32.mrf.mxu0
      %v4980 = vadd.f32 %v3130, %v4979
      %v4981 = vpop.f32.mrf.mxu0
      %v4982 = vadd.f32 %v3126, %v4981
      %v4983 = vpop.f32.mrf.mxu0
      %v4984 = vadd.f32 %v3130, %v4983
      %4985 = vmatprep.mubr.bf16.mxu0 %v2834
      %4986 = vmatmul.mubr.bf16.gmra.mxu0 %v2833
      %v4987 = vpop.f32.mrf.mxu0
      %v4988 = vadd.f32 %v3126, %v4987
      %v4989 = vpop.f32.mrf.mxu0
      %v4990 = vadd.f32 %v3130, %v4989
      %v4991 = vpop.f32.mrf.mxu0
      %v4992 = vadd.f32 %v3126, %v4991
      %v4993 = vpop.f32.mrf.mxu0
      %v4994 = vadd.f32 %v3130, %v4993
      %4995 = vmatprep.mubr.bf16.mxu0 %v2836
      %4996 = vmatmul.mubr.bf16.gmra.mxu0 %v2835
      %v4997 = vpop.f32.mrf.mxu0
      %v4998 = vadd.f32 %v3126, %v4997
      %v4999 = vpop.f32.mrf.mxu0
      %v5000 = vadd.f32 %v3130, %v4999
      %v5001 = vpop.f32.mrf.mxu0
      %v5002 = vadd.f32 %v3126, %v5001
      %v5003 = vpop.f32.mrf.mxu0
      %v5004 = vadd.f32 %v3130, %v5003
      %5005 = vmatprep.mubr.bf16.mxu0 %v2838
      %5006 = vmatmul.mubr.bf16.gmra.mxu0 %v2837
      %v5007 = vpop.f32.mrf.mxu0
      %v5008 = vadd.f32 %v3126, %v5007
      %v5009 = vpop.f32.mrf.mxu0
      %v5010 = vadd.f32 %v3130, %v5009
      %v5011 = vpop.f32.mrf.mxu0
      %v5012 = vadd.f32 %v3126, %v5011
      %v5013 = vpop.f32.mrf.mxu0
      %v5014 = vadd.f32 %v3130, %v5013
      %5015 = vmatprep.mubr.bf16.mxu0 %v2840
      %5016 = vmatmul.mubr.bf16.gmra.mxu0 %v2839
      %v5017 = vpop.f32.mrf.mxu0
      %v5018 = vadd.f32 %v3126, %v5017
      %v5019 = vpop.f32.mrf.mxu0
      %v5020 = vadd.f32 %v3130, %v5019
      %v5021 = vpop.f32.mrf.mxu0
      %v5022 = vadd.f32 %v3126, %v5021
      %v5023 = vpop.f32.mrf.mxu0
      %v5024 = vadd.f32 %v3130, %v5023
      %5025 = vmatprep.mubr.bf16.mxu0 %v2842
      %5026 = vmatmul.mubr.bf16.gmra.mxu0 %v2841
      %v5027 = vpop.f32.mrf.mxu0
      %v5028 = vadd.f32 %v3126, %v5027
      %v5029 = vpop.f32.mrf.mxu0
      %v5030 = vadd.f32 %v3130, %v5029
      %v5031 = vpop.f32.mrf.mxu0
      %v5032 = vadd.f32 %v3126, %v5031
      %v5033 = vpop.f32.mrf.mxu0
      %v5034 = vadd.f32 %v3130, %v5033
      %5035 = vmatprep.mubr.bf16.mxu0 %v2844
      %5036 = vmatmul.mubr.bf16.gmra.mxu0 %v2843
      %v5037 = vpop.f32.mrf.mxu0
      %v5038 = vadd.f32 %v3126, %v5037
      %v5039 = vpop.f32.mrf.mxu0
      %v5040 = vadd.f32 %v3130, %v5039
      %v5041 = vpop.f32.mrf.mxu0
      %v5042 = vadd.f32 %v3126, %v5041
      %v5043 = vpop.f32.mrf.mxu0
      %v5044 = vadd.f32 %v3130, %v5043
      %5045 = vmatprep.mubr.bf16.mxu0 %v2846
      %5046 = vmatmul.mubr.bf16.gmra.mxu0 %v2845
      %v5047 = vpop.f32.mrf.mxu0
      %v5048 = vadd.f32 %v3126, %v5047
      %v5049 = vpop.f32.mrf.mxu0
      %v5050 = vadd.f32 %v3130, %v5049
      %v5051 = vpop.f32.mrf.mxu0
      %v5052 = vadd.f32 %v3126, %v5051
      %v5053 = vpop.f32.mrf.mxu0
      %v5054 = vadd.f32 %v3130, %v5053
      %5055 = vdwg.mxu0
      %v5056 = vsub.f32 0.0, %v4300
      %v5057 = vsub.f32 0.0, %v4302
      %v5058 = vsub.f32 0.0, %v4413
      %v5059 = vsub.f32 0.0, %v4415
      %v5060 = vsub.f32 0.0, %v4526
      %v5061 = vsub.f32 0.0, %v4528
      %v5062 = vsub.f32 0.0, %v4639
      %v5063 = vsub.f32 0.0, %v4641
      %v5064 = vsub.f32 0.0, %v4752
      %v5065 = vsub.f32 0.0, %v4754
      %v5066 = vsub.f32 0.0, %v4865
      %v5067 = vsub.f32 0.0, %v4867
      %v5068 = vsub.f32 0.0, %v4978
      %v5069 = vsub.f32 0.0, %v4980
      %v5070 = vsub.f32 0.0, %v4304
      %v5071 = vsub.f32 0.0, %v4306
      %v5072 = vsub.f32 0.0, %v4417
      %v5073 = vsub.f32 0.0, %v4419
      %v5074 = vsub.f32 0.0, %v4530
      %v5075 = vsub.f32 0.0, %v4532
      %v5076 = vsub.f32 0.0, %v4643
      %v5077 = vsub.f32 0.0, %v4645
      %v5078 = vsub.f32 0.0, %v4756
      %v5079 = vsub.f32 0.0, %v4758
      %v5080 = vsub.f32 0.0, %v4869
      %v5081 = vsub.f32 0.0, %v4871
      %v5082 = vsub.f32 0.0, %v4982
      %v5083 = vsub.f32 0.0, %v4984
      %v5084 = vsub.f32 0.0, %v4310
      %v5085 = vsub.f32 0.0, %v4312
      %v5086 = vsub.f32 0.0, %v4423
      %v5087 = vsub.f32 0.0, %v4425
      %v5088 = vsub.f32 0.0, %v4536
      %v5089 = vsub.f32 0.0, %v4538
      %v5090 = vsub.f32 0.0, %v4649
      %v5091 = vsub.f32 0.0, %v4651
      %v5092 = vsub.f32 0.0, %v4762
      %v5093 = vsub.f32 0.0, %v4764
      %v5094 = vsub.f32 0.0, %v4875
      %v5095 = vsub.f32 0.0, %v4877
      %v5096 = vsub.f32 0.0, %v4988
      %v5097 = vsub.f32 0.0, %v4990
      %v5098 = vsub.f32 0.0, %v4314
      %v5099 = vsub.f32 0.0, %v4316
      %v5100 = vsub.f32 0.0, %v4427
      %v5101 = vsub.f32 0.0, %v4429
      %v5102 = vsub.f32 0.0, %v4540
      %v5103 = vsub.f32 0.0, %v4542
      %v5104 = vsub.f32 0.0, %v4653
      %v5105 = vsub.f32 0.0, %v4655
      %v5106 = vsub.f32 0.0, %v4766
      %v5107 = vsub.f32 0.0, %v4768
      %v5108 = vsub.f32 0.0, %v4879
      %v5109 = vsub.f32 0.0, %v4881
      %v5110 = vsub.f32 0.0, %v4992
      %v5111 = vsub.f32 0.0, %v4994
      %v5112 = vsub.f32 0.0, %v4320
      %v5113 = vsub.f32 0.0, %v4322
      %v5114 = vsub.f32 0.0, %v4433
      %v5115 = vsub.f32 0.0, %v4435
      %v5116 = vsub.f32 0.0, %v4546
      %v5117 = vsub.f32 0.0, %v4548
      %v5118 = vsub.f32 0.0, %v4659
      %v5119 = vsub.f32 0.0, %v4661
      %v5120 = vsub.f32 0.0, %v4772
      %v5121 = vsub.f32 0.0, %v4774
      %v5122 = vsub.f32 0.0, %v4885
      %v5123 = vsub.f32 0.0, %v4887
      %v5124 = vsub.f32 0.0, %v4998
      %v5125 = vsub.f32 0.0, %v5000
      %v5126 = vsub.f32 0.0, %v4324
      %v5127 = vsub.f32 0.0, %v4326
      %v5128 = vsub.f32 0.0, %v4437
      %v5129 = vsub.f32 0.0, %v4439
      %v5130 = vsub.f32 0.0, %v4550
      %v5131 = vsub.f32 0.0, %v4552
      %v5132 = vsub.f32 0.0, %v4663
      %v5133 = vsub.f32 0.0, %v4665
      %v5134 = vsub.f32 0.0, %v4776
      %v5135 = vsub.f32 0.0, %v4778
      %v5136 = vsub.f32 0.0, %v4889
      %v5137 = vsub.f32 0.0, %v4891
      %v5138 = vsub.f32 0.0, %v5002
      %v5139 = vsub.f32 0.0, %v5004
      %v5140 = vsub.f32 0.0, %v4330
      %v5141 = vsub.f32 0.0, %v4332
      %v5142 = vsub.f32 0.0, %v4443
      %v5143 = vsub.f32 0.0, %v4445
      %v5144 = vsub.f32 0.0, %v4556
      %v5145 = vsub.f32 0.0, %v4558
      %v5146 = vsub.f32 0.0, %v4669
      %v5147 = vsub.f32 0.0, %v4671
      %v5148 = vsub.f32 0.0, %v4782
      %v5149 = vsub.f32 0.0, %v4784
      %v5150 = vsub.f32 0.0, %v4895
      %v5151 = vsub.f32 0.0, %v4897
      %v5152 = vsub.f32 0.0, %v5008
      %v5153 = vsub.f32 0.0, %v5010
      %v5154 = vsub.f32 0.0, %v4334
      %v5155 = vsub.f32 0.0, %v4336
      %v5156 = vsub.f32 0.0, %v4447
      %v5157 = vsub.f32 0.0, %v4449
      %v5158 = vsub.f32 0.0, %v4560
      %v5159 = vsub.f32 0.0, %v4562
      %v5160 = vsub.f32 0.0, %v4673
      %v5161 = vsub.f32 0.0, %v4675
      %v5162 = vsub.f32 0.0, %v4786
      %v5163 = vsub.f32 0.0, %v4788
      %v5164 = vsub.f32 0.0, %v4899
      %v5165 = vsub.f32 0.0, %v4901
      %v5166 = vsub.f32 0.0, %v5012
      %v5167 = vsub.f32 0.0, %v5014
      %v5168 = vsub.f32 0.0, %v4340
      %v5169 = vsub.f32 0.0, %v4342
      %v5170 = vsub.f32 0.0, %v4453
      %v5171 = vsub.f32 0.0, %v4455
      %v5172 = vsub.f32 0.0, %v4566
      %v5173 = vsub.f32 0.0, %v4568
      %v5174 = vsub.f32 0.0, %v4679
      %v5175 = vsub.f32 0.0, %v4681
      %v5176 = vsub.f32 0.0, %v4792
      %v5177 = vsub.f32 0.0, %v4794
      %v5178 = vsub.f32 0.0, %v4905
      %v5179 = vsub.f32 0.0, %v4907
      %v5180 = vsub.f32 0.0, %v5018
      %v5181 = vsub.f32 0.0, %v5020
      %v5182 = vsub.f32 0.0, %v4344
      %v5183 = vsub.f32 0.0, %v4346
      %v5184 = vsub.f32 0.0, %v4457
      %v5185 = vsub.f32 0.0, %v4459
      %v5186 = vsub.f32 0.0, %v4570
      %v5187 = vsub.f32 0.0, %v4572
      %v5188 = vsub.f32 0.0, %v4683
      %v5189 = vsub.f32 0.0, %v4685
      %v5190 = vsub.f32 0.0, %v4796
      %v5191 = vsub.f32 0.0, %v4798
      %v5192 = vsub.f32 0.0, %v4909
      %v5193 = vsub.f32 0.0, %v4911
      %v5194 = vsub.f32 0.0, %v5022
      %v5195 = vsub.f32 0.0, %v5024
      %v5196 = vsub.f32 0.0, %v4350
      %v5197 = vsub.f32 0.0, %v4352
      %v5198 = vsub.f32 0.0, %v4463
      %v5199 = vsub.f32 0.0, %v4465
      %v5200 = vsub.f32 0.0, %v4576
      %v5201 = vsub.f32 0.0, %v4578
      %v5202 = vsub.f32 0.0, %v4689
      %v5203 = vsub.f32 0.0, %v4691
      %v5204 = vsub.f32 0.0, %v4802
      %v5205 = vsub.f32 0.0, %v4804
      %v5206 = vsub.f32 0.0, %v4915
      %v5207 = vsub.f32 0.0, %v4917
      %v5208 = vsub.f32 0.0, %v5028
      %v5209 = vsub.f32 0.0, %v5030
      %v5210 = vsub.f32 0.0, %v4354
      %v5211 = vsub.f32 0.0, %v4356
      %v5212 = vsub.f32 0.0, %v4467
      %v5213 = vsub.f32 0.0, %v4469
      %v5214 = vsub.f32 0.0, %v4580
      %v5215 = vsub.f32 0.0, %v4582
      %v5216 = vsub.f32 0.0, %v4693
      %v5217 = vsub.f32 0.0, %v4695
      %v5218 = vsub.f32 0.0, %v4806
      %v5219 = vsub.f32 0.0, %v4808
      %v5220 = vsub.f32 0.0, %v4919
      %v5221 = vsub.f32 0.0, %v4921
      %v5222 = vsub.f32 0.0, %v5032
      %v5223 = vsub.f32 0.0, %v5034
      %v5224 = vsub.f32 0.0, %v4360
      %v5225 = vsub.f32 0.0, %v4362
      %v5226 = vsub.f32 0.0, %v4473
      %v5227 = vsub.f32 0.0, %v4475
      %v5228 = vsub.f32 0.0, %v4586
      %v5229 = vsub.f32 0.0, %v4588
      %v5230 = vsub.f32 0.0, %v4699
      %v5231 = vsub.f32 0.0, %v4701
      %v5232 = vsub.f32 0.0, %v4812
      %v5233 = vsub.f32 0.0, %v4814
      %v5234 = vsub.f32 0.0, %v4925
      %v5235 = vsub.f32 0.0, %v4927
      %v5236 = vsub.f32 0.0, %v5038
      %v5237 = vsub.f32 0.0, %v5040
      %v5238 = vsub.f32 0.0, %v4364
      %v5239 = vsub.f32 0.0, %v4366
      %v5240 = vsub.f32 0.0, %v4477
      %v5241 = vsub.f32 0.0, %v4479
      %v5242 = vsub.f32 0.0, %v4590
      %v5243 = vsub.f32 0.0, %v4592
      %v5244 = vsub.f32 0.0, %v4703
      %v5245 = vsub.f32 0.0, %v4705
      %v5246 = vsub.f32 0.0, %v4816
      %v5247 = vsub.f32 0.0, %v4818
      %v5248 = vsub.f32 0.0, %v4929
      %v5249 = vsub.f32 0.0, %v4931
      %v5250 = vsub.f32 0.0, %v5042
      %v5251 = vsub.f32 0.0, %v5044
      %v5252 = vsub.f32 0.0, %v4370
      %v5253 = vsub.f32 0.0, %v4372
      %v5254 = vsub.f32 0.0, %v4483
      %v5255 = vsub.f32 0.0, %v4485
      %v5256 = vsub.f32 0.0, %v4596
      %v5257 = vsub.f32 0.0, %v4598
      %v5258 = vsub.f32 0.0, %v4709
      %v5259 = vsub.f32 0.0, %v4711
      %v5260 = vsub.f32 0.0, %v4822
      %v5261 = vsub.f32 0.0, %v4824
      %v5262 = vsub.f32 0.0, %v4935
      %v5263 = vsub.f32 0.0, %v4937
      %v5264 = vsub.f32 0.0, %v5048
      %v5265 = vsub.f32 0.0, %v5050
      %v5266 = vsub.f32 0.0, %v4374
      %v5267 = vsub.f32 0.0, %v4376
      %v5268 = vsub.f32 0.0, %v4487
      %v5269 = vsub.f32 0.0, %v4489
      %v5270 = vsub.f32 0.0, %v4600
      %v5271 = vsub.f32 0.0, %v4602
      %v5272 = vsub.f32 0.0, %v4713
      %v5273 = vsub.f32 0.0, %v4715
      %v5274 = vsub.f32 0.0, %v4826
      %v5275 = vsub.f32 0.0, %v4828
      %v5276 = vsub.f32 0.0, %v4939
      %v5277 = vsub.f32 0.0, %v4941
      %v5278 = vsub.f32 0.0, %v5052
      %v5279 = vsub.f32 0.0, %v5054
      %v5280 = vmul.f32 %v5056, 1.442695
      %v5281 = vpow.pop %v5280
      %v5282 = vmul.f32 %v5057, 1.442695
      %v5283 = vpow.pop %v5282
      %v5284 = vmul.f32 %v5058, 1.442695
      %v5285 = vpow.pop %v5284
      %v5286 = vmul.f32 %v5059, 1.442695
      %v5287 = vpow.pop %v5286
      %v5288 = vmul.f32 %v5060, 1.442695
      %v5289 = vpow.pop %v5288
      %v5290 = vmul.f32 %v5061, 1.442695
      %v5291 = vpow.pop %v5290
      %v5292 = vmul.f32 %v5062, 1.442695
      %v5293 = vpow.pop %v5292
      %v5294 = vmul.f32 %v5063, 1.442695
      %v5295 = vpow.pop %v5294
      %v5296 = vmul.f32 %v5064, 1.442695
      %v5297 = vpow.pop %v5296
      %v5298 = vmul.f32 %v5065, 1.442695
      %v5299 = vpow.pop %v5298
      %v5300 = vmul.f32 %v5066, 1.442695
      %v5301 = vpow.pop %v5300
      %v5302 = vmul.f32 %v5067, 1.442695
      %v5303 = vpow.pop %v5302
      %v5304 = vmul.f32 %v5068, 1.442695
      %v5305 = vpow.pop %v5304
      %v5306 = vmul.f32 %v5069, 1.442695
      %v5307 = vpow.pop %v5306
      %v5308 = vmul.f32 %v5070, 1.442695
      %v5309 = vpow.pop %v5308
      %v5310 = vmul.f32 %v5071, 1.442695
      %v5311 = vpow.pop %v5310
      %v5312 = vmul.f32 %v5072, 1.442695
      %v5313 = vpow.pop %v5312
      %v5314 = vmul.f32 %v5073, 1.442695
      %v5315 = vpow.pop %v5314
      %v5316 = vmul.f32 %v5074, 1.442695
      %v5317 = vpow.pop %v5316
      %v5318 = vmul.f32 %v5075, 1.442695
      %v5319 = vpow.pop %v5318
      %v5320 = vmul.f32 %v5076, 1.442695
      %v5321 = vpow.pop %v5320
      %v5322 = vmul.f32 %v5077, 1.442695
      %v5323 = vpow.pop %v5322
      %v5324 = vmul.f32 %v5078, 1.442695
      %v5325 = vpow.pop %v5324
      %v5326 = vmul.f32 %v5079, 1.442695
      %v5327 = vpow.pop %v5326
      %v5328 = vmul.f32 %v5080, 1.442695
      %v5329 = vpow.pop %v5328
      %v5330 = vmul.f32 %v5081, 1.442695
      %v5331 = vpow.pop %v5330
      %v5332 = vmul.f32 %v5082, 1.442695
      %v5333 = vpow.pop %v5332
      %v5334 = vmul.f32 %v5083, 1.442695
      %v5335 = vpow.pop %v5334
      %v5336 = vmul.f32 %v5084, 1.442695
      %v5337 = vpow.pop %v5336
      %v5338 = vmul.f32 %v5085, 1.442695
      %v5339 = vpow.pop %v5338
      %v5340 = vmul.f32 %v5086, 1.442695
      %v5341 = vpow.pop %v5340
      %v5342 = vmul.f32 %v5087, 1.442695
      %v5343 = vpow.pop %v5342
      %v5344 = vmul.f32 %v5088, 1.442695
      %v5345 = vpow.pop %v5344
      %v5346 = vmul.f32 %v5089, 1.442695
      %v5347 = vpow.pop %v5346
      %v5348 = vmul.f32 %v5090, 1.442695
      %v5349 = vpow.pop %v5348
      %v5350 = vmul.f32 %v5091, 1.442695
      %v5351 = vpow.pop %v5350
      %v5352 = vmul.f32 %v5092, 1.442695
      %v5353 = vpow.pop %v5352
      %v5354 = vmul.f32 %v5093, 1.442695
      %v5355 = vpow.pop %v5354
      %v5356 = vmul.f32 %v5094, 1.442695
      %v5357 = vpow.pop %v5356
      %v5358 = vmul.f32 %v5095, 1.442695
      %v5359 = vpow.pop %v5358
      %v5360 = vmul.f32 %v5096, 1.442695
      %v5361 = vpow.pop %v5360
      %v5362 = vmul.f32 %v5097, 1.442695
      %v5363 = vpow.pop %v5362
      %v5364 = vmul.f32 %v5098, 1.442695
      %v5365 = vpow.pop %v5364
      %v5366 = vmul.f32 %v5099, 1.442695
      %v5367 = vpow.pop %v5366
      %v5368 = vmul.f32 %v5100, 1.442695
      %v5369 = vpow.pop %v5368
      %v5370 = vmul.f32 %v5101, 1.442695
      %v5371 = vpow.pop %v5370
      %v5372 = vmul.f32 %v5102, 1.442695
      %v5373 = vpow.pop %v5372
      %v5374 = vmul.f32 %v5103, 1.442695
      %v5375 = vpow.pop %v5374
      %v5376 = vmul.f32 %v5104, 1.442695
      %v5377 = vpow.pop %v5376
      %v5378 = vmul.f32 %v5105, 1.442695
      %v5379 = vpow.pop %v5378
      %v5380 = vmul.f32 %v5106, 1.442695
      %v5381 = vpow.pop %v5380
      %v5382 = vmul.f32 %v5107, 1.442695
      %v5383 = vpow.pop %v5382
      %v5384 = vmul.f32 %v5108, 1.442695
      %v5385 = vpow.pop %v5384
      %v5386 = vmul.f32 %v5109, 1.442695
      %v5387 = vpow.pop %v5386
      %v5388 = vmul.f32 %v5110, 1.442695
      %v5389 = vpow.pop %v5388
      %v5390 = vmul.f32 %v5111, 1.442695
      %v5391 = vpow.pop %v5390
      %v5392 = vmul.f32 %v5112, 1.442695
      %v5393 = vpow.pop %v5392
      %v5394 = vmul.f32 %v5113, 1.442695
      %v5395 = vpow.pop %v5394
      %v5396 = vmul.f32 %v5114, 1.442695
      %v5397 = vpow.pop %v5396
      %v5398 = vmul.f32 %v5115, 1.442695
      %v5399 = vpow.pop %v5398
      %v5400 = vmul.f32 %v5116, 1.442695
      %v5401 = vpow.pop %v5400
      %v5402 = vmul.f32 %v5117, 1.442695
      %v5403 = vpow.pop %v5402
      %v5404 = vmul.f32 %v5118, 1.442695
      %v5405 = vpow.pop %v5404
      %v5406 = vmul.f32 %v5119, 1.442695
      %v5407 = vpow.pop %v5406
      %v5408 = vmul.f32 %v5120, 1.442695
      %v5409 = vpow.pop %v5408
      %v5410 = vmul.f32 %v5121, 1.442695
      %v5411 = vpow.pop %v5410
      %v5412 = vmul.f32 %v5122, 1.442695
      %v5413 = vpow.pop %v5412
      %v5414 = vmul.f32 %v5123, 1.442695
      %v5415 = vpow.pop %v5414
      %v5416 = vmul.f32 %v5124, 1.442695
      %v5417 = vpow.pop %v5416
      %v5418 = vmul.f32 %v5125, 1.442695
      %v5419 = vpow.pop %v5418
      %v5420 = vmul.f32 %v5126, 1.442695
      %v5421 = vpow.pop %v5420
      %v5422 = vmul.f32 %v5127, 1.442695
      %v5423 = vpow.pop %v5422
      %v5424 = vmul.f32 %v5128, 1.442695
      %v5425 = vpow.pop %v5424
      %v5426 = vmul.f32 %v5129, 1.442695
      %v5427 = vpow.pop %v5426
      %v5428 = vmul.f32 %v5130, 1.442695
      %v5429 = vpow.pop %v5428
      %v5430 = vmul.f32 %v5131, 1.442695
      %v5431 = vpow.pop %v5430
      %v5432 = vmul.f32 %v5132, 1.442695
      %v5433 = vpow.pop %v5432
      %v5434 = vmul.f32 %v5133, 1.442695
      %v5435 = vpow.pop %v5434
      %v5436 = vmul.f32 %v5134, 1.442695
      %v5437 = vpow.pop %v5436
      %v5438 = vmul.f32 %v5135, 1.442695
      %v5439 = vpow.pop %v5438
      %v5440 = vmul.f32 %v5136, 1.442695
      %v5441 = vpow.pop %v5440
      %v5442 = vmul.f32 %v5137, 1.442695
      %v5443 = vpow.pop %v5442
      %v5444 = vmul.f32 %v5138, 1.442695
      %v5445 = vpow.pop %v5444
      %v5446 = vmul.f32 %v5139, 1.442695
      %v5447 = vpow.pop %v5446
      %v5448 = vmul.f32 %v5140, 1.442695
      %v5449 = vpow.pop %v5448
      %v5450 = vmul.f32 %v5141, 1.442695
      %v5451 = vpow.pop %v5450
      %v5452 = vmul.f32 %v5142, 1.442695
      %v5453 = vpow.pop %v5452
      %v5454 = vmul.f32 %v5143, 1.442695
      %v5455 = vpow.pop %v5454
      %v5456 = vmul.f32 %v5144, 1.442695
      %v5457 = vpow.pop %v5456
      %v5458 = vmul.f32 %v5145, 1.442695
      %v5459 = vpow.pop %v5458
      %v5460 = vmul.f32 %v5146, 1.442695
      %v5461 = vpow.pop %v5460
      %v5462 = vmul.f32 %v5147, 1.442695
      %v5463 = vpow.pop %v5462
      %v5464 = vmul.f32 %v5148, 1.442695
      %v5465 = vpow.pop %v5464
      %v5466 = vmul.f32 %v5149, 1.442695
      %v5467 = vpow.pop %v5466
      %v5468 = vmul.f32 %v5150, 1.442695
      %v5469 = vpow.pop %v5468
      %v5470 = vmul.f32 %v5151, 1.442695
      %v5471 = vpow.pop %v5470
      %v5472 = vmul.f32 %v5152, 1.442695
      %v5473 = vpow.pop %v5472
      %v5474 = vmul.f32 %v5153, 1.442695
      %v5475 = vpow.pop %v5474
      %v5476 = vmul.f32 %v5154, 1.442695
      %v5477 = vpow.pop %v5476
      %v5478 = vmul.f32 %v5155, 1.442695
      %v5479 = vpow.pop %v5478
      %v5480 = vmul.f32 %v5156, 1.442695
      %v5481 = vpow.pop %v5480
      %v5482 = vmul.f32 %v5157, 1.442695
      %v5483 = vpow.pop %v5482
      %v5484 = vmul.f32 %v5158, 1.442695
      %v5485 = vpow.pop %v5484
      %v5486 = vmul.f32 %v5159, 1.442695
      %v5487 = vpow.pop %v5486
      %v5488 = vmul.f32 %v5160, 1.442695
      %v5489 = vpow.pop %v5488
      %v5490 = vmul.f32 %v5161, 1.442695
      %v5491 = vpow.pop %v5490
      %v5492 = vmul.f32 %v5162, 1.442695
      %v5493 = vpow.pop %v5492
      %v5494 = vmul.f32 %v5163, 1.442695
      %v5495 = vpow.pop %v5494
      %v5496 = vmul.f32 %v5164, 1.442695
      %v5497 = vpow.pop %v5496
      %v5498 = vmul.f32 %v5165, 1.442695
      %v5499 = vpow.pop %v5498
      %v5500 = vmul.f32 %v5166, 1.442695
      %v5501 = vpow.pop %v5500
      %v5502 = vmul.f32 %v5167, 1.442695
      %v5503 = vpow.pop %v5502
      %v5504 = vmul.f32 %v5168, 1.442695
      %v5505 = vpow.pop %v5504
      %v5506 = vmul.f32 %v5169, 1.442695
      %v5507 = vpow.pop %v5506
      %v5508 = vmul.f32 %v5170, 1.442695
      %v5509 = vpow.pop %v5508
      %v5510 = vmul.f32 %v5171, 1.442695
      %v5511 = vpow.pop %v5510
      %v5512 = vmul.f32 %v5172, 1.442695
      %v5513 = vpow.pop %v5512
      %v5514 = vmul.f32 %v5173, 1.442695
      %v5515 = vpow.pop %v5514
      %v5516 = vmul.f32 %v5174, 1.442695
      %v5517 = vpow.pop %v5516
      %v5518 = vmul.f32 %v5175, 1.442695
      %v5519 = vpow.pop %v5518
      %v5520 = vmul.f32 %v5176, 1.442695
      %v5521 = vpow.pop %v5520
      %v5522 = vmul.f32 %v5177, 1.442695
      %v5523 = vpow.pop %v5522
      %v5524 = vmul.f32 %v5178, 1.442695
      %v5525 = vpow.pop %v5524
      %v5526 = vmul.f32 %v5179, 1.442695
      %v5527 = vpow.pop %v5526
      %v5528 = vmul.f32 %v5180, 1.442695
      %v5529 = vpow.pop %v5528
      %v5530 = vmul.f32 %v5181, 1.442695
      %v5531 = vpow.pop %v5530
      %v5532 = vmul.f32 %v5182, 1.442695
      %v5533 = vpow.pop %v5532
      %v5534 = vmul.f32 %v5183, 1.442695
      %v5535 = vpow.pop %v5534
      %v5536 = vmul.f32 %v5184, 1.442695
      %v5537 = vpow.pop %v5536
      %v5538 = vmul.f32 %v5185, 1.442695
      %v5539 = vpow.pop %v5538
      %v5540 = vmul.f32 %v5186, 1.442695
      %v5541 = vpow.pop %v5540
      %v5542 = vmul.f32 %v5187, 1.442695
      %v5543 = vpow.pop %v5542
      %v5544 = vmul.f32 %v5188, 1.442695
      %v5545 = vpow.pop %v5544
      %v5546 = vmul.f32 %v5189, 1.442695
      %v5547 = vpow.pop %v5546
      %v5548 = vmul.f32 %v5190, 1.442695
      %v5549 = vpow.pop %v5548
      %v5550 = vmul.f32 %v5191, 1.442695
      %v5551 = vpow.pop %v5550
      %v5552 = vmul.f32 %v5192, 1.442695
      %v5553 = vpow.pop %v5552
      %v5554 = vmul.f32 %v5193, 1.442695
      %v5555 = vpow.pop %v5554
      %v5556 = vmul.f32 %v5194, 1.442695
      %v5557 = vpow.pop %v5556
      %v5558 = vmul.f32 %v5195, 1.442695
      %v5559 = vpow.pop %v5558
      %v5560 = vmul.f32 %v5196, 1.442695
      %v5561 = vpow.pop %v5560
      %v5562 = vmul.f32 %v5197, 1.442695
      %v5563 = vpow.pop %v5562
      %v5564 = vmul.f32 %v5198, 1.442695
      %v5565 = vpow.pop %v5564
      %v5566 = vmul.f32 %v5199, 1.442695
      %v5567 = vpow.pop %v5566
      %v5568 = vmul.f32 %v5200, 1.442695
      %v5569 = vpow.pop %v5568
      %v5570 = vmul.f32 %v5201, 1.442695
      %v5571 = vpow.pop %v5570
      %v5572 = vmul.f32 %v5202, 1.442695
      %v5573 = vpow.pop %v5572
      %v5574 = vmul.f32 %v5203, 1.442695
      %v5575 = vpow.pop %v5574
      %v5576 = vmul.f32 %v5204, 1.442695
      %v5577 = vpow.pop %v5576
      %v5578 = vmul.f32 %v5205, 1.442695
      %v5579 = vpow.pop %v5578
      %v5580 = vmul.f32 %v5206, 1.442695
      %v5581 = vpow.pop %v5580
      %v5582 = vmul.f32 %v5207, 1.442695
      %v5583 = vpow.pop %v5582
      %v5584 = vmul.f32 %v5208, 1.442695
      %v5585 = vpow.pop %v5584
      %v5586 = vmul.f32 %v5209, 1.442695
      %v5587 = vpow.pop %v5586
      %v5588 = vmul.f32 %v5210, 1.442695
      %v5589 = vpow.pop %v5588
      %v5590 = vmul.f32 %v5211, 1.442695
      %v5591 = vpow.pop %v5590
      %v5592 = vmul.f32 %v5212, 1.442695
      %v5593 = vpow.pop %v5592
      %v5594 = vmul.f32 %v5213, 1.442695
      %v5595 = vpow.pop %v5594
      %v5596 = vmul.f32 %v5214, 1.442695
      %v5597 = vpow.pop %v5596
      %v5598 = vmul.f32 %v5215, 1.442695
      %v5599 = vpow.pop %v5598
      %v5600 = vmul.f32 %v5216, 1.442695
      %v5601 = vpow.pop %v5600
      %v5602 = vmul.f32 %v5217, 1.442695
      %v5603 = vpow.pop %v5602
      %v5604 = vmul.f32 %v5218, 1.442695
      %v5605 = vpow.pop %v5604
      %v5606 = vmul.f32 %v5219, 1.442695
      %v5607 = vpow.pop %v5606
      %v5608 = vmul.f32 %v5220, 1.442695
      %v5609 = vpow.pop %v5608
      %v5610 = vmul.f32 %v5221, 1.442695
      %v5611 = vpow.pop %v5610
      %v5612 = vmul.f32 %v5222, 1.442695
      %v5613 = vpow.pop %v5612
      %v5614 = vmul.f32 %v5223, 1.442695
      %v5615 = vpow.pop %v5614
      %v5616 = vmul.f32 %v5224, 1.442695
      %v5617 = vpow.pop %v5616
      %v5618 = vmul.f32 %v5225, 1.442695
      %v5619 = vpow.pop %v5618
      %v5620 = vmul.f32 %v5226, 1.442695
      %v5621 = vpow.pop %v5620
      %v5622 = vmul.f32 %v5227, 1.442695
      %v5623 = vpow.pop %v5622
      %v5624 = vmul.f32 %v5228, 1.442695
      %v5625 = vpow.pop %v5624
      %v5626 = vmul.f32 %v5229, 1.442695
      %v5627 = vpow.pop %v5626
      %v5628 = vmul.f32 %v5230, 1.442695
      %v5629 = vpow.pop %v5628
      %v5630 = vmul.f32 %v5231, 1.442695
      %v5631 = vpow.pop %v5630
      %v5632 = vmul.f32 %v5232, 1.442695
      %v5633 = vpow.pop %v5632
      %v5634 = vmul.f32 %v5233, 1.442695
      %v5635 = vpow.pop %v5634
      %v5636 = vmul.f32 %v5234, 1.442695
      %v5637 = vpow.pop %v5636
      %v5638 = vmul.f32 %v5235, 1.442695
      %v5639 = vpow.pop %v5638
      %v5640 = vmul.f32 %v5236, 1.442695
      %v5641 = vpow.pop %v5640
      %v5642 = vmul.f32 %v5237, 1.442695
      %v5643 = vpow.pop %v5642
      %v5644 = vmul.f32 %v5238, 1.442695
      %v5645 = vpow.pop %v5644
      %v5646 = vmul.f32 %v5239, 1.442695
      %v5647 = vpow.pop %v5646
      %v5648 = vmul.f32 %v5240, 1.442695
      %v5649 = vpow.pop %v5648
      %v5650 = vmul.f32 %v5241, 1.442695
      %v5651 = vpow.pop %v5650
      %v5652 = vmul.f32 %v5242, 1.442695
      %v5653 = vpow.pop %v5652
      %v5654 = vmul.f32 %v5243, 1.442695
      %v5655 = vpow.pop %v5654
      %v5656 = vmul.f32 %v5244, 1.442695
      %v5657 = vpow.pop %v5656
      %v5658 = vmul.f32 %v5245, 1.442695
      %v5659 = vpow.pop %v5658
      %v5660 = vmul.f32 %v5246, 1.442695
      %v5661 = vpow.pop %v5660
      %v5662 = vmul.f32 %v5247, 1.442695
      %v5663 = vpow.pop %v5662
      %v5664 = vmul.f32 %v5248, 1.442695
      %v5665 = vpow.pop %v5664
      %v5666 = vmul.f32 %v5249, 1.442695
      %v5667 = vpow.pop %v5666
      %v5668 = vmul.f32 %v5250, 1.442695
      %v5669 = vpow.pop %v5668
      %v5670 = vmul.f32 %v5251, 1.442695
      %v5671 = vpow.pop %v5670
      %v5672 = vmul.f32 %v5252, 1.442695
      %v5673 = vpow.pop %v5672
      %v5674 = vmul.f32 %v5253, 1.442695
      %v5675 = vpow.pop %v5674
      %v5676 = vmul.f32 %v5254, 1.442695
      %v5677 = vpow.pop %v5676
      %v5678 = vmul.f32 %v5255, 1.442695
      %v5679 = vpow.pop %v5678
      %v5680 = vmul.f32 %v5256, 1.442695
      %v5681 = vpow.pop %v5680
      %v5682 = vmul.f32 %v5257, 1.442695
      %v5683 = vpow.pop %v5682
      %v5684 = vmul.f32 %v5258, 1.442695
      %v5685 = vpow.pop %v5684
      %v5686 = vmul.f32 %v5259, 1.442695
      %v5687 = vpow.pop %v5686
      %v5688 = vmul.f32 %v5260, 1.442695
      %v5689 = vpow.pop %v5688
      %v5690 = vmul.f32 %v5261, 1.442695
      %v5691 = vpow.pop %v5690
      %v5692 = vmul.f32 %v5262, 1.442695
      %v5693 = vpow.pop %v5692
      %v5694 = vmul.f32 %v5263, 1.442695
      %v5695 = vpow.pop %v5694
      %v5696 = vmul.f32 %v5264, 1.442695
      %v5697 = vpow.pop %v5696
      %v5698 = vmul.f32 %v5265, 1.442695
      %v5699 = vpow.pop %v5698
      %v5700 = vmul.f32 %v5266, 1.442695
      %v5701 = vpow.pop %v5700
      %v5702 = vmul.f32 %v5267, 1.442695
      %v5703 = vpow.pop %v5702
      %v5704 = vmul.f32 %v5268, 1.442695
      %v5705 = vpow.pop %v5704
      %v5706 = vmul.f32 %v5269, 1.442695
      %v5707 = vpow.pop %v5706
      %v5708 = vmul.f32 %v5270, 1.442695
      %v5709 = vpow.pop %v5708
      %v5710 = vmul.f32 %v5271, 1.442695
      %v5711 = vpow.pop %v5710
      %v5712 = vmul.f32 %v5272, 1.442695
      %v5713 = vpow.pop %v5712
      %v5714 = vmul.f32 %v5273, 1.442695
      %v5715 = vpow.pop %v5714
      %v5716 = vmul.f32 %v5274, 1.442695
      %v5717 = vpow.pop %v5716
      %v5718 = vmul.f32 %v5275, 1.442695
      %v5719 = vpow.pop %v5718
      %v5720 = vmul.f32 %v5276, 1.442695
      %v5721 = vpow.pop %v5720
      %v5722 = vmul.f32 %v5277, 1.442695
      %v5723 = vpow.pop %v5722
      %v5724 = vmul.f32 %v5278, 1.442695
      %v5725 = vpow.pop %v5724
      %v5726 = vmul.f32 %v5279, 1.442695
      %v5727 = vpow.pop %v5726
      %v5728 = vadd.f32 %v5281, 1.0
      %v5729 = vadd.f32 %v5283, 1.0
      %v5730 = vadd.f32 %v5285, 1.0
      %v5731 = vadd.f32 %v5287, 1.0
      %v5732 = vadd.f32 %v5289, 1.0
      %v5733 = vadd.f32 %v5291, 1.0
      %v5734 = vadd.f32 %v5293, 1.0
      %v5735 = vadd.f32 %v5295, 1.0
      %v5736 = vadd.f32 %v5297, 1.0
      %v5737 = vadd.f32 %v5299, 1.0
      %v5738 = vadd.f32 %v5301, 1.0
      %v5739 = vadd.f32 %v5303, 1.0
      %v5740 = vadd.f32 %v5305, 1.0
      %v5741 = vadd.f32 %v5307, 1.0
      %v5742 = vadd.f32 %v5309, 1.0
      %v5743 = vadd.f32 %v5311, 1.0
      %v5744 = vadd.f32 %v5313, 1.0
      %v5745 = vadd.f32 %v5315, 1.0
      %v5746 = vadd.f32 %v5317, 1.0
      %v5747 = vadd.f32 %v5319, 1.0
      %v5748 = vadd.f32 %v5321, 1.0
      %v5749 = vadd.f32 %v5323, 1.0
      %v5750 = vadd.f32 %v5325, 1.0
      %v5751 = vadd.f32 %v5327, 1.0
      %v5752 = vadd.f32 %v5329, 1.0
      %v5753 = vadd.f32 %v5331, 1.0
      %v5754 = vadd.f32 %v5333, 1.0
      %v5755 = vadd.f32 %v5335, 1.0
      %v5756 = vadd.f32 %v5337, 1.0
      %v5757 = vadd.f32 %v5339, 1.0
      %v5758 = vadd.f32 %v5341, 1.0
      %v5759 = vadd.f32 %v5343, 1.0
      %v5760 = vadd.f32 %v5345, 1.0
      %v5761 = vadd.f32 %v5347, 1.0
      %v5762 = vadd.f32 %v5349, 1.0
      %v5763 = vadd.f32 %v5351, 1.0
      %v5764 = vadd.f32 %v5353, 1.0
      %v5765 = vadd.f32 %v5355, 1.0
      %v5766 = vadd.f32 %v5357, 1.0
      %v5767 = vadd.f32 %v5359, 1.0
      %v5768 = vadd.f32 %v5361, 1.0
      %v5769 = vadd.f32 %v5363, 1.0
      %v5770 = vadd.f32 %v5365, 1.0
      %v5771 = vadd.f32 %v5367, 1.0
      %v5772 = vadd.f32 %v5369, 1.0
      %v5773 = vadd.f32 %v5371, 1.0
      %v5774 = vadd.f32 %v5373, 1.0
      %v5775 = vadd.f32 %v5375, 1.0
      %v5776 = vadd.f32 %v5377, 1.0
      %v5777 = vadd.f32 %v5379, 1.0
      %v5778 = vadd.f32 %v5381, 1.0
      %v5779 = vadd.f32 %v5383, 1.0
      %v5780 = vadd.f32 %v5385, 1.0
      %v5781 = vadd.f32 %v5387, 1.0
      %v5782 = vadd.f32 %v5389, 1.0
      %v5783 = vadd.f32 %v5391, 1.0
      %v5784 = vadd.f32 %v5393, 1.0
      %v5785 = vadd.f32 %v5395, 1.0
      %v5786 = vadd.f32 %v5397, 1.0
      %v5787 = vadd.f32 %v5399, 1.0
      %v5788 = vadd.f32 %v5401, 1.0
      %v5789 = vadd.f32 %v5403, 1.0
      %v5790 = vadd.f32 %v5405, 1.0
      %v5791 = vadd.f32 %v5407, 1.0
      %v5792 = vadd.f32 %v5409, 1.0
      %v5793 = vadd.f32 %v5411, 1.0
      %v5794 = vadd.f32 %v5413, 1.0
      %v5795 = vadd.f32 %v5415, 1.0
      %v5796 = vadd.f32 %v5417, 1.0
      %v5797 = vadd.f32 %v5419, 1.0
      %v5798 = vadd.f32 %v5421, 1.0
      %v5799 = vadd.f32 %v5423, 1.0
      %v5800 = vadd.f32 %v5425, 1.0
      %v5801 = vadd.f32 %v5427, 1.0
      %v5802 = vadd.f32 %v5429, 1.0
      %v5803 = vadd.f32 %v5431, 1.0
      %v5804 = vadd.f32 %v5433, 1.0
      %v5805 = vadd.f32 %v5435, 1.0
      %v5806 = vadd.f32 %v5437, 1.0
      %v5807 = vadd.f32 %v5439, 1.0
      %v5808 = vadd.f32 %v5441, 1.0
      %v5809 = vadd.f32 %v5443, 1.0
      %v5810 = vadd.f32 %v5445, 1.0
      %v5811 = vadd.f32 %v5447, 1.0
      %v5812 = vadd.f32 %v5449, 1.0
      %v5813 = vadd.f32 %v5451, 1.0
      %v5814 = vadd.f32 %v5453, 1.0
      %v5815 = vadd.f32 %v5455, 1.0
      %v5816 = vadd.f32 %v5457, 1.0
      %v5817 = vadd.f32 %v5459, 1.0
      %v5818 = vadd.f32 %v5461, 1.0
      %v5819 = vadd.f32 %v5463, 1.0
      %v5820 = vadd.f32 %v5465, 1.0
      %v5821 = vadd.f32 %v5467, 1.0
      %v5822 = vadd.f32 %v5469, 1.0
      %v5823 = vadd.f32 %v5471, 1.0
      %v5824 = vadd.f32 %v5473, 1.0
      %v5825 = vadd.f32 %v5475, 1.0
      %v5826 = vadd.f32 %v5477, 1.0
      %v5827 = vadd.f32 %v5479, 1.0
      %v5828 = vadd.f32 %v5481, 1.0
      %v5829 = vadd.f32 %v5483, 1.0
      %v5830 = vadd.f32 %v5485, 1.0
      %v5831 = vadd.f32 %v5487, 1.0
      %v5832 = vadd.f32 %v5489, 1.0
      %v5833 = vadd.f32 %v5491, 1.0
      %v5834 = vadd.f32 %v5493, 1.0
      %v5835 = vadd.f32 %v5495, 1.0
      %v5836 = vadd.f32 %v5497, 1.0
      %v5837 = vadd.f32 %v5499, 1.0
      %v5838 = vadd.f32 %v5501, 1.0
      %v5839 = vadd.f32 %v5503, 1.0
      %v5840 = vadd.f32 %v5505, 1.0
      %v5841 = vadd.f32 %v5507, 1.0
      %v5842 = vadd.f32 %v5509, 1.0
      %v5843 = vadd.f32 %v5511, 1.0
      %v5844 = vadd.f32 %v5513, 1.0
      %v5845 = vadd.f32 %v5515, 1.0
      %v5846 = vadd.f32 %v5517, 1.0
      %v5847 = vadd.f32 %v5519, 1.0
      %v5848 = vadd.f32 %v5521, 1.0
      %v5849 = vadd.f32 %v5523, 1.0
      %v5850 = vadd.f32 %v5525, 1.0
      %v5851 = vadd.f32 %v5527, 1.0
      %v5852 = vadd.f32 %v5529, 1.0
      %v5853 = vadd.f32 %v5531, 1.0
      %v5854 = vadd.f32 %v5533, 1.0
      %v5855 = vadd.f32 %v5535, 1.0
      %v5856 = vadd.f32 %v5537, 1.0
      %v5857 = vadd.f32 %v5539, 1.0
      %v5858 = vadd.f32 %v5541, 1.0
      %v5859 = vadd.f32 %v5543, 1.0
      %v5860 = vadd.f32 %v5545, 1.0
      %v5861 = vadd.f32 %v5547, 1.0
      %v5862 = vadd.f32 %v5549, 1.0
      %v5863 = vadd.f32 %v5551, 1.0
      %v5864 = vadd.f32 %v5553, 1.0
      %v5865 = vadd.f32 %v5555, 1.0
      %v5866 = vadd.f32 %v5557, 1.0
      %v5867 = vadd.f32 %v5559, 1.0
      %v5868 = vadd.f32 %v5561, 1.0
      %v5869 = vadd.f32 %v5563, 1.0
      %v5870 = vadd.f32 %v5565, 1.0
      %v5871 = vadd.f32 %v5567, 1.0
      %v5872 = vadd.f32 %v5569, 1.0
      %v5873 = vadd.f32 %v5571, 1.0
      %v5874 = vadd.f32 %v5573, 1.0
      %v5875 = vadd.f32 %v5575, 1.0
      %v5876 = vadd.f32 %v5577, 1.0
      %v5877 = vadd.f32 %v5579, 1.0
      %v5878 = vadd.f32 %v5581, 1.0
      %v5879 = vadd.f32 %v5583, 1.0
      %v5880 = vadd.f32 %v5585, 1.0
      %v5881 = vadd.f32 %v5587, 1.0
      %v5882 = vadd.f32 %v5589, 1.0
      %v5883 = vadd.f32 %v5591, 1.0
      %v5884 = vadd.f32 %v5593, 1.0
      %v5885 = vadd.f32 %v5595, 1.0
      %v5886 = vadd.f32 %v5597, 1.0
      %v5887 = vadd.f32 %v5599, 1.0
      %v5888 = vadd.f32 %v5601, 1.0
      %v5889 = vadd.f32 %v5603, 1.0
      %v5890 = vadd.f32 %v5605, 1.0
      %v5891 = vadd.f32 %v5607, 1.0
      %v5892 = vadd.f32 %v5609, 1.0
      %v5893 = vadd.f32 %v5611, 1.0
      %v5894 = vadd.f32 %v5613, 1.0
      %v5895 = vadd.f32 %v5615, 1.0
      %v5896 = vadd.f32 %v5617, 1.0
      %v5897 = vadd.f32 %v5619, 1.0
      %v5898 = vadd.f32 %v5621, 1.0
      %v5899 = vadd.f32 %v5623, 1.0
      %v5900 = vadd.f32 %v5625, 1.0
      %v5901 = vadd.f32 %v5627, 1.0
      %v5902 = vadd.f32 %v5629, 1.0
      %v5903 = vadd.f32 %v5631, 1.0
      %v5904 = vadd.f32 %v5633, 1.0
      %v5905 = vadd.f32 %v5635, 1.0
      %v5906 = vadd.f32 %v5637, 1.0
      %v5907 = vadd.f32 %v5639, 1.0
      %v5908 = vadd.f32 %v5641, 1.0
      %v5909 = vadd.f32 %v5643, 1.0
      %v5910 = vadd.f32 %v5645, 1.0
      %v5911 = vadd.f32 %v5647, 1.0
      %v5912 = vadd.f32 %v5649, 1.0
      %v5913 = vadd.f32 %v5651, 1.0
      %v5914 = vadd.f32 %v5653, 1.0
      %v5915 = vadd.f32 %v5655, 1.0
      %v5916 = vadd.f32 %v5657, 1.0
      %v5917 = vadd.f32 %v5659, 1.0
      %v5918 = vadd.f32 %v5661, 1.0
      %v5919 = vadd.f32 %v5663, 1.0
      %v5920 = vadd.f32 %v5665, 1.0
      %v5921 = vadd.f32 %v5667, 1.0
      %v5922 = vadd.f32 %v5669, 1.0
      %v5923 = vadd.f32 %v5671, 1.0
      %v5924 = vadd.f32 %v5673, 1.0
      %v5925 = vadd.f32 %v5675, 1.0
      %v5926 = vadd.f32 %v5677, 1.0
      %v5927 = vadd.f32 %v5679, 1.0
      %v5928 = vadd.f32 %v5681, 1.0
      %v5929 = vadd.f32 %v5683, 1.0
      %v5930 = vadd.f32 %v5685, 1.0
      %v5931 = vadd.f32 %v5687, 1.0
      %v5932 = vadd.f32 %v5689, 1.0
      %v5933 = vadd.f32 %v5691, 1.0
      %v5934 = vadd.f32 %v5693, 1.0
      %v5935 = vadd.f32 %v5695, 1.0
      %v5936 = vadd.f32 %v5697, 1.0
      %v5937 = vadd.f32 %v5699, 1.0
      %v5938 = vadd.f32 %v5701, 1.0
      %v5939 = vadd.f32 %v5703, 1.0
      %v5940 = vadd.f32 %v5705, 1.0
      %v5941 = vadd.f32 %v5707, 1.0
      %v5942 = vadd.f32 %v5709, 1.0
      %v5943 = vadd.f32 %v5711, 1.0
      %v5944 = vadd.f32 %v5713, 1.0
      %v5945 = vadd.f32 %v5715, 1.0
      %v5946 = vadd.f32 %v5717, 1.0
      %v5947 = vadd.f32 %v5719, 1.0
      %v5948 = vadd.f32 %v5721, 1.0
      %v5949 = vadd.f32 %v5723, 1.0
      %v5950 = vadd.f32 %v5725, 1.0
      %v5951 = vadd.f32 %v5727, 1.0
      %v5952 = vrcp.pop %v5728
      %v5953 = vrcp.pop %v5729
      %v5954 = vrcp.pop %v5730
      %v5955 = vrcp.pop %v5731
      %v5956 = vrcp.pop %v5732
      %v5957 = vrcp.pop %v5733
      %v5958 = vrcp.pop %v5734
      %v5959 = vrcp.pop %v5735
      %v5960 = vrcp.pop %v5736
      %v5961 = vrcp.pop %v5737
      %v5962 = vrcp.pop %v5738
      %v5963 = vrcp.pop %v5739
      %v5964 = vrcp.pop %v5740
      %v5965 = vrcp.pop %v5741
      %v5966 = vrcp.pop %v5742
      %v5967 = vrcp.pop %v5743
      %v5968 = vrcp.pop %v5744
      %v5969 = vrcp.pop %v5745
      %v5970 = vrcp.pop %v5746
      %v5971 = vrcp.pop %v5747
      %v5972 = vrcp.pop %v5748
      %v5973 = vrcp.pop %v5749
      %v5974 = vrcp.pop %v5750
      %v5975 = vrcp.pop %v5751
      %v5976 = vrcp.pop %v5752
      %v5977 = vrcp.pop %v5753
      %v5978 = vrcp.pop %v5754
      %v5979 = vrcp.pop %v5755
      %v5980 = vrcp.pop %v5756
      %v5981 = vrcp.pop %v5757
      %v5982 = vrcp.pop %v5758
      %v5983 = vrcp.pop %v5759
      %v5984 = vrcp.pop %v5760
      %v5985 = vrcp.pop %v5761
      %v5986 = vrcp.pop %v5762
      %v5987 = vrcp.pop %v5763
      %v5988 = vrcp.pop %v5764
      %v5989 = vrcp.pop %v5765
      %v5990 = vrcp.pop %v5766
      %v5991 = vrcp.pop %v5767
      %v5992 = vrcp.pop %v5768
      %v5993 = vrcp.pop %v5769
      %v5994 = vrcp.pop %v5770
      %v5995 = vrcp.pop %v5771
      %v5996 = vrcp.pop %v5772
      %v5997 = vrcp.pop %v5773
      %v5998 = vrcp.pop %v5774
      %v5999 = vrcp.pop %v5775
      %v6000 = vrcp.pop %v5776
      %v6001 = vrcp.pop %v5777
      %v6002 = vrcp.pop %v5778
      %v6003 = vrcp.pop %v5779
      %v6004 = vrcp.pop %v5780
      %v6005 = vrcp.pop %v5781
      %v6006 = vrcp.pop %v5782
      %v6007 = vrcp.pop %v5783
      %v6008 = vrcp.pop %v5784
      %v6009 = vrcp.pop %v5785
      %v6010 = vrcp.pop %v5786
      %v6011 = vrcp.pop %v5787
      %v6012 = vrcp.pop %v5788
      %v6013 = vrcp.pop %v5789
      %v6014 = vrcp.pop %v5790
      %v6015 = vrcp.pop %v5791
      %v6016 = vrcp.pop %v5792
      %v6017 = vrcp.pop %v5793
      %v6018 = vrcp.pop %v5794
      %v6019 = vrcp.pop %v5795
      %v6020 = vrcp.pop %v5796
      %v6021 = vrcp.pop %v5797
      %v6022 = vrcp.pop %v5798
      %v6023 = vrcp.pop %v5799
      %v6024 = vrcp.pop %v5800
      %v6025 = vrcp.pop %v5801
      %v6026 = vrcp.pop %v5802
      %v6027 = vrcp.pop %v5803
      %v6028 = vrcp.pop %v5804
      %v6029 = vrcp.pop %v5805
      %v6030 = vrcp.pop %v5806
      %v6031 = vrcp.pop %v5807
      %v6032 = vrcp.pop %v5808
      %v6033 = vrcp.pop %v5809
      %v6034 = vrcp.pop %v5810
      %v6035 = vrcp.pop %v5811
      %v6036 = vrcp.pop %v5812
      %v6037 = vrcp.pop %v5813
      %v6038 = vrcp.pop %v5814
      %v6039 = vrcp.pop %v5815
      %v6040 = vrcp.pop %v5816
      %v6041 = vrcp.pop %v5817
      %v6042 = vrcp.pop %v5818
      %v6043 = vrcp.pop %v5819
      %v6044 = vrcp.pop %v5820
      %v6045 = vrcp.pop %v5821
      %v6046 = vrcp.pop %v5822
      %v6047 = vrcp.pop %v5823
      %v6048 = vrcp.pop %v5824
      %v6049 = vrcp.pop %v5825
      %v6050 = vrcp.pop %v5826
      %v6051 = vrcp.pop %v5827
      %v6052 = vrcp.pop %v5828
      %v6053 = vrcp.pop %v5829
      %v6054 = vrcp.pop %v5830
      %v6055 = vrcp.pop %v5831
      %v6056 = vrcp.pop %v5832
      %v6057 = vrcp.pop %v5833
      %v6058 = vrcp.pop %v5834
      %v6059 = vrcp.pop %v5835
      %v6060 = vrcp.pop %v5836
      %v6061 = vrcp.pop %v5837
      %v6062 = vrcp.pop %v5838
      %v6063 = vrcp.pop %v5839
      %v6064 = vrcp.pop %v5840
      %v6065 = vrcp.pop %v5841
      %v6066 = vrcp.pop %v5842
      %v6067 = vrcp.pop %v5843
      %v6068 = vrcp.pop %v5844
      %v6069 = vrcp.pop %v5845
      %v6070 = vrcp.pop %v5846
      %v6071 = vrcp.pop %v5847
      %v6072 = vrcp.pop %v5848
      %v6073 = vrcp.pop %v5849
      %v6074 = vrcp.pop %v5850
      %v6075 = vrcp.pop %v5851
      %v6076 = vrcp.pop %v5852
      %v6077 = vrcp.pop %v5853
      %v6078 = vrcp.pop %v5854
      %v6079 = vrcp.pop %v5855
      %v6080 = vrcp.pop %v5856
      %v6081 = vrcp.pop %v5857
      %v6082 = vrcp.pop %v5858
      %v6083 = vrcp.pop %v5859
      %v6084 = vrcp.pop %v5860
      %v6085 = vrcp.pop %v5861
      %v6086 = vrcp.pop %v5862
      %v6087 = vrcp.pop %v5863
      %v6088 = vrcp.pop %v5864
      %v6089 = vrcp.pop %v5865
      %v6090 = vrcp.pop %v5866
      %v6091 = vrcp.pop %v5867
      %v6092 = vrcp.pop %v5868
      %v6093 = vrcp.pop %v5869
      %v6094 = vrcp.pop %v5870
      %v6095 = vrcp.pop %v5871
      %v6096 = vrcp.pop %v5872
      %v6097 = vrcp.pop %v5873
      %v6098 = vrcp.pop %v5874
      %v6099 = vrcp.pop %v5875
      %v6100 = vrcp.pop %v5876
      %v6101 = vrcp.pop %v5877
      %v6102 = vrcp.pop %v5878
      %v6103 = vrcp.pop %v5879
      %v6104 = vrcp.pop %v5880
      %v6105 = vrcp.pop %v5881
      %v6106 = vrcp.pop %v5882
      %v6107 = vrcp.pop %v5883
      %v6108 = vrcp.pop %v5884
      %v6109 = vrcp.pop %v5885
      %v6110 = vrcp.pop %v5886
      %v6111 = vrcp.pop %v5887
      %v6112 = vrcp.pop %v5888
      %v6113 = vrcp.pop %v5889
      %v6114 = vrcp.pop %v5890
      %v6115 = vrcp.pop %v5891
      %v6116 = vrcp.pop %v5892
      %v6117 = vrcp.pop %v5893
      %v6118 = vrcp.pop %v5894
      %v6119 = vrcp.pop %v5895
      %v6120 = vrcp.pop %v5896
      %v6121 = vrcp.pop %v5897
      %v6122 = vrcp.pop %v5898
      %v6123 = vrcp.pop %v5899
      %v6124 = vrcp.pop %v5900
      %v6125 = vrcp.pop %v5901
      %v6126 = vrcp.pop %v5902
      %v6127 = vrcp.pop %v5903
      %v6128 = vrcp.pop %v5904
      %v6129 = vrcp.pop %v5905
      %v6130 = vrcp.pop %v5906
      %v6131 = vrcp.pop %v5907
      %v6132 = vrcp.pop %v5908
      %v6133 = vrcp.pop %v5909
      %v6134 = vrcp.pop %v5910
      %v6135 = vrcp.pop %v5911
      %v6136 = vrcp.pop %v5912
      %v6137 = vrcp.pop %v5913
      %v6138 = vrcp.pop %v5914
      %v6139 = vrcp.pop %v5915
      %v6140 = vrcp.pop %v5916
      %v6141 = vrcp.pop %v5917
      %v6142 = vrcp.pop %v5918
      %v6143 = vrcp.pop %v5919
      %v6144 = vrcp.pop %v5920
      %v6145 = vrcp.pop %v5921
      %v6146 = vrcp.pop %v5922
      %v6147 = vrcp.pop %v5923
      %v6148 = vrcp.pop %v5924
      %v6149 = vrcp.pop %v5925
      %v6150 = vrcp.pop %v5926
      %v6151 = vrcp.pop %v5927
      %v6152 = vrcp.pop %v5928
      %v6153 = vrcp.pop %v5929
      %v6154 = vrcp.pop %v5930
      %v6155 = vrcp.pop %v5931
      %v6156 = vrcp.pop %v5932
      %v6157 = vrcp.pop %v5933
      %v6158 = vrcp.pop %v5934
      %v6159 = vrcp.pop %v5935
      %v6160 = vrcp.pop %v5936
      %v6161 = vrcp.pop %v5937
      %v6162 = vrcp.pop %v5938
      %v6163 = vrcp.pop %v5939
      %v6164 = vrcp.pop %v5940
      %v6165 = vrcp.pop %v5941
      %v6166 = vrcp.pop %v5942
      %v6167 = vrcp.pop %v5943
      %v6168 = vrcp.pop %v5944
      %v6169 = vrcp.pop %v5945
      %v6170 = vrcp.pop %v5946
      %v6171 = vrcp.pop %v5947
      %v6172 = vrcp.pop %v5948
      %v6173 = vrcp.pop %v5949
      %v6174 = vrcp.pop %v5950
      %v6175 = vrcp.pop %v5951
      %6176 = vst [vmem:[%s231] sm:$0xff] %v5952
      %6177 = vst [vmem:[%s231 + $0x8] sm:$0xff] %v5953
      %6178 = vst [vmem:[%s231 + $0x10] sm:$0xff] %v5954
      %6179 = vst [vmem:[%s231 + $0x18] sm:$0xff] %v5955
      %6180 = vst [vmem:[%s231 + $0x20] sm:$0xff] %v5956
      %6181 = vst [vmem:[%s231 + $0x28] sm:$0xff] %v5957
      %6182 = vst [vmem:[%s231 + $0x30] sm:$0xff] %v5958
      %6183 = vst [vmem:[%s231 + $0x38] sm:$0xff] %v5959
      %6184 = vst [vmem:[%s231 + $0x40] sm:$0xff] %v5960
      %6185 = vst [vmem:[%s231 + $0x48] sm:$0xff] %v5961
      %6186 = vst [vmem:[%s231 + $0x50] sm:$0xff] %v5962
      %6187 = vst [vmem:[%s231 + $0x58] sm:$0xff] %v5963
      %6188 = vst [vmem:[%s231 + $0x60] sm:$0xff] %v5964
      %6189 = vst.msk [vmem:[%s231 + $0x68] sm:$0xff] %vm1848, %v5965
      %6190 = vst [vmem:[%s231 + $0x70] sm:$0xff] %v5966
      %6191 = vst [vmem:[%s231 + $0x78] sm:$0xff] %v5967
      %6192 = vst [vmem:[%s231 + $0x80] sm:$0xff] %v5968
      %6193 = vst [vmem:[%s231 + $0x88] sm:$0xff] %v5969
      %6194 = vst [vmem:[%s231 + $0x90] sm:$0xff] %v5970
      %6195 = vst [vmem:[%s231 + $0x98] sm:$0xff] %v5971
      %6196 = vst [vmem:[%s231 + $0xa0] sm:$0xff] %v5972
      %6197 = vst [vmem:[%s231 + $0xa8] sm:$0xff] %v5973
      %6198 = vst [vmem:[%s231 + $0xb0] sm:$0xff] %v5974
      %6199 = vst [vmem:[%s231 + $0xb8] sm:$0xff] %v5975
      %6200 = vst [vmem:[%s231 + $0xc0] sm:$0xff] %v5976
      %6201 = vst [vmem:[%s231 + $0xc8] sm:$0xff] %v5977
      %6202 = vst [vmem:[%s231 + $0xd0] sm:$0xff] %v5978
      %6203 = vst.msk [vmem:[%s231 + $0xd8] sm:$0xff] %vm1848, %v5979
      %6204 = vst [vmem:[%s231 + $0xe0] sm:$0xff] %v5980
      %6205 = vst [vmem:[%s231 + $0xe8] sm:$0xff] %v5981
      %6206 = vst [vmem:[%s231 + $0xf0] sm:$0xff] %v5982
      %6207 = vst [vmem:[%s231 + $0xf8] sm:$0xff] %v5983
      %6208 = vst [vmem:[%s231 + $0x100] sm:$0xff] %v5984
      %6209 = vst [vmem:[%s231 + $0x108] sm:$0xff] %v5985
      %6210 = vst [vmem:[%s231 + $0x110] sm:$0xff] %v5986
      %6211 = vst [vmem:[%s231 + $0x118] sm:$0xff] %v5987
      %6212 = vst [vmem:[%s231 + $0x120] sm:$0xff] %v5988
      %6213 = vst [vmem:[%s231 + $0x128] sm:$0xff] %v5989
      %6214 = vst [vmem:[%s231 + $0x130] sm:$0xff] %v5990
      %6215 = vst [vmem:[%s231 + $0x138] sm:$0xff] %v5991
      %6216 = vst [vmem:[%s231 + $0x140] sm:$0xff] %v5992
      %6217 = vst.msk [vmem:[%s231 + $0x148] sm:$0xff] %vm1848, %v5993
      %6218 = vst [vmem:[%s231 + $0x150] sm:$0xff] %v5994
      %6219 = vst [vmem:[%s231 + $0x158] sm:$0xff] %v5995
      %6220 = vst [vmem:[%s231 + $0x160] sm:$0xff] %v5996
      %6221 = vst [vmem:[%s231 + $0x168] sm:$0xff] %v5997
      %6222 = vst [vmem:[%s231 + $0x170] sm:$0xff] %v5998
      %6223 = vst [vmem:[%s231 + $0x178] sm:$0xff] %v5999
      %6224 = vst [vmem:[%s231 + $0x180] sm:$0xff] %v6000
      %6225 = vst [vmem:[%s231 + $0x188] sm:$0xff] %v6001
      %6226 = vst [vmem:[%s231 + $0x190] sm:$0xff] %v6002
      %6227 = vst [vmem:[%s231 + $0x198] sm:$0xff] %v6003
      %6228 = vst [vmem:[%s231 + $0x1a0] sm:$0xff] %v6004
      %6229 = vst [vmem:[%s231 + $0x1a8] sm:$0xff] %v6005
      %6230 = vst [vmem:[%s231 + $0x1b0] sm:$0xff] %v6006
      %6231 = vst.msk [vmem:[%s231 + $0x1b8] sm:$0xff] %vm1848, %v6007
      %6232 = vst [vmem:[%s231 + $0x1c0] sm:$0xff] %v6008
      %6233 = vst [vmem:[%s231 + $0x1c8] sm:$0xff] %v6009
      %6234 = vst [vmem:[%s231 + $0x1d0] sm:$0xff] %v6010
      %6235 = vst [vmem:[%s231 + $0x1d8] sm:$0xff] %v6011
      %6236 = vst [vmem:[%s231 + $0x1e0] sm:$0xff] %v6012
      %6237 = vst [vmem:[%s231 + $0x1e8] sm:$0xff] %v6013
      %6238 = vst [vmem:[%s231 + $0x1f0] sm:$0xff] %v6014
      %6239 = vst [vmem:[%s231 + $0x1f8] sm:$0xff] %v6015
      %6240 = vst [vmem:[%s231 + $0x200] sm:$0xff] %v6016
      %6241 = vst [vmem:[%s231 + $0x208] sm:$0xff] %v6017
      %6242 = vst [vmem:[%s231 + $0x210] sm:$0xff] %v6018
      %6243 = vst [vmem:[%s231 + $0x218] sm:$0xff] %v6019
      %6244 = vst [vmem:[%s231 + $0x220] sm:$0xff] %v6020
      %6245 = vst.msk [vmem:[%s231 + $0x228] sm:$0xff] %vm1848, %v6021
      %6246 = vst [vmem:[%s231 + $0x230] sm:$0xff] %v6022
      %6247 = vst [vmem:[%s231 + $0x238] sm:$0xff] %v6023
      %6248 = vst [vmem:[%s231 + $0x240] sm:$0xff] %v6024
      %6249 = vst [vmem:[%s231 + $0x248] sm:$0xff] %v6025
      %6250 = vst [vmem:[%s231 + $0x250] sm:$0xff] %v6026
      %6251 = vst [vmem:[%s231 + $0x258] sm:$0xff] %v6027
      %6252 = vst [vmem:[%s231 + $0x260] sm:$0xff] %v6028
      %6253 = vst [vmem:[%s231 + $0x268] sm:$0xff] %v6029
      %6254 = vst [vmem:[%s231 + $0x270] sm:$0xff] %v6030
      %6255 = vst [vmem:[%s231 + $0x278] sm:$0xff] %v6031
      %6256 = vst [vmem:[%s231 + $0x280] sm:$0xff] %v6032
      %6257 = vst [vmem:[%s231 + $0x288] sm:$0xff] %v6033
      %6258 = vst [vmem:[%s231 + $0x290] sm:$0xff] %v6034
      %6259 = vst.msk [vmem:[%s231 + $0x298] sm:$0xff] %vm1848, %v6035
      %6260 = vst [vmem:[%s231 + $0x2a0] sm:$0xff] %v6036
      %6261 = vst [vmem:[%s231 + $0x2a8] sm:$0xff] %v6037
      %6262 = vst [vmem:[%s231 + $0x2b0] sm:$0xff] %v6038
      %6263 = vst [vmem:[%s231 + $0x2b8] sm:$0xff] %v6039
      %6264 = vst [vmem:[%s231 + $0x2c0] sm:$0xff] %v6040
      %6265 = vst [vmem:[%s231 + $0x2c8] sm:$0xff] %v6041
      %6266 = vst [vmem:[%s231 + $0x2d0] sm:$0xff] %v6042
      %6267 = vst [vmem:[%s231 + $0x2d8] sm:$0xff] %v6043
      %6268 = vst [vmem:[%s231 + $0x2e0] sm:$0xff] %v6044
      %6269 = vst [vmem:[%s231 + $0x2e8] sm:$0xff] %v6045
      %6270 = vst [vmem:[%s231 + $0x2f0] sm:$0xff] %v6046
      %6271 = vst [vmem:[%s231 + $0x2f8] sm:$0xff] %v6047
      %6272 = vst [vmem:[%s231 + $0x300] sm:$0xff] %v6048
      %6273 = vst.msk [vmem:[%s231 + $0x308] sm:$0xff] %vm1848, %v6049
      %6274 = vst [vmem:[%s231 + $0x310] sm:$0xff] %v6050
      %6275 = vst [vmem:[%s231 + $0x318] sm:$0xff] %v6051
      %6276 = vst [vmem:[%s231 + $0x320] sm:$0xff] %v6052
      %6277 = vst [vmem:[%s231 + $0x328] sm:$0xff] %v6053
      %6278 = vst [vmem:[%s231 + $0x330] sm:$0xff] %v6054
      %6279 = vst [vmem:[%s231 + $0x338] sm:$0xff] %v6055
      %6280 = vst [vmem:[%s231 + $0x340] sm:$0xff] %v6056
      %6281 = vst [vmem:[%s231 + $0x348] sm:$0xff] %v6057
      %6282 = vst [vmem:[%s231 + $0x350] sm:$0xff] %v6058
      %6283 = vst [vmem:[%s231 + $0x358] sm:$0xff] %v6059
      %6284 = vst [vmem:[%s231 + $0x360] sm:$0xff] %v6060
      %6285 = vst [vmem:[%s231 + $0x368] sm:$0xff] %v6061
      %6286 = vst [vmem:[%s231 + $0x370] sm:$0xff] %v6062
      %6287 = vst.msk [vmem:[%s231 + $0x378] sm:$0xff] %vm1848, %v6063
      %6288 = vst [vmem:[%s231 + $0x380] sm:$0xff] %v6064
      %6289 = vst [vmem:[%s231 + $0x388] sm:$0xff] %v6065
      %6290 = vst [vmem:[%s231 + $0x390] sm:$0xff] %v6066
      %6291 = vst [vmem:[%s231 + $0x398] sm:$0xff] %v6067
      %6292 = vst [vmem:[%s231 + $0x3a0] sm:$0xff] %v6068
      %6293 = vst [vmem:[%s231 + $0x3a8] sm:$0xff] %v6069
      %6294 = vst [vmem:[%s231 + $0x3b0] sm:$0xff] %v6070
      %6295 = vst [vmem:[%s231 + $0x3b8] sm:$0xff] %v6071
      %6296 = vst [vmem:[%s231 + $0x3c0] sm:$0xff] %v6072
      %6297 = vst [vmem:[%s231 + $0x3c8] sm:$0xff] %v6073
      %6298 = vst [vmem:[%s231 + $0x3d0] sm:$0xff] %v6074
      %6299 = vst [vmem:[%s231 + $0x3d8] sm:$0xff] %v6075
      %6300 = vst [vmem:[%s231 + $0x3e0] sm:$0xff] %v6076
      %6301 = vst.msk [vmem:[%s231 + $0x3e8] sm:$0xff] %vm1848, %v6077
      %6302 = vst [vmem:[%s231 + $0x3f0] sm:$0xff] %v6078
      %6303 = vst [vmem:[%s231 + $0x3f8] sm:$0xff] %v6079
      %6304 = vst [vmem:[%s231 + $0x400] sm:$0xff] %v6080
      %6305 = vst [vmem:[%s231 + $0x408] sm:$0xff] %v6081
      %6306 = vst [vmem:[%s231 + $0x410] sm:$0xff] %v6082
      %6307 = vst [vmem:[%s231 + $0x418] sm:$0xff] %v6083
      %6308 = vst [vmem:[%s231 + $0x420] sm:$0xff] %v6084
      %6309 = vst [vmem:[%s231 + $0x428] sm:$0xff] %v6085
      %6310 = vst [vmem:[%s231 + $0x430] sm:$0xff] %v6086
      %6311 = vst [vmem:[%s231 + $0x438] sm:$0xff] %v6087
      %6312 = vst [vmem:[%s231 + $0x440] sm:$0xff] %v6088
      %6313 = vst [vmem:[%s231 + $0x448] sm:$0xff] %v6089
      %6314 = vst [vmem:[%s231 + $0x450] sm:$0xff] %v6090
      %6315 = vst.msk [vmem:[%s231 + $0x458] sm:$0xff] %vm1848, %v6091
      %6316 = vst [vmem:[%s231 + $0x460] sm:$0xff] %v6092
      %6317 = vst [vmem:[%s231 + $0x468] sm:$0xff] %v6093
      %6318 = vst [vmem:[%s231 + $0x470] sm:$0xff] %v6094
      %6319 = vst [vmem:[%s231 + $0x478] sm:$0xff] %v6095
      %6320 = vst [vmem:[%s231 + $0x480] sm:$0xff] %v6096
      %6321 = vst [vmem:[%s231 + $0x488] sm:$0xff] %v6097
      %6322 = vst [vmem:[%s231 + $0x490] sm:$0xff] %v6098
      %6323 = vst [vmem:[%s231 + $0x498] sm:$0xff] %v6099
      %6324 = vst [vmem:[%s231 + $0x4a0] sm:$0xff] %v6100
      %6325 = vst [vmem:[%s231 + $0x4a8] sm:$0xff] %v6101
      %6326 = vst [vmem:[%s231 + $0x4b0] sm:$0xff] %v6102
      %6327 = vst [vmem:[%s231 + $0x4b8] sm:$0xff] %v6103
      %6328 = vst [vmem:[%s231 + $0x4c0] sm:$0xff] %v6104
      %6329 = vst.msk [vmem:[%s231 + $0x4c8] sm:$0xff] %vm1848, %v6105
      %6330 = vst [vmem:[%s231 + $0x4d0] sm:$0xff] %v6106
      %6331 = vst [vmem:[%s231 + $0x4d8] sm:$0xff] %v6107
      %6332 = vst [vmem:[%s231 + $0x4e0] sm:$0xff] %v6108
      %6333 = vst [vmem:[%s231 + $0x4e8] sm:$0xff] %v6109
      %6334 = vst [vmem:[%s231 + $0x4f0] sm:$0xff] %v6110
      %6335 = vst [vmem:[%s231 + $0x4f8] sm:$0xff] %v6111
      %6336 = vst [vmem:[%s231 + $0x500] sm:$0xff] %v6112
      %6337 = vst [vmem:[%s231 + $0x508] sm:$0xff] %v6113
      %6338 = vst [vmem:[%s231 + $0x510] sm:$0xff] %v6114
      %6339 = vst [vmem:[%s231 + $0x518] sm:$0xff] %v6115
      %6340 = vst [vmem:[%s231 + $0x520] sm:$0xff] %v6116
      %6341 = vst [vmem:[%s231 + $0x528] sm:$0xff] %v6117
      %6342 = vst [vmem:[%s231 + $0x530] sm:$0xff] %v6118
      %6343 = vst.msk [vmem:[%s231 + $0x538] sm:$0xff] %vm1848, %v6119
      %6344 = vst [vmem:[%s231 + $0x540] sm:$0xff] %v6120
      %6345 = vst [vmem:[%s231 + $0x548] sm:$0xff] %v6121
      %6346 = vst [vmem:[%s231 + $0x550] sm:$0xff] %v6122
      %6347 = vst [vmem:[%s231 + $0x558] sm:$0xff] %v6123
      %6348 = vst [vmem:[%s231 + $0x560] sm:$0xff] %v6124
      %6349 = vst [vmem:[%s231 + $0x568] sm:$0xff] %v6125
      %6350 = vst [vmem:[%s231 + $0x570] sm:$0xff] %v6126
      %6351 = vst [vmem:[%s231 + $0x578] sm:$0xff] %v6127
      %6352 = vst [vmem:[%s231 + $0x580] sm:$0xff] %v6128
      %6353 = vst [vmem:[%s231 + $0x588] sm:$0xff] %v6129
      %6354 = vst [vmem:[%s231 + $0x590] sm:$0xff] %v6130
      %6355 = vst [vmem:[%s231 + $0x598] sm:$0xff] %v6131
      %6356 = vst [vmem:[%s231 + $0x5a0] sm:$0xff] %v6132
      %6357 = vst.msk [vmem:[%s231 + $0x5a8] sm:$0xff] %vm1848, %v6133
      %6358 = vst [vmem:[%s231 + $0x5b0] sm:$0xff] %v6134
      %6359 = vst [vmem:[%s231 + $0x5b8] sm:$0xff] %v6135
      %6360 = vst [vmem:[%s231 + $0x5c0] sm:$0xff] %v6136
      %6361 = vst [vmem:[%s231 + $0x5c8] sm:$0xff] %v6137
      %6362 = vst [vmem:[%s231 + $0x5d0] sm:$0xff] %v6138
      %6363 = vst [vmem:[%s231 + $0x5d8] sm:$0xff] %v6139
      %6364 = vst [vmem:[%s231 + $0x5e0] sm:$0xff] %v6140
      %6365 = vst [vmem:[%s231 + $0x5e8] sm:$0xff] %v6141
      %6366 = vst [vmem:[%s231 + $0x5f0] sm:$0xff] %v6142
      %6367 = vst [vmem:[%s231 + $0x5f8] sm:$0xff] %v6143
      %6368 = vst [vmem:[%s231 + $0x600] sm:$0xff] %v6144
      %6369 = vst [vmem:[%s231 + $0x608] sm:$0xff] %v6145
      %6370 = vst [vmem:[%s231 + $0x610] sm:$0xff] %v6146
      %6371 = vst.msk [vmem:[%s231 + $0x618] sm:$0xff] %vm1848, %v6147
      %6372 = vst [vmem:[%s231 + $0x620] sm:$0xff] %v6148
      %6373 = vst [vmem:[%s231 + $0x628] sm:$0xff] %v6149
      %6374 = vst [vmem:[%s231 + $0x630] sm:$0xff] %v6150
      %6375 = vst [vmem:[%s231 + $0x638] sm:$0xff] %v6151
      %6376 = vst [vmem:[%s231 + $0x640] sm:$0xff] %v6152
      %6377 = vst [vmem:[%s231 + $0x648] sm:$0xff] %v6153
      %6378 = vst [vmem:[%s231 + $0x650] sm:$0xff] %v6154
      %6379 = vst [vmem:[%s231 + $0x658] sm:$0xff] %v6155
      %6380 = vst [vmem:[%s231 + $0x660] sm:$0xff] %v6156
      %6381 = vst [vmem:[%s231 + $0x668] sm:$0xff] %v6157
      %6382 = vst [vmem:[%s231 + $0x670] sm:$0xff] %v6158
      %6383 = vst [vmem:[%s231 + $0x678] sm:$0xff] %v6159
      %6384 = vst [vmem:[%s231 + $0x680] sm:$0xff] %v6160
      %6385 = vst.msk [vmem:[%s231 + $0x688] sm:$0xff] %vm1848, %v6161
      %6386 = vst [vmem:[%s231 + $0x690] sm:$0xff] %v6162
      %6387 = vst [vmem:[%s231 + $0x698] sm:$0xff] %v6163
      %6388 = vst [vmem:[%s231 + $0x6a0] sm:$0xff] %v6164
      %6389 = vst [vmem:[%s231 + $0x6a8] sm:$0xff] %v6165
      %6390 = vst [vmem:[%s231 + $0x6b0] sm:$0xff] %v6166
      %6391 = vst [vmem:[%s231 + $0x6b8] sm:$0xff] %v6167
      %6392 = vst [vmem:[%s231 + $0x6c0] sm:$0xff] %v6168
      %6393 = vst [vmem:[%s231 + $0x6c8] sm:$0xff] %v6169
      %6394 = vst [vmem:[%s231 + $0x6d0] sm:$0xff] %v6170
      %6395 = vst [vmem:[%s231 + $0x6d8] sm:$0xff] %v6171
      %6396 = vst [vmem:[%s231 + $0x6e0] sm:$0xff] %v6172
      %6397 = vst [vmem:[%s231 + $0x6e8] sm:$0xff] %v6173
      %6398 = vst [vmem:[%s231 + $0x6f0] sm:$0xff] %v6174
      %6399 = vst.msk [vmem:[%s231 + $0x6f8] sm:$0xff] %vm1848, %v6175
      %s6400 = smul.u32 16, %s16
      %p6401 = scmp.lt.s32.totalorder %s6400, 63
      %s6402 = scalar_select %p6401, %s6400, 63
      %s6403 = smul.addr %s6402, 14
      %s6404 = smul.addr %s6403, 8
      %s6405 = scalar_lea.vmem %s5, %s6404
      // Predicated region
      $region41: #{tpu_custom_call.1} parent=39 // pred_check
        %p6406 = pneg %p144
      $region42: #{tpu_custom_call.1} parent=39 // pred_check_branch
        %6408 = sbr.rel (%p6406) target = $region44
      $region43: #{tpu_custom_call.1} parent=39 // pred_region
        %s6409 = smul.u32 16, %s16
      $region44: #{tpu_custom_call.1} parent=39 // pred_fallthru
        _
    $region40: #{tpu_custom_call.1} parent=5 // pred_fallthru
      _
    %p6410 = scmp.le.s32.totalorder 2, %s11
    // Predicated region
    $region45: #{tpu_custom_call.1} parent=5 // pred_check
      %p6411 = pneg %p6410
    $region46: #{tpu_custom_call.1} parent=5 // pred_check_branch
      %6413 = sbr.rel (%p6411) target = $region48
    $region47: #{tpu_custom_call.1} parent=5 // pred_region
      %s6414 = ssub.s32 %s11, 2
      // Predicated region
      $region49: #{tpu_custom_call.1} parent=47 // pred_check
        %p6415 = pneg %p150
      $region50: #{tpu_custom_call.1} parent=47 // pred_check_branch
        %6417 = sbr.rel (%p6415) target = $region52
      $region51: #{tpu_custom_call.1} parent=47 // pred_region
        %s6418 = smul.u32 16, %s17
        %p6419 = scmp.lt.s32.totalorder %s6418, 63
        %s6420 = scalar_select %p6419, %s6418, 63
        %s6421 = smul.addr %s6420, 14
        %s6422 = smul.addr %s6421, 8
        %s6423 = scalar_lea.vmem %s5, %s6422
      $region52: #{tpu_custom_call.1} parent=47 // pred_fallthru
        _
    $region48: #{tpu_custom_call.1} parent=5 // pred_fallthru
      _
  $region6: #{tpu_custom_call.1} parent=0 // loop_footer
    %s15 = sadd.s32 1, %s11
  $region7: #{tpu_custom_call.1} parent=0 // loop_footer_branch
    %10 = sbr.rel target = $region3
  $region8: #{tpu_custom_call.1} parent=0 // loop_exit
    _

// kernel: tpu_custom_call.1
$region0: #{tpu_custom_call.1}
  #allocation0 [shape = 'u32[]', space=smem, size = 0x4, offset = 0x4, fixed_abs, tag = 'smem constant byte address 0x4 - core index']
  #allocation1 [shape = 'u32[144,128]{1,0:T(1,128)}', space=vmem, size = 0x12000, scoped, tag = 'internal scratch']
  %s0 = inlined_call_operand.vmem [shape: f32[512,1682], index: 0, kind: input, shape index: {}]
  %s1 = inlined_call_operand.vmem [shape: bf16[1682,256], index: 1, kind: input, shape index: {}]
  %s2 = inlined_call_operand.vmem [shape: f32[1,256], index: 2, kind: input, shape index: {}]
  %s3 = inlined_call_operand.vmem [shape: bf16[256,1682], index: 3, kind: input, shape index: {}]
  %s4 = inlined_call_operand.vmem [shape: f32[1,1682], index: 4, kind: input, shape index: {}]
  %s5 = inlined_call_operand.vmem [shape: f32[512,1682], index: 5, kind: output, shape index: {}]
  %s6 = sld [smem:[#allocation0]]
  $region53: #{tpu_custom_call.1} parent=0
    _
  %s8 = ssub.s32 1, %s6
  %s9 = scalar_select 0, %s8, %s6
  loop: start=0, step=1, limit=6
  $region2: #{tpu_custom_call.1} parent=0 // loop_pre_header
    _
  $region3: #{tpu_custom_call.1} parent=0 // loop_header
    %s11 = sphi 0, %s15
    %p12 = scmp.ge.s32.totalorder %s11, 6
    %s21 = sphi 0, %s23
    %s24 = sphi 0, %s21
    %s25 = sphi 0, %s24
    %s41 = sphi 0, %s25
    %s45 = sphi 0, %s45
    %s47 = sphi 0, %s45
    %s48 = sphi 0, %s47
    %s62 = sphi 0, %s48
    %s66 = sphi 0, %s66
    %s68 = sphi 0, %s66
    %s69 = sphi 0, %s68
    %s83 = sphi 0, %s69
    %s87 = sphi 0, %s87
    %s89 = sphi 0, %s87
    %s90 = sphi 0, %s89
    %s104 = sphi 0, %s90
    %s108 = sphi 0, %s108
    %s110 = sphi 0, %s108
    %s111 = sphi 0, %s110
    %s125 = sphi 0, %s111
    %s131 = sphi 0, %s133
    %s134 = sphi 0, %s131
    %s135 = sphi 0, %s134
    %s151 = sphi 0, %s135
  $region4: #{tpu_custom_call.1} parent=0 // loop_header_branch
    %14 = sbr.rel (%p12) target = $region8
  $region5: #{tpu_custom_call.1} parent=0 // loop_body
    %s16 = ssub.s32 %s11, 1
    %s17 = ssub.s32 %s11, 2
    %s18 = sadd.s32 %s11, 1
    %s19 = ssub.s32 %s11, %s18
    %p20 = scmp.eq.s32.totalorder %s19, 0
    %s22 = sadd.s32 %s21, 1
    %s23 = scalar_select %p20, %s21, %s22
    %p26 = pneg %p20
    %p27 = scmp.eq.s32.totalorder %s11, 3
    %p28 = por %p26, %p27
    %p29 = scmp.ne.s32.totalorder %s21, %s24
    %p30 = scmp.eq.s32.totalorder %s11, 0
    %p31 = por %p29, %p30
    %p32 = scmp.ne.s32.totalorder %s21, %s24
    %p33 = scmp.eq.s32.totalorder %s16, 3
    %p34 = por %p32, %p33
    %p35 = scmp.ne.s32.totalorder %s24, %s25
    %p36 = scmp.eq.s32.totalorder %s16, 0
    %p37 = por %p35, %p36
    %p38 = scmp.ne.s32.totalorder %s24, %s25
    %p39 = scmp.eq.s32.totalorder %s17, 3
    %p40 = por %p38, %p39
    %p42 = scmp.ne.s32.totalorder %s25, %s41
    %p43 = scmp.eq.s32.totalorder %s17, 0
    %p44 = por %p42, %p43
    %s46 = sadd.s32 %s45, 1
    %p49 = scmp.eq.s32.totalorder %s11, 3
    %p50 = scmp.ne.s32.totalorder %s45, %s47
    %p51 = scmp.eq.s32.totalorder %s11, 0
    %p52 = por %p50, %p51
    %p53 = scmp.ne.s32.totalorder %s45, %s47
    %p54 = scmp.eq.s32.totalorder %s16, 3
    %p55 = por %p53, %p54
    %p56 = scmp.ne.s32.totalorder %s47, %s48
    %p57 = scmp.eq.s32.totalorder %s16, 0
    %p58 = por %p56, %p57
    %p59 = scmp.ne.s32.totalorder %s47, %s48
    %p60 = scmp.eq.s32.totalorder %s17, 3
    %p61 = por %p59, %p60
    %p63 = scmp.ne.s32.totalorder %s48, %s62
    %p64 = scmp.eq.s32.totalorder %s17, 0
    %p65 = por %p63, %p64
    %s67 = sadd.s32 %s66, 1
    %p70 = scmp.eq.s32.totalorder %s11, 3
    %p71 = scmp.ne.s32.totalorder %s66, %s68
    %p72 = scmp.eq.s32.totalorder %s11, 0
    %p73 = por %p71, %p72
    %p74 = scmp.ne.s32.totalorder %s66, %s68
    %p75 = scmp.eq.s32.totalorder %s16, 3
    %p76 = por %p74, %p75
    %p77 = scmp.ne.s32.totalorder %s68, %s69
    %p78 = scmp.eq.s32.totalorder %s16, 0
    %p79 = por %p77, %p78
    %p80 = scmp.ne.s32.totalorder %s68, %s69
    %p81 = scmp.eq.s32.totalorder %s17, 3
    %p82 = por %p80, %p81
    %p84 = scmp.ne.s32.totalorder %s69, %s83
    %p85 = scmp.eq.s32.totalorder %s17, 0
    %p86 = por %p84, %p85
    %s88 = sadd.s32 %s87, 1
    %p91 = scmp.eq.s32.totalorder %s11, 3
    %p92 = scmp.ne.s32.totalorder %s87, %s89
    %p93 = scmp.eq.s32.totalorder %s11, 0
    %p94 = por %p92, %p93
    %p95 = scmp.ne.s32.totalorder %s87, %s89
    %p96 = scmp.eq.s32.totalorder %s16, 3
    %p97 = por %p95, %p96
    %p98 = scmp.ne.s32.totalorder %s89, %s90
    %p99 = scmp.eq.s32.totalorder %s16, 0
    %p100 = por %p98, %p99
    %p101 = scmp.ne.s32.totalorder %s89, %s90
    %p102 = scmp.eq.s32.totalorder %s17, 3
    %p103 = por %p101, %p102
    %p105 = scmp.ne.s32.totalorder %s90, %s104
    %p106 = scmp.eq.s32.totalorder %s17, 0
    %p107 = por %p105, %p106
    %s109 = sadd.s32 %s108, 1
    %p112 = scmp.eq.s32.totalorder %s11, 3
    %p113 = scmp.ne.s32.totalorder %s108, %s110
    %p114 = scmp.eq.s32.totalorder %s11, 0
    %p115 = por %p113, %p114
    %p116 = scmp.ne.s32.totalorder %s108, %s110
    %p117 = scmp.eq.s32.totalorder %s16, 3
    %p118 = por %p116, %p117
    %p119 = scmp.ne.s32.totalorder %s110, %s111
    %p120 = scmp.eq.s32.totalorder %s16, 0
    %p121 = por %p119, %p120
    %p122 = scmp.ne.s32.totalorder %s110, %s111
    %p123 = scmp.eq.s32.totalorder %s17, 3
    %p124 = por %p122, %p123
    %p126 = scmp.ne.s32.totalorder %s111, %s125
    %p127 = scmp.eq.s32.totalorder %s17, 0
    %p128 = por %p126, %p127
    %s129 = ssub.s32 %s11, %s18
    %p130 = scmp.eq.s32.totalorder %s129, 0
    %s132 = sadd.s32 %s131, 1
    %s133 = scalar_select %p130, %s131, %s132
    %p136 = pneg %p130
    %p137 = scmp.eq.s32.totalorder %s11, 3
    %p138 = por %p136, %p137
    %p139 = scmp.ne.s32.totalorder %s131, %s134
    %p140 = scmp.eq.s32.totalorder %s11, 0
    %p141 = por %p139, %p140
    %p142 = scmp.ne.s32.totalorder %s131, %s134
    %p143 = scmp.eq.s32.totalorder %s16, 3
    %p144 = por %p142, %p143
    %p145 = scmp.ne.s32.totalorder %s134, %s135
    %p146 = scmp.eq.s32.totalorder %s16, 0
    %p147 = por %p145, %p146
    %p148 = scmp.ne.s32.totalorder %s134, %s135
    %p149 = scmp.eq.s32.totalorder %s17, 3
    %p150 = por %p148, %p149
    %p152 = scmp.ne.s32.totalorder %s135, %s151
    %p153 = scmp.eq.s32.totalorder %s17, 0
    %p154 = por %p152, %p153
    %p155 = scmp.le.s32.totalorder 1, %s11
    %p156 = scmp.lt.s32.totalorder %s11, 5
    %p157 = pnand %p155, %p156
    %p158 = pneg %p157
    // Predicated region
    $region9: #{tpu_custom_call.1} parent=5 // pred_check
      _
    $region10: #{tpu_custom_call.1} parent=5 // pred_check_branch
      %160 = sbr.rel (%p157) target = $region12
    $region11: #{tpu_custom_call.1} parent=5 // pred_region
      %s161 = ssub.s32 %s11, 1
      // Predicated region
      $region13: #{tpu_custom_call.1} parent=11 // pred_check
        %p162 = pneg %p58
      $region14: #{tpu_custom_call.1} parent=11 // pred_check_branch
        %164 = sbr.rel (%p162) target = $region16
      $region15: #{tpu_custom_call.1} parent=11 // pred_region
        _
      $region16: #{tpu_custom_call.1} parent=11 // pred_fallthru
        _
      // Predicated region
      $region17: #{tpu_custom_call.1} parent=11 // pred_check
        %p165 = pneg %p79
      $region18: #{tpu_custom_call.1} parent=11 // pred_check_branch
        %167 = sbr.rel (%p165) target = $region20
      $region19: #{tpu_custom_call.1} parent=11 // pred_region
        _
      $region20: #{tpu_custom_call.1} parent=11 // pred_fallthru
        _
      // Predicated region
      $region21: #{tpu_custom_call.1} parent=11 // pred_check
        %p168 = pneg %p100
      $region22: #{tpu_custom_call.1} parent=11 // pred_check_branch
        %170 = sbr.rel (%p168) target = $region24
      $region23: #{tpu_custom_call.1} parent=11 // pred_region
        _
      $region24: #{tpu_custom_call.1} parent=11 // pred_fallthru
        _
      // Predicated region
      $region25: #{tpu_custom_call.1} parent=11 // pred_check
        %p171 = pneg %p121
      $region26: #{tpu_custom_call.1} parent=11 // pred_check_branch
        %173 = sbr.rel (%p171) target = $region28
      $region27: #{tpu_custom_call.1} parent=11 // pred_region
        _
      $region28: #{tpu_custom_call.1} parent=11 // pred_fallthru
        _
    $region12: #{tpu_custom_call.1} parent=5 // pred_fallthru
      _
    %p174 = scmp.lt.s32.totalorder %s11, 4
    // Predicated region
    $region29: #{tpu_custom_call.1} parent=5 // pred_check
      %p175 = pneg %p174
    $region30: #{tpu_custom_call.1} parent=5 // pred_check_branch
      %177 = sbr.rel (%p175) target = $region32
    $region31: #{tpu_custom_call.1} parent=5 // pred_region
      // Predicated region
      $region33: #{tpu_custom_call.1} parent=31 // pred_check
        %p178 = pneg %p31
      $region34: #{tpu_custom_call.1} parent=31 // pred_check_branch
        %180 = sbr.rel (%p178) target = $region36
      $region35: #{tpu_custom_call.1} parent=31 // pred_region
        %s181 = smul.u32 16, %s11
        %p182 = scmp.lt.s32.totalorder %s181, 63
        %s183 = scalar_select %p182, %s181, 63
        %s184 = smul.addr %s183, 14
        %s185 = smul.addr %s184, 8
        %s186 = scalar_lea.vmem %s0, %s185
        %s187 = smul.u32 16, %s11
      $region36: #{tpu_custom_call.1} parent=31 // pred_fallthru
        _
    $region32: #{tpu_custom_call.1} parent=5 // pred_fallthru
      _
    %p188 = scmp.le.s32.totalorder 1, %s11
    %p189 = scmp.lt.s32.totalorder %s11, 5
    %p190 = pnand %p188, %p189
    %p191 = pneg %p190
    // Predicated region
    $region37: #{tpu_custom_call.1} parent=5 // pred_check
      _
    $region38: #{tpu_custom_call.1} parent=5 // pred_check_branch
      %193 = sbr.rel (%p190) target = $region40
    $region39: #{tpu_custom_call.1} parent=5 // pred_region
      %s194 = ssub.s32 %s11, 1
      %s195 = smul.u32 16, %s16
      %p196 = scmp.lt.s32.totalorder %s195, 63
      %s197 = scalar_select %p196, %s195, 63
      %s198 = smul.addr %s197, 14
      %s199 = smul.addr %s198, 8
      %s200 = scalar_lea.vmem %s0, %s199
      %p201 = pneg %p37
      %p202 = pneg %p34
      %p203 = pneg %p58
      %p204 = pneg %p55
      %p205 = pneg %p79
      %p206 = pneg %p76
      %p207 = pneg %p100
      %p208 = pneg %p97
      %p209 = pneg %p121
      %p210 = pneg %p118
      %p211 = pneg %p147
      %p212 = pneg %p144
      %s213 = smul.u32 16, %s16
      %p214 = scmp.lt.s32.totalorder %s213, 63
      %s215 = scalar_select %p214, %s213, 63
      %s216 = smul.addr %s215, 14
      %s217 = smul.addr %s216, 8
      %s218 = scalar_lea.vmem %s5, %s217
      %s219 = smul.u32 16, %s16
      %p220 = scmp.lt.s32.totalorder %s219, 63
      %s221 = scalar_select %p220, %s219, 63
      %s222 = smul.addr %s221, 14
      %s223 = smul.addr %s222, 8
      %s224 = scalar_lea.vmem %s0, %s223
      %s225 = smul.u32 16, %s16
      %s226 = smul.u32 16, %s16
      %p227 = scmp.lt.s32.totalorder %s226, 63
      %s228 = scalar_select %p227, %s226, 63
      %s229 = smul.addr %s228, 14
      %s230 = smul.addr %s229, 8
      %s231 = scalar_lea.vmem %s5, %s230
      %s232 = smul.u32 16, %s16
      %v234 = vld [vmem:[%s224] sm:$0xff]
      %v235 = vld [vmem:[%s224 + $0x8] sm:$0xff]
      %v236 = vld [vmem:[%s224 + $0x10] sm:$0xff]
      %v237 = vld [vmem:[%s224 + $0x18] sm:$0xff]
      %v238 = vld [vmem:[%s224 + $0x20] sm:$0xff]
      %v239 = vld [vmem:[%s224 + $0x28] sm:$0xff]
      %v240 = vld [vmem:[%s224 + $0x30] sm:$0xff]
      %v241 = vld [vmem:[%s224 + $0x38] sm:$0xff]
      %v242 = vld [vmem:[%s224 + $0x40] sm:$0xff]
      %v243 = vld [vmem:[%s224 + $0x48] sm:$0xff]
      %v244 = vld [vmem:[%s224 + $0x50] sm:$0xff]
      %v245 = vld [vmem:[%s224 + $0x58] sm:$0xff]
      %v246 = vld [vmem:[%s224 + $0x60] sm:$0xff]
      %v247 = vld [vmem:[%s224 + $0x68] sm:$0xff]
      %v248 = vld [vmem:[%s224 + $0x70] sm:$0xff]
      %v249 = vld [vmem:[%s224 + $0x78] sm:$0xff]
      %v250 = vld [vmem:[%s224 + $0x80] sm:$0xff]
      %v251 = vld [vmem:[%s224 + $0x88] sm:$0xff]
      %v252 = vld [vmem:[%s224 + $0x90] sm:$0xff]
      %v253 = vld [vmem:[%s224 + $0x98] sm:$0xff]
      %v254 = vld [vmem:[%s224 + $0xa0] sm:$0xff]
      %v255 = vld [vmem:[%s224 + $0xa8] sm:$0xff]
      %v256 = vld [vmem:[%s224 + $0xb0] sm:$0xff]
      %v257 = vld [vmem:[%s224 + $0xb8] sm:$0xff]
      %v258 = vld [vmem:[%s224 + $0xc0] sm:$0xff]
      %v259 = vld [vmem:[%s224 + $0xc8] sm:$0xff]
      %v260 = vld [vmem:[%s224 + $0xd0] sm:$0xff]
      %v261 = vld [vmem:[%s224 + $0xd8] sm:$0xff]
      %v262 = vld [vmem:[%s224 + $0xe0] sm:$0xff]
      %v263 = vld [vmem:[%s224 + $0xe8] sm:$0xff]
      %v264 = vld [vmem:[%s224 + $0xf0] sm:$0xff]
      %v265 = vld [vmem:[%s224 + $0xf8] sm:$0xff]
      %v266 = vld [vmem:[%s224 + $0x100] sm:$0xff]
      %v267 = vld [vmem:[%s224 + $0x108] sm:$0xff]
      %v268 = vld [vmem:[%s224 + $0x110] sm:$0xff]
      %v269 = vld [vmem:[%s224 + $0x118] sm:$0xff]
      %v270 = vld [vmem:[%s224 + $0x120] sm:$0xff]
      %v271 = vld [vmem:[%s224 + $0x128] sm:$0xff]
      %v272 = vld [vmem:[%s224 + $0x130] sm:$0xff]
      %v273 = vld [vmem:[%s224 + $0x138] sm:$0xff]
      %v274 = vld [vmem:[%s224 + $0x140] sm:$0xff]
      %v275 = vld [vmem:[%s224 + $0x148] sm:$0xff]
      %v276 = vld [vmem:[%s224 + $0x150] sm:$0xff]
      %v277 = vld [vmem:[%s224 + $0x158] sm:$0xff]
      %v278 = vld [vmem:[%s224 + $0x160] sm:$0xff]
      %v279 = vld [vmem:[%s224 + $0x168] sm:$0xff]
      %v280 = vld [vmem:[%s224 + $0x170] sm:$0xff]
      %v281 = vld [vmem:[%s224 + $0x178] sm:$0xff]
      %v282 = vld [vmem:[%s224 + $0x180] sm:$0xff]
      %v283 = vld [vmem:[%s224 + $0x188] sm:$0xff]
      %v284 = vld [vmem:[%s224 + $0x190] sm:$0xff]
      %v285 = vld [vmem:[%s224 + $0x198] sm:$0xff]
      %v286 = vld [vmem:[%s224 + $0x1a0] sm:$0xff]
      %v287 = vld [vmem:[%s224 + $0x1a8] sm:$0xff]
      %v288 = vld [vmem:[%s224 + $0x1b0] sm:$0xff]
      %v289 = vld [vmem:[%s224 + $0x1b8] sm:$0xff]
      %v290 = vld [vmem:[%s224 + $0x1c0] sm:$0xff]
      %v291 = vld [vmem:[%s224 + $0x1c8] sm:$0xff]
      %v292 = vld [vmem:[%s224 + $0x1d0] sm:$0xff]
      %v293 = vld [vmem:[%s224 + $0x1d8] sm:$0xff]
      %v294 = vld [vmem:[%s224 + $0x1e0] sm:$0xff]
      %v295 = vld [vmem:[%s224 + $0x1e8] sm:$0xff]
      %v296 = vld [vmem:[%s224 + $0x1f0] sm:$0xff]
      %v297 = vld [vmem:[%s224 + $0x1f8] sm:$0xff]
      %v298 = vld [vmem:[%s224 + $0x200] sm:$0xff]
      %v299 = vld [vmem:[%s224 + $0x208] sm:$0xff]
      %v300 = vld [vmem:[%s224 + $0x210] sm:$0xff]
      %v301 = vld [vmem:[%s224 + $0x218] sm:$0xff]
      %v302 = vld [vmem:[%s224 + $0x220] sm:$0xff]
      %v303 = vld [vmem:[%s224 + $0x228] sm:$0xff]
      %v304 = vld [vmem:[%s224 + $0x230] sm:$0xff]
      %v305 = vld [vmem:[%s224 + $0x238] sm:$0xff]
      %v306 = vld [vmem:[%s224 + $0x240] sm:$0xff]
      %v307 = vld [vmem:[%s224 + $0x248] sm:$0xff]
      %v308 = vld [vmem:[%s224 + $0x250] sm:$0xff]
      %v309 = vld [vmem:[%s224 + $0x258] sm:$0xff]
      %v310 = vld [vmem:[%s224 + $0x260] sm:$0xff]
      %v311 = vld [vmem:[%s224 + $0x268] sm:$0xff]
      %v312 = vld [vmem:[%s224 + $0x270] sm:$0xff]
      %v313 = vld [vmem:[%s224 + $0x278] sm:$0xff]
      %v314 = vld [vmem:[%s224 + $0x280] sm:$0xff]
      %v315 = vld [vmem:[%s224 + $0x288] sm:$0xff]
      %v316 = vld [vmem:[%s224 + $0x290] sm:$0xff]
      %v317 = vld [vmem:[%s224 + $0x298] sm:$0xff]
      %v318 = vld [vmem:[%s224 + $0x2a0] sm:$0xff]
      %v319 = vld [vmem:[%s224 + $0x2a8] sm:$0xff]
      %v320 = vld [vmem:[%s224 + $0x2b0] sm:$0xff]
      %v321 = vld [vmem:[%s224 + $0x2b8] sm:$0xff]
      %v322 = vld [vmem:[%s224 + $0x2c0] sm:$0xff]
      %v323 = vld [vmem:[%s224 + $0x2c8] sm:$0xff]
      %v324 = vld [vmem:[%s224 + $0x2d0] sm:$0xff]
      %v325 = vld [vmem:[%s224 + $0x2d8] sm:$0xff]
      %v326 = vld [vmem:[%s224 + $0x2e0] sm:$0xff]
      %v327 = vld [vmem:[%s224 + $0x2e8] sm:$0xff]
      %v328 = vld [vmem:[%s224 + $0x2f0] sm:$0xff]
      %v329 = vld [vmem:[%s224 + $0x2f8] sm:$0xff]
      %v330 = vld [vmem:[%s224 + $0x300] sm:$0xff]
      %v331 = vld [vmem:[%s224 + $0x308] sm:$0xff]
      %v332 = vld [vmem:[%s224 + $0x310] sm:$0xff]
      %v333 = vld [vmem:[%s224 + $0x318] sm:$0xff]
      %v334 = vld [vmem:[%s224 + $0x320] sm:$0xff]
      %v335 = vld [vmem:[%s224 + $0x328] sm:$0xff]
      %v336 = vld [vmem:[%s224 + $0x330] sm:$0xff]
      %v337 = vld [vmem:[%s224 + $0x338] sm:$0xff]
      %v338 = vld [vmem:[%s224 + $0x340] sm:$0xff]
      %v339 = vld [vmem:[%s224 + $0x348] sm:$0xff]
      %v340 = vld [vmem:[%s224 + $0x350] sm:$0xff]
      %v341 = vld [vmem:[%s224 + $0x358] sm:$0xff]
      %v342 = vld [vmem:[%s224 + $0x360] sm:$0xff]
      %v343 = vld [vmem:[%s224 + $0x368] sm:$0xff]
      %v344 = vld [vmem:[%s224 + $0x370] sm:$0xff]
      %v345 = vld [vmem:[%s224 + $0x378] sm:$0xff]
      %v346 = vld [vmem:[%s224 + $0x380] sm:$0xff]
      %v347 = vld [vmem:[%s224 + $0x388] sm:$0xff]
      %v348 = vld [vmem:[%s224 + $0x390] sm:$0xff]
      %v349 = vld [vmem:[%s224 + $0x398] sm:$0xff]
      %v350 = vld [vmem:[%s224 + $0x3a0] sm:$0xff]
      %v351 = vld [vmem:[%s224 + $0x3a8] sm:$0xff]
      %v352 = vld [vmem:[%s224 + $0x3b0] sm:$0xff]
      %v353 = vld [vmem:[%s224 + $0x3b8] sm:$0xff]
      %v354 = vld [vmem:[%s224 + $0x3c0] sm:$0xff]
      %v355 = vld [vmem:[%s224 + $0x3c8] sm:$0xff]
      %v356 = vld [vmem:[%s224 + $0x3d0] sm:$0xff]
      %v357 = vld [vmem:[%s224 + $0x3d8] sm:$0xff]
      %v358 = vld [vmem:[%s224 + $0x3e0] sm:$0xff]
      %v359 = vld [vmem:[%s224 + $0x3e8] sm:$0xff]
      %v360 = vld [vmem:[%s224 + $0x3f0] sm:$0xff]
      %v361 = vld [vmem:[%s224 + $0x3f8] sm:$0xff]
      %v362 = vld [vmem:[%s224 + $0x400] sm:$0xff]
      %v363 = vld [vmem:[%s224 + $0x408] sm:$0xff]
      %v364 = vld [vmem:[%s224 + $0x410] sm:$0xff]
      %v365 = vld [vmem:[%s224 + $0x418] sm:$0xff]
      %v366 = vld [vmem:[%s224 + $0x420] sm:$0xff]
      %v367 = vld [vmem:[%s224 + $0x428] sm:$0xff]
      %v368 = vld [vmem:[%s224 + $0x430] sm:$0xff]
      %v369 = vld [vmem:[%s224 + $0x438] sm:$0xff]
      %v370 = vld [vmem:[%s224 + $0x440] sm:$0xff]
      %v371 = vld [vmem:[%s224 + $0x448] sm:$0xff]
      %v372 = vld [vmem:[%s224 + $0x450] sm:$0xff]
      %v373 = vld [vmem:[%s224 + $0x458] sm:$0xff]
      %v374 = vld [vmem:[%s224 + $0x460] sm:$0xff]
      %v375 = vld [vmem:[%s224 + $0x468] sm:$0xff]
      %v376 = vld [vmem:[%s224 + $0x470] sm:$0xff]
      %v377 = vld [vmem:[%s224 + $0x478] sm:$0xff]
      %v378 = vld [vmem:[%s224 + $0x480] sm:$0xff]
      %v379 = vld [vmem:[%s224 + $0x488] sm:$0xff]
      %v380 = vld [vmem:[%s224 + $0x490] sm:$0xff]
      %v381 = vld [vmem:[%s224 + $0x498] sm:$0xff]
      %v382 = vld [vmem:[%s224 + $0x4a0] sm:$0xff]
      %v383 = vld [vmem:[%s224 + $0x4a8] sm:$0xff]
      %v384 = vld [vmem:[%s224 + $0x4b0] sm:$0xff]
      %v385 = vld [vmem:[%s224 + $0x4b8] sm:$0xff]
      %v386 = vld [vmem:[%s224 + $0x4c0] sm:$0xff]
      %v387 = vld [vmem:[%s224 + $0x4c8] sm:$0xff]
      %v388 = vld [vmem:[%s224 + $0x4d0] sm:$0xff]
      %v389 = vld [vmem:[%s224 + $0x4d8] sm:$0xff]
      %v390 = vld [vmem:[%s224 + $0x4e0] sm:$0xff]
      %v391 = vld [vmem:[%s224 + $0x4e8] sm:$0xff]
      %v392 = vld [vmem:[%s224 + $0x4f0] sm:$0xff]
      %v393 = vld [vmem:[%s224 + $0x4f8] sm:$0xff]
      %v394 = vld [vmem:[%s224 + $0x500] sm:$0xff]
      %v395 = vld [vmem:[%s224 + $0x508] sm:$0xff]
      %v396 = vld [vmem:[%s224 + $0x510] sm:$0xff]
      %v397 = vld [vmem:[%s224 + $0x518] sm:$0xff]
      %v398 = vld [vmem:[%s224 + $0x520] sm:$0xff]
      %v399 = vld [vmem:[%s224 + $0x528] sm:$0xff]
      %v400 = vld [vmem:[%s224 + $0x530] sm:$0xff]
      %v401 = vld [vmem:[%s224 + $0x538] sm:$0xff]
      %v402 = vld [vmem:[%s224 + $0x540] sm:$0xff]
      %v403 = vld [vmem:[%s224 + $0x548] sm:$0xff]
      %v404 = vld [vmem:[%s224 + $0x550] sm:$0xff]
      %v405 = vld [vmem:[%s224 + $0x558] sm:$0xff]
      %v406 = vld [vmem:[%s224 + $0x560] sm:$0xff]
      %v407 = vld [vmem:[%s224 + $0x568] sm:$0xff]
      %v408 = vld [vmem:[%s224 + $0x570] sm:$0xff]
      %v409 = vld [vmem:[%s224 + $0x578] sm:$0xff]
      %v410 = vld [vmem:[%s224 + $0x580] sm:$0xff]
      %v411 = vld [vmem:[%s224 + $0x588] sm:$0xff]
      %v412 = vld [vmem:[%s224 + $0x590] sm:$0xff]
      %v413 = vld [vmem:[%s224 + $0x598] sm:$0xff]
      %v414 = vld [vmem:[%s224 + $0x5a0] sm:$0xff]
      %v415 = vld [vmem:[%s224 + $0x5a8] sm:$0xff]
      %v416 = vld [vmem:[%s224 + $0x5b0] sm:$0xff]
      %v417 = vld [vmem:[%s224 + $0x5b8] sm:$0xff]
      %v418 = vld [vmem:[%s224 + $0x5c0] sm:$0xff]
      %v419 = vld [vmem:[%s224 + $0x5c8] sm:$0xff]
      %v420 = vld [vmem:[%s224 + $0x5d0] sm:$0xff]
      %v421 = vld [vmem:[%s224 + $0x5d8] sm:$0xff]
      %v422 = vld [vmem:[%s224 + $0x5e0] sm:$0xff]
      %v423 = vld [vmem:[%s224 + $0x5e8] sm:$0xff]
      %v424 = vld [vmem:[%s224 + $0x5f0] sm:$0xff]
      %v425 = vld [vmem:[%s224 + $0x5f8] sm:$0xff]
      %v426 = vld [vmem:[%s224 + $0x600] sm:$0xff]
      %v427 = vld [vmem:[%s224 + $0x608] sm:$0xff]
      %v428 = vld [vmem:[%s224 + $0x610] sm:$0xff]
      %v429 = vld [vmem:[%s224 + $0x618] sm:$0xff]
      %v430 = vld [vmem:[%s224 + $0x620] sm:$0xff]
      %v431 = vld [vmem:[%s224 + $0x628] sm:$0xff]
      %v432 = vld [vmem:[%s224 + $0x630] sm:$0xff]
      %v433 = vld [vmem:[%s224 + $0x638] sm:$0xff]
      %v434 = vld [vmem:[%s224 + $0x640] sm:$0xff]
      %v435 = vld [vmem:[%s224 + $0x648] sm:$0xff]
      %v436 = vld [vmem:[%s224 + $0x650] sm:$0xff]
      %v437 = vld [vmem:[%s224 + $0x658] sm:$0xff]
      %v438 = vld [vmem:[%s224 + $0x660] sm:$0xff]
      %v439 = vld [vmem:[%s224 + $0x668] sm:$0xff]
      %v440 = vld [vmem:[%s224 + $0x670] sm:$0xff]
      %v441 = vld [vmem:[%s224 + $0x678] sm:$0xff]
      %v442 = vld [vmem:[%s224 + $0x680] sm:$0xff]
      %v443 = vld [vmem:[%s224 + $0x688] sm:$0xff]
      %v444 = vld [vmem:[%s224 + $0x690] sm:$0xff]
      %v445 = vld [vmem:[%s224 + $0x698] sm:$0xff]
      %v446 = vld [vmem:[%s224 + $0x6a0] sm:$0xff]
      %v447 = vld [vmem:[%s224 + $0x6a8] sm:$0xff]
      %v448 = vld [vmem:[%s224 + $0x6b0] sm:$0xff]
      %v449 = vld [vmem:[%s224 + $0x6b8] sm:$0xff]
      %v450 = vld [vmem:[%s224 + $0x6c0] sm:$0xff]
      %v451 = vld [vmem:[%s224 + $0x6c8] sm:$0xff]
      %v452 = vld [vmem:[%s224 + $0x6d0] sm:$0xff]
      %v453 = vld [vmem:[%s224 + $0x6d8] sm:$0xff]
      %v454 = vld [vmem:[%s224 + $0x6e0] sm:$0xff]
      %v455 = vld [vmem:[%s224 + $0x6e8] sm:$0xff]
      %v456 = vld [vmem:[%s224 + $0x6f0] sm:$0xff]
      %v457 = vld [vmem:[%s224 + $0x6f8] sm:$0xff]
      %v458 = vpack.c.bf16 %v248, %v234
      %v459 = vpack.c.bf16 %v249, %v235
      %v460 = vpack.c.bf16 %v250, %v236
      %v461 = vpack.c.bf16 %v251, %v237
      %v462 = vpack.c.bf16 %v252, %v238
      %v463 = vpack.c.bf16 %v253, %v239
      %v464 = vpack.c.bf16 %v254, %v240
      %v465 = vpack.c.bf16 %v255, %v241
      %v466 = vpack.c.bf16 %v256, %v242
      %v467 = vpack.c.bf16 %v257, %v243
      %v468 = vpack.c.bf16 %v258, %v244
      %v469 = vpack.c.bf16 %v259, %v245
      %v470 = vpack.c.bf16 %v260, %v246
      %v471 = vpack.c.bf16 %v261, %v247
      %v472 = vpack.c.bf16 %v276, %v262
      %v473 = vpack.c.bf16 %v277, %v263
      %v474 = vpack.c.bf16 %v278, %v264
      %v475 = vpack.c.bf16 %v279, %v265
      %v476 = vpack.c.bf16 %v280, %v266
      %v477 = vpack.c.bf16 %v281, %v267
      %v478 = vpack.c.bf16 %v282, %v268
      %v479 = vpack.c.bf16 %v283, %v269
      %v480 = vpack.c.bf16 %v284, %v270
      %v481 = vpack.c.bf16 %v285, %v271
      %v482 = vpack.c.bf16 %v286, %v272
      %v483 = vpack.c.bf16 %v287, %v273
      %v484 = vpack.c.bf16 %v288, %v274
      %v485 = vpack.c.bf16 %v289, %v275
      %v486 = vpack.c.bf16 %v304, %v290
      %v487 = vpack.c.bf16 %v305, %v291
      %v488 = vpack.c.bf16 %v306, %v292
      %v489 = vpack.c.bf16 %v307, %v293
      %v490 = vpack.c.bf16 %v308, %v294
      %v491 = vpack.c.bf16 %v309, %v295
      %v492 = vpack.c.bf16 %v310, %v296
      %v493 = vpack.c.bf16 %v311, %v297
      %v494 = vpack.c.bf16 %v312, %v298
      %v495 = vpack.c.bf16 %v313, %v299
      %v496 = vpack.c.bf16 %v314, %v300
      %v497 = vpack.c.bf16 %v315, %v301
      %v498 = vpack.c.bf16 %v316, %v302
      %v499 = vpack.c.bf16 %v317, %v303
      %v500 = vpack.c.bf16 %v332, %v318
      %v501 = vpack.c.bf16 %v333, %v319
      %v502 = vpack.c.bf16 %v334, %v320
      %v503 = vpack.c.bf16 %v335, %v321
      %v504 = vpack.c.bf16 %v336, %v322
      %v505 = vpack.c.bf16 %v337, %v323
      %v506 = vpack.c.bf16 %v338, %v324
      %v507 = vpack.c.bf16 %v339, %v325
      %v508 = vpack.c.bf16 %v340, %v326
      %v509 = vpack.c.bf16 %v341, %v327
      %v510 = vpack.c.bf16 %v342, %v328
      %v511 = vpack.c.bf16 %v343, %v329
      %v512 = vpack.c.bf16 %v344, %v330
      %v513 = vpack.c.bf16 %v345, %v331
      %v514 = vpack.c.bf16 %v360, %v346
      %v515 = vpack.c.bf16 %v361, %v347
      %v516 = vpack.c.bf16 %v362, %v348
      %v517 = vpack.c.bf16 %v363, %v349
      %v518 = vpack.c.bf16 %v364, %v350
      %v519 = vpack.c.bf16 %v365, %v351
      %v520 = vpack.c.bf16 %v366, %v352
      %v521 = vpack.c.bf16 %v367, %v353
      %v522 = vpack.c.bf16 %v368, %v354
      %v523 = vpack.c.bf16 %v369, %v355
      %v524 = vpack.c.bf16 %v370, %v356
      %v525 = vpack.c.bf16 %v371, %v357
      %v526 = vpack.c.bf16 %v372, %v358
      %v527 = vpack.c.bf16 %v373, %v359
      %v528 = vpack.c.bf16 %v388, %v374
      %v529 = vpack.c.bf16 %v389, %v375
      %v530 = vpack.c.bf16 %v390, %v376
      %v531 = vpack.c.bf16 %v391, %v377
      %v532 = vpack.c.bf16 %v392, %v378
      %v533 = vpack.c.bf16 %v393, %v379
      %v534 = vpack.c.bf16 %v394, %v380
      %v535 = vpack.c.bf16 %v395, %v381
      %v536 = vpack.c.bf16 %v396, %v382
      %v537 = vpack.c.bf16 %v397, %v383
      %v538 = vpack.c.bf16 %v398, %v384
      %v539 = vpack.c.bf16 %v399, %v385
      %v540 = vpack.c.bf16 %v400, %v386
      %v541 = vpack.c.bf16 %v401, %v387
      %v542 = vpack.c.bf16 %v416, %v402
      %v543 = vpack.c.bf16 %v417, %v403
      %v544 = vpack.c.bf16 %v418, %v404
      %v545 = vpack.c.bf16 %v419, %v405
      %v546 = vpack.c.bf16 %v420, %v406
      %v547 = vpack.c.bf16 %v421, %v407
      %v548 = vpack.c.bf16 %v422, %v408
      %v549 = vpack.c.bf16 %v423, %v409
      %v550 = vpack.c.bf16 %v424, %v410
      %v551 = vpack.c.bf16 %v425, %v411
      %v552 = vpack.c.bf16 %v426, %v412
      %v553 = vpack.c.bf16 %v427, %v413
      %v554 = vpack.c.bf16 %v428, %v414
      %v555 = vpack.c.bf16 %v429, %v415
      %v556 = vpack.c.bf16 %v444, %v430
      %v557 = vpack.c.bf16 %v445, %v431
      %v558 = vpack.c.bf16 %v446, %v432
      %v559 = vpack.c.bf16 %v447, %v433
      %v560 = vpack.c.bf16 %v448, %v434
      %v561 = vpack.c.bf16 %v449, %v435
      %v562 = vpack.c.bf16 %v450, %v436
      %v563 = vpack.c.bf16 %v451, %v437
      %v564 = vpack.c.bf16 %v452, %v438
      %v565 = vpack.c.bf16 %v453, %v439
      %v566 = vpack.c.bf16 %v454, %v440
      %v567 = vpack.c.bf16 %v455, %v441
      %v568 = vpack.c.bf16 %v456, %v442
      %v569 = vpack.c.bf16 %v457, %v443
      %v570 = vld [vmem:[%s1] sm:$0xff]
      %v571 = vld [vmem:[%s1 + $0x8] sm:$0xff]
      %v572 = vld [vmem:[%s1 + $0x10] sm:$0xff]
      %v573 = vld [vmem:[%s1 + $0x18] sm:$0xff]
      %v574 = vld [vmem:[%s1 + $0x20] sm:$0xff]
      %v575 = vld [vmem:[%s1 + $0x28] sm:$0xff]
      %v576 = vld [vmem:[%s1 + $0x30] sm:$0xff]
      %v577 = vld [vmem:[%s1 + $0x38] sm:$0xff]
      %v578 = vld [vmem:[%s1 + $0x40] sm:$0xff]
      %v579 = vld [vmem:[%s1 + $0x48] sm:$0xff]
      %v580 = vld [vmem:[%s1 + $0x50] sm:$0xff]
      %v581 = vld [vmem:[%s1 + $0x58] sm:$0xff]
      %v582 = vld [vmem:[%s1 + $0x60] sm:$0xff]
      %v583 = vld [vmem:[%s1 + $0x68] sm:$0xff]
      %v584 = vld [vmem:[%s1 + $0x70] sm:$0xff]
      %v585 = vld [vmem:[%s1 + $0x78] sm:$0xff]
      %v586 = vld [vmem:[%s1 + $0x80] sm:$0xff]
      %v587 = vld [vmem:[%s1 + $0x88] sm:$0xff]
      %v588 = vld [vmem:[%s1 + $0x90] sm:$0xff]
      %v589 = vld [vmem:[%s1 + $0x98] sm:$0xff]
      %v590 = vld [vmem:[%s1 + $0xa0] sm:$0xff]
      %v591 = vld [vmem:[%s1 + $0xa8] sm:$0xff]
      %v592 = vld [vmem:[%s1 + $0xb0] sm:$0xff]
      %v593 = vld [vmem:[%s1 + $0xb8] sm:$0xff]
      %v594 = vld [vmem:[%s1 + $0xc0] sm:$0xff]
      %v595 = vld [vmem:[%s1 + $0xc8] sm:$0xff]
      %v596 = vld [vmem:[%s1 + $0xd0] sm:$0xff]
      %v597 = vld [vmem:[%s1 + $0xd8] sm:$0xff]
      %v598 = vld [vmem:[%s1 + $0xe0] sm:$0xff]
      %v599 = vld [vmem:[%s1 + $0xe8] sm:$0xff]
      %v600 = vld [vmem:[%s1 + $0xf0] sm:$0xff]
      %v601 = vld [vmem:[%s1 + $0xf8] sm:$0xff]
      %v602 = vld [vmem:[%s1 + $0x100] sm:$0xff]
      %v603 = vld [vmem:[%s1 + $0x108] sm:$0xff]
      %v604 = vld [vmem:[%s1 + $0x110] sm:$0xff]
      %v605 = vld [vmem:[%s1 + $0x118] sm:$0xff]
      %v606 = vld [vmem:[%s1 + $0x120] sm:$0xff]
      %v607 = vld [vmem:[%s1 + $0x128] sm:$0xff]
      %v608 = vld [vmem:[%s1 + $0x130] sm:$0xff]
      %v609 = vld [vmem:[%s1 + $0x138] sm:$0xff]
      %v610 = vld [vmem:[%s1 + $0x140] sm:$0xff]
      %v611 = vld [vmem:[%s1 + $0x148] sm:$0xff]
      %v612 = vld [vmem:[%s1 + $0x150] sm:$0xff]
      %v613 = vld [vmem:[%s1 + $0x158] sm:$0xff]
      %v614 = vld [vmem:[%s1 + $0x160] sm:$0xff]
      %v615 = vld [vmem:[%s1 + $0x168] sm:$0xff]
      %v616 = vld [vmem:[%s1 + $0x170] sm:$0xff]
      %v617 = vld [vmem:[%s1 + $0x178] sm:$0xff]
      %v618 = vld [vmem:[%s1 + $0x180] sm:$0xff]
      %v619 = vld [vmem:[%s1 + $0x188] sm:$0xff]
      %v620 = vld [vmem:[%s1 + $0x190] sm:$0xff]
      %v621 = vld [vmem:[%s1 + $0x198] sm:$0xff]
      %v622 = vld [vmem:[%s1 + $0x1a0] sm:$0xff]
      %v623 = vld [vmem:[%s1 + $0x1a8] sm:$0xff]
      %v624 = vld [vmem:[%s1 + $0x1b0] sm:$0xff]
      %v625 = vld [vmem:[%s1 + $0x1b8] sm:$0xff]
      %v626 = vld [vmem:[%s1 + $0x1c0] sm:$0xff]
      %v627 = vld [vmem:[%s1 + $0x1c8] sm:$0xff]
      %v628 = vld [vmem:[%s1 + $0x1d0] sm:$0xff]
      %v629 = vld [vmem:[%s1 + $0x1d8] sm:$0xff]
      %v630 = vld [vmem:[%s1 + $0x1e0] sm:$0xff]
      %v631 = vld [vmem:[%s1 + $0x1e8] sm:$0xff]
      %v632 = vld [vmem:[%s1 + $0x1f0] sm:$0xff]
      %v633 = vld [vmem:[%s1 + $0x1f8] sm:$0xff]
      %v634 = vld [vmem:[%s1 + $0x200] sm:$0xff]
      %v635 = vld [vmem:[%s1 + $0x208] sm:$0xff]
      %v636 = vld [vmem:[%s1 + $0x210] sm:$0xff]
      %v637 = vld [vmem:[%s1 + $0x218] sm:$0xff]
      %v638 = vld [vmem:[%s1 + $0x220] sm:$0xff]
      %v639 = vld [vmem:[%s1 + $0x228] sm:$0xff]
      %v640 = vld [vmem:[%s1 + $0x230] sm:$0xff]
      %v641 = vld [vmem:[%s1 + $0x238] sm:$0xff]
      %v642 = vld [vmem:[%s1 + $0x240] sm:$0xff]
      %v643 = vld [vmem:[%s1 + $0x248] sm:$0xff]
      %v644 = vld [vmem:[%s1 + $0x250] sm:$0xff]
      %v645 = vld [vmem:[%s1 + $0x258] sm:$0xff]
      %v646 = vld [vmem:[%s1 + $0x260] sm:$0xff]
      %v647 = vld [vmem:[%s1 + $0x268] sm:$0xff]
      %v648 = vld [vmem:[%s1 + $0x270] sm:$0xff]
      %v649 = vld [vmem:[%s1 + $0x278] sm:$0xff]
      %v650 = vld [vmem:[%s1 + $0x280] sm:$0xff]
      %v651 = vld [vmem:[%s1 + $0x288] sm:$0xff]
      %v652 = vld [vmem:[%s1 + $0x290] sm:$0xff]
      %v653 = vld [vmem:[%s1 + $0x298] sm:$0xff]
      %v654 = vld [vmem:[%s1 + $0x2a0] sm:$0xff]
      %v655 = vld [vmem:[%s1 + $0x2a8] sm:$0xff]
      %v656 = vld [vmem:[%s1 + $0x2b0] sm:$0xff]
      %v657 = vld [vmem:[%s1 + $0x2b8] sm:$0xff]
      %v658 = vld [vmem:[%s1 + $0x2c0] sm:$0xff]
      %v659 = vld [vmem:[%s1 + $0x2c8] sm:$0xff]
      %v660 = vld [vmem:[%s1 + $0x2d0] sm:$0xff]
      %v661 = vld [vmem:[%s1 + $0x2d8] sm:$0xff]
      %v662 = vld [vmem:[%s1 + $0x2e0] sm:$0xff]
      %v663 = vld [vmem:[%s1 + $0x2e8] sm:$0xff]
      %v664 = vld [vmem:[%s1 + $0x2f0] sm:$0xff]
      %v665 = vld [vmem:[%s1 + $0x2f8] sm:$0xff]
      %v666 = vld [vmem:[%s1 + $0x300] sm:$0xff]
      %v667 = vld [vmem:[%s1 + $0x308] sm:$0xff]
      %v668 = vld [vmem:[%s1 + $0x310] sm:$0xff]
      %v669 = vld [vmem:[%s1 + $0x318] sm:$0xff]
      %v670 = vld [vmem:[%s1 + $0x320] sm:$0xff]
      %v671 = vld [vmem:[%s1 + $0x328] sm:$0xff]
      %v672 = vld [vmem:[%s1 + $0x330] sm:$0xff]
      %v673 = vld [vmem:[%s1 + $0x338] sm:$0xff]
      %v674 = vld [vmem:[%s1 + $0x340] sm:$0xff]
      %v675 = vld [vmem:[%s1 + $0x348] sm:$0xff]
      %v676 = vld [vmem:[%s1 + $0x350] sm:$0xff]
      %v677 = vld [vmem:[%s1 + $0x358] sm:$0xff]
      %v678 = vld [vmem:[%s1 + $0x360] sm:$0xff]
      %v679 = vld [vmem:[%s1 + $0x368] sm:$0xff]
      %v680 = vld [vmem:[%s1 + $0x370] sm:$0xff]
      %v681 = vld [vmem:[%s1 + $0x378] sm:$0xff]
      %v682 = vld [vmem:[%s1 + $0x380] sm:$0xff]
      %v683 = vld [vmem:[%s1 + $0x388] sm:$0xff]
      %v684 = vld [vmem:[%s1 + $0x390] sm:$0xff]
      %v685 = vld [vmem:[%s1 + $0x398] sm:$0xff]
      %v686 = vld [vmem:[%s1 + $0x3a0] sm:$0xff]
      %v687 = vld [vmem:[%s1 + $0x3a8] sm:$0xff]
      %v688 = vld [vmem:[%s1 + $0x3b0] sm:$0xff]
      %v689 = vld [vmem:[%s1 + $0x3b8] sm:$0xff]
      %v690 = vld [vmem:[%s1 + $0x3c0] sm:$0xff]
      %v691 = vld [vmem:[%s1 + $0x3c8] sm:$0xff]
      %v692 = vld [vmem:[%s1 + $0x3d0] sm:$0xff]
      %v693 = vld [vmem:[%s1 + $0x3d8] sm:$0xff]
      %v694 = vld [vmem:[%s1 + $0x3e0] sm:$0xff]
      %v695 = vld [vmem:[%s1 + $0x3e8] sm:$0xff]
      %v696 = vld [vmem:[%s1 + $0x3f0] sm:$0xff]
      %v697 = vld [vmem:[%s1 + $0x3f8] sm:$0xff]
      %v698 = vld [vmem:[%s1 + $0x400] sm:$0xff]
      %v699 = vld [vmem:[%s1 + $0x408] sm:$0xff]
      %v700 = vld [vmem:[%s1 + $0x410] sm:$0xff]
      %v701 = vld [vmem:[%s1 + $0x418] sm:$0xff]
      %v702 = vld [vmem:[%s1 + $0x420] sm:$0xff]
      %v703 = vld [vmem:[%s1 + $0x428] sm:$0xff]
      %v704 = vld [vmem:[%s1 + $0x430] sm:$0xff]
      %v705 = vld [vmem:[%s1 + $0x438] sm:$0xff]
      %v706 = vld [vmem:[%s1 + $0x440] sm:$0xff]
      %v707 = vld [vmem:[%s1 + $0x448] sm:$0xff]
      %v708 = vld [vmem:[%s1 + $0x450] sm:$0xff]
      %v709 = vld [vmem:[%s1 + $0x458] sm:$0xff]
      %v710 = vld [vmem:[%s1 + $0x460] sm:$0xff]
      %v711 = vld [vmem:[%s1 + $0x468] sm:$0xff]
      %v712 = vld [vmem:[%s1 + $0x470] sm:$0xff]
      %v713 = vld [vmem:[%s1 + $0x478] sm:$0xff]
      %v714 = vld [vmem:[%s1 + $0x480] sm:$0xff]
      %v715 = vld [vmem:[%s1 + $0x488] sm:$0xff]
      %v716 = vld [vmem:[%s1 + $0x490] sm:$0xff]
      %v717 = vld [vmem:[%s1 + $0x498] sm:$0xff]
      %v718 = vld [vmem:[%s1 + $0x4a0] sm:$0xff]
      %v719 = vld [vmem:[%s1 + $0x4a8] sm:$0xff]
      %v720 = vld [vmem:[%s1 + $0x4b0] sm:$0xff]
      %v721 = vld [vmem:[%s1 + $0x4b8] sm:$0xff]
      %v722 = vld [vmem:[%s1 + $0x4c0] sm:$0xff]
      %v723 = vld [vmem:[%s1 + $0x4c8] sm:$0xff]
      %v724 = vld [vmem:[%s1 + $0x4d0] sm:$0xff]
      %v725 = vld [vmem:[%s1 + $0x4d8] sm:$0xff]
      %v726 = vld [vmem:[%s1 + $0x4e0] sm:$0xff]
      %v727 = vld [vmem:[%s1 + $0x4e8] sm:$0xff]
      %v728 = vld [vmem:[%s1 + $0x4f0] sm:$0xff]
      %v729 = vld [vmem:[%s1 + $0x4f8] sm:$0xff]
      %v730 = vld [vmem:[%s1 + $0x500] sm:$0xff]
      %v731 = vld [vmem:[%s1 + $0x508] sm:$0xff]
      %v732 = vld [vmem:[%s1 + $0x510] sm:$0xff]
      %v733 = vld [vmem:[%s1 + $0x518] sm:$0xff]
      %v734 = vld [vmem:[%s1 + $0x520] sm:$0xff]
      %v735 = vld [vmem:[%s1 + $0x528] sm:$0xff]
      %v736 = vld [vmem:[%s1 + $0x530] sm:$0xff]
      %v737 = vld [vmem:[%s1 + $0x538] sm:$0xff]
      %v738 = vld [vmem:[%s1 + $0x540] sm:$0xff]
      %v739 = vld [vmem:[%s1 + $0x548] sm:$0xff]
      %v740 = vld [vmem:[%s1 + $0x550] sm:$0xff]
      %v741 = vld [vmem:[%s1 + $0x558] sm:$0xff]
      %v742 = vld [vmem:[%s1 + $0x560] sm:$0xff]
      %v743 = vld [vmem:[%s1 + $0x568] sm:$0xff]
      %v744 = vld [vmem:[%s1 + $0x570] sm:$0xff]
      %v745 = vld [vmem:[%s1 + $0x578] sm:$0xff]
      %v746 = vld [vmem:[%s1 + $0x580] sm:$0xff]
      %v747 = vld [vmem:[%s1 + $0x588] sm:$0xff]
      %v748 = vld [vmem:[%s1 + $0x590] sm:$0xff]
      %v749 = vld [vmem:[%s1 + $0x598] sm:$0xff]
      %v750 = vld [vmem:[%s1 + $0x5a0] sm:$0xff]
      %v751 = vld [vmem:[%s1 + $0x5a8] sm:$0xff]
      %v752 = vld [vmem:[%s1 + $0x5b0] sm:$0xff]
      %v753 = vld [vmem:[%s1 + $0x5b8] sm:$0xff]
      %v754 = vld [vmem:[%s1 + $0x5c0] sm:$0xff]
      %v755 = vld [vmem:[%s1 + $0x5c8] sm:$0xff]
      %v756 = vld [vmem:[%s1 + $0x5d0] sm:$0xff]
      %v757 = vld [vmem:[%s1 + $0x5d8] sm:$0xff]
      %v758 = vld [vmem:[%s1 + $0x5e0] sm:$0xff]
      %v759 = vld [vmem:[%s1 + $0x5e8] sm:$0xff]
      %v760 = vld [vmem:[%s1 + $0x5f0] sm:$0xff]
      %v761 = vld [vmem:[%s1 + $0x5f8] sm:$0xff]
      %v762 = vld [vmem:[%s1 + $0x600] sm:$0xff]
      %v763 = vld [vmem:[%s1 + $0x608] sm:$0xff]
      %v764 = vld [vmem:[%s1 + $0x610] sm:$0xff]
      %v765 = vld [vmem:[%s1 + $0x618] sm:$0xff]
      %v766 = vld [vmem:[%s1 + $0x620] sm:$0xff]
      %v767 = vld [vmem:[%s1 + $0x628] sm:$0xff]
      %v768 = vld [vmem:[%s1 + $0x630] sm:$0xff]
      %v769 = vld [vmem:[%s1 + $0x638] sm:$0xff]
      %v770 = vld [vmem:[%s1 + $0x640] sm:$0xff]
      %v771 = vld [vmem:[%s1 + $0x648] sm:$0xff]
      %v772 = vld [vmem:[%s1 + $0x650] sm:$0xff]
      %v773 = vld [vmem:[%s1 + $0x658] sm:$0xff]
      %v774 = vld [vmem:[%s1 + $0x660] sm:$0xff]
      %v775 = vld [vmem:[%s1 + $0x668] sm:$0xff]
      %v776 = vld [vmem:[%s1 + $0x670] sm:$0xff]
      %v777 = vld [vmem:[%s1 + $0x678] sm:$0xff]
      %v778 = vld [vmem:[%s1 + $0x680] sm:$0xff]
      %v779 = vld [vmem:[%s1 + $0x688] sm:$0xff]
      %v780 = vld [vmem:[%s1 + $0x690] sm:$0x11]
      %v781 = vld [vmem:[%s2] sm:$0x3]
      %v783 = vlaneseq
      %v784 = vshrl.u32 %v783, 7
      %v785 = vsub.s32 0, %v784
      %v786 = vrot.slane %v781, %v785
      %v787 = vlaneseq
      %v788 = vshrl.u32 %v787, 7
      %v789 = vsub.s32 1, %v788
      %v790 = vrot.slane %v781, %v789
      %v1004 = vunpack.c.l.b16 %v570
      %v1005 = vunpack.c.h.b16 %v570
      %v1006 = vunpack.c.l.b16 %v571
      %v1007 = vunpack.c.h.b16 %v571
      %v1008 = vunpack.c.l.b16 %v572
      %v1009 = vunpack.c.h.b16 %v572
      %v1010 = vunpack.c.l.b16 %v573
      %v1011 = vunpack.c.h.b16 %v573
      %v1012 = vunpack.c.l.b16 %v574
      %v1013 = vunpack.c.h.b16 %v574
      %v1014 = vunpack.c.l.b16 %v575
      %v1015 = vunpack.c.h.b16 %v575
      %v1016 = vunpack.c.l.b16 %v576
      %v1017 = vunpack.c.h.b16 %v576
      %v1018 = vunpack.c.l.b16 %v577
      %v1019 = vunpack.c.h.b16 %v577
      %v1020 = vunpack.c.l.b16 %v578
      %v1021 = vunpack.c.h.b16 %v578
      %v1022 = vunpack.c.l.b16 %v579
      %v1023 = vunpack.c.h.b16 %v579
      %v1024 = vunpack.c.l.b16 %v580
      %v1025 = vunpack.c.h.b16 %v580
      %v1026 = vunpack.c.l.b16 %v581
      %v1027 = vunpack.c.h.b16 %v581
      %v1028 = vunpack.c.l.b16 %v582
      %v1029 = vunpack.c.h.b16 %v582
      %v1030 = vunpack.c.l.b16 %v583
      %v1031 = vunpack.c.h.b16 %v583
      %v1032 = vunpack.c.l.b16 %v584
      %v1033 = vunpack.c.h.b16 %v584
      %v1034 = vunpack.c.l.b16 %v585
      %v1035 = vunpack.c.h.b16 %v585
      %v1036 = vunpack.c.l.b16 %v586
      %v1037 = vunpack.c.h.b16 %v586
      %v1038 = vunpack.c.l.b16 %v587
      %v1039 = vunpack.c.h.b16 %v587
      %v1040 = vunpack.c.l.b16 %v588
      %v1041 = vunpack.c.h.b16 %v588
      %v1042 = vunpack.c.l.b16 %v589
      %v1043 = vunpack.c.h.b16 %v589
      %v1044 = vunpack.c.l.b16 %v590
      %v1045 = vunpack.c.h.b16 %v590
      %v1046 = vunpack.c.l.b16 %v591
      %v1047 = vunpack.c.h.b16 %v591
      %v1048 = vunpack.c.l.b16 %v592
      %v1049 = vunpack.c.h.b16 %v592
      %v1050 = vunpack.c.l.b16 %v593
      %v1051 = vunpack.c.h.b16 %v593
      %v1052 = vunpack.c.l.b16 %v594
      %v1053 = vunpack.c.h.b16 %v594
      %v1054 = vunpack.c.l.b16 %v595
      %v1055 = vunpack.c.h.b16 %v595
      %v1056 = vunpack.c.l.b16 %v596
      %v1057 = vunpack.c.h.b16 %v596
      %v1058 = vunpack.c.l.b16 %v597
      %v1059 = vunpack.c.h.b16 %v597
      %v1060 = vunpack.c.l.b16 %v598
      %v1061 = vunpack.c.h.b16 %v598
      %v1062 = vunpack.c.l.b16 %v599
      %v1063 = vunpack.c.h.b16 %v599
      %v1064 = vunpack.c.l.b16 %v600
      %v1065 = vunpack.c.h.b16 %v600
      %v1066 = vunpack.c.l.b16 %v601
      %v1067 = vunpack.c.h.b16 %v601
      %v1068 = vunpack.c.l.b16 %v602
      %v1069 = vunpack.c.h.b16 %v602
      %v1070 = vunpack.c.l.b16 %v603
      %v1071 = vunpack.c.h.b16 %v603
      %v1072 = vunpack.c.l.b16 %v604
      %v1073 = vunpack.c.h.b16 %v604
      %v1074 = vunpack.c.l.b16 %v605
      %v1075 = vunpack.c.h.b16 %v605
      %v1076 = vunpack.c.l.b16 %v606
      %v1077 = vunpack.c.h.b16 %v606
      %v1078 = vunpack.c.l.b16 %v607
      %v1079 = vunpack.c.h.b16 %v607
      %v1080 = vunpack.c.l.b16 %v608
      %v1081 = vunpack.c.h.b16 %v608
      %v1082 = vunpack.c.l.b16 %v609
      %v1083 = vunpack.c.h.b16 %v609
      %v1084 = vunpack.c.l.b16 %v610
      %v1085 = vunpack.c.h.b16 %v610
      %v1086 = vunpack.c.l.b16 %v611
      %v1087 = vunpack.c.h.b16 %v611
      %v1088 = vunpack.c.l.b16 %v612
      %v1089 = vunpack.c.h.b16 %v612
      %v1090 = vunpack.c.l.b16 %v613
      %v1091 = vunpack.c.h.b16 %v613
      %v1092 = vunpack.c.l.b16 %v614
      %v1093 = vunpack.c.h.b16 %v614
      %v1094 = vunpack.c.l.b16 %v615
      %v1095 = vunpack.c.h.b16 %v615
      %v1096 = vunpack.c.l.b16 %v616
      %v1097 = vunpack.c.h.b16 %v616
      %v1098 = vunpack.c.l.b16 %v617
      %v1099 = vunpack.c.h.b16 %v617
      %v1100 = vunpack.c.l.b16 %v618
      %v1101 = vunpack.c.h.b16 %v618
      %v1102 = vunpack.c.l.b16 %v619
      %v1103 = vunpack.c.h.b16 %v619
      %v1104 = vunpack.c.l.b16 %v620
      %v1105 = vunpack.c.h.b16 %v620
      %v1106 = vunpack.c.l.b16 %v621
      %v1107 = vunpack.c.h.b16 %v621
      %v1108 = vunpack.c.l.b16 %v622
      %v1109 = vunpack.c.h.b16 %v622
      %v1110 = vunpack.c.l.b16 %v623
      %v1111 = vunpack.c.h.b16 %v623
      %v1112 = vunpack.c.l.b16 %v624
      %v1113 = vunpack.c.h.b16 %v624
      %v1114 = vunpack.c.l.b16 %v625
      %v1115 = vunpack.c.h.b16 %v625
      %v1116 = vunpack.c.l.b16 %v626
      %v1117 = vunpack.c.h.b16 %v626
      %v1118 = vunpack.c.l.b16 %v627
      %v1119 = vunpack.c.h.b16 %v627
      %v1120 = vunpack.c.l.b16 %v628
      %v1121 = vunpack.c.h.b16 %v628
      %v1122 = vunpack.c.l.b16 %v629
      %v1123 = vunpack.c.h.b16 %v629
      %v1124 = vunpack.c.l.b16 %v630
      %v1125 = vunpack.c.h.b16 %v630
      %v1126 = vunpack.c.l.b16 %v631
      %v1127 = vunpack.c.h.b16 %v631
      %v1128 = vunpack.c.l.b16 %v632
      %v1129 = vunpack.c.h.b16 %v632
      %v1130 = vunpack.c.l.b16 %v633
      %v1131 = vunpack.c.h.b16 %v633
      %v1132 = vunpack.c.l.b16 %v634
      %v1133 = vunpack.c.h.b16 %v634
      %v1134 = vunpack.c.l.b16 %v635
      %v1135 = vunpack.c.h.b16 %v635
      %v1136 = vunpack.c.l.b16 %v636
      %v1137 = vunpack.c.h.b16 %v636
      %v1138 = vunpack.c.l.b16 %v637
      %v1139 = vunpack.c.h.b16 %v637
      %v1140 = vunpack.c.l.b16 %v638
      %v1141 = vunpack.c.h.b16 %v638
      %v1142 = vunpack.c.l.b16 %v639
      %v1143 = vunpack.c.h.b16 %v639
      %v1144 = vunpack.c.l.b16 %v640
      %v1145 = vunpack.c.h.b16 %v640
      %v1146 = vunpack.c.l.b16 %v641
      %v1147 = vunpack.c.h.b16 %v641
      %v1148 = vunpack.c.l.b16 %v642
      %v1149 = vunpack.c.h.b16 %v642
      %v1150 = vunpack.c.l.b16 %v643
      %v1151 = vunpack.c.h.b16 %v643
      %v1152 = vunpack.c.l.b16 %v644
      %v1153 = vunpack.c.h.b16 %v644
      %v1154 = vunpack.c.l.b16 %v645
      %v1155 = vunpack.c.h.b16 %v645
      %v1156 = vunpack.c.l.b16 %v646
      %v1157 = vunpack.c.h.b16 %v646
      %v1158 = vunpack.c.l.b16 %v647
      %v1159 = vunpack.c.h.b16 %v647
      %v1160 = vunpack.c.l.b16 %v648
      %v1161 = vunpack.c.h.b16 %v648
      %v1162 = vunpack.c.l.b16 %v649
      %v1163 = vunpack.c.h.b16 %v649
      %v1164 = vunpack.c.l.b16 %v650
      %v1165 = vunpack.c.h.b16 %v650
      %v1166 = vunpack.c.l.b16 %v651
      %v1167 = vunpack.c.h.b16 %v651
      %v1168 = vunpack.c.l.b16 %v652
      %v1169 = vunpack.c.h.b16 %v652
      %v1170 = vunpack.c.l.b16 %v653
      %v1171 = vunpack.c.h.b16 %v653
      %v1172 = vunpack.c.l.b16 %v654
      %v1173 = vunpack.c.h.b16 %v654
      %v1174 = vunpack.c.l.b16 %v655
      %v1175 = vunpack.c.h.b16 %v655
      %v1176 = vunpack.c.l.b16 %v656
      %v1177 = vunpack.c.h.b16 %v656
      %v1178 = vunpack.c.l.b16 %v657
      %v1179 = vunpack.c.h.b16 %v657
      %v1180 = vunpack.c.l.b16 %v658
      %v1181 = vunpack.c.h.b16 %v658
      %v1182 = vunpack.c.l.b16 %v659
      %v1183 = vunpack.c.h.b16 %v659
      %v1184 = vunpack.c.l.b16 %v660
      %v1185 = vunpack.c.h.b16 %v660
      %v1186 = vunpack.c.l.b16 %v661
      %v1187 = vunpack.c.h.b16 %v661
      %v1188 = vunpack.c.l.b16 %v662
      %v1189 = vunpack.c.h.b16 %v662
      %v1190 = vunpack.c.l.b16 %v663
      %v1191 = vunpack.c.h.b16 %v663
      %v1192 = vunpack.c.l.b16 %v664
      %v1193 = vunpack.c.h.b16 %v664
      %v1194 = vunpack.c.l.b16 %v665
      %v1195 = vunpack.c.h.b16 %v665
      %v1196 = vunpack.c.l.b16 %v666
      %v1197 = vunpack.c.h.b16 %v666
      %v1198 = vunpack.c.l.b16 %v667
      %v1199 = vunpack.c.h.b16 %v667
      %v1200 = vunpack.c.l.b16 %v668
      %v1201 = vunpack.c.h.b16 %v668
      %v1202 = vunpack.c.l.b16 %v669
      %v1203 = vunpack.c.h.b16 %v669
      %v1204 = vunpack.c.l.b16 %v670
      %v1205 = vunpack.c.h.b16 %v670
      %v1206 = vunpack.c.l.b16 %v671
      %v1207 = vunpack.c.h.b16 %v671
      %v1208 = vunpack.c.l.b16 %v672
      %v1209 = vunpack.c.h.b16 %v672
      %v1210 = vunpack.c.l.b16 %v673
      %v1211 = vunpack.c.h.b16 %v673
      %v1212 = vunpack.c.l.b16 %v674
      %v1213 = vunpack.c.h.b16 %v674
      %v1214 = vunpack.c.l.b16 %v675
      %v1215 = vunpack.c.h.b16 %v675
      %v1216 = vunpack.c.l.b16 %v676
      %v1217 = vunpack.c.h.b16 %v676
      %v1218 = vunpack.c.l.b16 %v677
      %v1219 = vunpack.c.h.b16 %v677
      %v1220 = vunpack.c.l.b16 %v678
      %v1221 = vunpack.c.h.b16 %v678
      %v1222 = vunpack.c.l.b16 %v679
      %v1223 = vunpack.c.h.b16 %v679
      %v1224 = vunpack.c.l.b16 %v680
      %v1225 = vunpack.c.h.b16 %v680
      %v1226 = vunpack.c.l.b16 %v681
      %v1227 = vunpack.c.h.b16 %v681
      %v1228 = vunpack.c.l.b16 %v682
      %v1229 = vunpack.c.h.b16 %v682
      %v1230 = vunpack.c.l.b16 %v683
      %v1231 = vunpack.c.h.b16 %v683
      %v1232 = vunpack.c.l.b16 %v684
      %v1233 = vunpack.c.h.b16 %v684
      %v1234 = vunpack.c.l.b16 %v685
      %v1235 = vunpack.c.h.b16 %v685
      %v1236 = vunpack.c.l.b16 %v686
      %v1237 = vunpack.c.h.b16 %v686
      %v1238 = vunpack.c.l.b16 %v687
      %v1239 = vunpack.c.h.b16 %v687
      %v1240 = vunpack.c.l.b16 %v688
      %v1241 = vunpack.c.h.b16 %v688
      %v1242 = vunpack.c.l.b16 %v689
      %v1243 = vunpack.c.h.b16 %v689
      %v1244 = vunpack.c.l.b16 %v690
      %v1245 = vunpack.c.h.b16 %v690
      %v1246 = vunpack.c.l.b16 %v691
      %v1247 = vunpack.c.h.b16 %v691
      %v1248 = vunpack.c.l.b16 %v692
      %v1249 = vunpack.c.h.b16 %v692
      %v1250 = vunpack.c.l.b16 %v693
      %v1251 = vunpack.c.h.b16 %v693
      %v1252 = vunpack.c.l.b16 %v694
      %v1253 = vunpack.c.h.b16 %v694
      %v1254 = vunpack.c.l.b16 %v695
      %v1255 = vunpack.c.h.b16 %v695
      %v1256 = vunpack.c.l.b16 %v696
      %v1257 = vunpack.c.h.b16 %v696
      %v1258 = vunpack.c.l.b16 %v697
      %v1259 = vunpack.c.h.b16 %v697
      %v1260 = vunpack.c.l.b16 %v698
      %v1261 = vunpack.c.h.b16 %v698
      %v1262 = vunpack.c.l.b16 %v699
      %v1263 = vunpack.c.h.b16 %v699
      %v1264 = vunpack.c.l.b16 %v700
      %v1265 = vunpack.c.h.b16 %v700
      %v1266 = vunpack.c.l.b16 %v701
      %v1267 = vunpack.c.h.b16 %v701
      %v1268 = vunpack.c.l.b16 %v702
      %v1269 = vunpack.c.h.b16 %v702
      %v1270 = vunpack.c.l.b16 %v703
      %v1271 = vunpack.c.h.b16 %v703
      %v1272 = vunpack.c.l.b16 %v704
      %v1273 = vunpack.c.h.b16 %v704
      %v1274 = vunpack.c.l.b16 %v705
      %v1275 = vunpack.c.h.b16 %v705
      %v1276 = vunpack.c.l.b16 %v706
      %v1277 = vunpack.c.h.b16 %v706
      %v1278 = vunpack.c.l.b16 %v707
      %v1279 = vunpack.c.h.b16 %v707
      %v1280 = vunpack.c.l.b16 %v708
      %v1281 = vunpack.c.h.b16 %v708
      %v1282 = vunpack.c.l.b16 %v709
      %v1283 = vunpack.c.h.b16 %v709
      %v1284 = vunpack.c.l.b16 %v710
      %v1285 = vunpack.c.h.b16 %v710
      %v1286 = vunpack.c.l.b16 %v711
      %v1287 = vunpack.c.h.b16 %v711
      %v1288 = vunpack.c.l.b16 %v712
      %v1289 = vunpack.c.h.b16 %v712
      %v1290 = vunpack.c.l.b16 %v713
      %v1291 = vunpack.c.h.b16 %v713
      %v1292 = vunpack.c.l.b16 %v714
      %v1293 = vunpack.c.h.b16 %v714
      %v1294 = vunpack.c.l.b16 %v715
      %v1295 = vunpack.c.h.b16 %v715
      %v1296 = vunpack.c.l.b16 %v716
      %v1297 = vunpack.c.h.b16 %v716
      %v1298 = vunpack.c.l.b16 %v717
      %v1299 = vunpack.c.h.b16 %v717
      %v1300 = vunpack.c.l.b16 %v718
      %v1301 = vunpack.c.h.b16 %v718
      %v1302 = vunpack.c.l.b16 %v719
      %v1303 = vunpack.c.h.b16 %v719
      %v1304 = vunpack.c.l.b16 %v720
      %v1305 = vunpack.c.h.b16 %v720
      %v1306 = vunpack.c.l.b16 %v721
      %v1307 = vunpack.c.h.b16 %v721
      %v1308 = vunpack.c.l.b16 %v722
      %v1309 = vunpack.c.h.b16 %v722
      %v1310 = vunpack.c.l.b16 %v723
      %v1311 = vunpack.c.h.b16 %v723
      %v1312 = vunpack.c.l.b16 %v724
      %v1313 = vunpack.c.h.b16 %v724
      %v1314 = vunpack.c.l.b16 %v725
      %v1315 = vunpack.c.h.b16 %v725
      %v1316 = vunpack.c.l.b16 %v726
      %v1317 = vunpack.c.h.b16 %v726
      %v1318 = vunpack.c.l.b16 %v727
      %v1319 = vunpack.c.h.b16 %v727
      %v1320 = vunpack.c.l.b16 %v728
      %v1321 = vunpack.c.h.b16 %v728
      %v1322 = vunpack.c.l.b16 %v729
      %v1323 = vunpack.c.h.b16 %v729
      %v1324 = vunpack.c.l.b16 %v730
      %v1325 = vunpack.c.h.b16 %v730
      %v1326 = vunpack.c.l.b16 %v731
      %v1327 = vunpack.c.h.b16 %v731
      %v1328 = vunpack.c.l.b16 %v732
      %v1329 = vunpack.c.h.b16 %v732
      %v1330 = vunpack.c.l.b16 %v733
      %v1331 = vunpack.c.h.b16 %v733
      %v1332 = vunpack.c.l.b16 %v734
      %v1333 = vunpack.c.h.b16 %v734
      %v1334 = vunpack.c.l.b16 %v735
      %v1335 = vunpack.c.h.b16 %v735
      %v1336 = vunpack.c.l.b16 %v736
      %v1337 = vunpack.c.h.b16 %v736
      %v1338 = vunpack.c.l.b16 %v737
      %v1339 = vunpack.c.h.b16 %v737
      %v1340 = vunpack.c.l.b16 %v738
      %v1341 = vunpack.c.h.b16 %v738
      %v1342 = vunpack.c.l.b16 %v739
      %v1343 = vunpack.c.h.b16 %v739
      %v1344 = vunpack.c.l.b16 %v740
      %v1345 = vunpack.c.h.b16 %v740
      %v1346 = vunpack.c.l.b16 %v741
      %v1347 = vunpack.c.h.b16 %v741
      %v1348 = vunpack.c.l.b16 %v742
      %v1349 = vunpack.c.h.b16 %v742
      %v1350 = vunpack.c.l.b16 %v743
      %v1351 = vunpack.c.h.b16 %v743
      %v1352 = vunpack.c.l.b16 %v744
      %v1353 = vunpack.c.h.b16 %v744
      %v1354 = vunpack.c.l.b16 %v745
      %v1355 = vunpack.c.h.b16 %v745
      %v1356 = vunpack.c.l.b16 %v746
      %v1357 = vunpack.c.h.b16 %v746
      %v1358 = vunpack.c.l.b16 %v747
      %v1359 = vunpack.c.h.b16 %v747
      %v1360 = vunpack.c.l.b16 %v748
      %v1361 = vunpack.c.h.b16 %v748
      %v1362 = vunpack.c.l.b16 %v749
      %v1363 = vunpack.c.h.b16 %v749
      %v1364 = vunpack.c.l.b16 %v750
      %v1365 = vunpack.c.h.b16 %v750
      %v1366 = vunpack.c.l.b16 %v751
      %v1367 = vunpack.c.h.b16 %v751
      %v1368 = vunpack.c.l.b16 %v752
      %v1369 = vunpack.c.h.b16 %v752
      %v1370 = vunpack.c.l.b16 %v753
      %v1371 = vunpack.c.h.b16 %v753
      %v1372 = vunpack.c.l.b16 %v754
      %v1373 = vunpack.c.h.b16 %v754
      %v1374 = vunpack.c.l.b16 %v755
      %v1375 = vunpack.c.h.b16 %v755
      %v1376 = vunpack.c.l.b16 %v756
      %v1377 = vunpack.c.h.b16 %v756
      %v1378 = vunpack.c.l.b16 %v757
      %v1379 = vunpack.c.h.b16 %v757
      %v1380 = vunpack.c.l.b16 %v758
      %v1381 = vunpack.c.h.b16 %v758
      %v1382 = vunpack.c.l.b16 %v759
      %v1383 = vunpack.c.h.b16 %v759
      %v1384 = vunpack.c.l.b16 %v760
      %v1385 = vunpack.c.h.b16 %v760
      %v1386 = vunpack.c.l.b16 %v761
      %v1387 = vunpack.c.h.b16 %v761
      %v1388 = vunpack.c.l.b16 %v762
      %v1389 = vunpack.c.h.b16 %v762
      %v1390 = vunpack.c.l.b16 %v763
      %v1391 = vunpack.c.h.b16 %v763
      %v1392 = vunpack.c.l.b16 %v764
      %v1393 = vunpack.c.h.b16 %v764
      %v1394 = vunpack.c.l.b16 %v765
      %v1395 = vunpack.c.h.b16 %v765
      %v1396 = vunpack.c.l.b16 %v766
      %v1397 = vunpack.c.h.b16 %v766
      %v1398 = vunpack.c.l.b16 %v767
      %v1399 = vunpack.c.h.b16 %v767
      %v1400 = vunpack.c.l.b16 %v768
      %v1401 = vunpack.c.h.b16 %v768
      %v1402 = vunpack.c.l.b16 %v769
      %v1403 = vunpack.c.h.b16 %v769
      %v1404 = vunpack.c.l.b16 %v770
      %v1405 = vunpack.c.h.b16 %v770
      %v1406 = vunpack.c.l.b16 %v771
      %v1407 = vunpack.c.h.b16 %v771
      %v1408 = vunpack.c.l.b16 %v772
      %v1409 = vunpack.c.h.b16 %v772
      %v1410 = vunpack.c.l.b16 %v773
      %v1411 = vunpack.c.h.b16 %v773
      %v1412 = vunpack.c.l.b16 %v774
      %v1413 = vunpack.c.h.b16 %v774
      %v1414 = vunpack.c.l.b16 %v775
      %v1415 = vunpack.c.h.b16 %v775
      %v1416 = vunpack.c.l.b16 %v776
      %v1417 = vunpack.c.h.b16 %v776
      %v1418 = vunpack.c.l.b16 %v777
      %v1419 = vunpack.c.h.b16 %v777
      %v1420 = vunpack.c.l.b16 %v778
      %v1421 = vunpack.c.h.b16 %v778
      %v1422 = vunpack.c.l.b16 %v779
      %v1423 = vunpack.c.h.b16 %v779
      %v1424 = vunpack.c.l.b16 %v780
      %v1425 = vunpack.c.h.b16 %v780
      %v1426 = vpack.c.b16 %v1006, %v1004
      %v1427 = vpack.c.b16 %v1007, %v1005
      %v1428 = vpack.c.b16 %v1010, %v1008
      %v1429 = vpack.c.b16 %v1011, %v1009
      %v1430 = vpack.c.b16 %v1014, %v1012
      %v1431 = vpack.c.b16 %v1015, %v1013
      %v1432 = vpack.c.b16 %v1018, %v1016
      %v1433 = vpack.c.b16 %v1019, %v1017
      %v1434 = vpack.c.b16 %v1022, %v1020
      %v1435 = vpack.c.b16 %v1023, %v1021
      %v1436 = vpack.c.b16 %v1026, %v1024
      %v1437 = vpack.c.b16 %v1027, %v1025
      %v1438 = vpack.c.b16 %v1030, %v1028
      %v1439 = vpack.c.b16 %v1031, %v1029
      %v1440 = vpack.c.b16 %v1034, %v1032
      %v1441 = vpack.c.b16 %v1035, %v1033
      %v1442 = vpack.c.b16 %v1038, %v1036
      %v1443 = vpack.c.b16 %v1039, %v1037
      %v1444 = vpack.c.b16 %v1042, %v1040
      %v1445 = vpack.c.b16 %v1043, %v1041
      %v1446 = vpack.c.b16 %v1046, %v1044
      %v1447 = vpack.c.b16 %v1047, %v1045
      %v1448 = vpack.c.b16 %v1050, %v1048
      %v1449 = vpack.c.b16 %v1051, %v1049
      %v1450 = vpack.c.b16 %v1054, %v1052
      %v1451 = vpack.c.b16 %v1055, %v1053
      %v1452 = vpack.c.b16 %v1058, %v1056
      %v1453 = vpack.c.b16 %v1059, %v1057
      %v1454 = vpack.c.b16 %v1062, %v1060
      %v1455 = vpack.c.b16 %v1063, %v1061
      %v1456 = vpack.c.b16 %v1066, %v1064
      %v1457 = vpack.c.b16 %v1067, %v1065
      %v1458 = vpack.c.b16 %v1070, %v1068
      %v1459 = vpack.c.b16 %v1071, %v1069
      %v1460 = vpack.c.b16 %v1074, %v1072
      %v1461 = vpack.c.b16 %v1075, %v1073
      %v1462 = vpack.c.b16 %v1078, %v1076
      %v1463 = vpack.c.b16 %v1079, %v1077
      %v1464 = vpack.c.b16 %v1082, %v1080
      %v1465 = vpack.c.b16 %v1083, %v1081
      %v1466 = vpack.c.b16 %v1086, %v1084
      %v1467 = vpack.c.b16 %v1087, %v1085
      %v1468 = vpack.c.b16 %v1090, %v1088
      %v1469 = vpack.c.b16 %v1091, %v1089
      %v1470 = vpack.c.b16 %v1094, %v1092
      %v1471 = vpack.c.b16 %v1095, %v1093
      %v1472 = vpack.c.b16 %v1098, %v1096
      %v1473 = vpack.c.b16 %v1099, %v1097
      %v1474 = vpack.c.b16 %v1102, %v1100
      %v1475 = vpack.c.b16 %v1103, %v1101
      %v1476 = vpack.c.b16 %v1106, %v1104
      %v1477 = vpack.c.b16 %v1107, %v1105
      %v1478 = vpack.c.b16 %v1110, %v1108
      %v1479 = vpack.c.b16 %v1111, %v1109
      %v1480 = vpack.c.b16 %v1114, %v1112
      %v1481 = vpack.c.b16 %v1115, %v1113
      %v1482 = vpack.c.b16 %v1118, %v1116
      %v1483 = vpack.c.b16 %v1119, %v1117
      %v1484 = vpack.c.b16 %v1122, %v1120
      %v1485 = vpack.c.b16 %v1123, %v1121
      %v1486 = vpack.c.b16 %v1126, %v1124
      %v1487 = vpack.c.b16 %v1127, %v1125
      %v1488 = vpack.c.b16 %v1130, %v1128
      %v1489 = vpack.c.b16 %v1131, %v1129
      %v1490 = vpack.c.b16 %v1134, %v1132
      %v1491 = vpack.c.b16 %v1135, %v1133
      %v1492 = vpack.c.b16 %v1138, %v1136
      %v1493 = vpack.c.b16 %v1139, %v1137
      %v1494 = vpack.c.b16 %v1142, %v1140
      %v1495 = vpack.c.b16 %v1143, %v1141
      %v1496 = vpack.c.b16 %v1146, %v1144
      %v1497 = vpack.c.b16 %v1147, %v1145
      %v1498 = vpack.c.b16 %v1150, %v1148
      %v1499 = vpack.c.b16 %v1151, %v1149
      %v1500 = vpack.c.b16 %v1154, %v1152
      %v1501 = vpack.c.b16 %v1155, %v1153
      %v1502 = vpack.c.b16 %v1158, %v1156
      %v1503 = vpack.c.b16 %v1159, %v1157
      %v1504 = vpack.c.b16 %v1162, %v1160
      %v1505 = vpack.c.b16 %v1163, %v1161
      %v1506 = vpack.c.b16 %v1166, %v1164
      %v1507 = vpack.c.b16 %v1167, %v1165
      %v1508 = vpack.c.b16 %v1170, %v1168
      %v1509 = vpack.c.b16 %v1171, %v1169
      %v1510 = vpack.c.b16 %v1174, %v1172
      %v1511 = vpack.c.b16 %v1175, %v1173
      %v1512 = vpack.c.b16 %v1178, %v1176
      %v1513 = vpack.c.b16 %v1179, %v1177
      %v1514 = vpack.c.b16 %v1182, %v1180
      %v1515 = vpack.c.b16 %v1183, %v1181
      %v1516 = vpack.c.b16 %v1186, %v1184
      %v1517 = vpack.c.b16 %v1187, %v1185
      %v1518 = vpack.c.b16 %v1190, %v1188
      %v1519 = vpack.c.b16 %v1191, %v1189
      %v1520 = vpack.c.b16 %v1194, %v1192
      %v1521 = vpack.c.b16 %v1195, %v1193
      %v1522 = vpack.c.b16 %v1198, %v1196
      %v1523 = vpack.c.b16 %v1199, %v1197
      %v1524 = vpack.c.b16 %v1202, %v1200
      %v1525 = vpack.c.b16 %v1203, %v1201
      %v1526 = vpack.c.b16 %v1206, %v1204
      %v1527 = vpack.c.b16 %v1207, %v1205
      %v1528 = vpack.c.b16 %v1210, %v1208
      %v1529 = vpack.c.b16 %v1211, %v1209
      %v1530 = vpack.c.b16 %v1214, %v1212
      %v1531 = vpack.c.b16 %v1215, %v1213
      %v1532 = vpack.c.b16 %v1218, %v1216
      %v1533 = vpack.c.b16 %v1219, %v1217
      %v1534 = vpack.c.b16 %v1222, %v1220
      %v1535 = vpack.c.b16 %v1223, %v1221
      %v1536 = vpack.c.b16 %v1226, %v1224
      %v1537 = vpack.c.b16 %v1227, %v1225
      %v1538 = vpack.c.b16 %v1230, %v1228
      %v1539 = vpack.c.b16 %v1231, %v1229
      %v1540 = vpack.c.b16 %v1234, %v1232
      %v1541 = vpack.c.b16 %v1235, %v1233
      %v1542 = vpack.c.b16 %v1238, %v1236
      %v1543 = vpack.c.b16 %v1239, %v1237
      %v1544 = vpack.c.b16 %v1242, %v1240
      %v1545 = vpack.c.b16 %v1243, %v1241
      %v1546 = vpack.c.b16 %v1246, %v1244
      %v1547 = vpack.c.b16 %v1247, %v1245
      %v1548 = vpack.c.b16 %v1250, %v1248
      %v1549 = vpack.c.b16 %v1251, %v1249
      %v1550 = vpack.c.b16 %v1254, %v1252
      %v1551 = vpack.c.b16 %v1255, %v1253
      %v1552 = vpack.c.b16 %v1258, %v1256
      %v1553 = vpack.c.b16 %v1259, %v1257
      %v1554 = vpack.c.b16 %v1262, %v1260
      %v1555 = vpack.c.b16 %v1263, %v1261
      %v1556 = vpack.c.b16 %v1266, %v1264
      %v1557 = vpack.c.b16 %v1267, %v1265
      %v1558 = vpack.c.b16 %v1270, %v1268
      %v1559 = vpack.c.b16 %v1271, %v1269
      %v1560 = vpack.c.b16 %v1274, %v1272
      %v1561 = vpack.c.b16 %v1275, %v1273
      %v1562 = vpack.c.b16 %v1278, %v1276
      %v1563 = vpack.c.b16 %v1279, %v1277
      %v1564 = vpack.c.b16 %v1282, %v1280
      %v1565 = vpack.c.b16 %v1283, %v1281
      %v1566 = vpack.c.b16 %v1286, %v1284
      %v1567 = vpack.c.b16 %v1287, %v1285
      %v1568 = vpack.c.b16 %v1290, %v1288
      %v1569 = vpack.c.b16 %v1291, %v1289
      %v1570 = vpack.c.b16 %v1294, %v1292
      %v1571 = vpack.c.b16 %v1295, %v1293
      %v1572 = vpack.c.b16 %v1298, %v1296
      %v1573 = vpack.c.b16 %v1299, %v1297
      %v1574 = vpack.c.b16 %v1302, %v1300
      %v1575 = vpack.c.b16 %v1303, %v1301
      %v1576 = vpack.c.b16 %v1306, %v1304
      %v1577 = vpack.c.b16 %v1307, %v1305
      %v1578 = vpack.c.b16 %v1310, %v1308
      %v1579 = vpack.c.b16 %v1311, %v1309
      %v1580 = vpack.c.b16 %v1314, %v1312
      %v1581 = vpack.c.b16 %v1315, %v1313
      %v1582 = vpack.c.b16 %v1318, %v1316
      %v1583 = vpack.c.b16 %v1319, %v1317
      %v1584 = vpack.c.b16 %v1322, %v1320
      %v1585 = vpack.c.b16 %v1323, %v1321
      %v1586 = vpack.c.b16 %v1326, %v1324
      %v1587 = vpack.c.b16 %v1327, %v1325
      %v1588 = vpack.c.b16 %v1330, %v1328
      %v1589 = vpack.c.b16 %v1331, %v1329
      %v1590 = vpack.c.b16 %v1334, %v1332
      %v1591 = vpack.c.b16 %v1335, %v1333
      %v1592 = vpack.c.b16 %v1338, %v1336
      %v1593 = vpack.c.b16 %v1339, %v1337
      %v1594 = vpack.c.b16 %v1342, %v1340
      %v1595 = vpack.c.b16 %v1343, %v1341
      %v1596 = vpack.c.b16 %v1346, %v1344
      %v1597 = vpack.c.b16 %v1347, %v1345
      %v1598 = vpack.c.b16 %v1350, %v1348
      %v1599 = vpack.c.b16 %v1351, %v1349
      %v1600 = vpack.c.b16 %v1354, %v1352
      %v1601 = vpack.c.b16 %v1355, %v1353
      %v1602 = vpack.c.b16 %v1358, %v1356
      %v1603 = vpack.c.b16 %v1359, %v1357
      %v1604 = vpack.c.b16 %v1362, %v1360
      %v1605 = vpack.c.b16 %v1363, %v1361
      %v1606 = vpack.c.b16 %v1366, %v1364
      %v1607 = vpack.c.b16 %v1367, %v1365
      %v1608 = vpack.c.b16 %v1370, %v1368
      %v1609 = vpack.c.b16 %v1371, %v1369
      %v1610 = vpack.c.b16 %v1374, %v1372
      %v1611 = vpack.c.b16 %v1375, %v1373
      %v1612 = vpack.c.b16 %v1378, %v1376
      %v1613 = vpack.c.b16 %v1379, %v1377
      %v1614 = vpack.c.b16 %v1382, %v1380
      %v1615 = vpack.c.b16 %v1383, %v1381
      %v1616 = vpack.c.b16 %v1386, %v1384
      %v1617 = vpack.c.b16 %v1387, %v1385
      %v1618 = vpack.c.b16 %v1390, %v1388
      %v1619 = vpack.c.b16 %v1391, %v1389
      %v1620 = vpack.c.b16 %v1394, %v1392
      %v1621 = vpack.c.b16 %v1395, %v1393
      %v1622 = vpack.c.b16 %v1398, %v1396
      %v1623 = vpack.c.b16 %v1399, %v1397
      %v1624 = vpack.c.b16 %v1402, %v1400
      %v1625 = vpack.c.b16 %v1403, %v1401
      %v1626 = vpack.c.b16 %v1406, %v1404
      %v1627 = vpack.c.b16 %v1407, %v1405
      %v1628 = vpack.c.b16 %v1410, %v1408
      %v1629 = vpack.c.b16 %v1411, %v1409
      %v1630 = vpack.c.b16 %v1414, %v1412
      %v1631 = vpack.c.b16 %v1415, %v1413
      %v1632 = vpack.c.b16 %v1418, %v1416
      %v1633 = vpack.c.b16 %v1419, %v1417
      %v1634 = vpack.c.b16 %v1422, %v1420
      %v1635 = vpack.c.b16 %v1423, %v1421
      %v1636 = vpack.c.b16 %v1424, %v1424
      %v1637 = vpack.c.b16 %v1425, %v1425
      %vm1848 = vcmask 146432
      %v1850 = vsel %vm1848, %v471, 0
      %v1853 = vsel %vm1848, %v485, 0
      %v1856 = vsel %vm1848, %v499, 0
      %v1859 = vsel %vm1848, %v513, 0
      %v1862 = vsel %vm1848, %v527, 0
      %v1865 = vsel %vm1848, %v541, 0
      %v1868 = vsel %vm1848, %v555, 0
      %v1871 = vsel %vm1848, %v569, 0
      %vm1873 = vcmask 1040384
      %v1875 = vsel %vm1873, %v1636, 0
      %v1878 = vsel %vm1873, %v1637, 0
      %1880 = vmatprep.subr.bf16.mxu0 %v1441
      %1881 = vmatpush1.bf16.msra.mxu0 %v1440
      %1882 = vmatprep.subr.bf16.mxu0 %v1439
      %1883 = vmatpush1.bf16.msra.mxu0 %v1438
      %1884 = vmatprep.subr.bf16.mxu0 %v1437
      %1885 = vmatpush1.bf16.msra.mxu0 %v1436
      %1886 = vmatprep.subr.bf16.mxu0 %v1435
      %1887 = vmatpush1.bf16.msra.mxu0 %v1434
      %1888 = vmatprep.subr.bf16.mxu0 %v1433
      %1889 = vmatpush1.bf16.msra.mxu0 %v1432
      %1890 = vmatprep.subr.bf16.mxu0 %v1431
      %1891 = vmatpush1.bf16.msra.mxu0 %v1430
      %1892 = vmatprep.subr.bf16.mxu0 %v1429
      %1893 = vmatpush1.bf16.msra.mxu0 %v1428
      %1894 = vmatprep.subr.bf16.mxu0 %v1427
      %1895 = vmatpush1.bf16.msra.mxu0 %v1426
      %1896 = vmatprep.subr.bf16.mxu0 %v1457
      %1897 = vmatpush2.bf16.msra.mxu0 %v1456
      %1898 = vmatprep.subr.bf16.mxu0 %v1455
      %1899 = vmatpush2.bf16.msra.mxu0 %v1454
      %1900 = vmatprep.subr.bf16.mxu0 %v1453
      %1901 = vmatpush2.bf16.msra.mxu0 %v1452
      %1902 = vmatprep.subr.bf16.mxu0 %v1451
      %1903 = vmatpush2.bf16.msra.mxu0 %v1450
      %1904 = vmatprep.subr.bf16.mxu0 %v1449
      %1905 = vmatpush2.bf16.msra.mxu0 %v1448
      %1906 = vmatprep.subr.bf16.mxu0 %v1447
      %1907 = vmatpush2.bf16.msra.mxu0 %v1446
      %1908 = vmatprep.subr.bf16.mxu0 %v1445
      %1909 = vmatpush2.bf16.msra.mxu0 %v1444
      %1910 = vmatprep.subr.bf16.mxu0 %v1443
      %1911 = vmatpush2.bf16.msra.mxu0 %v1442
      %1912 = vmatprep.mubr.bf16.mxu0 %v459
      %1913 = vmatmul.mubr.bf16.gmra.mxu0 %v458
      %v1914 = vpop.f32.mrf.mxu0
      %v1915 = vadd.f32 %v786, %v1914
      %v1916 = vpop.f32.mrf.mxu0
      %v1917 = vadd.f32 %v790, %v1916
      %v1918 = vpop.f32.mrf.mxu0
      %v1919 = vadd.f32 %v786, %v1918
      %v1920 = vpop.f32.mrf.mxu0
      %v1921 = vadd.f32 %v790, %v1920
      %1922 = vmatprep.mubr.bf16.mxu0 %v473
      %1923 = vmatmul.mubr.bf16.gmra.mxu0 %v472
      %v1924 = vpop.f32.mrf.mxu0
      %v1925 = vadd.f32 %v786, %v1924
      %v1926 = vpop.f32.mrf.mxu0
      %v1927 = vadd.f32 %v790, %v1926
      %v1928 = vpop.f32.mrf.mxu0
      %v1929 = vadd.f32 %v786, %v1928
      %v1930 = vpop.f32.mrf.mxu0
      %v1931 = vadd.f32 %v790, %v1930
      %1932 = vmatprep.mubr.bf16.mxu0 %v487
      %1933 = vmatmul.mubr.bf16.gmra.mxu0 %v486
      %v1934 = vpop.f32.mrf.mxu0
      %v1935 = vadd.f32 %v786, %v1934
      %v1936 = vpop.f32.mrf.mxu0
      %v1937 = vadd.f32 %v790, %v1936
      %v1938 = vpop.f32.mrf.mxu0
      %v1939 = vadd.f32 %v786, %v1938
      %v1940 = vpop.f32.mrf.mxu0
      %v1941 = vadd.f32 %v790, %v1940
      %1942 = vmatprep.mubr.bf16.mxu0 %v501
      %1943 = vmatmul.mubr.bf16.gmra.mxu0 %v500
      %v1944 = vpop.f32.mrf.mxu0
      %v1945 = vadd.f32 %v786, %v1944
      %v1946 = vpop.f32.mrf.mxu0
      %v1947 = vadd.f32 %v790, %v1946
      %v1948 = vpop.f32.mrf.mxu0
      %v1949 = vadd.f32 %v786, %v1948
      %v1950 = vpop.f32.mrf.mxu0
      %v1951 = vadd.f32 %v790, %v1950
      %1952 = vmatprep.mubr.bf16.mxu0 %v515
      %1953 = vmatmul.mubr.bf16.gmra.mxu0 %v514
      %v1954 = vpop.f32.mrf.mxu0
      %v1955 = vadd.f32 %v786, %v1954
      %v1956 = vpop.f32.mrf.mxu0
      %v1957 = vadd.f32 %v790, %v1956
      %v1958 = vpop.f32.mrf.mxu0
      %v1959 = vadd.f32 %v786, %v1958
      %v1960 = vpop.f32.mrf.mxu0
      %v1961 = vadd.f32 %v790, %v1960
      %1962 = vmatprep.mubr.bf16.mxu0 %v529
      %1963 = vmatmul.mubr.bf16.gmra.mxu0 %v528
      %v1964 = vpop.f32.mrf.mxu0
      %v1965 = vadd.f32 %v786, %v1964
      %v1966 = vpop.f32.mrf.mxu0
      %v1967 = vadd.f32 %v790, %v1966
      %v1968 = vpop.f32.mrf.mxu0
      %v1969 = vadd.f32 %v786, %v1968
      %v1970 = vpop.f32.mrf.mxu0
      %v1971 = vadd.f32 %v790, %v1970
      %1972 = vmatprep.mubr.bf16.mxu0 %v543
      %1973 = vmatmul.mubr.bf16.gmra.mxu0 %v542
      %v1974 = vpop.f32.mrf.mxu0
      %v1975 = vadd.f32 %v786, %v1974
      %v1976 = vpop.f32.mrf.mxu0
      %v1977 = vadd.f32 %v790, %v1976
      %v1978 = vpop.f32.mrf.mxu0
      %v1979 = vadd.f32 %v786, %v1978
      %v1980 = vpop.f32.mrf.mxu0
      %v1981 = vadd.f32 %v790, %v1980
      %1982 = vmatprep.mubr.bf16.mxu0 %v557
      %1983 = vmatmul.mubr.bf16.gmra.mxu0 %v556
      %v1984 = vpop.f32.mrf.mxu0
      %v1985 = vadd.f32 %v786, %v1984
      %v1986 = vpop.f32.mrf.mxu0
      %v1987 = vadd.f32 %v790, %v1986
      %v1988 = vpop.f32.mrf.mxu0
      %v1989 = vadd.f32 %v786, %v1988
      %v1990 = vpop.f32.mrf.mxu0
      %v1991 = vadd.f32 %v790, %v1990
      %1992 = vdwg.mxu0
      %1993 = vmatprep.subr.bf16.mxu0 %v1473
      %1994 = vmatpush1.bf16.msra.mxu0 %v1472
      %1995 = vmatprep.subr.bf16.mxu0 %v1471
      %1996 = vmatpush1.bf16.msra.mxu0 %v1470
      %1997 = vmatprep.subr.bf16.mxu0 %v1469
      %1998 = vmatpush1.bf16.msra.mxu0 %v1468
      %1999 = vmatprep.subr.bf16.mxu0 %v1467
      %2000 = vmatpush1.bf16.msra.mxu0 %v1466
      %2001 = vmatprep.subr.bf16.mxu0 %v1465
      %2002 = vmatpush1.bf16.msra.mxu0 %v1464
      %2003 = vmatprep.subr.bf16.mxu0 %v1463
      %2004 = vmatpush1.bf16.msra.mxu0 %v1462
      %2005 = vmatprep.subr.bf16.mxu0 %v1461
      %2006 = vmatpush1.bf16.msra.mxu0 %v1460
      %2007 = vmatprep.subr.bf16.mxu0 %v1459
      %2008 = vmatpush1.bf16.msra.mxu0 %v1458
      %2009 = vmatprep.subr.bf16.mxu0 %v1489
      %2010 = vmatpush2.bf16.msra.mxu0 %v1488
      %2011 = vmatprep.subr.bf16.mxu0 %v1487
      %2012 = vmatpush2.bf16.msra.mxu0 %v1486
      %2013 = vmatprep.subr.bf16.mxu0 %v1485
      %2014 = vmatpush2.bf16.msra.mxu0 %v1484
      %2015 = vmatprep.subr.bf16.mxu0 %v1483
      %2016 = vmatpush2.bf16.msra.mxu0 %v1482
      %2017 = vmatprep.subr.bf16.mxu0 %v1481
      %2018 = vmatpush2.bf16.msra.mxu0 %v1480
      %2019 = vmatprep.subr.bf16.mxu0 %v1479
      %2020 = vmatpush2.bf16.msra.mxu0 %v1478
      %2021 = vmatprep.subr.bf16.mxu0 %v1477
      %2022 = vmatpush2.bf16.msra.mxu0 %v1476
      %2023 = vmatprep.subr.bf16.mxu0 %v1475
      %2024 = vmatpush2.bf16.msra.mxu0 %v1474
      %2025 = vmatprep.mubr.bf16.mxu0 %v461
      %2026 = vmatmul.mubr.bf16.gmra.mxu0 %v460
      %v2027 = vpop.f32.mrf.mxu0
      %v2028 = vadd.f32 %v1915, %v2027
      %v2029 = vpop.f32.mrf.mxu0
      %v2030 = vadd.f32 %v1917, %v2029
      %v2031 = vpop.f32.mrf.mxu0
      %v2032 = vadd.f32 %v1919, %v2031
      %v2033 = vpop.f32.mrf.mxu0
      %v2034 = vadd.f32 %v1921, %v2033
      %2035 = vmatprep.mubr.bf16.mxu0 %v475
      %2036 = vmatmul.mubr.bf16.gmra.mxu0 %v474
      %v2037 = vpop.f32.mrf.mxu0
      %v2038 = vadd.f32 %v1925, %v2037
      %v2039 = vpop.f32.mrf.mxu0
      %v2040 = vadd.f32 %v1927, %v2039
      %v2041 = vpop.f32.mrf.mxu0
      %v2042 = vadd.f32 %v1929, %v2041
      %v2043 = vpop.f32.mrf.mxu0
      %v2044 = vadd.f32 %v1931, %v2043
      %2045 = vmatprep.mubr.bf16.mxu0 %v489
      %2046 = vmatmul.mubr.bf16.gmra.mxu0 %v488
      %v2047 = vpop.f32.mrf.mxu0
      %v2048 = vadd.f32 %v1935, %v2047
      %v2049 = vpop.f32.mrf.mxu0
      %v2050 = vadd.f32 %v1937, %v2049
      %v2051 = vpop.f32.mrf.mxu0
      %v2052 = vadd.f32 %v1939, %v2051
      %v2053 = vpop.f32.mrf.mxu0
      %v2054 = vadd.f32 %v1941, %v2053
      %2055 = vmatprep.mubr.bf16.mxu0 %v503
      %2056 = vmatmul.mubr.bf16.gmra.mxu0 %v502
      %v2057 = vpop.f32.mrf.mxu0
      %v2058 = vadd.f32 %v1945, %v2057
      %v2059 = vpop.f32.mrf.mxu0
      %v2060 = vadd.f32 %v1947, %v2059
      %v2061 = vpop.f32.mrf.mxu0
      %v2062 = vadd.f32 %v1949, %v2061
      %v2063 = vpop.f32.mrf.mxu0
      %v2064 = vadd.f32 %v1951, %v2063
      %2065 = vmatprep.mubr.bf16.mxu0 %v517
      %2066 = vmatmul.mubr.bf16.gmra.mxu0 %v516
      %v2067 = vpop.f32.mrf.mxu0
      %v2068 = vadd.f32 %v1955, %v2067
      %v2069 = vpop.f32.mrf.mxu0
      %v2070 = vadd.f32 %v1957, %v2069
      %v2071 = vpop.f32.mrf.mxu0
      %v2072 = vadd.f32 %v1959, %v2071
      %v2073 = vpop.f32.mrf.mxu0
      %v2074 = vadd.f32 %v1961, %v2073
      %2075 = vmatprep.mubr.bf16.mxu0 %v531
      %2076 = vmatmul.mubr.bf16.gmra.mxu0 %v530
      %v2077 = vpop.f32.mrf.mxu0
      %v2078 = vadd.f32 %v1965, %v2077
      %v2079 = vpop.f32.mrf.mxu0
      %v2080 = vadd.f32 %v1967, %v2079
      %v2081 = vpop.f32.mrf.mxu0
      %v2082 = vadd.f32 %v1969, %v2081
      %v2083 = vpop.f32.mrf.mxu0
      %v2084 = vadd.f32 %v1971, %v2083
      %2085 = vmatprep.mubr.bf16.mxu0 %v545
      %2086 = vmatmul.mubr.bf16.gmra.mxu0 %v544
      %v2087 = vpop.f32.mrf.mxu0
      %v2088 = vadd.f32 %v1975, %v2087
      %v2089 = vpop.f32.mrf.mxu0
      %v2090 = vadd.f32 %v1977, %v2089
      %v2091 = vpop.f32.mrf.mxu0
      %v2092 = vadd.f32 %v1979, %v2091
      %v2093 = vpop.f32.mrf.mxu0
      %v2094 = vadd.f32 %v1981, %v2093
      %2095 = vmatprep.mubr.bf16.mxu0 %v559
      %2096 = vmatmul.mubr.bf16.gmra.mxu0 %v558
      %v2097 = vpop.f32.mrf.mxu0
      %v2098 = vadd.f32 %v1985, %v2097
      %v2099 = vpop.f32.mrf.mxu0
      %v2100 = vadd.f32 %v1987, %v2099
      %v2101 = vpop.f32.mrf.mxu0
      %v2102 = vadd.f32 %v1989, %v2101
      %v2103 = vpop.f32.mrf.mxu0
      %v2104 = vadd.f32 %v1991, %v2103
      %2105 = vdwg.mxu0
      %2106 = vmatprep.subr.bf16.mxu0 %v1505
      %2107 = vmatpush1.bf16.msra.mxu0 %v1504
      %2108 = vmatprep.subr.bf16.mxu0 %v1503
      %2109 = vmatpush1.bf16.msra.mxu0 %v1502
      %2110 = vmatprep.subr.bf16.mxu0 %v1501
      %2111 = vmatpush1.bf16.msra.mxu0 %v1500
      %2112 = vmatprep.subr.bf16.mxu0 %v1499
      %2113 = vmatpush1.bf16.msra.mxu0 %v1498
      %2114 = vmatprep.subr.bf16.mxu0 %v1497
      %2115 = vmatpush1.bf16.msra.mxu0 %v1496
      %2116 = vmatprep.subr.bf16.mxu0 %v1495
      %2117 = vmatpush1.bf16.msra.mxu0 %v1494
      %2118 = vmatprep.subr.bf16.mxu0 %v1493
      %2119 = vmatpush1.bf16.msra.mxu0 %v1492
      %2120 = vmatprep.subr.bf16.mxu0 %v1491
      %2121 = vmatpush1.bf16.msra.mxu0 %v1490
      %2122 = vmatprep.subr.bf16.mxu0 %v1521
      %2123 = vmatpush2.bf16.msra.mxu0 %v1520
      %2124 = vmatprep.subr.bf16.mxu0 %v1519
      %2125 = vmatpush2.bf16.msra.mxu0 %v1518
      %2126 = vmatprep.subr.bf16.mxu0 %v1517
      %2127 = vmatpush2.bf16.msra.mxu0 %v1516
      %2128 = vmatprep.subr.bf16.mxu0 %v1515
      %2129 = vmatpush2.bf16.msra.mxu0 %v1514
      %2130 = vmatprep.subr.bf16.mxu0 %v1513
      %2131 = vmatpush2.bf16.msra.mxu0 %v1512
      %2132 = vmatprep.subr.bf16.mxu0 %v1511
      %2133 = vmatpush2.bf16.msra.mxu0 %v1510
      %2134 = vmatprep.subr.bf16.mxu0 %v1509
      %2135 = vmatpush2.bf16.msra.mxu0 %v1508
      %2136 = vmatprep.subr.bf16.mxu0 %v1507
      %2137 = vmatpush2.bf16.msra.mxu0 %v1506
      %2138 = vmatprep.mubr.bf16.mxu0 %v463
      %2139 = vmatmul.mubr.bf16.gmra.mxu0 %v462
      %v2140 = vpop.f32.mrf.mxu0
      %v2141 = vadd.f32 %v2028, %v2140
      %v2142 = vpop.f32.mrf.mxu0
      %v2143 = vadd.f32 %v2030, %v2142
      %v2144 = vpop.f32.mrf.mxu0
      %v2145 = vadd.f32 %v2032, %v2144
      %v2146 = vpop.f32.mrf.mxu0
      %v2147 = vadd.f32 %v2034, %v2146
      %2148 = vmatprep.mubr.bf16.mxu0 %v477
      %2149 = vmatmul.mubr.bf16.gmra.mxu0 %v476
      %v2150 = vpop.f32.mrf.mxu0
      %v2151 = vadd.f32 %v2038, %v2150
      %v2152 = vpop.f32.mrf.mxu0
      %v2153 = vadd.f32 %v2040, %v2152
      %v2154 = vpop.f32.mrf.mxu0
      %v2155 = vadd.f32 %v2042, %v2154
      %v2156 = vpop.f32.mrf.mxu0
      %v2157 = vadd.f32 %v2044, %v2156
      %2158 = vmatprep.mubr.bf16.mxu0 %v491
      %2159 = vmatmul.mubr.bf16.gmra.mxu0 %v490
      %v2160 = vpop.f32.mrf.mxu0
      %v2161 = vadd.f32 %v2048, %v2160
      %v2162 = vpop.f32.mrf.mxu0
      %v2163 = vadd.f32 %v2050, %v2162
      %v2164 = vpop.f32.mrf.mxu0
      %v2165 = vadd.f32 %v2052, %v2164
      %v2166 = vpop.f32.mrf.mxu0
      %v2167 = vadd.f32 %v2054, %v2166
      %2168 = vmatprep.mubr.bf16.mxu0 %v505
      %2169 = vmatmul.mubr.bf16.gmra.mxu0 %v504
      %v2170 = vpop.f32.mrf.mxu0
      %v2171 = vadd.f32 %v2058, %v2170
      %v2172 = vpop.f32.mrf.mxu0
      %v2173 = vadd.f32 %v2060, %v2172
      %v2174 = vpop.f32.mrf.mxu0
      %v2175 = vadd.f32 %v2062, %v2174
      %v2176 = vpop.f32.mrf.mxu0
      %v2177 = vadd.f32 %v2064, %v2176
      %2178 = vmatprep.mubr.bf16.mxu0 %v519
      %2179 = vmatmul.mubr.bf16.gmra.mxu0 %v518
      %v2180 = vpop.f32.mrf.mxu0
      %v2181 = vadd.f32 %v2068, %v2180
      %v2182 = vpop.f32.mrf.mxu0
      %v2183 = vadd.f32 %v2070, %v2182
      %v2184 = vpop.f32.mrf.mxu0
      %v2185 = vadd.f32 %v2072, %v2184
      %v2186 = vpop.f32.mrf.mxu0
      %v2187 = vadd.f32 %v2074, %v2186
      %2188 = vmatprep.mubr.bf16.mxu0 %v533
      %2189 = vmatmul.mubr.bf16.gmra.mxu0 %v532
      %v2190 = vpop.f32.mrf.mxu0
      %v2191 = vadd.f32 %v2078, %v2190
      %v2192 = vpop.f32.mrf.mxu0
      %v2193 = vadd.f32 %v2080, %v2192
      %v2194 = vpop.f32.mrf.mxu0
      %v2195 = vadd.f32 %v2082, %v2194
      %v2196 = vpop.f32.mrf.mxu0
      %v2197 = vadd.f32 %v2084, %v2196
      %2198 = vmatprep.mubr.bf16.mxu0 %v547
      %2199 = vmatmul.mubr.bf16.gmra.mxu0 %v546
      %v2200 = vpop.f32.mrf.mxu0
      %v2201 = vadd.f32 %v2088, %v2200
      %v2202 = vpop.f32.mrf.mxu0
      %v2203 = vadd.f32 %v2090, %v2202
      %v2204 = vpop.f32.mrf.mxu0
      %v2205 = vadd.f32 %v2092, %v2204
      %v2206 = vpop.f32.mrf.mxu0
      %v2207 = vadd.f32 %v2094, %v2206
      %2208 = vmatprep.mubr.bf16.mxu0 %v561
      %2209 = vmatmul.mubr.bf16.gmra.mxu0 %v560
      %v2210 = vpop.f32.mrf.mxu0
      %v2211 = vadd.f32 %v2098, %v2210
      %v2212 = vpop.f32.mrf.mxu0
      %v2213 = vadd.f32 %v2100, %v2212
      %v2214 = vpop.f32.mrf.mxu0
      %v2215 = vadd.f32 %v2102, %v2214
      %v2216 = vpop.f32.mrf.mxu0
      %v2217 = vadd.f32 %v2104, %v2216
      %2218 = vdwg.mxu0
      %2219 = vmatprep.subr.bf16.mxu0 %v1537
      %2220 = vmatpush1.bf16.msra.mxu0 %v1536
      %2221 = vmatprep.subr.bf16.mxu0 %v1535
      %2222 = vmatpush1.bf16.msra.mxu0 %v1534
      %2223 = vmatprep.subr.bf16.mxu0 %v1533
      %2224 = vmatpush1.bf16.msra.mxu0 %v1532
      %2225 = vmatprep.subr.bf16.mxu0 %v1531
      %2226 = vmatpush1.bf16.msra.mxu0 %v1530
      %2227 = vmatprep.subr.bf16.mxu0 %v1529
      %2228 = vmatpush1.bf16.msra.mxu0 %v1528
      %2229 = vmatprep.subr.bf16.mxu0 %v1527
      %2230 = vmatpush1.bf16.msra.mxu0 %v1526
      %2231 = vmatprep.subr.bf16.mxu0 %v1525
      %2232 = vmatpush1.bf16.msra.mxu0 %v1524
      %2233 = vmatprep.subr.bf16.mxu0 %v1523
      %2234 = vmatpush1.bf16.msra.mxu0 %v1522
      %2235 = vmatprep.subr.bf16.mxu0 %v1553
      %2236 = vmatpush2.bf16.msra.mxu0 %v1552
      %2237 = vmatprep.subr.bf16.mxu0 %v1551
      %2238 = vmatpush2.bf16.msra.mxu0 %v1550
      %2239 = vmatprep.subr.bf16.mxu0 %v1549
      %2240 = vmatpush2.bf16.msra.mxu0 %v1548
      %2241 = vmatprep.subr.bf16.mxu0 %v1547
      %2242 = vmatpush2.bf16.msra.mxu0 %v1546
      %2243 = vmatprep.subr.bf16.mxu0 %v1545
      %2244 = vmatpush2.bf16.msra.mxu0 %v1544
      %2245 = vmatprep.subr.bf16.mxu0 %v1543
      %2246 = vmatpush2.bf16.msra.mxu0 %v1542
      %2247 = vmatprep.subr.bf16.mxu0 %v1541
      %2248 = vmatpush2.bf16.msra.mxu0 %v1540
      %2249 = vmatprep.subr.bf16.mxu0 %v1539
      %2250 = vmatpush2.bf16.msra.mxu0 %v1538
      %2251 = vmatprep.mubr.bf16.mxu0 %v465
      %2252 = vmatmul.mubr.bf16.gmra.mxu0 %v464
      %v2253 = vpop.f32.mrf.mxu0
      %v2254 = vadd.f32 %v2141, %v2253
      %v2255 = vpop.f32.mrf.mxu0
      %v2256 = vadd.f32 %v2143, %v2255
      %v2257 = vpop.f32.mrf.mxu0
      %v2258 = vadd.f32 %v2145, %v2257
      %v2259 = vpop.f32.mrf.mxu0
      %v2260 = vadd.f32 %v2147, %v2259
      %2261 = vmatprep.mubr.bf16.mxu0 %v479
      %2262 = vmatmul.mubr.bf16.gmra.mxu0 %v478
      %v2263 = vpop.f32.mrf.mxu0
      %v2264 = vadd.f32 %v2151, %v2263
      %v2265 = vpop.f32.mrf.mxu0
      %v2266 = vadd.f32 %v2153, %v2265
      %v2267 = vpop.f32.mrf.mxu0
      %v2268 = vadd.f32 %v2155, %v2267
      %v2269 = vpop.f32.mrf.mxu0
      %v2270 = vadd.f32 %v2157, %v2269
      %2271 = vmatprep.mubr.bf16.mxu0 %v493
      %2272 = vmatmul.mubr.bf16.gmra.mxu0 %v492
      %v2273 = vpop.f32.mrf.mxu0
      %v2274 = vadd.f32 %v2161, %v2273
      %v2275 = vpop.f32.mrf.mxu0
      %v2276 = vadd.f32 %v2163, %v2275
      %v2277 = vpop.f32.mrf.mxu0
      %v2278 = vadd.f32 %v2165, %v2277
      %v2279 = vpop.f32.mrf.mxu0
      %v2280 = vadd.f32 %v2167, %v2279
      %2281 = vmatprep.mubr.bf16.mxu0 %v507
      %2282 = vmatmul.mubr.bf16.gmra.mxu0 %v506
      %v2283 = vpop.f32.mrf.mxu0
      %v2284 = vadd.f32 %v2171, %v2283
      %v2285 = vpop.f32.mrf.mxu0
      %v2286 = vadd.f32 %v2173, %v2285
      %v2287 = vpop.f32.mrf.mxu0
      %v2288 = vadd.f32 %v2175, %v2287
      %v2289 = vpop.f32.mrf.mxu0
      %v2290 = vadd.f32 %v2177, %v2289
      %2291 = vmatprep.mubr.bf16.mxu0 %v521
      %2292 = vmatmul.mubr.bf16.gmra.mxu0 %v520
      %v2293 = vpop.f32.mrf.mxu0
      %v2294 = vadd.f32 %v2181, %v2293
      %v2295 = vpop.f32.mrf.mxu0
      %v2296 = vadd.f32 %v2183, %v2295
      %v2297 = vpop.f32.mrf.mxu0
      %v2298 = vadd.f32 %v2185, %v2297
      %v2299 = vpop.f32.mrf.mxu0
      %v2300 = vadd.f32 %v2187, %v2299
      %2301 = vmatprep.mubr.bf16.mxu0 %v535
      %2302 = vmatmul.mubr.bf16.gmra.mxu0 %v534
      %v2303 = vpop.f32.mrf.mxu0
      %v2304 = vadd.f32 %v2191, %v2303
      %v2305 = vpop.f32.mrf.mxu0
      %v2306 = vadd.f32 %v2193, %v2305
      %v2307 = vpop.f32.mrf.mxu0
      %v2308 = vadd.f32 %v2195, %v2307
      %v2309 = vpop.f32.mrf.mxu0
      %v2310 = vadd.f32 %v2197, %v2309
      %2311 = vmatprep.mubr.bf16.mxu0 %v549
      %2312 = vmatmul.mubr.bf16.gmra.mxu0 %v548
      %v2313 = vpop.f32.mrf.mxu0
      %v2314 = vadd.f32 %v2201, %v2313
      %v2315 = vpop.f32.mrf.mxu0
      %v2316 = vadd.f32 %v2203, %v2315
      %v2317 = vpop.f32.mrf.mxu0
      %v2318 = vadd.f32 %v2205, %v2317
      %v2319 = vpop.f32.mrf.mxu0
      %v2320 = vadd.f32 %v2207, %v2319
      %2321 = vmatprep.mubr.bf16.mxu0 %v563
      %2322 = vmatmul.mubr.bf16.gmra.mxu0 %v562
      %v2323 = vpop.f32.mrf.mxu0
      %v2324 = vadd.f32 %v2211, %v2323
      %v2325 = vpop.f32.mrf.mxu0
      %v2326 = vadd.f32 %v2213, %v2325
      %v2327 = vpop.f32.mrf.mxu0
      %v2328 = vadd.f32 %v2215, %v2327
      %v2329 = vpop.f32.mrf.mxu0
      %v2330 = vadd.f32 %v2217, %v2329
      %2331 = vdwg.mxu0
      %2332 = vmatprep.subr.bf16.mxu0 %v1569
      %2333 = vmatpush1.bf16.msra.mxu0 %v1568
      %2334 = vmatprep.subr.bf16.mxu0 %v1567
      %2335 = vmatpush1.bf16.msra.mxu0 %v1566
      %2336 = vmatprep.subr.bf16.mxu0 %v1565
      %2337 = vmatpush1.bf16.msra.mxu0 %v1564
      %2338 = vmatprep.subr.bf16.mxu0 %v1563
      %2339 = vmatpush1.bf16.msra.mxu0 %v1562
      %2340 = vmatprep.subr.bf16.mxu0 %v1561
      %2341 = vmatpush1.bf16.msra.mxu0 %v1560
      %2342 = vmatprep.subr.bf16.mxu0 %v1559
      %2343 = vmatpush1.bf16.msra.mxu0 %v1558
      %2344 = vmatprep.subr.bf16.mxu0 %v1557
      %2345 = vmatpush1.bf16.msra.mxu0 %v1556
      %2346 = vmatprep.subr.bf16.mxu0 %v1555
      %2347 = vmatpush1.bf16.msra.mxu0 %v1554
      %2348 = vmatprep.subr.bf16.mxu0 %v1585
      %2349 = vmatpush2.bf16.msra.mxu0 %v1584
      %2350 = vmatprep.subr.bf16.mxu0 %v1583
      %2351 = vmatpush2.bf16.msra.mxu0 %v1582
      %2352 = vmatprep.subr.bf16.mxu0 %v1581
      %2353 = vmatpush2.bf16.msra.mxu0 %v1580
      %2354 = vmatprep.subr.bf16.mxu0 %v1579
      %2355 = vmatpush2.bf16.msra.mxu0 %v1578
      %2356 = vmatprep.subr.bf16.mxu0 %v1577
      %2357 = vmatpush2.bf16.msra.mxu0 %v1576
      %2358 = vmatprep.subr.bf16.mxu0 %v1575
      %2359 = vmatpush2.bf16.msra.mxu0 %v1574
      %2360 = vmatprep.subr.bf16.mxu0 %v1573
      %2361 = vmatpush2.bf16.msra.mxu0 %v1572
      %2362 = vmatprep.subr.bf16.mxu0 %v1571
      %2363 = vmatpush2.bf16.msra.mxu0 %v1570
      %2364 = vmatprep.mubr.bf16.mxu0 %v467
      %2365 = vmatmul.mubr.bf16.gmra.mxu0 %v466
      %v2366 = vpop.f32.mrf.mxu0
      %v2367 = vadd.f32 %v2254, %v2366
      %v2368 = vpop.f32.mrf.mxu0
      %v2369 = vadd.f32 %v2256, %v2368
      %v2370 = vpop.f32.mrf.mxu0
      %v2371 = vadd.f32 %v2258, %v2370
      %v2372 = vpop.f32.mrf.mxu0
      %v2373 = vadd.f32 %v2260, %v2372
      %2374 = vmatprep.mubr.bf16.mxu0 %v481
      %2375 = vmatmul.mubr.bf16.gmra.mxu0 %v480
      %v2376 = vpop.f32.mrf.mxu0
      %v2377 = vadd.f32 %v2264, %v2376
      %v2378 = vpop.f32.mrf.mxu0
      %v2379 = vadd.f32 %v2266, %v2378
      %v2380 = vpop.f32.mrf.mxu0
      %v2381 = vadd.f32 %v2268, %v2380
      %v2382 = vpop.f32.mrf.mxu0
      %v2383 = vadd.f32 %v2270, %v2382
      %2384 = vmatprep.mubr.bf16.mxu0 %v495
      %2385 = vmatmul.mubr.bf16.gmra.mxu0 %v494
      %v2386 = vpop.f32.mrf.mxu0
      %v2387 = vadd.f32 %v2274, %v2386
      %v2388 = vpop.f32.mrf.mxu0
      %v2389 = vadd.f32 %v2276, %v2388
      %v2390 = vpop.f32.mrf.mxu0
      %v2391 = vadd.f32 %v2278, %v2390
      %v2392 = vpop.f32.mrf.mxu0
      %v2393 = vadd.f32 %v2280, %v2392
      %2394 = vmatprep.mubr.bf16.mxu0 %v509
      %2395 = vmatmul.mubr.bf16.gmra.mxu0 %v508
      %v2396 = vpop.f32.mrf.mxu0
      %v2397 = vadd.f32 %v2284, %v2396
      %v2398 = vpop.f32.mrf.mxu0
      %v2399 = vadd.f32 %v2286, %v2398
      %v2400 = vpop.f32.mrf.mxu0
      %v2401 = vadd.f32 %v2288, %v2400
      %v2402 = vpop.f32.mrf.mxu0
      %v2403 = vadd.f32 %v2290, %v2402
      %2404 = vmatprep.mubr.bf16.mxu0 %v523
      %2405 = vmatmul.mubr.bf16.gmra.mxu0 %v522
      %v2406 = vpop.f32.mrf.mxu0
      %v2407 = vadd.f32 %v2294, %v2406
      %v2408 = vpop.f32.mrf.mxu0
      %v2409 = vadd.f32 %v2296, %v2408
      %v2410 = vpop.f32.mrf.mxu0
      %v2411 = vadd.f32 %v2298, %v2410
      %v2412 = vpop.f32.mrf.mxu0
      %v2413 = vadd.f32 %v2300, %v2412
      %2414 = vmatprep.mubr.bf16.mxu0 %v537
      %2415 = vmatmul.mubr.bf16.gmra.mxu0 %v536
      %v2416 = vpop.f32.mrf.mxu0
      %v2417 = vadd.f32 %v2304, %v2416
      %v2418 = vpop.f32.mrf.mxu0
      %v2419 = vadd.f32 %v2306, %v2418
      %v2420 = vpop.f32.mrf.mxu0
      %v2421 = vadd.f32 %v2308, %v2420
      %v2422 = vpop.f32.mrf.mxu0
      %v2423 = vadd.f32 %v2310, %v2422
      %2424 = vmatprep.mubr.bf16.mxu0 %v551
      %2425 = vmatmul.mubr.bf16.gmra.mxu0 %v550
      %v2426 = vpop.f32.mrf.mxu0
      %v2427 = vadd.f32 %v2314, %v2426
      %v2428 = vpop.f32.mrf.mxu0
      %v2429 = vadd.f32 %v2316, %v2428
      %v2430 = vpop.f32.mrf.mxu0
      %v2431 = vadd.f32 %v2318, %v2430
      %v2432 = vpop.f32.mrf.mxu0
      %v2433 = vadd.f32 %v2320, %v2432
      %2434 = vmatprep.mubr.bf16.mxu0 %v565
      %2435 = vmatmul.mubr.bf16.gmra.mxu0 %v564
      %v2436 = vpop.f32.mrf.mxu0
      %v2437 = vadd.f32 %v2324, %v2436
      %v2438 = vpop.f32.mrf.mxu0
      %v2439 = vadd.f32 %v2326, %v2438
      %v2440 = vpop.f32.mrf.mxu0
      %v2441 = vadd.f32 %v2328, %v2440
      %v2442 = vpop.f32.mrf.mxu0
      %v2443 = vadd.f32 %v2330, %v2442
      %2444 = vdwg.mxu0
      %2445 = vmatprep.subr.bf16.mxu0 %v1601
      %2446 = vmatpush1.bf16.msra.mxu0 %v1600
      %2447 = vmatprep.subr.bf16.mxu0 %v1599
      %2448 = vmatpush1.bf16.msra.mxu0 %v1598
      %2449 = vmatprep.subr.bf16.mxu0 %v1597
      %2450 = vmatpush1.bf16.msra.mxu0 %v1596
      %2451 = vmatprep.subr.bf16.mxu0 %v1595
      %2452 = vmatpush1.bf16.msra.mxu0 %v1594
      %2453 = vmatprep.subr.bf16.mxu0 %v1593
      %2454 = vmatpush1.bf16.msra.mxu0 %v1592
      %2455 = vmatprep.subr.bf16.mxu0 %v1591
      %2456 = vmatpush1.bf16.msra.mxu0 %v1590
      %2457 = vmatprep.subr.bf16.mxu0 %v1589
      %2458 = vmatpush1.bf16.msra.mxu0 %v1588
      %2459 = vmatprep.subr.bf16.mxu0 %v1587
      %2460 = vmatpush1.bf16.msra.mxu0 %v1586
      %2461 = vmatprep.subr.bf16.mxu0 %v1617
      %2462 = vmatpush2.bf16.msra.mxu0 %v1616
      %2463 = vmatprep.subr.bf16.mxu0 %v1615
      %2464 = vmatpush2.bf16.msra.mxu0 %v1614
      %2465 = vmatprep.subr.bf16.mxu0 %v1613
      %2466 = vmatpush2.bf16.msra.mxu0 %v1612
      %2467 = vmatprep.subr.bf16.mxu0 %v1611
      %2468 = vmatpush2.bf16.msra.mxu0 %v1610
      %2469 = vmatprep.subr.bf16.mxu0 %v1609
      %2470 = vmatpush2.bf16.msra.mxu0 %v1608
      %2471 = vmatprep.subr.bf16.mxu0 %v1607
      %2472 = vmatpush2.bf16.msra.mxu0 %v1606
      %2473 = vmatprep.subr.bf16.mxu0 %v1605
      %2474 = vmatpush2.bf16.msra.mxu0 %v1604
      %2475 = vmatprep.subr.bf16.mxu0 %v1603
      %2476 = vmatpush2.bf16.msra.mxu0 %v1602
      %2477 = vmatprep.mubr.bf16.mxu0 %v469
      %2478 = vmatmul.mubr.bf16.gmra.mxu0 %v468
      %v2479 = vpop.f32.mrf.mxu0
      %v2480 = vadd.f32 %v2367, %v2479
      %v2481 = vpop.f32.mrf.mxu0
      %v2482 = vadd.f32 %v2369, %v2481
      %v2483 = vpop.f32.mrf.mxu0
      %v2484 = vadd.f32 %v2371, %v2483
      %v2485 = vpop.f32.mrf.mxu0
      %v2486 = vadd.f32 %v2373, %v2485
      %2487 = vmatprep.mubr.bf16.mxu0 %v483
      %2488 = vmatmul.mubr.bf16.gmra.mxu0 %v482
      %v2489 = vpop.f32.mrf.mxu0
      %v2490 = vadd.f32 %v2377, %v2489
      %v2491 = vpop.f32.mrf.mxu0
      %v2492 = vadd.f32 %v2379, %v2491
      %v2493 = vpop.f32.mrf.mxu0
      %v2494 = vadd.f32 %v2381, %v2493
      %v2495 = vpop.f32.mrf.mxu0
      %v2496 = vadd.f32 %v2383, %v2495
      %2497 = vmatprep.mubr.bf16.mxu0 %v497
      %2498 = vmatmul.mubr.bf16.gmra.mxu0 %v496
      %v2499 = vpop.f32.mrf.mxu0
      %v2500 = vadd.f32 %v2387, %v2499
      %v2501 = vpop.f32.mrf.mxu0
      %v2502 = vadd.f32 %v2389, %v2501
      %v2503 = vpop.f32.mrf.mxu0
      %v2504 = vadd.f32 %v2391, %v2503
      %v2505 = vpop.f32.mrf.mxu0
      %v2506 = vadd.f32 %v2393, %v2505
      %2507 = vmatprep.mubr.bf16.mxu0 %v511
      %2508 = vmatmul.mubr.bf16.gmra.mxu0 %v510
      %v2509 = vpop.f32.mrf.mxu0
      %v2510 = vadd.f32 %v2397, %v2509
      %v2511 = vpop.f32.mrf.mxu0
      %v2512 = vadd.f32 %v2399, %v2511
      %v2513 = vpop.f32.mrf.mxu0
      %v2514 = vadd.f32 %v2401, %v2513
      %v2515 = vpop.f32.mrf.mxu0
      %v2516 = vadd.f32 %v2403, %v2515
      %2517 = vmatprep.mubr.bf16.mxu0 %v525
      %2518 = vmatmul.mubr.bf16.gmra.mxu0 %v524
      %v2519 = vpop.f32.mrf.mxu0
      %v2520 = vadd.f32 %v2407, %v2519
      %v2521 = vpop.f32.mrf.mxu0
      %v2522 = vadd.f32 %v2409, %v2521
      %v2523 = vpop.f32.mrf.mxu0
      %v2524 = vadd.f32 %v2411, %v2523
      %v2525 = vpop.f32.mrf.mxu0
      %v2526 = vadd.f32 %v2413, %v2525
      %2527 = vmatprep.mubr.bf16.mxu0 %v539
      %2528 = vmatmul.mubr.bf16.gmra.mxu0 %v538
      %v2529 = vpop.f32.mrf.mxu0
      %v2530 = vadd.f32 %v2417, %v2529
      %v2531 = vpop.f32.mrf.mxu0
      %v2532 = vadd.f32 %v2419, %v2531
      %v2533 = vpop.f32.mrf.mxu0
      %v2534 = vadd.f32 %v2421, %v2533
      %v2535 = vpop.f32.mrf.mxu0
      %v2536 = vadd.f32 %v2423, %v2535
      %2537 = vmatprep.mubr.bf16.mxu0 %v553
      %2538 = vmatmul.mubr.bf16.gmra.mxu0 %v552
      %v2539 = vpop.f32.mrf.mxu0
      %v2540 = vadd.f32 %v2427, %v2539
      %v2541 = vpop.f32.mrf.mxu0
      %v2542 = vadd.f32 %v2429, %v2541
      %v2543 = vpop.f32.mrf.mxu0
      %v2544 = vadd.f32 %v2431, %v2543
      %v2545 = vpop.f32.mrf.mxu0
      %v2546 = vadd.f32 %v2433, %v2545
      %2547 = vmatprep.mubr.bf16.mxu0 %v567
      %2548 = vmatmul.mubr.bf16.gmra.mxu0 %v566
      %v2549 = vpop.f32.mrf.mxu0
      %v2550 = vadd.f32 %v2437, %v2549
      %v2551 = vpop.f32.mrf.mxu0
      %v2552 = vadd.f32 %v2439, %v2551
      %v2553 = vpop.f32.mrf.mxu0
      %v2554 = vadd.f32 %v2441, %v2553
      %v2555 = vpop.f32.mrf.mxu0
      %v2556 = vadd.f32 %v2443, %v2555
      %2557 = vdwg.mxu0
      %2558 = vmatprep.subr.bf16.mxu0 %v1633
      %2559 = vmatpush1.bf16.msra.mxu0 %v1632
      %2560 = vmatprep.subr.bf16.mxu0 %v1631
      %2561 = vmatpush1.bf16.msra.mxu0 %v1630
      %2562 = vmatprep.subr.bf16.mxu0 %v1629
      %2563 = vmatpush1.bf16.msra.mxu0 %v1628
      %2564 = vmatprep.subr.bf16.mxu0 %v1627
      %2565 = vmatpush1.bf16.msra.mxu0 %v1626
      %2566 = vmatprep.subr.bf16.mxu0 %v1625
      %2567 = vmatpush1.bf16.msra.mxu0 %v1624
      %2568 = vmatprep.subr.bf16.mxu0 %v1623
      %2569 = vmatpush1.bf16.msra.mxu0 %v1622
      %2570 = vmatprep.subr.bf16.mxu0 %v1621
      %2571 = vmatpush1.bf16.msra.mxu0 %v1620
      %2572 = vmatprep.subr.bf16.mxu0 %v1619
      %2573 = vmatpush1.bf16.msra.mxu0 %v1618
      %2574 = vmatprep.subr.bf16.mxu0 0
      %2575 = vmatpush2.bf16.msra.mxu0 0
      %2576 = vmatprep.subr.bf16.mxu0 0
      %2577 = vmatpush2.bf16.msra.mxu0 0
      %2578 = vmatprep.subr.bf16.mxu0 0
      %2579 = vmatpush2.bf16.msra.mxu0 0
      %2580 = vmatprep.subr.bf16.mxu0 0
      %2581 = vmatpush2.bf16.msra.mxu0 0
      %2582 = vmatprep.subr.bf16.mxu0 0
      %2583 = vmatpush2.bf16.msra.mxu0 0
      %2584 = vmatprep.subr.bf16.mxu0 0
      %2585 = vmatpush2.bf16.msra.mxu0 0
      %2586 = vmatprep.subr.bf16.mxu0 %v1878
      %2587 = vmatpush2.bf16.msra.mxu0 %v1875
      %2588 = vmatprep.subr.bf16.mxu0 %v1635
      %2589 = vmatpush2.bf16.msra.mxu0 %v1634
      %2590 = vmatprep.mubr.bf16.mxu0 %v1850
      %2591 = vmatmul.mubr.bf16.gmra.mxu0 %v470
      %v2592 = vpop.f32.mrf.mxu0
      %v2593 = vadd.f32 %v2480, %v2592
      %v2594 = vpop.f32.mrf.mxu0
      %v2595 = vadd.f32 %v2482, %v2594
      %v2596 = vpop.f32.mrf.mxu0
      %v2597 = vadd.f32 %v2484, %v2596
      %v2598 = vpop.f32.mrf.mxu0
      %v2599 = vadd.f32 %v2486, %v2598
      %2600 = vmatprep.mubr.bf16.mxu0 %v1853
      %2601 = vmatmul.mubr.bf16.gmra.mxu0 %v484
      %v2602 = vpop.f32.mrf.mxu0
      %v2603 = vadd.f32 %v2490, %v2602
      %v2604 = vpop.f32.mrf.mxu0
      %v2605 = vadd.f32 %v2492, %v2604
      %v2606 = vpop.f32.mrf.mxu0
      %v2607 = vadd.f32 %v2494, %v2606
      %v2608 = vpop.f32.mrf.mxu0
      %v2609 = vadd.f32 %v2496, %v2608
      %2610 = vmatprep.mubr.bf16.mxu0 %v1856
      %2611 = vmatmul.mubr.bf16.gmra.mxu0 %v498
      %v2612 = vpop.f32.mrf.mxu0
      %v2613 = vadd.f32 %v2500, %v2612
      %v2614 = vpop.f32.mrf.mxu0
      %v2615 = vadd.f32 %v2502, %v2614
      %v2616 = vpop.f32.mrf.mxu0
      %v2617 = vadd.f32 %v2504, %v2616
      %v2618 = vpop.f32.mrf.mxu0
      %v2619 = vadd.f32 %v2506, %v2618
      %2620 = vmatprep.mubr.bf16.mxu0 %v1859
      %2621 = vmatmul.mubr.bf16.gmra.mxu0 %v512
      %v2622 = vpop.f32.mrf.mxu0
      %v2623 = vadd.f32 %v2510, %v2622
      %v2624 = vpop.f32.mrf.mxu0
      %v2625 = vadd.f32 %v2512, %v2624
      %v2626 = vpop.f32.mrf.mxu0
      %v2627 = vadd.f32 %v2514, %v2626
      %v2628 = vpop.f32.mrf.mxu0
      %v2629 = vadd.f32 %v2516, %v2628
      %2630 = vmatprep.mubr.bf16.mxu0 %v1862
      %2631 = vmatmul.mubr.bf16.gmra.mxu0 %v526
      %v2632 = vpop.f32.mrf.mxu0
      %v2633 = vadd.f32 %v2520, %v2632
      %v2634 = vpop.f32.mrf.mxu0
      %v2635 = vadd.f32 %v2522, %v2634
      %v2636 = vpop.f32.mrf.mxu0
      %v2637 = vadd.f32 %v2524, %v2636
      %v2638 = vpop.f32.mrf.mxu0
      %v2639 = vadd.f32 %v2526, %v2638
      %2640 = vmatprep.mubr.bf16.mxu0 %v1865
      %2641 = vmatmul.mubr.bf16.gmra.mxu0 %v540
      %v2642 = vpop.f32.mrf.mxu0
      %v2643 = vadd.f32 %v2530, %v2642
      %v2644 = vpop.f32.mrf.mxu0
      %v2645 = vadd.f32 %v2532, %v2644
      %v2646 = vpop.f32.mrf.mxu0
      %v2647 = vadd.f32 %v2534, %v2646
      %v2648 = vpop.f32.mrf.mxu0
      %v2649 = vadd.f32 %v2536, %v2648
      %2650 = vmatprep.mubr.bf16.mxu0 %v1868
      %2651 = vmatmul.mubr.bf16.gmra.mxu0 %v554
      %v2652 = vpop.f32.mrf.mxu0
      %v2653 = vadd.f32 %v2540, %v2652
      %v2654 = vpop.f32.mrf.mxu0
      %v2655 = vadd.f32 %v2542, %v2654
      %v2656 = vpop.f32.mrf.mxu0
      %v2657 = vadd.f32 %v2544, %v2656
      %v2658 = vpop.f32.mrf.mxu0
      %v2659 = vadd.f32 %v2546, %v2658
      %2660 = vmatprep.mubr.bf16.mxu0 %v1871
      %2661 = vmatmul.mubr.bf16.gmra.mxu0 %v568
      %v2662 = vpop.f32.mrf.mxu0
      %v2663 = vadd.f32 %v2550, %v2662
      %v2664 = vpop.f32.mrf.mxu0
      %v2665 = vadd.f32 %v2552, %v2664
      %v2666 = vpop.f32.mrf.mxu0
      %v2667 = vadd.f32 %v2554, %v2666
      %v2668 = vpop.f32.mrf.mxu0
      %v2669 = vadd.f32 %v2556, %v2668
      %2670 = vdwg.mxu0
      %v2671 = vsub.f32 0.0, %v2593
      %v2672 = vsub.f32 0.0, %v2595
      %v2673 = vsub.f32 0.0, %v2597
      %v2674 = vsub.f32 0.0, %v2599
      %v2675 = vsub.f32 0.0, %v2603
      %v2676 = vsub.f32 0.0, %v2605
      %v2677 = vsub.f32 0.0, %v2607
      %v2678 = vsub.f32 0.0, %v2609
      %v2679 = vsub.f32 0.0, %v2613
      %v2680 = vsub.f32 0.0, %v2615
      %v2681 = vsub.f32 0.0, %v2617
      %v2682 = vsub.f32 0.0, %v2619
      %v2683 = vsub.f32 0.0, %v2623
      %v2684 = vsub.f32 0.0, %v2625
      %v2685 = vsub.f32 0.0, %v2627
      %v2686 = vsub.f32 0.0, %v2629
      %v2687 = vsub.f32 0.0, %v2633
      %v2688 = vsub.f32 0.0, %v2635
      %v2689 = vsub.f32 0.0, %v2637
      %v2690 = vsub.f32 0.0, %v2639
      %v2691 = vsub.f32 0.0, %v2643
      %v2692 = vsub.f32 0.0, %v2645
      %v2693 = vsub.f32 0.0, %v2647
      %v2694 = vsub.f32 0.0, %v2649
      %v2695 = vsub.f32 0.0, %v2653
      %v2696 = vsub.f32 0.0, %v2655
      %v2697 = vsub.f32 0.0, %v2657
      %v2698 = vsub.f32 0.0, %v2659
      %v2699 = vsub.f32 0.0, %v2663
      %v2700 = vsub.f32 0.0, %v2665
      %v2701 = vsub.f32 0.0, %v2667
      %v2702 = vsub.f32 0.0, %v2669
      %v2703 = vmul.f32 %v2671, 1.442695
      %v2704 = vpow.pop %v2703
      %v2705 = vmul.f32 %v2672, 1.442695
      %v2706 = vpow.pop %v2705
      %v2707 = vmul.f32 %v2673, 1.442695
      %v2708 = vpow.pop %v2707
      %v2709 = vmul.f32 %v2674, 1.442695
      %v2710 = vpow.pop %v2709
      %v2711 = vmul.f32 %v2675, 1.442695
      %v2712 = vpow.pop %v2711
      %v2713 = vmul.f32 %v2676, 1.442695
      %v2714 = vpow.pop %v2713
      %v2715 = vmul.f32 %v2677, 1.442695
      %v2716 = vpow.pop %v2715
      %v2717 = vmul.f32 %v2678, 1.442695
      %v2718 = vpow.pop %v2717
      %v2719 = vmul.f32 %v2679, 1.442695
      %v2720 = vpow.pop %v2719
      %v2721 = vmul.f32 %v2680, 1.442695
      %v2722 = vpow.pop %v2721
      %v2723 = vmul.f32 %v2681, 1.442695
      %v2724 = vpow.pop %v2723
      %v2725 = vmul.f32 %v2682, 1.442695
      %v2726 = vpow.pop %v2725
      %v2727 = vmul.f32 %v2683, 1.442695
      %v2728 = vpow.pop %v2727
      %v2729 = vmul.f32 %v2684, 1.442695
      %v2730 = vpow.pop %v2729
      %v2731 = vmul.f32 %v2685, 1.442695
      %v2732 = vpow.pop %v2731
      %v2733 = vmul.f32 %v2686, 1.442695
      %v2734 = vpow.pop %v2733
      %v2735 = vmul.f32 %v2687, 1.442695
      %v2736 = vpow.pop %v2735
      %v2737 = vmul.f32 %v2688, 1.442695
      %v2738 = vpow.pop %v2737
      %v2739 = vmul.f32 %v2689, 1.442695
      %v2740 = vpow.pop %v2739
      %v2741 = vmul.f32 %v2690, 1.442695
      %v2742 = vpow.pop %v2741
      %v2743 = vmul.f32 %v2691, 1.442695
      %v2744 = vpow.pop %v2743
      %v2745 = vmul.f32 %v2692, 1.442695
      %v2746 = vpow.pop %v2745
      %v2747 = vmul.f32 %v2693, 1.442695
      %v2748 = vpow.pop %v2747
      %v2749 = vmul.f32 %v2694, 1.442695
      %v2750 = vpow.pop %v2749
      %v2751 = vmul.f32 %v2695, 1.442695
      %v2752 = vpow.pop %v2751
      %v2753 = vmul.f32 %v2696, 1.442695
      %v2754 = vpow.pop %v2753
      %v2755 = vmul.f32 %v2697, 1.442695
      %v2756 = vpow.pop %v2755
      %v2757 = vmul.f32 %v2698, 1.442695
      %v2758 = vpow.pop %v2757
      %v2759 = vmul.f32 %v2699, 1.442695
      %v2760 = vpow.pop %v2759
      %v2761 = vmul.f32 %v2700, 1.442695
      %v2762 = vpow.pop %v2761
      %v2763 = vmul.f32 %v2701, 1.442695
      %v2764 = vpow.pop %v2763
      %v2765 = vmul.f32 %v2702, 1.442695
      %v2766 = vpow.pop %v2765
      %v2767 = vadd.f32 %v2704, 1.0
      %v2768 = vadd.f32 %v2706, 1.0
      %v2769 = vadd.f32 %v2708, 1.0
      %v2770 = vadd.f32 %v2710, 1.0
      %v2771 = vadd.f32 %v2712, 1.0
      %v2772 = vadd.f32 %v2714, 1.0
      %v2773 = vadd.f32 %v2716, 1.0
      %v2774 = vadd.f32 %v2718, 1.0
      %v2775 = vadd.f32 %v2720, 1.0
      %v2776 = vadd.f32 %v2722, 1.0
      %v2777 = vadd.f32 %v2724, 1.0
      %v2778 = vadd.f32 %v2726, 1.0
      %v2779 = vadd.f32 %v2728, 1.0
      %v2780 = vadd.f32 %v2730, 1.0
      %v2781 = vadd.f32 %v2732, 1.0
      %v2782 = vadd.f32 %v2734, 1.0
      %v2783 = vadd.f32 %v2736, 1.0
      %v2784 = vadd.f32 %v2738, 1.0
      %v2785 = vadd.f32 %v2740, 1.0
      %v2786 = vadd.f32 %v2742, 1.0
      %v2787 = vadd.f32 %v2744, 1.0
      %v2788 = vadd.f32 %v2746, 1.0
      %v2789 = vadd.f32 %v2748, 1.0
      %v2790 = vadd.f32 %v2750, 1.0
      %v2791 = vadd.f32 %v2752, 1.0
      %v2792 = vadd.f32 %v2754, 1.0
      %v2793 = vadd.f32 %v2756, 1.0
      %v2794 = vadd.f32 %v2758, 1.0
      %v2795 = vadd.f32 %v2760, 1.0
      %v2796 = vadd.f32 %v2762, 1.0
      %v2797 = vadd.f32 %v2764, 1.0
      %v2798 = vadd.f32 %v2766, 1.0
      %v2799 = vrcp.pop %v2767
      %v2800 = vrcp.pop %v2768
      %v2801 = vrcp.pop %v2769
      %v2802 = vrcp.pop %v2770
      %v2803 = vrcp.pop %v2771
      %v2804 = vrcp.pop %v2772
      %v2805 = vrcp.pop %v2773
      %v2806 = vrcp.pop %v2774
      %v2807 = vrcp.pop %v2775
      %v2808 = vrcp.pop %v2776
      %v2809 = vrcp.pop %v2777
      %v2810 = vrcp.pop %v2778
      %v2811 = vrcp.pop %v2779
      %v2812 = vrcp.pop %v2780
      %v2813 = vrcp.pop %v2781
      %v2814 = vrcp.pop %v2782
      %v2815 = vrcp.pop %v2783
      %v2816 = vrcp.pop %v2784
      %v2817 = vrcp.pop %v2785
      %v2818 = vrcp.pop %v2786
      %v2819 = vrcp.pop %v2787
      %v2820 = vrcp.pop %v2788
      %v2821 = vrcp.pop %v2789
      %v2822 = vrcp.pop %v2790
      %v2823 = vrcp.pop %v2791
      %v2824 = vrcp.pop %v2792
      %v2825 = vrcp.pop %v2793
      %v2826 = vrcp.pop %v2794
      %v2827 = vrcp.pop %v2795
      %v2828 = vrcp.pop %v2796
      %v2829 = vrcp.pop %v2797
      %v2830 = vrcp.pop %v2798
      %v2831 = vpack.c.bf16 %v2801, %v2799
      %v2832 = vpack.c.bf16 %v2802, %v2800
      %v2833 = vpack.c.bf16 %v2805, %v2803
      %v2834 = vpack.c.bf16 %v2806, %v2804
      %v2835 = vpack.c.bf16 %v2809, %v2807
      %v2836 = vpack.c.bf16 %v2810, %v2808
      %v2837 = vpack.c.bf16 %v2813, %v2811
      %v2838 = vpack.c.bf16 %v2814, %v2812
      %v2839 = vpack.c.bf16 %v2817, %v2815
      %v2840 = vpack.c.bf16 %v2818, %v2816
      %v2841 = vpack.c.bf16 %v2821, %v2819
      %v2842 = vpack.c.bf16 %v2822, %v2820
      %v2843 = vpack.c.bf16 %v2825, %v2823
      %v2844 = vpack.c.bf16 %v2826, %v2824
      %v2845 = vpack.c.bf16 %v2829, %v2827
      %v2846 = vpack.c.bf16 %v2830, %v2828
      %v2847 = vld [vmem:[%s3] sm:$0xff]
      %v2848 = vld [vmem:[%s3 + $0x8] sm:$0xff]
      %v2849 = vld [vmem:[%s3 + $0x10] sm:$0xff]
      %v2850 = vld [vmem:[%s3 + $0x18] sm:$0xff]
      %v2851 = vld [vmem:[%s3 + $0x20] sm:$0xff]
      %v2852 = vld [vmem:[%s3 + $0x28] sm:$0xff]
      %v2853 = vld [vmem:[%s3 + $0x30] sm:$0xff]
      %v2854 = vld [vmem:[%s3 + $0x38] sm:$0xff]
      %v2855 = vld [vmem:[%s3 + $0x40] sm:$0xff]
      %v2856 = vld [vmem:[%s3 + $0x48] sm:$0xff]
      %v2857 = vld [vmem:[%s3 + $0x50] sm:$0xff]
      %v2858 = vld [vmem:[%s3 + $0x58] sm:$0xff]
      %v2859 = vld [vmem:[%s3 + $0x60] sm:$0xff]
      %v2860 = vld [vmem:[%s3 + $0x68] sm:$0xff]
      %v2861 = vld [vmem:[%s3 + $0x70] sm:$0xff]
      %v2862 = vld [vmem:[%s3 + $0x78] sm:$0xff]
      %v2863 = vld [vmem:[%s3 + $0x80] sm:$0xff]
      %v2864 = vld [vmem:[%s3 + $0x88] sm:$0xff]
      %v2865 = vld [vmem:[%s3 + $0x90] sm:$0xff]
      %v2866 = vld [vmem:[%s3 + $0x98] sm:$0xff]
      %v2867 = vld [vmem:[%s3 + $0xa0] sm:$0xff]
      %v2868 = vld [vmem:[%s3 + $0xa8] sm:$0xff]
      %v2869 = vld [vmem:[%s3 + $0xb0] sm:$0xff]
      %v2870 = vld [vmem:[%s3 + $0xb8] sm:$0xff]
      %v2871 = vld [vmem:[%s3 + $0xc0] sm:$0xff]
      %v2872 = vld [vmem:[%s3 + $0xc8] sm:$0xff]
      %v2873 = vld [vmem:[%s3 + $0xd0] sm:$0xff]
      %v2874 = vld [vmem:[%s3 + $0xd8] sm:$0xff]
      %v2875 = vld [vmem:[%s3 + $0xe0] sm:$0xff]
      %v2876 = vld [vmem:[%s3 + $0xe8] sm:$0xff]
      %v2877 = vld [vmem:[%s3 + $0xf0] sm:$0xff]
      %v2878 = vld [vmem:[%s3 + $0xf8] sm:$0xff]
      %v2879 = vld [vmem:[%s3 + $0x100] sm:$0xff]
      %v2880 = vld [vmem:[%s3 + $0x108] sm:$0xff]
      %v2881 = vld [vmem:[%s3 + $0x110] sm:$0xff]
      %v2882 = vld [vmem:[%s3 + $0x118] sm:$0xff]
      %v2883 = vld [vmem:[%s3 + $0x120] sm:$0xff]
      %v2884 = vld [vmem:[%s3 + $0x128] sm:$0xff]
      %v2885 = vld [vmem:[%s3 + $0x130] sm:$0xff]
      %v2886 = vld [vmem:[%s3 + $0x138] sm:$0xff]
      %v2887 = vld [vmem:[%s3 + $0x140] sm:$0xff]
      %v2888 = vld [vmem:[%s3 + $0x148] sm:$0xff]
      %v2889 = vld [vmem:[%s3 + $0x150] sm:$0xff]
      %v2890 = vld [vmem:[%s3 + $0x158] sm:$0xff]
      %v2891 = vld [vmem:[%s3 + $0x160] sm:$0xff]
      %v2892 = vld [vmem:[%s3 + $0x168] sm:$0xff]
      %v2893 = vld [vmem:[%s3 + $0x170] sm:$0xff]
      %v2894 = vld [vmem:[%s3 + $0x178] sm:$0xff]
      %v2895 = vld [vmem:[%s3 + $0x180] sm:$0xff]
      %v2896 = vld [vmem:[%s3 + $0x188] sm:$0xff]
      %v2897 = vld [vmem:[%s3 + $0x190] sm:$0xff]
      %v2898 = vld [vmem:[%s3 + $0x198] sm:$0xff]
      %v2899 = vld [vmem:[%s3 + $0x1a0] sm:$0xff]
      %v2900 = vld [vmem:[%s3 + $0x1a8] sm:$0xff]
      %v2901 = vld [vmem:[%s3 + $0x1b0] sm:$0xff]
      %v2902 = vld [vmem:[%s3 + $0x1b8] sm:$0xff]
      %v2903 = vld [vmem:[%s3 + $0x1c0] sm:$0xff]
      %v2904 = vld [vmem:[%s3 + $0x1c8] sm:$0xff]
      %v2905 = vld [vmem:[%s3 + $0x1d0] sm:$0xff]
      %v2906 = vld [vmem:[%s3 + $0x1d8] sm:$0xff]
      %v2907 = vld [vmem:[%s3 + $0x1e0] sm:$0xff]
      %v2908 = vld [vmem:[%s3 + $0x1e8] sm:$0xff]
      %v2909 = vld [vmem:[%s3 + $0x1f0] sm:$0xff]
      %v2910 = vld [vmem:[%s3 + $0x1f8] sm:$0xff]
      %v2911 = vld [vmem:[%s3 + $0x200] sm:$0xff]
      %v2912 = vld [vmem:[%s3 + $0x208] sm:$0xff]
      %v2913 = vld [vmem:[%s3 + $0x210] sm:$0xff]
      %v2914 = vld [vmem:[%s3 + $0x218] sm:$0xff]
      %v2915 = vld [vmem:[%s3 + $0x220] sm:$0xff]
      %v2916 = vld [vmem:[%s3 + $0x228] sm:$0xff]
      %v2917 = vld [vmem:[%s3 + $0x230] sm:$0xff]
      %v2918 = vld [vmem:[%s3 + $0x238] sm:$0xff]
      %v2919 = vld [vmem:[%s3 + $0x240] sm:$0xff]
      %v2920 = vld [vmem:[%s3 + $0x248] sm:$0xff]
      %v2921 = vld [vmem:[%s3 + $0x250] sm:$0xff]
      %v2922 = vld [vmem:[%s3 + $0x258] sm:$0xff]
      %v2923 = vld [vmem:[%s3 + $0x260] sm:$0xff]
      %v2924 = vld [vmem:[%s3 + $0x268] sm:$0xff]
      %v2925 = vld [vmem:[%s3 + $0x270] sm:$0xff]
      %v2926 = vld [vmem:[%s3 + $0x278] sm:$0xff]
      %v2927 = vld [vmem:[%s3 + $0x280] sm:$0xff]
      %v2928 = vld [vmem:[%s3 + $0x288] sm:$0xff]
      %v2929 = vld [vmem:[%s3 + $0x290] sm:$0xff]
      %v2930 = vld [vmem:[%s3 + $0x298] sm:$0xff]
      %v2931 = vld [vmem:[%s3 + $0x2a0] sm:$0xff]
      %v2932 = vld [vmem:[%s3 + $0x2a8] sm:$0xff]
      %v2933 = vld [vmem:[%s3 + $0x2b0] sm:$0xff]
      %v2934 = vld [vmem:[%s3 + $0x2b8] sm:$0xff]
      %v2935 = vld [vmem:[%s3 + $0x2c0] sm:$0xff]
      %v2936 = vld [vmem:[%s3 + $0x2c8] sm:$0xff]
      %v2937 = vld [vmem:[%s3 + $0x2d0] sm:$0xff]
      %v2938 = vld [vmem:[%s3 + $0x2d8] sm:$0xff]
      %v2939 = vld [vmem:[%s3 + $0x2e0] sm:$0xff]
      %v2940 = vld [vmem:[%s3 + $0x2e8] sm:$0xff]
      %v2941 = vld [vmem:[%s3 + $0x2f0] sm:$0xff]
      %v2942 = vld [vmem:[%s3 + $0x2f8] sm:$0xff]
      %v2943 = vld [vmem:[%s3 + $0x300] sm:$0xff]
      %v2944 = vld [vmem:[%s3 + $0x308] sm:$0xff]
      %v2945 = vld [vmem:[%s3 + $0x310] sm:$0xff]
      %v2946 = vld [vmem:[%s3 + $0x318] sm:$0xff]
      %v2947 = vld [vmem:[%s3 + $0x320] sm:$0xff]
      %v2948 = vld [vmem:[%s3 + $0x328] sm:$0xff]
      %v2949 = vld [vmem:[%s3 + $0x330] sm:$0xff]
      %v2950 = vld [vmem:[%s3 + $0x338] sm:$0xff]
      %v2951 = vld [vmem:[%s3 + $0x340] sm:$0xff]
      %v2952 = vld [vmem:[%s3 + $0x348] sm:$0xff]
      %v2953 = vld [vmem:[%s3 + $0x350] sm:$0xff]
      %v2954 = vld [vmem:[%s3 + $0x358] sm:$0xff]
      %v2955 = vld [vmem:[%s3 + $0x360] sm:$0xff]
      %v2956 = vld [vmem:[%s3 + $0x368] sm:$0xff]
      %v2957 = vld [vmem:[%s3 + $0x370] sm:$0xff]
      %v2958 = vld [vmem:[%s3 + $0x378] sm:$0xff]
      %v2959 = vld [vmem:[%s3 + $0x380] sm:$0xff]
      %v2960 = vld [vmem:[%s3 + $0x388] sm:$0xff]
      %v2961 = vld [vmem:[%s3 + $0x390] sm:$0xff]
      %v2962 = vld [vmem:[%s3 + $0x398] sm:$0xff]
      %v2963 = vld [vmem:[%s3 + $0x3a0] sm:$0xff]
      %v2964 = vld [vmem:[%s3 + $0x3a8] sm:$0xff]
      %v2965 = vld [vmem:[%s3 + $0x3b0] sm:$0xff]
      %v2966 = vld [vmem:[%s3 + $0x3b8] sm:$0xff]
      %v2967 = vld [vmem:[%s3 + $0x3c0] sm:$0xff]
      %v2968 = vld [vmem:[%s3 + $0x3c8] sm:$0xff]
      %v2969 = vld [vmem:[%s3 + $0x3d0] sm:$0xff]
      %v2970 = vld [vmem:[%s3 + $0x3d8] sm:$0xff]
      %v2971 = vld [vmem:[%s3 + $0x3e0] sm:$0xff]
      %v2972 = vld [vmem:[%s3 + $0x3e8] sm:$0xff]
      %v2973 = vld [vmem:[%s3 + $0x3f0] sm:$0xff]
      %v2974 = vld [vmem:[%s3 + $0x3f8] sm:$0xff]
      %v2975 = vld [vmem:[%s3 + $0x400] sm:$0xff]
      %v2976 = vld [vmem:[%s3 + $0x408] sm:$0xff]
      %v2977 = vld [vmem:[%s3 + $0x410] sm:$0xff]
      %v2978 = vld [vmem:[%s3 + $0x418] sm:$0xff]
      %v2979 = vld [vmem:[%s3 + $0x420] sm:$0xff]
      %v2980 = vld [vmem:[%s3 + $0x428] sm:$0xff]
      %v2981 = vld [vmem:[%s3 + $0x430] sm:$0xff]
      %v2982 = vld [vmem:[%s3 + $0x438] sm:$0xff]
      %v2983 = vld [vmem:[%s3 + $0x440] sm:$0xff]
      %v2984 = vld [vmem:[%s3 + $0x448] sm:$0xff]
      %v2985 = vld [vmem:[%s3 + $0x450] sm:$0xff]
      %v2986 = vld [vmem:[%s3 + $0x458] sm:$0xff]
      %v2987 = vld [vmem:[%s3 + $0x460] sm:$0xff]
      %v2988 = vld [vmem:[%s3 + $0x468] sm:$0xff]
      %v2989 = vld [vmem:[%s3 + $0x470] sm:$0xff]
      %v2990 = vld [vmem:[%s3 + $0x478] sm:$0xff]
      %v2991 = vld [vmem:[%s3 + $0x480] sm:$0xff]
      %v2992 = vld [vmem:[%s3 + $0x488] sm:$0xff]
      %v2993 = vld [vmem:[%s3 + $0x490] sm:$0xff]
      %v2994 = vld [vmem:[%s3 + $0x498] sm:$0xff]
      %v2995 = vld [vmem:[%s3 + $0x4a0] sm:$0xff]
      %v2996 = vld [vmem:[%s3 + $0x4a8] sm:$0xff]
      %v2997 = vld [vmem:[%s3 + $0x4b0] sm:$0xff]
      %v2998 = vld [vmem:[%s3 + $0x4b8] sm:$0xff]
      %v2999 = vld [vmem:[%s3 + $0x4c0] sm:$0xff]
      %v3000 = vld [vmem:[%s3 + $0x4c8] sm:$0xff]
      %v3001 = vld [vmem:[%s3 + $0x4d0] sm:$0xff]
      %v3002 = vld [vmem:[%s3 + $0x4d8] sm:$0xff]
      %v3003 = vld [vmem:[%s3 + $0x4e0] sm:$0xff]
      %v3004 = vld [vmem:[%s3 + $0x4e8] sm:$0xff]
      %v3005 = vld [vmem:[%s3 + $0x4f0] sm:$0xff]
      %v3006 = vld [vmem:[%s3 + $0x4f8] sm:$0xff]
      %v3007 = vld [vmem:[%s3 + $0x500] sm:$0xff]
      %v3008 = vld [vmem:[%s3 + $0x508] sm:$0xff]
      %v3009 = vld [vmem:[%s3 + $0x510] sm:$0xff]
      %v3010 = vld [vmem:[%s3 + $0x518] sm:$0xff]
      %v3011 = vld [vmem:[%s3 + $0x520] sm:$0xff]
      %v3012 = vld [vmem:[%s3 + $0x528] sm:$0xff]
      %v3013 = vld [vmem:[%s3 + $0x530] sm:$0xff]
      %v3014 = vld [vmem:[%s3 + $0x538] sm:$0xff]
      %v3015 = vld [vmem:[%s3 + $0x540] sm:$0xff]
      %v3016 = vld [vmem:[%s3 + $0x548] sm:$0xff]
      %v3017 = vld [vmem:[%s3 + $0x550] sm:$0xff]
      %v3018 = vld [vmem:[%s3 + $0x558] sm:$0xff]
      %v3019 = vld [vmem:[%s3 + $0x560] sm:$0xff]
      %v3020 = vld [vmem:[%s3 + $0x568] sm:$0xff]
      %v3021 = vld [vmem:[%s3 + $0x570] sm:$0xff]
      %v3022 = vld [vmem:[%s3 + $0x578] sm:$0xff]
      %v3023 = vld [vmem:[%s3 + $0x580] sm:$0xff]
      %v3024 = vld [vmem:[%s3 + $0x588] sm:$0xff]
      %v3025 = vld [vmem:[%s3 + $0x590] sm:$0xff]
      %v3026 = vld [vmem:[%s3 + $0x598] sm:$0xff]
      %v3027 = vld [vmem:[%s3 + $0x5a0] sm:$0xff]
      %v3028 = vld [vmem:[%s3 + $0x5a8] sm:$0xff]
      %v3029 = vld [vmem:[%s3 + $0x5b0] sm:$0xff]
      %v3030 = vld [vmem:[%s3 + $0x5b8] sm:$0xff]
      %v3031 = vld [vmem:[%s3 + $0x5c0] sm:$0xff]
      %v3032 = vld [vmem:[%s3 + $0x5c8] sm:$0xff]
      %v3033 = vld [vmem:[%s3 + $0x5d0] sm:$0xff]
      %v3034 = vld [vmem:[%s3 + $0x5d8] sm:$0xff]
      %v3035 = vld [vmem:[%s3 + $0x5e0] sm:$0xff]
      %v3036 = vld [vmem:[%s3 + $0x5e8] sm:$0xff]
      %v3037 = vld [vmem:[%s3 + $0x5f0] sm:$0xff]
      %v3038 = vld [vmem:[%s3 + $0x5f8] sm:$0xff]
      %v3039 = vld [vmem:[%s3 + $0x600] sm:$0xff]
      %v3040 = vld [vmem:[%s3 + $0x608] sm:$0xff]
      %v3041 = vld [vmem:[%s3 + $0x610] sm:$0xff]
      %v3042 = vld [vmem:[%s3 + $0x618] sm:$0xff]
      %v3043 = vld [vmem:[%s3 + $0x620] sm:$0xff]
      %v3044 = vld [vmem:[%s3 + $0x628] sm:$0xff]
      %v3045 = vld [vmem:[%s3 + $0x630] sm:$0xff]
      %v3046 = vld [vmem:[%s3 + $0x638] sm:$0xff]
      %v3047 = vld [vmem:[%s3 + $0x640] sm:$0xff]
      %v3048 = vld [vmem:[%s3 + $0x648] sm:$0xff]
      %v3049 = vld [vmem:[%s3 + $0x650] sm:$0xff]
      %v3050 = vld [vmem:[%s3 + $0x658] sm:$0xff]
      %v3051 = vld [vmem:[%s3 + $0x660] sm:$0xff]
      %v3052 = vld [vmem:[%s3 + $0x668] sm:$0xff]
      %v3053 = vld [vmem:[%s3 + $0x670] sm:$0xff]
      %v3054 = vld [vmem:[%s3 + $0x678] sm:$0xff]
      %v3055 = vld [vmem:[%s3 + $0x680] sm:$0xff]
      %v3056 = vld [vmem:[%s3 + $0x688] sm:$0xff]
      %v3057 = vld [vmem:[%s3 + $0x690] sm:$0xff]
      %v3058 = vld [vmem:[%s3 + $0x698] sm:$0xff]
      %v3059 = vld [vmem:[%s3 + $0x6a0] sm:$0xff]
      %v3060 = vld [vmem:[%s3 + $0x6a8] sm:$0xff]
      %v3061 = vld [vmem:[%s3 + $0x6b0] sm:$0xff]
      %v3062 = vld [vmem:[%s3 + $0x6b8] sm:$0xff]
      %v3063 = vld [vmem:[%s3 + $0x6c0] sm:$0xff]
      %v3064 = vld [vmem:[%s3 + $0x6c8] sm:$0xff]
      %v3065 = vld [vmem:[%s3 + $0x6d0] sm:$0xff]
      %v3066 = vld [vmem:[%s3 + $0x6d8] sm:$0xff]
      %v3067 = vld [vmem:[%s3 + $0x6e0] sm:$0xff]
      %v3068 = vld [vmem:[%s3 + $0x6e8] sm:$0xff]
      %v3069 = vld [vmem:[%s3 + $0x6f0] sm:$0xff]
      %v3070 = vld [vmem:[%s3 + $0x6f8] sm:$0xff]
      %v3071 = vld [vmem:[%s4] sm:$0xff]
      %v3072 = vld [vmem:[%s4 + $0x8] sm:$0x3f]
      %v3075 = vlaneseq
      %v3076 = vshrl.u32 %v3075, 7
      %v3077 = vsub.s32 0, %v3076
      %v3078 = vrot.slane %v3071, %v3077
      %v3079 = vlaneseq
      %v3080 = vshrl.u32 %v3079, 7
      %v3081 = vsub.s32 1, %v3080
      %v3082 = vrot.slane %v3071, %v3081
      %v3083 = vlaneseq
      %v3084 = vshrl.u32 %v3083, 7
      %v3085 = vsub.s32 2, %v3084
      %v3086 = vrot.slane %v3071, %v3085
      %v3087 = vlaneseq
      %v3088 = vshrl.u32 %v3087, 7
      %v3089 = vsub.s32 3, %v3088
      %v3090 = vrot.slane %v3071, %v3089
      %v3091 = vlaneseq
      %v3092 = vshrl.u32 %v3091, 7
      %v3093 = vsub.s32 4, %v3092
      %v3094 = vrot.slane %v3071, %v3093
      %v3095 = vlaneseq
      %v3096 = vshrl.u32 %v3095, 7
      %v3097 = vsub.s32 5, %v3096
      %v3098 = vrot.slane %v3071, %v3097
      %v3099 = vlaneseq
      %v3100 = vshrl.u32 %v3099, 7
      %v3101 = vsub.s32 6, %v3100
      %v3102 = vrot.slane %v3071, %v3101
      %v3103 = vlaneseq
      %v3104 = vshrl.u32 %v3103, 7
      %v3105 = vsub.s32 7, %v3104
      %v3106 = vrot.slane %v3071, %v3105
      %v3107 = vlaneseq
      %v3108 = vshrl.u32 %v3107, 7
      %v3109 = vsub.s32 0, %v3108
      %v3110 = vrot.slane %v3072, %v3109
      %v3111 = vlaneseq
      %v3112 = vshrl.u32 %v3111, 7
      %v3113 = vsub.s32 1, %v3112
      %v3114 = vrot.slane %v3072, %v3113
      %v3115 = vlaneseq
      %v3116 = vshrl.u32 %v3115, 7
      %v3117 = vsub.s32 2, %v3116
      %v3118 = vrot.slane %v3072, %v3117
      %v3119 = vlaneseq
      %v3120 = vshrl.u32 %v3119, 7
      %v3121 = vsub.s32 3, %v3120
      %v3122 = vrot.slane %v3072, %v3121
      %v3123 = vlaneseq
      %v3124 = vshrl.u32 %v3123, 7
      %v3125 = vsub.s32 4, %v3124
      %v3126 = vrot.slane %v3072, %v3125
      %v3127 = vlaneseq
      %v3128 = vshrl.u32 %v3127, 7
      %v3129 = vsub.s32 5, %v3128
      %v3130 = vrot.slane %v3072, %v3129
      %v3369 = vunpack.c.l.b16 %v2847
      %v3370 = vunpack.c.h.b16 %v2847
      %v3371 = vunpack.c.l.b16 %v2848
      %v3372 = vunpack.c.h.b16 %v2848
      %v3373 = vunpack.c.l.b16 %v2849
      %v3374 = vunpack.c.h.b16 %v2849
      %v3375 = vunpack.c.l.b16 %v2850
      %v3376 = vunpack.c.h.b16 %v2850
      %v3377 = vunpack.c.l.b16 %v2851
      %v3378 = vunpack.c.h.b16 %v2851
      %v3379 = vunpack.c.l.b16 %v2852
      %v3380 = vunpack.c.h.b16 %v2852
      %v3381 = vunpack.c.l.b16 %v2853
      %v3382 = vunpack.c.h.b16 %v2853
      %v3383 = vunpack.c.l.b16 %v2854
      %v3384 = vunpack.c.h.b16 %v2854
      %v3385 = vunpack.c.l.b16 %v2855
      %v3386 = vunpack.c.h.b16 %v2855
      %v3387 = vunpack.c.l.b16 %v2856
      %v3388 = vunpack.c.h.b16 %v2856
      %v3389 = vunpack.c.l.b16 %v2857
      %v3390 = vunpack.c.h.b16 %v2857
      %v3391 = vunpack.c.l.b16 %v2858
      %v3392 = vunpack.c.h.b16 %v2858
      %v3393 = vunpack.c.l.b16 %v2859
      %v3394 = vunpack.c.h.b16 %v2859
      %v3395 = vunpack.c.l.b16 %v2860
      %v3396 = vunpack.c.h.b16 %v2860
      %v3397 = vunpack.c.l.b16 %v2861
      %v3398 = vunpack.c.h.b16 %v2861
      %v3399 = vunpack.c.l.b16 %v2862
      %v3400 = vunpack.c.h.b16 %v2862
      %v3401 = vunpack.c.l.b16 %v2863
      %v3402 = vunpack.c.h.b16 %v2863
      %v3403 = vunpack.c.l.b16 %v2864
      %v3404 = vunpack.c.h.b16 %v2864
      %v3405 = vunpack.c.l.b16 %v2865
      %v3406 = vunpack.c.h.b16 %v2865
      %v3407 = vunpack.c.l.b16 %v2866
      %v3408 = vunpack.c.h.b16 %v2866
      %v3409 = vunpack.c.l.b16 %v2867
      %v3410 = vunpack.c.h.b16 %v2867
      %v3411 = vunpack.c.l.b16 %v2868
      %v3412 = vunpack.c.h.b16 %v2868
      %v3413 = vunpack.c.l.b16 %v2869
      %v3414 = vunpack.c.h.b16 %v2869
      %v3415 = vunpack.c.l.b16 %v2870
      %v3416 = vunpack.c.h.b16 %v2870
      %v3417 = vunpack.c.l.b16 %v2871
      %v3418 = vunpack.c.h.b16 %v2871
      %v3419 = vunpack.c.l.b16 %v2872
      %v3420 = vunpack.c.h.b16 %v2872
      %v3421 = vunpack.c.l.b16 %v2873
      %v3422 = vunpack.c.h.b16 %v2873
      %v3423 = vunpack.c.l.b16 %v2874
      %v3424 = vunpack.c.h.b16 %v2874
      %v3425 = vunpack.c.l.b16 %v2875
      %v3426 = vunpack.c.h.b16 %v2875
      %v3427 = vunpack.c.l.b16 %v2876
      %v3428 = vunpack.c.h.b16 %v2876
      %v3429 = vunpack.c.l.b16 %v2877
      %v3430 = vunpack.c.h.b16 %v2877
      %v3431 = vunpack.c.l.b16 %v2878
      %v3432 = vunpack.c.h.b16 %v2878
      %v3433 = vunpack.c.l.b16 %v2879
      %v3434 = vunpack.c.h.b16 %v2879
      %v3435 = vunpack.c.l.b16 %v2880
      %v3436 = vunpack.c.h.b16 %v2880
      %v3437 = vunpack.c.l.b16 %v2881
      %v3438 = vunpack.c.h.b16 %v2881
      %v3439 = vunpack.c.l.b16 %v2882
      %v3440 = vunpack.c.h.b16 %v2882
      %v3441 = vunpack.c.l.b16 %v2883
      %v3442 = vunpack.c.h.b16 %v2883
      %v3443 = vunpack.c.l.b16 %v2884
      %v3444 = vunpack.c.h.b16 %v2884
      %v3445 = vunpack.c.l.b16 %v2885
      %v3446 = vunpack.c.h.b16 %v2885
      %v3447 = vunpack.c.l.b16 %v2886
      %v3448 = vunpack.c.h.b16 %v2886
      %v3449 = vunpack.c.l.b16 %v2887
      %v3450 = vunpack.c.h.b16 %v2887
      %v3451 = vunpack.c.l.b16 %v2888
      %v3452 = vunpack.c.h.b16 %v2888
      %v3453 = vunpack.c.l.b16 %v2889
      %v3454 = vunpack.c.h.b16 %v2889
      %v3455 = vunpack.c.l.b16 %v2890
      %v3456 = vunpack.c.h.b16 %v2890
      %v3457 = vunpack.c.l.b16 %v2891
      %v3458 = vunpack.c.h.b16 %v2891
      %v3459 = vunpack.c.l.b16 %v2892
      %v3460 = vunpack.c.h.b16 %v2892
      %v3461 = vunpack.c.l.b16 %v2893
      %v3462 = vunpack.c.h.b16 %v2893
      %v3463 = vunpack.c.l.b16 %v2894
      %v3464 = vunpack.c.h.b16 %v2894
      %v3465 = vunpack.c.l.b16 %v2895
      %v3466 = vunpack.c.h.b16 %v2895
      %v3467 = vunpack.c.l.b16 %v2896
      %v3468 = vunpack.c.h.b16 %v2896
      %v3469 = vunpack.c.l.b16 %v2897
      %v3470 = vunpack.c.h.b16 %v2897
      %v3471 = vunpack.c.l.b16 %v2898
      %v3472 = vunpack.c.h.b16 %v2898
      %v3473 = vunpack.c.l.b16 %v2899
      %v3474 = vunpack.c.h.b16 %v2899
      %v3475 = vunpack.c.l.b16 %v2900
      %v3476 = vunpack.c.h.b16 %v2900
      %v3477 = vunpack.c.l.b16 %v2901
      %v3478 = vunpack.c.h.b16 %v2901
      %v3479 = vunpack.c.l.b16 %v2902
      %v3480 = vunpack.c.h.b16 %v2902
      %v3481 = vunpack.c.l.b16 %v2903
      %v3482 = vunpack.c.h.b16 %v2903
      %v3483 = vunpack.c.l.b16 %v2904
      %v3484 = vunpack.c.h.b16 %v2904
      %v3485 = vunpack.c.l.b16 %v2905
      %v3486 = vunpack.c.h.b16 %v2905
      %v3487 = vunpack.c.l.b16 %v2906
      %v3488 = vunpack.c.h.b16 %v2906
      %v3489 = vunpack.c.l.b16 %v2907
      %v3490 = vunpack.c.h.b16 %v2907
      %v3491 = vunpack.c.l.b16 %v2908
      %v3492 = vunpack.c.h.b16 %v2908
      %v3493 = vunpack.c.l.b16 %v2909
      %v3494 = vunpack.c.h.b16 %v2909
      %v3495 = vunpack.c.l.b16 %v2910
      %v3496 = vunpack.c.h.b16 %v2910
      %v3497 = vunpack.c.l.b16 %v2911
      %v3498 = vunpack.c.h.b16 %v2911
      %v3499 = vunpack.c.l.b16 %v2912
      %v3500 = vunpack.c.h.b16 %v2912
      %v3501 = vunpack.c.l.b16 %v2913
      %v3502 = vunpack.c.h.b16 %v2913
      %v3503 = vunpack.c.l.b16 %v2914
      %v3504 = vunpack.c.h.b16 %v2914
      %v3505 = vunpack.c.l.b16 %v2915
      %v3506 = vunpack.c.h.b16 %v2915
      %v3507 = vunpack.c.l.b16 %v2916
      %v3508 = vunpack.c.h.b16 %v2916
      %v3509 = vunpack.c.l.b16 %v2917
      %v3510 = vunpack.c.h.b16 %v2917
      %v3511 = vunpack.c.l.b16 %v2918
      %v3512 = vunpack.c.h.b16 %v2918
      %v3513 = vunpack.c.l.b16 %v2919
      %v3514 = vunpack.c.h.b16 %v2919
      %v3515 = vunpack.c.l.b16 %v2920
      %v3516 = vunpack.c.h.b16 %v2920
      %v3517 = vunpack.c.l.b16 %v2921
      %v3518 = vunpack.c.h.b16 %v2921
      %v3519 = vunpack.c.l.b16 %v2922
      %v3520 = vunpack.c.h.b16 %v2922
      %v3521 = vunpack.c.l.b16 %v2923
      %v3522 = vunpack.c.h.b16 %v2923
      %v3523 = vunpack.c.l.b16 %v2924
      %v3524 = vunpack.c.h.b16 %v2924
      %v3525 = vunpack.c.l.b16 %v2925
      %v3526 = vunpack.c.h.b16 %v2925
      %v3527 = vunpack.c.l.b16 %v2926
      %v3528 = vunpack.c.h.b16 %v2926
      %v3529 = vunpack.c.l.b16 %v2927
      %v3530 = vunpack.c.h.b16 %v2927
      %v3531 = vunpack.c.l.b16 %v2928
      %v3532 = vunpack.c.h.b16 %v2928
      %v3533 = vunpack.c.l.b16 %v2929
      %v3534 = vunpack.c.h.b16 %v2929
      %v3535 = vunpack.c.l.b16 %v2930
      %v3536 = vunpack.c.h.b16 %v2930
      %v3537 = vunpack.c.l.b16 %v2931
      %v3538 = vunpack.c.h.b16 %v2931
      %v3539 = vunpack.c.l.b16 %v2932
      %v3540 = vunpack.c.h.b16 %v2932
      %v3541 = vunpack.c.l.b16 %v2933
      %v3542 = vunpack.c.h.b16 %v2933
      %v3543 = vunpack.c.l.b16 %v2934
      %v3544 = vunpack.c.h.b16 %v2934
      %v3545 = vunpack.c.l.b16 %v2935
      %v3546 = vunpack.c.h.b16 %v2935
      %v3547 = vunpack.c.l.b16 %v2936
      %v3548 = vunpack.c.h.b16 %v2936
      %v3549 = vunpack.c.l.b16 %v2937
      %v3550 = vunpack.c.h.b16 %v2937
      %v3551 = vunpack.c.l.b16 %v2938
      %v3552 = vunpack.c.h.b16 %v2938
      %v3553 = vunpack.c.l.b16 %v2939
      %v3554 = vunpack.c.h.b16 %v2939
      %v3555 = vunpack.c.l.b16 %v2940
      %v3556 = vunpack.c.h.b16 %v2940
      %v3557 = vunpack.c.l.b16 %v2941
      %v3558 = vunpack.c.h.b16 %v2941
      %v3559 = vunpack.c.l.b16 %v2942
      %v3560 = vunpack.c.h.b16 %v2942
      %v3561 = vunpack.c.l.b16 %v2943
      %v3562 = vunpack.c.h.b16 %v2943
      %v3563 = vunpack.c.l.b16 %v2944
      %v3564 = vunpack.c.h.b16 %v2944
      %v3565 = vunpack.c.l.b16 %v2945
      %v3566 = vunpack.c.h.b16 %v2945
      %v3567 = vunpack.c.l.b16 %v2946
      %v3568 = vunpack.c.h.b16 %v2946
      %v3569 = vunpack.c.l.b16 %v2947
      %v3570 = vunpack.c.h.b16 %v2947
      %v3571 = vunpack.c.l.b16 %v2948
      %v3572 = vunpack.c.h.b16 %v2948
      %v3573 = vunpack.c.l.b16 %v2949
      %v3574 = vunpack.c.h.b16 %v2949
      %v3575 = vunpack.c.l.b16 %v2950
      %v3576 = vunpack.c.h.b16 %v2950
      %v3577 = vunpack.c.l.b16 %v2951
      %v3578 = vunpack.c.h.b16 %v2951
      %v3579 = vunpack.c.l.b16 %v2952
      %v3580 = vunpack.c.h.b16 %v2952
      %v3581 = vunpack.c.l.b16 %v2953
      %v3582 = vunpack.c.h.b16 %v2953
      %v3583 = vunpack.c.l.b16 %v2954
      %v3584 = vunpack.c.h.b16 %v2954
      %v3585 = vunpack.c.l.b16 %v2955
      %v3586 = vunpack.c.h.b16 %v2955
      %v3587 = vunpack.c.l.b16 %v2956
      %v3588 = vunpack.c.h.b16 %v2956
      %v3589 = vunpack.c.l.b16 %v2957
      %v3590 = vunpack.c.h.b16 %v2957
      %v3591 = vunpack.c.l.b16 %v2958
      %v3592 = vunpack.c.h.b16 %v2958
      %v3593 = vunpack.c.l.b16 %v2959
      %v3594 = vunpack.c.h.b16 %v2959
      %v3595 = vunpack.c.l.b16 %v2960
      %v3596 = vunpack.c.h.b16 %v2960
      %v3597 = vunpack.c.l.b16 %v2961
      %v3598 = vunpack.c.h.b16 %v2961
      %v3599 = vunpack.c.l.b16 %v2962
      %v3600 = vunpack.c.h.b16 %v2962
      %v3601 = vunpack.c.l.b16 %v2963
      %v3602 = vunpack.c.h.b16 %v2963
      %v3603 = vunpack.c.l.b16 %v2964
      %v3604 = vunpack.c.h.b16 %v2964
      %v3605 = vunpack.c.l.b16 %v2965
      %v3606 = vunpack.c.h.b16 %v2965
      %v3607 = vunpack.c.l.b16 %v2966
      %v3608 = vunpack.c.h.b16 %v2966
      %v3609 = vunpack.c.l.b16 %v2967
      %v3610 = vunpack.c.h.b16 %v2967
      %v3611 = vunpack.c.l.b16 %v2968
      %v3612 = vunpack.c.h.b16 %v2968
      %v3613 = vunpack.c.l.b16 %v2969
      %v3614 = vunpack.c.h.b16 %v2969
      %v3615 = vunpack.c.l.b16 %v2970
      %v3616 = vunpack.c.h.b16 %v2970
      %v3617 = vunpack.c.l.b16 %v2971
      %v3618 = vunpack.c.h.b16 %v2971
      %v3619 = vunpack.c.l.b16 %v2972
      %v3620 = vunpack.c.h.b16 %v2972
      %v3621 = vunpack.c.l.b16 %v2973
      %v3622 = vunpack.c.h.b16 %v2973
      %v3623 = vunpack.c.l.b16 %v2974
      %v3624 = vunpack.c.h.b16 %v2974
      %v3625 = vunpack.c.l.b16 %v2975
      %v3626 = vunpack.c.h.b16 %v2975
      %v3627 = vunpack.c.l.b16 %v2976
      %v3628 = vunpack.c.h.b16 %v2976
      %v3629 = vunpack.c.l.b16 %v2977
      %v3630 = vunpack.c.h.b16 %v2977
      %v3631 = vunpack.c.l.b16 %v2978
      %v3632 = vunpack.c.h.b16 %v2978
      %v3633 = vunpack.c.l.b16 %v2979
      %v3634 = vunpack.c.h.b16 %v2979
      %v3635 = vunpack.c.l.b16 %v2980
      %v3636 = vunpack.c.h.b16 %v2980
      %v3637 = vunpack.c.l.b16 %v2981
      %v3638 = vunpack.c.h.b16 %v2981
      %v3639 = vunpack.c.l.b16 %v2982
      %v3640 = vunpack.c.h.b16 %v2982
      %v3641 = vunpack.c.l.b16 %v2983
      %v3642 = vunpack.c.h.b16 %v2983
      %v3643 = vunpack.c.l.b16 %v2984
      %v3644 = vunpack.c.h.b16 %v2984
      %v3645 = vunpack.c.l.b16 %v2985
      %v3646 = vunpack.c.h.b16 %v2985
      %v3647 = vunpack.c.l.b16 %v2986
      %v3648 = vunpack.c.h.b16 %v2986
      %v3649 = vunpack.c.l.b16 %v2987
      %v3650 = vunpack.c.h.b16 %v2987
      %v3651 = vunpack.c.l.b16 %v2988
      %v3652 = vunpack.c.h.b16 %v2988
      %v3653 = vunpack.c.l.b16 %v2989
      %v3654 = vunpack.c.h.b16 %v2989
      %v3655 = vunpack.c.l.b16 %v2990
      %v3656 = vunpack.c.h.b16 %v2990
      %v3657 = vunpack.c.l.b16 %v2991
      %v3658 = vunpack.c.h.b16 %v2991
      %v3659 = vunpack.c.l.b16 %v2992
      %v3660 = vunpack.c.h.b16 %v2992
      %v3661 = vunpack.c.l.b16 %v2993
      %v3662 = vunpack.c.h.b16 %v2993
      %v3663 = vunpack.c.l.b16 %v2994
      %v3664 = vunpack.c.h.b16 %v2994
      %v3665 = vunpack.c.l.b16 %v2995
      %v3666 = vunpack.c.h.b16 %v2995
      %v3667 = vunpack.c.l.b16 %v2996
      %v3668 = vunpack.c.h.b16 %v2996
      %v3669 = vunpack.c.l.b16 %v2997
      %v3670 = vunpack.c.h.b16 %v2997
      %v3671 = vunpack.c.l.b16 %v2998
      %v3672 = vunpack.c.h.b16 %v2998
      %v3673 = vunpack.c.l.b16 %v2999
      %v3674 = vunpack.c.h.b16 %v2999
      %v3675 = vunpack.c.l.b16 %v3000
      %v3676 = vunpack.c.h.b16 %v3000
      %v3677 = vunpack.c.l.b16 %v3001
      %v3678 = vunpack.c.h.b16 %v3001
      %v3679 = vunpack.c.l.b16 %v3002
      %v3680 = vunpack.c.h.b16 %v3002
      %v3681 = vunpack.c.l.b16 %v3003
      %v3682 = vunpack.c.h.b16 %v3003
      %v3683 = vunpack.c.l.b16 %v3004
      %v3684 = vunpack.c.h.b16 %v3004
      %v3685 = vunpack.c.l.b16 %v3005
      %v3686 = vunpack.c.h.b16 %v3005
      %v3687 = vunpack.c.l.b16 %v3006
      %v3688 = vunpack.c.h.b16 %v3006
      %v3689 = vunpack.c.l.b16 %v3007
      %v3690 = vunpack.c.h.b16 %v3007
      %v3691 = vunpack.c.l.b16 %v3008
      %v3692 = vunpack.c.h.b16 %v3008
      %v3693 = vunpack.c.l.b16 %v3009
      %v3694 = vunpack.c.h.b16 %v3009
      %v3695 = vunpack.c.l.b16 %v3010
      %v3696 = vunpack.c.h.b16 %v3010
      %v3697 = vunpack.c.l.b16 %v3011
      %v3698 = vunpack.c.h.b16 %v3011
      %v3699 = vunpack.c.l.b16 %v3012
      %v3700 = vunpack.c.h.b16 %v3012
      %v3701 = vunpack.c.l.b16 %v3013
      %v3702 = vunpack.c.h.b16 %v3013
      %v3703 = vunpack.c.l.b16 %v3014
      %v3704 = vunpack.c.h.b16 %v3014
      %v3705 = vunpack.c.l.b16 %v3015
      %v3706 = vunpack.c.h.b16 %v3015
      %v3707 = vunpack.c.l.b16 %v3016
      %v3708 = vunpack.c.h.b16 %v3016
      %v3709 = vunpack.c.l.b16 %v3017
      %v3710 = vunpack.c.h.b16 %v3017
      %v3711 = vunpack.c.l.b16 %v3018
      %v3712 = vunpack.c.h.b16 %v3018
      %v3713 = vunpack.c.l.b16 %v3019
      %v3714 = vunpack.c.h.b16 %v3019
      %v3715 = vunpack.c.l.b16 %v3020
      %v3716 = vunpack.c.h.b16 %v3020
      %v3717 = vunpack.c.l.b16 %v3021
      %v3718 = vunpack.c.h.b16 %v3021
      %v3719 = vunpack.c.l.b16 %v3022
      %v3720 = vunpack.c.h.b16 %v3022
      %v3721 = vunpack.c.l.b16 %v3023
      %v3722 = vunpack.c.h.b16 %v3023
      %v3723 = vunpack.c.l.b16 %v3024
      %v3724 = vunpack.c.h.b16 %v3024
      %v3725 = vunpack.c.l.b16 %v3025
      %v3726 = vunpack.c.h.b16 %v3025
      %v3727 = vunpack.c.l.b16 %v3026
      %v3728 = vunpack.c.h.b16 %v3026
      %v3729 = vunpack.c.l.b16 %v3027
      %v3730 = vunpack.c.h.b16 %v3027
      %v3731 = vunpack.c.l.b16 %v3028
      %v3732 = vunpack.c.h.b16 %v3028
      %v3733 = vunpack.c.l.b16 %v3029
      %v3734 = vunpack.c.h.b16 %v3029
      %v3735 = vunpack.c.l.b16 %v3030
      %v3736 = vunpack.c.h.b16 %v3030
      %v3737 = vunpack.c.l.b16 %v3031
      %v3738 = vunpack.c.h.b16 %v3031
      %v3739 = vunpack.c.l.b16 %v3032
      %v3740 = vunpack.c.h.b16 %v3032
      %v3741 = vunpack.c.l.b16 %v3033
      %v3742 = vunpack.c.h.b16 %v3033
      %v3743 = vunpack.c.l.b16 %v3034
      %v3744 = vunpack.c.h.b16 %v3034
      %v3745 = vunpack.c.l.b16 %v3035
      %v3746 = vunpack.c.h.b16 %v3035
      %v3747 = vunpack.c.l.b16 %v3036
      %v3748 = vunpack.c.h.b16 %v3036
      %v3749 = vunpack.c.l.b16 %v3037
      %v3750 = vunpack.c.h.b16 %v3037
      %v3751 = vunpack.c.l.b16 %v3038
      %v3752 = vunpack.c.h.b16 %v3038
      %v3753 = vunpack.c.l.b16 %v3039
      %v3754 = vunpack.c.h.b16 %v3039
      %v3755 = vunpack.c.l.b16 %v3040
      %v3756 = vunpack.c.h.b16 %v3040
      %v3757 = vunpack.c.l.b16 %v3041
      %v3758 = vunpack.c.h.b16 %v3041
      %v3759 = vunpack.c.l.b16 %v3042
      %v3760 = vunpack.c.h.b16 %v3042
      %v3761 = vunpack.c.l.b16 %v3043
      %v3762 = vunpack.c.h.b16 %v3043
      %v3763 = vunpack.c.l.b16 %v3044
      %v3764 = vunpack.c.h.b16 %v3044
      %v3765 = vunpack.c.l.b16 %v3045
      %v3766 = vunpack.c.h.b16 %v3045
      %v3767 = vunpack.c.l.b16 %v3046
      %v3768 = vunpack.c.h.b16 %v3046
      %v3769 = vunpack.c.l.b16 %v3047
      %v3770 = vunpack.c.h.b16 %v3047
      %v3771 = vunpack.c.l.b16 %v3048
      %v3772 = vunpack.c.h.b16 %v3048
      %v3773 = vunpack.c.l.b16 %v3049
      %v3774 = vunpack.c.h.b16 %v3049
      %v3775 = vunpack.c.l.b16 %v3050
      %v3776 = vunpack.c.h.b16 %v3050
      %v3777 = vunpack.c.l.b16 %v3051
      %v3778 = vunpack.c.h.b16 %v3051
      %v3779 = vunpack.c.l.b16 %v3052
      %v3780 = vunpack.c.h.b16 %v3052
      %v3781 = vunpack.c.l.b16 %v3053
      %v3782 = vunpack.c.h.b16 %v3053
      %v3783 = vunpack.c.l.b16 %v3054
      %v3784 = vunpack.c.h.b16 %v3054
      %v3785 = vunpack.c.l.b16 %v3055
      %v3786 = vunpack.c.h.b16 %v3055
      %v3787 = vunpack.c.l.b16 %v3056
      %v3788 = vunpack.c.h.b16 %v3056
      %v3789 = vunpack.c.l.b16 %v3057
      %v3790 = vunpack.c.h.b16 %v3057
      %v3791 = vunpack.c.l.b16 %v3058
      %v3792 = vunpack.c.h.b16 %v3058
      %v3793 = vunpack.c.l.b16 %v3059
      %v3794 = vunpack.c.h.b16 %v3059
      %v3795 = vunpack.c.l.b16 %v3060
      %v3796 = vunpack.c.h.b16 %v3060
      %v3797 = vunpack.c.l.b16 %v3061
      %v3798 = vunpack.c.h.b16 %v3061
      %v3799 = vunpack.c.l.b16 %v3062
      %v3800 = vunpack.c.h.b16 %v3062
      %v3801 = vunpack.c.l.b16 %v3063
      %v3802 = vunpack.c.h.b16 %v3063
      %v3803 = vunpack.c.l.b16 %v3064
      %v3804 = vunpack.c.h.b16 %v3064
      %v3805 = vunpack.c.l.b16 %v3065
      %v3806 = vunpack.c.h.b16 %v3065
      %v3807 = vunpack.c.l.b16 %v3066
      %v3808 = vunpack.c.h.b16 %v3066
      %v3809 = vunpack.c.l.b16 %v3067
      %v3810 = vunpack.c.h.b16 %v3067
      %v3811 = vunpack.c.l.b16 %v3068
      %v3812 = vunpack.c.h.b16 %v3068
      %v3813 = vunpack.c.l.b16 %v3069
      %v3814 = vunpack.c.h.b16 %v3069
      %v3815 = vunpack.c.l.b16 %v3070
      %v3816 = vunpack.c.h.b16 %v3070
      %v3817 = vpack.c.b16 %v3383, %v3369
      %v3818 = vpack.c.b16 %v3384, %v3370
      %v3819 = vpack.c.b16 %v3385, %v3371
      %v3820 = vpack.c.b16 %v3386, %v3372
      %v3821 = vpack.c.b16 %v3387, %v3373
      %v3822 = vpack.c.b16 %v3388, %v3374
      %v3823 = vpack.c.b16 %v3389, %v3375
      %v3824 = vpack.c.b16 %v3390, %v3376
      %v3825 = vpack.c.b16 %v3391, %v3377
      %v3826 = vpack.c.b16 %v3392, %v3378
      %v3827 = vpack.c.b16 %v3393, %v3379
      %v3828 = vpack.c.b16 %v3394, %v3380
      %v3829 = vpack.c.b16 %v3395, %v3381
      %v3830 = vpack.c.b16 %v3396, %v3382
      %v3831 = vpack.c.b16 %v3411, %v3397
      %v3832 = vpack.c.b16 %v3412, %v3398
      %v3833 = vpack.c.b16 %v3413, %v3399
      %v3834 = vpack.c.b16 %v3414, %v3400
      %v3835 = vpack.c.b16 %v3415, %v3401
      %v3836 = vpack.c.b16 %v3416, %v3402
      %v3837 = vpack.c.b16 %v3417, %v3403
      %v3838 = vpack.c.b16 %v3418, %v3404
      %v3839 = vpack.c.b16 %v3419, %v3405
      %v3840 = vpack.c.b16 %v3420, %v3406
      %v3841 = vpack.c.b16 %v3421, %v3407
      %v3842 = vpack.c.b16 %v3422, %v3408
      %v3843 = vpack.c.b16 %v3423, %v3409
      %v3844 = vpack.c.b16 %v3424, %v3410
      %v3845 = vpack.c.b16 %v3439, %v3425
      %v3846 = vpack.c.b16 %v3440, %v3426
      %v3847 = vpack.c.b16 %v3441, %v3427
      %v3848 = vpack.c.b16 %v3442, %v3428
      %v3849 = vpack.c.b16 %v3443, %v3429
      %v3850 = vpack.c.b16 %v3444, %v3430
      %v3851 = vpack.c.b16 %v3445, %v3431
      %v3852 = vpack.c.b16 %v3446, %v3432
      %v3853 = vpack.c.b16 %v3447, %v3433
      %v3854 = vpack.c.b16 %v3448, %v3434
      %v3855 = vpack.c.b16 %v3449, %v3435
      %v3856 = vpack.c.b16 %v3450, %v3436
      %v3857 = vpack.c.b16 %v3451, %v3437
      %v3858 = vpack.c.b16 %v3452, %v3438
      %v3859 = vpack.c.b16 %v3467, %v3453
      %v3860 = vpack.c.b16 %v3468, %v3454
      %v3861 = vpack.c.b16 %v3469, %v3455
      %v3862 = vpack.c.b16 %v3470, %v3456
      %v3863 = vpack.c.b16 %v3471, %v3457
      %v3864 = vpack.c.b16 %v3472, %v3458
      %v3865 = vpack.c.b16 %v3473, %v3459
      %v3866 = vpack.c.b16 %v3474, %v3460
      %v3867 = vpack.c.b16 %v3475, %v3461
      %v3868 = vpack.c.b16 %v3476, %v3462
      %v3869 = vpack.c.b16 %v3477, %v3463
      %v3870 = vpack.c.b16 %v3478, %v3464
      %v3871 = vpack.c.b16 %v3479, %v3465
      %v3872 = vpack.c.b16 %v3480, %v3466
      %v3873 = vpack.c.b16 %v3495, %v3481
      %v3874 = vpack.c.b16 %v3496, %v3482
      %v3875 = vpack.c.b16 %v3497, %v3483
      %v3876 = vpack.c.b16 %v3498, %v3484
      %v3877 = vpack.c.b16 %v3499, %v3485
      %v3878 = vpack.c.b16 %v3500, %v3486
      %v3879 = vpack.c.b16 %v3501, %v3487
      %v3880 = vpack.c.b16 %v3502, %v3488
      %v3881 = vpack.c.b16 %v3503, %v3489
      %v3882 = vpack.c.b16 %v3504, %v3490
      %v3883 = vpack.c.b16 %v3505, %v3491
      %v3884 = vpack.c.b16 %v3506, %v3492
      %v3885 = vpack.c.b16 %v3507, %v3493
      %v3886 = vpack.c.b16 %v3508, %v3494
      %v3887 = vpack.c.b16 %v3523, %v3509
      %v3888 = vpack.c.b16 %v3524, %v3510
      %v3889 = vpack.c.b16 %v3525, %v3511
      %v3890 = vpack.c.b16 %v3526, %v3512
      %v3891 = vpack.c.b16 %v3527, %v3513
      %v3892 = vpack.c.b16 %v3528, %v3514
      %v3893 = vpack.c.b16 %v3529, %v3515
      %v3894 = vpack.c.b16 %v3530, %v3516
      %v3895 = vpack.c.b16 %v3531, %v3517
      %v3896 = vpack.c.b16 %v3532, %v3518
      %v3897 = vpack.c.b16 %v3533, %v3519
      %v3898 = vpack.c.b16 %v3534, %v3520
      %v3899 = vpack.c.b16 %v3535, %v3521
      %v3900 = vpack.c.b16 %v3536, %v3522
      %v3901 = vpack.c.b16 %v3551, %v3537
      %v3902 = vpack.c.b16 %v3552, %v3538
      %v3903 = vpack.c.b16 %v3553, %v3539
      %v3904 = vpack.c.b16 %v3554, %v3540
      %v3905 = vpack.c.b16 %v3555, %v3541
      %v3906 = vpack.c.b16 %v3556, %v3542
      %v3907 = vpack.c.b16 %v3557, %v3543
      %v3908 = vpack.c.b16 %v3558, %v3544
      %v3909 = vpack.c.b16 %v3559, %v3545
      %v3910 = vpack.c.b16 %v3560, %v3546
      %v3911 = vpack.c.b16 %v3561, %v3547
      %v3912 = vpack.c.b16 %v3562, %v3548
      %v3913 = vpack.c.b16 %v3563, %v3549
      %v3914 = vpack.c.b16 %v3564, %v3550
      %v3915 = vpack.c.b16 %v3579, %v3565
      %v3916 = vpack.c.b16 %v3580, %v3566
      %v3917 = vpack.c.b16 %v3581, %v3567
      %v3918 = vpack.c.b16 %v3582, %v3568
      %v3919 = vpack.c.b16 %v3583, %v3569
      %v3920 = vpack.c.b16 %v3584, %v3570
      %v3921 = vpack.c.b16 %v3585, %v3571
      %v3922 = vpack.c.b16 %v3586, %v3572
      %v3923 = vpack.c.b16 %v3587, %v3573
      %v3924 = vpack.c.b16 %v3588, %v3574
      %v3925 = vpack.c.b16 %v3589, %v3575
      %v3926 = vpack.c.b16 %v3590, %v3576
      %v3927 = vpack.c.b16 %v3591, %v3577
      %v3928 = vpack.c.b16 %v3592, %v3578
      %v3929 = vpack.c.b16 %v3607, %v3593
      %v3930 = vpack.c.b16 %v3608, %v3594
      %v3931 = vpack.c.b16 %v3609, %v3595
      %v3932 = vpack.c.b16 %v3610, %v3596
      %v3933 = vpack.c.b16 %v3611, %v3597
      %v3934 = vpack.c.b16 %v3612, %v3598
      %v3935 = vpack.c.b16 %v3613, %v3599
      %v3936 = vpack.c.b16 %v3614, %v3600
      %v3937 = vpack.c.b16 %v3615, %v3601
      %v3938 = vpack.c.b16 %v3616, %v3602
      %v3939 = vpack.c.b16 %v3617, %v3603
      %v3940 = vpack.c.b16 %v3618, %v3604
      %v3941 = vpack.c.b16 %v3619, %v3605
      %v3942 = vpack.c.b16 %v3620, %v3606
      %v3943 = vpack.c.b16 %v3635, %v3621
      %v3944 = vpack.c.b16 %v3636, %v3622
      %v3945 = vpack.c.b16 %v3637, %v3623
      %v3946 = vpack.c.b16 %v3638, %v3624
      %v3947 = vpack.c.b16 %v3639, %v3625
      %v3948 = vpack.c.b16 %v3640, %v3626
      %v3949 = vpack.c.b16 %v3641, %v3627
      %v3950 = vpack.c.b16 %v3642, %v3628
      %v3951 = vpack.c.b16 %v3643, %v3629
      %v3952 = vpack.c.b16 %v3644, %v3630
      %v3953 = vpack.c.b16 %v3645, %v3631
      %v3954 = vpack.c.b16 %v3646, %v3632
      %v3955 = vpack.c.b16 %v3647, %v3633
      %v3956 = vpack.c.b16 %v3648, %v3634
      %v3957 = vpack.c.b16 %v3663, %v3649
      %v3958 = vpack.c.b16 %v3664, %v3650
      %v3959 = vpack.c.b16 %v3665, %v3651
      %v3960 = vpack.c.b16 %v3666, %v3652
      %v3961 = vpack.c.b16 %v3667, %v3653
      %v3962 = vpack.c.b16 %v3668, %v3654
      %v3963 = vpack.c.b16 %v3669, %v3655
      %v3964 = vpack.c.b16 %v3670, %v3656
      %v3965 = vpack.c.b16 %v3671, %v3657
      %v3966 = vpack.c.b16 %v3672, %v3658
      %v3967 = vpack.c.b16 %v3673, %v3659
      %v3968 = vpack.c.b16 %v3674, %v3660
      %v3969 = vpack.c.b16 %v3675, %v3661
      %v3970 = vpack.c.b16 %v3676, %v3662
      %v3971 = vpack.c.b16 %v3691, %v3677
      %v3972 = vpack.c.b16 %v3692, %v3678
      %v3973 = vpack.c.b16 %v3693, %v3679
      %v3974 = vpack.c.b16 %v3694, %v3680
      %v3975 = vpack.c.b16 %v3695, %v3681
      %v3976 = vpack.c.b16 %v3696, %v3682
      %v3977 = vpack.c.b16 %v3697, %v3683
      %v3978 = vpack.c.b16 %v3698, %v3684
      %v3979 = vpack.c.b16 %v3699, %v3685
      %v3980 = vpack.c.b16 %v3700, %v3686
      %v3981 = vpack.c.b16 %v3701, %v3687
      %v3982 = vpack.c.b16 %v3702, %v3688
      %v3983 = vpack.c.b16 %v3703, %v3689
      %v3984 = vpack.c.b16 %v3704, %v3690
      %v3985 = vpack.c.b16 %v3719, %v3705
      %v3986 = vpack.c.b16 %v3720, %v3706
      %v3987 = vpack.c.b16 %v3721, %v3707
      %v3988 = vpack.c.b16 %v3722, %v3708
      %v3989 = vpack.c.b16 %v3723, %v3709
      %v3990 = vpack.c.b16 %v3724, %v3710
      %v3991 = vpack.c.b16 %v3725, %v3711
      %v3992 = vpack.c.b16 %v3726, %v3712
      %v3993 = vpack.c.b16 %v3727, %v3713
      %v3994 = vpack.c.b16 %v3728, %v3714
      %v3995 = vpack.c.b16 %v3729, %v3715
      %v3996 = vpack.c.b16 %v3730, %v3716
      %v3997 = vpack.c.b16 %v3731, %v3717
      %v3998 = vpack.c.b16 %v3732, %v3718
      %v3999 = vpack.c.b16 %v3747, %v3733
      %v4000 = vpack.c.b16 %v3748, %v3734
      %v4001 = vpack.c.b16 %v3749, %v3735
      %v4002 = vpack.c.b16 %v3750, %v3736
      %v4003 = vpack.c.b16 %v3751, %v3737
      %v4004 = vpack.c.b16 %v3752, %v3738
      %v4005 = vpack.c.b16 %v3753, %v3739
      %v4006 = vpack.c.b16 %v3754, %v3740
      %v4007 = vpack.c.b16 %v3755, %v3741
      %v4008 = vpack.c.b16 %v3756, %v3742
      %v4009 = vpack.c.b16 %v3757, %v3743
      %v4010 = vpack.c.b16 %v3758, %v3744
      %v4011 = vpack.c.b16 %v3759, %v3745
      %v4012 = vpack.c.b16 %v3760, %v3746
      %v4013 = vpack.c.b16 %v3775, %v3761
      %v4014 = vpack.c.b16 %v3776, %v3762
      %v4015 = vpack.c.b16 %v3777, %v3763
      %v4016 = vpack.c.b16 %v3778, %v3764
      %v4017 = vpack.c.b16 %v3779, %v3765
      %v4018 = vpack.c.b16 %v3780, %v3766
      %v4019 = vpack.c.b16 %v3781, %v3767
      %v4020 = vpack.c.b16 %v3782, %v3768
      %v4021 = vpack.c.b16 %v3783, %v3769
      %v4022 = vpack.c.b16 %v3784, %v3770
      %v4023 = vpack.c.b16 %v3785, %v3771
      %v4024 = vpack.c.b16 %v3786, %v3772
      %v4025 = vpack.c.b16 %v3787, %v3773
      %v4026 = vpack.c.b16 %v3788, %v3774
      %v4027 = vpack.c.b16 %v3803, %v3789
      %v4028 = vpack.c.b16 %v3804, %v3790
      %v4029 = vpack.c.b16 %v3805, %v3791
      %v4030 = vpack.c.b16 %v3806, %v3792
      %v4031 = vpack.c.b16 %v3807, %v3793
      %v4032 = vpack.c.b16 %v3808, %v3794
      %v4033 = vpack.c.b16 %v3809, %v3795
      %v4034 = vpack.c.b16 %v3810, %v3796
      %v4035 = vpack.c.b16 %v3811, %v3797
      %v4036 = vpack.c.b16 %v3812, %v3798
      %v4037 = vpack.c.b16 %v3813, %v3799
      %v4038 = vpack.c.b16 %v3814, %v3800
      %v4039 = vpack.c.b16 %v3815, %v3801
      %v4040 = vpack.c.b16 %v3816, %v3802
      %4265 = vmatprep.subr.bf16.mxu0 %v3916
      %4266 = vmatpush1.bf16.msra.mxu0 %v3915
      %4267 = vmatprep.subr.bf16.mxu0 %v3902
      %4268 = vmatpush1.bf16.msra.mxu0 %v3901
      %4269 = vmatprep.subr.bf16.mxu0 %v3888
      %4270 = vmatpush1.bf16.msra.mxu0 %v3887
      %4271 = vmatprep.subr.bf16.mxu0 %v3874
      %4272 = vmatpush1.bf16.msra.mxu0 %v3873
      %4273 = vmatprep.subr.bf16.mxu0 %v3860
      %4274 = vmatpush1.bf16.msra.mxu0 %v3859
      %4275 = vmatprep.subr.bf16.mxu0 %v3846
      %4276 = vmatpush1.bf16.msra.mxu0 %v3845
      %4277 = vmatprep.subr.bf16.mxu0 %v3832
      %4278 = vmatpush1.bf16.msra.mxu0 %v3831
      %4279 = vmatprep.subr.bf16.mxu0 %v3818
      %4280 = vmatpush1.bf16.msra.mxu0 %v3817
      %4281 = vmatprep.subr.bf16.mxu0 %v4028
      %4282 = vmatpush2.bf16.msra.mxu0 %v4027
      %4283 = vmatprep.subr.bf16.mxu0 %v4014
      %4284 = vmatpush2.bf16.msra.mxu0 %v4013
      %4285 = vmatprep.subr.bf16.mxu0 %v4000
      %4286 = vmatpush2.bf16.msra.mxu0 %v3999
      %4287 = vmatprep.subr.bf16.mxu0 %v3986
      %4288 = vmatpush2.bf16.msra.mxu0 %v3985
      %4289 = vmatprep.subr.bf16.mxu0 %v3972
      %4290 = vmatpush2.bf16.msra.mxu0 %v3971
      %4291 = vmatprep.subr.bf16.mxu0 %v3958
      %4292 = vmatpush2.bf16.msra.mxu0 %v3957
      %4293 = vmatprep.subr.bf16.mxu0 %v3944
      %4294 = vmatpush2.bf16.msra.mxu0 %v3943
      %4295 = vmatprep.subr.bf16.mxu0 %v3930
      %4296 = vmatpush2.bf16.msra.mxu0 %v3929
      %4297 = vmatprep.mubr.bf16.mxu0 %v2832
      %4298 = vmatmul.mubr.bf16.gmra.mxu0 %v2831
      %v4299 = vpop.f32.mrf.mxu0
      %v4300 = vadd.f32 %v3078, %v4299
      %v4301 = vpop.f32.mrf.mxu0
      %v4302 = vadd.f32 %v3082, %v4301
      %v4303 = vpop.f32.mrf.mxu0
      %v4304 = vadd.f32 %v3078, %v4303
      %v4305 = vpop.f32.mrf.mxu0
      %v4306 = vadd.f32 %v3082, %v4305
      %4307 = vmatprep.mubr.bf16.mxu0 %v2834
      %4308 = vmatmul.mubr.bf16.gmra.mxu0 %v2833
      %v4309 = vpop.f32.mrf.mxu0
      %v4310 = vadd.f32 %v3078, %v4309
      %v4311 = vpop.f32.mrf.mxu0
      %v4312 = vadd.f32 %v3082, %v4311
      %v4313 = vpop.f32.mrf.mxu0
      %v4314 = vadd.f32 %v3078, %v4313
      %v4315 = vpop.f32.mrf.mxu0
      %v4316 = vadd.f32 %v3082, %v4315
      %4317 = vmatprep.mubr.bf16.mxu0 %v2836
      %4318 = vmatmul.mubr.bf16.gmra.mxu0 %v2835
      %v4319 = vpop.f32.mrf.mxu0
      %v4320 = vadd.f32 %v3078, %v4319
      %v4321 = vpop.f32.mrf.mxu0
      %v4322 = vadd.f32 %v3082, %v4321
      %v4323 = vpop.f32.mrf.mxu0
      %v4324 = vadd.f32 %v3078, %v4323
      %v4325 = vpop.f32.mrf.mxu0
      %v4326 = vadd.f32 %v3082, %v4325
      %4327 = vmatprep.mubr.bf16.mxu0 %v2838
      %4328 = vmatmul.mubr.bf16.gmra.mxu0 %v2837
      %v4329 = vpop.f32.mrf.mxu0
      %v4330 = vadd.f32 %v3078, %v4329
      %v4331 = vpop.f32.mrf.mxu0
      %v4332 = vadd.f32 %v3082, %v4331
      %v4333 = vpop.f32.mrf.mxu0
      %v4334 = vadd.f32 %v3078, %v4333
      %v4335 = vpop.f32.mrf.mxu0
      %v4336 = vadd.f32 %v3082, %v4335
      %4337 = vmatprep.mubr.bf16.mxu0 %v2840
      %4338 = vmatmul.mubr.bf16.gmra.mxu0 %v2839
      %v4339 = vpop.f32.mrf.mxu0
      %v4340 = vadd.f32 %v3078, %v4339
      %v4341 = vpop.f32.mrf.mxu0
      %v4342 = vadd.f32 %v3082, %v4341
      %v4343 = vpop.f32.mrf.mxu0
      %v4344 = vadd.f32 %v3078, %v4343
      %v4345 = vpop.f32.mrf.mxu0
      %v4346 = vadd.f32 %v3082, %v4345
      %4347 = vmatprep.mubr.bf16.mxu0 %v2842
      %4348 = vmatmul.mubr.bf16.gmra.mxu0 %v2841
      %v4349 = vpop.f32.mrf.mxu0
      %v4350 = vadd.f32 %v3078, %v4349
      %v4351 = vpop.f32.mrf.mxu0
      %v4352 = vadd.f32 %v3082, %v4351
      %v4353 = vpop.f32.mrf.mxu0
      %v4354 = vadd.f32 %v3078, %v4353
      %v4355 = vpop.f32.mrf.mxu0
      %v4356 = vadd.f32 %v3082, %v4355
      %4357 = vmatprep.mubr.bf16.mxu0 %v2844
      %4358 = vmatmul.mubr.bf16.gmra.mxu0 %v2843
      %v4359 = vpop.f32.mrf.mxu0
      %v4360 = vadd.f32 %v3078, %v4359
      %v4361 = vpop.f32.mrf.mxu0
      %v4362 = vadd.f32 %v3082, %v4361
      %v4363 = vpop.f32.mrf.mxu0
      %v4364 = vadd.f32 %v3078, %v4363
      %v4365 = vpop.f32.mrf.mxu0
      %v4366 = vadd.f32 %v3082, %v4365
      %4367 = vmatprep.mubr.bf16.mxu0 %v2846
      %4368 = vmatmul.mubr.bf16.gmra.mxu0 %v2845
      %v4369 = vpop.f32.mrf.mxu0
      %v4370 = vadd.f32 %v3078, %v4369
      %v4371 = vpop.f32.mrf.mxu0
      %v4372 = vadd.f32 %v3082, %v4371
      %v4373 = vpop.f32.mrf.mxu0
      %v4374 = vadd.f32 %v3078, %v4373
      %v4375 = vpop.f32.mrf.mxu0
      %v4376 = vadd.f32 %v3082, %v4375
      %4377 = vdwg.mxu0
      %4378 = vmatprep.subr.bf16.mxu0 %v3918
      %4379 = vmatpush1.bf16.msra.mxu0 %v3917
      %4380 = vmatprep.subr.bf16.mxu0 %v3904
      %4381 = vmatpush1.bf16.msra.mxu0 %v3903
      %4382 = vmatprep.subr.bf16.mxu0 %v3890
      %4383 = vmatpush1.bf16.msra.mxu0 %v3889
      %4384 = vmatprep.subr.bf16.mxu0 %v3876
      %4385 = vmatpush1.bf16.msra.mxu0 %v3875
      %4386 = vmatprep.subr.bf16.mxu0 %v3862
      %4387 = vmatpush1.bf16.msra.mxu0 %v3861
      %4388 = vmatprep.subr.bf16.mxu0 %v3848
      %4389 = vmatpush1.bf16.msra.mxu0 %v3847
      %4390 = vmatprep.subr.bf16.mxu0 %v3834
      %4391 = vmatpush1.bf16.msra.mxu0 %v3833
      %4392 = vmatprep.subr.bf16.mxu0 %v3820
      %4393 = vmatpush1.bf16.msra.mxu0 %v3819
      %4394 = vmatprep.subr.bf16.mxu0 %v4030
      %4395 = vmatpush2.bf16.msra.mxu0 %v4029
      %4396 = vmatprep.subr.bf16.mxu0 %v4016
      %4397 = vmatpush2.bf16.msra.mxu0 %v4015
      %4398 = vmatprep.subr.bf16.mxu0 %v4002
      %4399 = vmatpush2.bf16.msra.mxu0 %v4001
      %4400 = vmatprep.subr.bf16.mxu0 %v3988
      %4401 = vmatpush2.bf16.msra.mxu0 %v3987
      %4402 = vmatprep.subr.bf16.mxu0 %v3974
      %4403 = vmatpush2.bf16.msra.mxu0 %v3973
      %4404 = vmatprep.subr.bf16.mxu0 %v3960
      %4405 = vmatpush2.bf16.msra.mxu0 %v3959
      %4406 = vmatprep.subr.bf16.mxu0 %v3946
      %4407 = vmatpush2.bf16.msra.mxu0 %v3945
      %4408 = vmatprep.subr.bf16.mxu0 %v3932
      %4409 = vmatpush2.bf16.msra.mxu0 %v3931
      %4410 = vmatprep.mubr.bf16.mxu0 %v2832
      %4411 = vmatmul.mubr.bf16.gmra.mxu0 %v2831
      %v4412 = vpop.f32.mrf.mxu0
      %v4413 = vadd.f32 %v3086, %v4412
      %v4414 = vpop.f32.mrf.mxu0
      %v4415 = vadd.f32 %v3090, %v4414
      %v4416 = vpop.f32.mrf.mxu0
      %v4417 = vadd.f32 %v3086, %v4416
      %v4418 = vpop.f32.mrf.mxu0
      %v4419 = vadd.f32 %v3090, %v4418
      %4420 = vmatprep.mubr.bf16.mxu0 %v2834
      %4421 = vmatmul.mubr.bf16.gmra.mxu0 %v2833
      %v4422 = vpop.f32.mrf.mxu0
      %v4423 = vadd.f32 %v3086, %v4422
      %v4424 = vpop.f32.mrf.mxu0
      %v4425 = vadd.f32 %v3090, %v4424
      %v4426 = vpop.f32.mrf.mxu0
      %v4427 = vadd.f32 %v3086, %v4426
      %v4428 = vpop.f32.mrf.mxu0
      %v4429 = vadd.f32 %v3090, %v4428
      %4430 = vmatprep.mubr.bf16.mxu0 %v2836
      %4431 = vmatmul.mubr.bf16.gmra.mxu0 %v2835
      %v4432 = vpop.f32.mrf.mxu0
      %v4433 = vadd.f32 %v3086, %v4432
      %v4434 = vpop.f32.mrf.mxu0
      %v4435 = vadd.f32 %v3090, %v4434
      %v4436 = vpop.f32.mrf.mxu0
      %v4437 = vadd.f32 %v3086, %v4436
      %v4438 = vpop.f32.mrf.mxu0
      %v4439 = vadd.f32 %v3090, %v4438
      %4440 = vmatprep.mubr.bf16.mxu0 %v2838
      %4441 = vmatmul.mubr.bf16.gmra.mxu0 %v2837
      %v4442 = vpop.f32.mrf.mxu0
      %v4443 = vadd.f32 %v3086, %v4442
      %v4444 = vpop.f32.mrf.mxu0
      %v4445 = vadd.f32 %v3090, %v4444
      %v4446 = vpop.f32.mrf.mxu0
      %v4447 = vadd.f32 %v3086, %v4446
      %v4448 = vpop.f32.mrf.mxu0
      %v4449 = vadd.f32 %v3090, %v4448
      %4450 = vmatprep.mubr.bf16.mxu0 %v2840
      %4451 = vmatmul.mubr.bf16.gmra.mxu0 %v2839
      %v4452 = vpop.f32.mrf.mxu0
      %v4453 = vadd.f32 %v3086, %v4452
      %v4454 = vpop.f32.mrf.mxu0
      %v4455 = vadd.f32 %v3090, %v4454
      %v4456 = vpop.f32.mrf.mxu0
      %v4457 = vadd.f32 %v3086, %v4456
      %v4458 = vpop.f32.mrf.mxu0
      %v4459 = vadd.f32 %v3090, %v4458
      %4460 = vmatprep.mubr.bf16.mxu0 %v2842
      %4461 = vmatmul.mubr.bf16.gmra.mxu0 %v2841
      %v4462 = vpop.f32.mrf.mxu0
      %v4463 = vadd.f32 %v3086, %v4462
      %v4464 = vpop.f32.mrf.mxu0
      %v4465 = vadd.f32 %v3090, %v4464
      %v4466 = vpop.f32.mrf.mxu0
      %v4467 = vadd.f32 %v3086, %v4466
      %v4468 = vpop.f32.mrf.mxu0
      %v4469 = vadd.f32 %v3090, %v4468
      %4470 = vmatprep.mubr.bf16.mxu0 %v2844
      %4471 = vmatmul.mubr.bf16.gmra.mxu0 %v2843
      %v4472 = vpop.f32.mrf.mxu0
      %v4473 = vadd.f32 %v3086, %v4472
      %v4474 = vpop.f32.mrf.mxu0
      %v4475 = vadd.f32 %v3090, %v4474
      %v4476 = vpop.f32.mrf.mxu0
      %v4477 = vadd.f32 %v3086, %v4476
      %v4478 = vpop.f32.mrf.mxu0
      %v4479 = vadd.f32 %v3090, %v4478
      %4480 = vmatprep.mubr.bf16.mxu0 %v2846
      %4481 = vmatmul.mubr.bf16.gmra.mxu0 %v2845
      %v4482 = vpop.f32.mrf.mxu0
      %v4483 = vadd.f32 %v3086, %v4482
      %v4484 = vpop.f32.mrf.mxu0
      %v4485 = vadd.f32 %v3090, %v4484
      %v4486 = vpop.f32.mrf.mxu0
      %v4487 = vadd.f32 %v3086, %v4486
      %v4488 = vpop.f32.mrf.mxu0
      %v4489 = vadd.f32 %v3090, %v4488
      %4490 = vdwg.mxu0
      %4491 = vmatprep.subr.bf16.mxu0 %v3920
      %4492 = vmatpush1.bf16.msra.mxu0 %v3919
      %4493 = vmatprep.subr.bf16.mxu0 %v3906
      %4494 = vmatpush1.bf16.msra.mxu0 %v3905
      %4495 = vmatprep.subr.bf16.mxu0 %v3892
      %4496 = vmatpush1.bf16.msra.mxu0 %v3891
      %4497 = vmatprep.subr.bf16.mxu0 %v3878
      %4498 = vmatpush1.bf16.msra.mxu0 %v3877
      %4499 = vmatprep.subr.bf16.mxu0 %v3864
      %4500 = vmatpush1.bf16.msra.mxu0 %v3863
      %4501 = vmatprep.subr.bf16.mxu0 %v3850
      %4502 = vmatpush1.bf16.msra.mxu0 %v3849
      %4503 = vmatprep.subr.bf16.mxu0 %v3836
      %4504 = vmatpush1.bf16.msra.mxu0 %v3835
      %4505 = vmatprep.subr.bf16.mxu0 %v3822
      %4506 = vmatpush1.bf16.msra.mxu0 %v3821
      %4507 = vmatprep.subr.bf16.mxu0 %v4032
      %4508 = vmatpush2.bf16.msra.mxu0 %v4031
      %4509 = vmatprep.subr.bf16.mxu0 %v4018
      %4510 = vmatpush2.bf16.msra.mxu0 %v4017
      %4511 = vmatprep.subr.bf16.mxu0 %v4004
      %4512 = vmatpush2.bf16.msra.mxu0 %v4003
      %4513 = vmatprep.subr.bf16.mxu0 %v3990
      %4514 = vmatpush2.bf16.msra.mxu0 %v3989
      %4515 = vmatprep.subr.bf16.mxu0 %v3976
      %4516 = vmatpush2.bf16.msra.mxu0 %v3975
      %4517 = vmatprep.subr.bf16.mxu0 %v3962
      %4518 = vmatpush2.bf16.msra.mxu0 %v3961
      %4519 = vmatprep.subr.bf16.mxu0 %v3948
      %4520 = vmatpush2.bf16.msra.mxu0 %v3947
      %4521 = vmatprep.subr.bf16.mxu0 %v3934
      %4522 = vmatpush2.bf16.msra.mxu0 %v3933
      %4523 = vmatprep.mubr.bf16.mxu0 %v2832
      %4524 = vmatmul.mubr.bf16.gmra.mxu0 %v2831
      %v4525 = vpop.f32.mrf.mxu0
      %v4526 = vadd.f32 %v3094, %v4525
      %v4527 = vpop.f32.mrf.mxu0
      %v4528 = vadd.f32 %v3098, %v4527
      %v4529 = vpop.f32.mrf.mxu0
      %v4530 = vadd.f32 %v3094, %v4529
      %v4531 = vpop.f32.mrf.mxu0
      %v4532 = vadd.f32 %v3098, %v4531
      %4533 = vmatprep.mubr.bf16.mxu0 %v2834
      %4534 = vmatmul.mubr.bf16.gmra.mxu0 %v2833
      %v4535 = vpop.f32.mrf.mxu0
      %v4536 = vadd.f32 %v3094, %v4535
      %v4537 = vpop.f32.mrf.mxu0
      %v4538 = vadd.f32 %v3098, %v4537
      %v4539 = vpop.f32.mrf.mxu0
      %v4540 = vadd.f32 %v3094, %v4539
      %v4541 = vpop.f32.mrf.mxu0
      %v4542 = vadd.f32 %v3098, %v4541
      %4543 = vmatprep.mubr.bf16.mxu0 %v2836
      %4544 = vmatmul.mubr.bf16.gmra.mxu0 %v2835
      %v4545 = vpop.f32.mrf.mxu0
      %v4546 = vadd.f32 %v3094, %v4545
      %v4547 = vpop.f32.mrf.mxu0
      %v4548 = vadd.f32 %v3098, %v4547
      %v4549 = vpop.f32.mrf.mxu0
      %v4550 = vadd.f32 %v3094, %v4549
      %v4551 = vpop.f32.mrf.mxu0
      %v4552 = vadd.f32 %v3098, %v4551
      %4553 = vmatprep.mubr.bf16.mxu0 %v2838
      %4554 = vmatmul.mubr.bf16.gmra.mxu0 %v2837
      %v4555 = vpop.f32.mrf.mxu0
      %v4556 = vadd.f32 %v3094, %v4555
      %v4557 = vpop.f32.mrf.mxu0
      %v4558 = vadd.f32 %v3098, %v4557
      %v4559 = vpop.f32.mrf.mxu0
      %v4560 = vadd.f32 %v3094, %v4559
      %v4561 = vpop.f32.mrf.mxu0
      %v4562 = vadd.f32 %v3098, %v4561
      %4563 = vmatprep.mubr.bf16.mxu0 %v2840
      %4564 = vmatmul.mubr.bf16.gmra.mxu0 %v2839
      %v4565 = vpop.f32.mrf.mxu0
      %v4566 = vadd.f32 %v3094, %v4565
      %v4567 = vpop.f32.mrf.mxu0
      %v4568 = vadd.f32 %v3098, %v4567
      %v4569 = vpop.f32.mrf.mxu0
      %v4570 = vadd.f32 %v3094, %v4569
      %v4571 = vpop.f32.mrf.mxu0
      %v4572 = vadd.f32 %v3098, %v4571
      %4573 = vmatprep.mubr.bf16.mxu0 %v2842
      %4574 = vmatmul.mubr.bf16.gmra.mxu0 %v2841
      %v4575 = vpop.f32.mrf.mxu0
      %v4576 = vadd.f32 %v3094, %v4575
      %v4577 = vpop.f32.mrf.mxu0
      %v4578 = vadd.f32 %v3098, %v4577
      %v4579 = vpop.f32.mrf.mxu0
      %v4580 = vadd.f32 %v3094, %v4579
      %v4581 = vpop.f32.mrf.mxu0
      %v4582 = vadd.f32 %v3098, %v4581
      %4583 = vmatprep.mubr.bf16.mxu0 %v2844
      %4584 = vmatmul.mubr.bf16.gmra.mxu0 %v2843
      %v4585 = vpop.f32.mrf.mxu0
      %v4586 = vadd.f32 %v3094, %v4585
      %v4587 = vpop.f32.mrf.mxu0
      %v4588 = vadd.f32 %v3098, %v4587
      %v4589 = vpop.f32.mrf.mxu0
      %v4590 = vadd.f32 %v3094, %v4589
      %v4591 = vpop.f32.mrf.mxu0
      %v4592 = vadd.f32 %v3098, %v4591
      %4593 = vmatprep.mubr.bf16.mxu0 %v2846
      %4594 = vmatmul.mubr.bf16.gmra.mxu0 %v2845
      %v4595 = vpop.f32.mrf.mxu0
      %v4596 = vadd.f32 %v3094, %v4595
      %v4597 = vpop.f32.mrf.mxu0
      %v4598 = vadd.f32 %v3098, %v4597
      %v4599 = vpop.f32.mrf.mxu0
      %v4600 = vadd.f32 %v3094, %v4599
      %v4601 = vpop.f32.mrf.mxu0
      %v4602 = vadd.f32 %v3098, %v4601
      %4603 = vdwg.mxu0
      %4604 = vmatprep.subr.bf16.mxu0 %v3922
      %4605 = vmatpush1.bf16.msra.mxu0 %v3921
      %4606 = vmatprep.subr.bf16.mxu0 %v3908
      %4607 = vmatpush1.bf16.msra.mxu0 %v3907
      %4608 = vmatprep.subr.bf16.mxu0 %v3894
      %4609 = vmatpush1.bf16.msra.mxu0 %v3893
      %4610 = vmatprep.subr.bf16.mxu0 %v3880
      %4611 = vmatpush1.bf16.msra.mxu0 %v3879
      %4612 = vmatprep.subr.bf16.mxu0 %v3866
      %4613 = vmatpush1.bf16.msra.mxu0 %v3865
      %4614 = vmatprep.subr.bf16.mxu0 %v3852
      %4615 = vmatpush1.bf16.msra.mxu0 %v3851
      %4616 = vmatprep.subr.bf16.mxu0 %v3838
      %4617 = vmatpush1.bf16.msra.mxu0 %v3837
      %4618 = vmatprep.subr.bf16.mxu0 %v3824
      %4619 = vmatpush1.bf16.msra.mxu0 %v3823
      %4620 = vmatprep.subr.bf16.mxu0 %v4034
      %4621 = vmatpush2.bf16.msra.mxu0 %v4033
      %4622 = vmatprep.subr.bf16.mxu0 %v4020
      %4623 = vmatpush2.bf16.msra.mxu0 %v4019
      %4624 = vmatprep.subr.bf16.mxu0 %v4006
      %4625 = vmatpush2.bf16.msra.mxu0 %v4005
      %4626 = vmatprep.subr.bf16.mxu0 %v3992
      %4627 = vmatpush2.bf16.msra.mxu0 %v3991
      %4628 = vmatprep.subr.bf16.mxu0 %v3978
      %4629 = vmatpush2.bf16.msra.mxu0 %v3977
      %4630 = vmatprep.subr.bf16.mxu0 %v3964
      %4631 = vmatpush2.bf16.msra.mxu0 %v3963
      %4632 = vmatprep.subr.bf16.mxu0 %v3950
      %4633 = vmatpush2.bf16.msra.mxu0 %v3949
      %4634 = vmatprep.subr.bf16.mxu0 %v3936
      %4635 = vmatpush2.bf16.msra.mxu0 %v3935
      %4636 = vmatprep.mubr.bf16.mxu0 %v2832
      %4637 = vmatmul.mubr.bf16.gmra.mxu0 %v2831
      %v4638 = vpop.f32.mrf.mxu0
      %v4639 = vadd.f32 %v3102, %v4638
      %v4640 = vpop.f32.mrf.mxu0
      %v4641 = vadd.f32 %v3106, %v4640
      %v4642 = vpop.f32.mrf.mxu0
      %v4643 = vadd.f32 %v3102, %v4642
      %v4644 = vpop.f32.mrf.mxu0
      %v4645 = vadd.f32 %v3106, %v4644
      %4646 = vmatprep.mubr.bf16.mxu0 %v2834
      %4647 = vmatmul.mubr.bf16.gmra.mxu0 %v2833
      %v4648 = vpop.f32.mrf.mxu0
      %v4649 = vadd.f32 %v3102, %v4648
      %v4650 = vpop.f32.mrf.mxu0
      %v4651 = vadd.f32 %v3106, %v4650
      %v4652 = vpop.f32.mrf.mxu0
      %v4653 = vadd.f32 %v3102, %v4652
      %v4654 = vpop.f32.mrf.mxu0
      %v4655 = vadd.f32 %v3106, %v4654
      %4656 = vmatprep.mubr.bf16.mxu0 %v2836
      %4657 = vmatmul.mubr.bf16.gmra.mxu0 %v2835
      %v4658 = vpop.f32.mrf.mxu0
      %v4659 = vadd.f32 %v3102, %v4658
      %v4660 = vpop.f32.mrf.mxu0
      %v4661 = vadd.f32 %v3106, %v4660
      %v4662 = vpop.f32.mrf.mxu0
      %v4663 = vadd.f32 %v3102, %v4662
      %v4664 = vpop.f32.mrf.mxu0
      %v4665 = vadd.f32 %v3106, %v4664
      %4666 = vmatprep.mubr.bf16.mxu0 %v2838
      %4667 = vmatmul.mubr.bf16.gmra.mxu0 %v2837
      %v4668 = vpop.f32.mrf.mxu0
      %v4669 = vadd.f32 %v3102, %v4668
      %v4670 = vpop.f32.mrf.mxu0
      %v4671 = vadd.f32 %v3106, %v4670
      %v4672 = vpop.f32.mrf.mxu0
      %v4673 = vadd.f32 %v3102, %v4672
      %v4674 = vpop.f32.mrf.mxu0
      %v4675 = vadd.f32 %v3106, %v4674
      %4676 = vmatprep.mubr.bf16.mxu0 %v2840
      %4677 = vmatmul.mubr.bf16.gmra.mxu0 %v2839
      %v4678 = vpop.f32.mrf.mxu0
      %v4679 = vadd.f32 %v3102, %v4678
      %v4680 = vpop.f32.mrf.mxu0
      %v4681 = vadd.f32 %v3106, %v4680
      %v4682 = vpop.f32.mrf.mxu0
      %v4683 = vadd.f32 %v3102, %v4682
      %v4684 = vpop.f32.mrf.mxu0
      %v4685 = vadd.f32 %v3106, %v4684
      %4686 = vmatprep.mubr.bf16.mxu0 %v2842
      %4687 = vmatmul.mubr.bf16.gmra.mxu0 %v2841
      %v4688 = vpop.f32.mrf.mxu0
      %v4689 = vadd.f32 %v3102, %v4688
      %v4690 = vpop.f32.mrf.mxu0
      %v4691 = vadd.f32 %v3106, %v4690
      %v4692 = vpop.f32.mrf.mxu0
      %v4693 = vadd.f32 %v3102, %v4692
      %v4694 = vpop.f32.mrf.mxu0
      %v4695 = vadd.f32 %v3106, %v4694
      %4696 = vmatprep.mubr.bf16.mxu0 %v2844
      %4697 = vmatmul.mubr.bf16.gmra.mxu0 %v2843
      %v4698 = vpop.f32.mrf.mxu0
      %v4699 = vadd.f32 %v3102, %v4698
      %v4700 = vpop.f32.mrf.mxu0
      %v4701 = vadd.f32 %v3106, %v4700
      %v4702 = vpop.f32.mrf.mxu0
      %v4703 = vadd.f32 %v3102, %v4702
      %v4704 = vpop.f32.mrf.mxu0
      %v4705 = vadd.f32 %v3106, %v4704
      %4706 = vmatprep.mubr.bf16.mxu0 %v2846
      %4707 = vmatmul.mubr.bf16.gmra.mxu0 %v2845
      %v4708 = vpop.f32.mrf.mxu0
      %v4709 = vadd.f32 %v3102, %v4708
      %v4710 = vpop.f32.mrf.mxu0
      %v4711 = vadd.f32 %v3106, %v4710
      %v4712 = vpop.f32.mrf.mxu0
      %v4713 = vadd.f32 %v3102, %v4712
      %v4714 = vpop.f32.mrf.mxu0
      %v4715 = vadd.f32 %v3106, %v4714
      %4716 = vdwg.mxu0
      %4717 = vmatprep.subr.bf16.mxu0 %v3924
      %4718 = vmatpush1.bf16.msra.mxu0 %v3923
      %4719 = vmatprep.subr.bf16.mxu0 %v3910
      %4720 = vmatpush1.bf16.msra.mxu0 %v3909
      %4721 = vmatprep.subr.bf16.mxu0 %v3896
      %4722 = vmatpush1.bf16.msra.mxu0 %v3895
      %4723 = vmatprep.subr.bf16.mxu0 %v3882
      %4724 = vmatpush1.bf16.msra.mxu0 %v3881
      %4725 = vmatprep.subr.bf16.mxu0 %v3868
      %4726 = vmatpush1.bf16.msra.mxu0 %v3867
      %4727 = vmatprep.subr.bf16.mxu0 %v3854
      %4728 = vmatpush1.bf16.msra.mxu0 %v3853
      %4729 = vmatprep.subr.bf16.mxu0 %v3840
      %4730 = vmatpush1.bf16.msra.mxu0 %v3839
      %4731 = vmatprep.subr.bf16.mxu0 %v3826
      %4732 = vmatpush1.bf16.msra.mxu0 %v3825
      %4733 = vmatprep.subr.bf16.mxu0 %v4036
      %4734 = vmatpush2.bf16.msra.mxu0 %v4035
      %4735 = vmatprep.subr.bf16.mxu0 %v4022
      %4736 = vmatpush2.bf16.msra.mxu0 %v4021
      %4737 = vmatprep.subr.bf16.mxu0 %v4008
      %4738 = vmatpush2.bf16.msra.mxu0 %v4007
      %4739 = vmatprep.subr.bf16.mxu0 %v3994
      %4740 = vmatpush2.bf16.msra.mxu0 %v3993
      %4741 = vmatprep.subr.bf16.mxu0 %v3980
      %4742 = vmatpush2.bf16.msra.mxu0 %v3979
      %4743 = vmatprep.subr.bf16.mxu0 %v3966
      %4744 = vmatpush2.bf16.msra.mxu0 %v3965
      %4745 = vmatprep.subr.bf16.mxu0 %v3952
      %4746 = vmatpush2.bf16.msra.mxu0 %v3951
      %4747 = vmatprep.subr.bf16.mxu0 %v3938
      %4748 = vmatpush2.bf16.msra.mxu0 %v3937
      %4749 = vmatprep.mubr.bf16.mxu0 %v2832
      %4750 = vmatmul.mubr.bf16.gmra.mxu0 %v2831
      %v4751 = vpop.f32.mrf.mxu0
      %v4752 = vadd.f32 %v3110, %v4751
      %v4753 = vpop.f32.mrf.mxu0
      %v4754 = vadd.f32 %v3114, %v4753
      %v4755 = vpop.f32.mrf.mxu0
      %v4756 = vadd.f32 %v3110, %v4755
      %v4757 = vpop.f32.mrf.mxu0
      %v4758 = vadd.f32 %v3114, %v4757
      %4759 = vmatprep.mubr.bf16.mxu0 %v2834
      %4760 = vmatmul.mubr.bf16.gmra.mxu0 %v2833
      %v4761 = vpop.f32.mrf.mxu0
      %v4762 = vadd.f32 %v3110, %v4761
      %v4763 = vpop.f32.mrf.mxu0
      %v4764 = vadd.f32 %v3114, %v4763
      %v4765 = vpop.f32.mrf.mxu0
      %v4766 = vadd.f32 %v3110, %v4765
      %v4767 = vpop.f32.mrf.mxu0
      %v4768 = vadd.f32 %v3114, %v4767
      %4769 = vmatprep.mubr.bf16.mxu0 %v2836
      %4770 = vmatmul.mubr.bf16.gmra.mxu0 %v2835
      %v4771 = vpop.f32.mrf.mxu0
      %v4772 = vadd.f32 %v3110, %v4771
      %v4773 = vpop.f32.mrf.mxu0
      %v4774 = vadd.f32 %v3114, %v4773
      %v4775 = vpop.f32.mrf.mxu0
      %v4776 = vadd.f32 %v3110, %v4775
      %v4777 = vpop.f32.mrf.mxu0
      %v4778 = vadd.f32 %v3114, %v4777
      %4779 = vmatprep.mubr.bf16.mxu0 %v2838
      %4780 = vmatmul.mubr.bf16.gmra.mxu0 %v2837
      %v4781 = vpop.f32.mrf.mxu0
      %v4782 = vadd.f32 %v3110, %v4781
      %v4783 = vpop.f32.mrf.mxu0
      %v4784 = vadd.f32 %v3114, %v4783
      %v4785 = vpop.f32.mrf.mxu0
      %v4786 = vadd.f32 %v3110, %v4785
      %v4787 = vpop.f32.mrf.mxu0
      %v4788 = vadd.f32 %v3114, %v4787
      %4789 = vmatprep.mubr.bf16.mxu0 %v2840
      %4790 = vmatmul.mubr.bf16.gmra.mxu0 %v2839
      %v4791 = vpop.f32.mrf.mxu0
      %v4792 = vadd.f32 %v3110, %v4791
      %v4793 = vpop.f32.mrf.mxu0
      %v4794 = vadd.f32 %v3114, %v4793
      %v4795 = vpop.f32.mrf.mxu0
      %v4796 = vadd.f32 %v3110, %v4795
      %v4797 = vpop.f32.mrf.mxu0
      %v4798 = vadd.f32 %v3114, %v4797
      %4799 = vmatprep.mubr.bf16.mxu0 %v2842
      %4800 = vmatmul.mubr.bf16.gmra.mxu0 %v2841
      %v4801 = vpop.f32.mrf.mxu0
      %v4802 = vadd.f32 %v3110, %v4801
      %v4803 = vpop.f32.mrf.mxu0
      %v4804 = vadd.f32 %v3114, %v4803
      %v4805 = vpop.f32.mrf.mxu0
      %v4806 = vadd.f32 %v3110, %v4805
      %v4807 = vpop.f32.mrf.mxu0
      %v4808 = vadd.f32 %v3114, %v4807
      %4809 = vmatprep.mubr.bf16.mxu0 %v2844
      %4810 = vmatmul.mubr.bf16.gmra.mxu0 %v2843
      %v4811 = vpop.f32.mrf.mxu0
      %v4812 = vadd.f32 %v3110, %v4811
      %v4813 = vpop.f32.mrf.mxu0
      %v4814 = vadd.f32 %v3114, %v4813
      %v4815 = vpop.f32.mrf.mxu0
      %v4816 = vadd.f32 %v3110, %v4815
      %v4817 = vpop.f32.mrf.mxu0
      %v4818 = vadd.f32 %v3114, %v4817
      %4819 = vmatprep.mubr.bf16.mxu0 %v2846
      %4820 = vmatmul.mubr.bf16.gmra.mxu0 %v2845
      %v4821 = vpop.f32.mrf.mxu0
      %v4822 = vadd.f32 %v3110, %v4821
      %v4823 = vpop.f32.mrf.mxu0
      %v4824 = vadd.f32 %v3114, %v4823
      %v4825 = vpop.f32.mrf.mxu0
      %v4826 = vadd.f32 %v3110, %v4825
      %v4827 = vpop.f32.mrf.mxu0
      %v4828 = vadd.f32 %v3114, %v4827
      %4829 = vdwg.mxu0
      %4830 = vmatprep.subr.bf16.mxu0 %v3926
      %4831 = vmatpush1.bf16.msra.mxu0 %v3925
      %4832 = vmatprep.subr.bf16.mxu0 %v3912
      %4833 = vmatpush1.bf16.msra.mxu0 %v3911
      %4834 = vmatprep.subr.bf16.mxu0 %v3898
      %4835 = vmatpush1.bf16.msra.mxu0 %v3897
      %4836 = vmatprep.subr.bf16.mxu0 %v3884
      %4837 = vmatpush1.bf16.msra.mxu0 %v3883
      %4838 = vmatprep.subr.bf16.mxu0 %v3870
      %4839 = vmatpush1.bf16.msra.mxu0 %v3869
      %4840 = vmatprep.subr.bf16.mxu0 %v3856
      %4841 = vmatpush1.bf16.msra.mxu0 %v3855
      %4842 = vmatprep.subr.bf16.mxu0 %v3842
      %4843 = vmatpush1.bf16.msra.mxu0 %v3841
      %4844 = vmatprep.subr.bf16.mxu0 %v3828
      %4845 = vmatpush1.bf16.msra.mxu0 %v3827
      %4846 = vmatprep.subr.bf16.mxu0 %v4038
      %4847 = vmatpush2.bf16.msra.mxu0 %v4037
      %4848 = vmatprep.subr.bf16.mxu0 %v4024
      %4849 = vmatpush2.bf16.msra.mxu0 %v4023
      %4850 = vmatprep.subr.bf16.mxu0 %v4010
      %4851 = vmatpush2.bf16.msra.mxu0 %v4009
      %4852 = vmatprep.subr.bf16.mxu0 %v3996
      %4853 = vmatpush2.bf16.msra.mxu0 %v3995
      %4854 = vmatprep.subr.bf16.mxu0 %v3982
      %4855 = vmatpush2.bf16.msra.mxu0 %v3981
      %4856 = vmatprep.subr.bf16.mxu0 %v3968
      %4857 = vmatpush2.bf16.msra.mxu0 %v3967
      %4858 = vmatprep.subr.bf16.mxu0 %v3954
      %4859 = vmatpush2.bf16.msra.mxu0 %v3953
      %4860 = vmatprep.subr.bf16.mxu0 %v3940
      %4861 = vmatpush2.bf16.msra.mxu0 %v3939
      %4862 = vmatprep.mubr.bf16.mxu0 %v2832
      %4863 = vmatmul.mubr.bf16.gmra.mxu0 %v2831
      %v4864 = vpop.f32.mrf.mxu0
      %v4865 = vadd.f32 %v3118, %v4864
      %v4866 = vpop.f32.mrf.mxu0
      %v4867 = vadd.f32 %v3122, %v4866
      %v4868 = vpop.f32.mrf.mxu0
      %v4869 = vadd.f32 %v3118, %v4868
      %v4870 = vpop.f32.mrf.mxu0
      %v4871 = vadd.f32 %v3122, %v4870
      %4872 = vmatprep.mubr.bf16.mxu0 %v2834
      %4873 = vmatmul.mubr.bf16.gmra.mxu0 %v2833
      %v4874 = vpop.f32.mrf.mxu0
      %v4875 = vadd.f32 %v3118, %v4874
      %v4876 = vpop.f32.mrf.mxu0
      %v4877 = vadd.f32 %v3122, %v4876
      %v4878 = vpop.f32.mrf.mxu0
      %v4879 = vadd.f32 %v3118, %v4878
      %v4880 = vpop.f32.mrf.mxu0
      %v4881 = vadd.f32 %v3122, %v4880
      %4882 = vmatprep.mubr.bf16.mxu0 %v2836
      %4883 = vmatmul.mubr.bf16.gmra.mxu0 %v2835
      %v4884 = vpop.f32.mrf.mxu0
      %v4885 = vadd.f32 %v3118, %v4884
      %v4886 = vpop.f32.mrf.mxu0
      %v4887 = vadd.f32 %v3122, %v4886
      %v4888 = vpop.f32.mrf.mxu0
      %v4889 = vadd.f32 %v3118, %v4888
      %v4890 = vpop.f32.mrf.mxu0
      %v4891 = vadd.f32 %v3122, %v4890
      %4892 = vmatprep.mubr.bf16.mxu0 %v2838
      %4893 = vmatmul.mubr.bf16.gmra.mxu0 %v2837
      %v4894 = vpop.f32.mrf.mxu0
      %v4895 = vadd.f32 %v3118, %v4894
      %v4896 = vpop.f32.mrf.mxu0
      %v4897 = vadd.f32 %v3122, %v4896
      %v4898 = vpop.f32.mrf.mxu0
      %v4899 = vadd.f32 %v3118, %v4898
      %v4900 = vpop.f32.mrf.mxu0
      %v4901 = vadd.f32 %v3122, %v4900
      %4902 = vmatprep.mubr.bf16.mxu0 %v2840
      %4903 = vmatmul.mubr.bf16.gmra.mxu0 %v2839
      %v4904 = vpop.f32.mrf.mxu0
      %v4905 = vadd.f32 %v3118, %v4904
      %v4906 = vpop.f32.mrf.mxu0
      %v4907 = vadd.f32 %v3122, %v4906
      %v4908 = vpop.f32.mrf.mxu0
      %v4909 = vadd.f32 %v3118, %v4908
      %v4910 = vpop.f32.mrf.mxu0
      %v4911 = vadd.f32 %v3122, %v4910
      %4912 = vmatprep.mubr.bf16.mxu0 %v2842
      %4913 = vmatmul.mubr.bf16.gmra.mxu0 %v2841
      %v4914 = vpop.f32.mrf.mxu0
      %v4915 = vadd.f32 %v3118, %v4914
      %v4916 = vpop.f32.mrf.mxu0
      %v4917 = vadd.f32 %v3122, %v4916
      %v4918 = vpop.f32.mrf.mxu0
      %v4919 = vadd.f32 %v3118, %v4918
      %v4920 = vpop.f32.mrf.mxu0
      %v4921 = vadd.f32 %v3122, %v4920
      %4922 = vmatprep.mubr.bf16.mxu0 %v2844
      %4923 = vmatmul.mubr.bf16.gmra.mxu0 %v2843
      %v4924 = vpop.f32.mrf.mxu0
      %v4925 = vadd.f32 %v3118, %v4924
      %v4926 = vpop.f32.mrf.mxu0
      %v4927 = vadd.f32 %v3122, %v4926
      %v4928 = vpop.f32.mrf.mxu0
      %v4929 = vadd.f32 %v3118, %v4928
      %v4930 = vpop.f32.mrf.mxu0
      %v4931 = vadd.f32 %v3122, %v4930
      %4932 = vmatprep.mubr.bf16.mxu0 %v2846
      %4933 = vmatmul.mubr.bf16.gmra.mxu0 %v2845
      %v4934 = vpop.f32.mrf.mxu0
      %v4935 = vadd.f32 %v3118, %v4934
      %v4936 = vpop.f32.mrf.mxu0
      %v4937 = vadd.f32 %v3122, %v4936
      %v4938 = vpop.f32.mrf.mxu0
      %v4939 = vadd.f32 %v3118, %v4938
      %v4940 = vpop.f32.mrf.mxu0
      %v4941 = vadd.f32 %v3122, %v4940
      %4942 = vdwg.mxu0
      %4943 = vmatprep.subr.bf16.mxu0 %v3928
      %4944 = vmatpush1.bf16.msra.mxu0 %v3927
      %4945 = vmatprep.subr.bf16.mxu0 %v3914
      %4946 = vmatpush1.bf16.msra.mxu0 %v3913
      %4947 = vmatprep.subr.bf16.mxu0 %v3900
      %4948 = vmatpush1.bf16.msra.mxu0 %v3899
      %4949 = vmatprep.subr.bf16.mxu0 %v3886
      %4950 = vmatpush1.bf16.msra.mxu0 %v3885
      %4951 = vmatprep.subr.bf16.mxu0 %v3872
      %4952 = vmatpush1.bf16.msra.mxu0 %v3871
      %4953 = vmatprep.subr.bf16.mxu0 %v3858
      %4954 = vmatpush1.bf16.msra.mxu0 %v3857
      %4955 = vmatprep.subr.bf16.mxu0 %v3844
      %4956 = vmatpush1.bf16.msra.mxu0 %v3843
      %4957 = vmatprep.subr.bf16.mxu0 %v3830
      %4958 = vmatpush1.bf16.msra.mxu0 %v3829
      %4959 = vmatprep.subr.bf16.mxu0 %v4040
      %4960 = vmatpush2.bf16.msra.mxu0 %v4039
      %4961 = vmatprep.subr.bf16.mxu0 %v4026
      %4962 = vmatpush2.bf16.msra.mxu0 %v4025
      %4963 = vmatprep.subr.bf16.mxu0 %v4012
      %4964 = vmatpush2.bf16.msra.mxu0 %v4011
      %4965 = vmatprep.subr.bf16.mxu0 %v3998
      %4966 = vmatpush2.bf16.msra.mxu0 %v3997
      %4967 = vmatprep.subr.bf16.mxu0 %v3984
      %4968 = vmatpush2.bf16.msra.mxu0 %v3983
      %4969 = vmatprep.subr.bf16.mxu0 %v3970
      %4970 = vmatpush2.bf16.msra.mxu0 %v3969
      %4971 = vmatprep.subr.bf16.mxu0 %v3956
      %4972 = vmatpush2.bf16.msra.mxu0 %v3955
      %4973 = vmatprep.subr.bf16.mxu0 %v3942
      %4974 = vmatpush2.bf16.msra.mxu0 %v3941
      %4975 = vmatprep.mubr.bf16.mxu0 %v2832
      %4976 = vmatmul.mubr.bf16.gmra.mxu0 %v2831
      %v4977 = vpop.f32.mrf.mxu0
      %v4978 = vadd.f32 %v3126, %v4977
      %v4979 = vpop.f32.mrf.mxu0
      %v4980 = vadd.f32 %v3130, %v4979
      %v4981 = vpop.f32.mrf.mxu0
      %v4982 = vadd.f32 %v3126, %v4981
      %v4983 = vpop.f32.mrf.mxu0
      %v4984 = vadd.f32 %v3130, %v4983
      %4985 = vmatprep.mubr.bf16.mxu0 %v2834
      %4986 = vmatmul.mubr.bf16.gmra.mxu0 %v2833
      %v4987 = vpop.f32.mrf.mxu0
      %v4988 = vadd.f32 %v3126, %v4987
      %v4989 = vpop.f32.mrf.mxu0
      %v4990 = vadd.f32 %v3130, %v4989
      %v4991 = vpop.f32.mrf.mxu0
      %v4992 = vadd.f32 %v3126, %v4991
      %v4993 = vpop.f32.mrf.mxu0
      %v4994 = vadd.f32 %v3130, %v4993
      %4995 = vmatprep.mubr.bf16.mxu0 %v2836
      %4996 = vmatmul.mubr.bf16.gmra.mxu0 %v2835
      %v4997 = vpop.f32.mrf.mxu0
      %v4998 = vadd.f32 %v3126, %v4997
      %v4999 = vpop.f32.mrf.mxu0
      %v5000 = vadd.f32 %v3130, %v4999
      %v5001 = vpop.f32.mrf.mxu0
      %v5002 = vadd.f32 %v3126, %v5001
      %v5003 = vpop.f32.mrf.mxu0
      %v5004 = vadd.f32 %v3130, %v5003
      %5005 = vmatprep.mubr.bf16.mxu0 %v2838
      %5006 = vmatmul.mubr.bf16.gmra.mxu0 %v2837
      %v5007 = vpop.f32.mrf.mxu0
      %v5008 = vadd.f32 %v3126, %v5007
      %v5009 = vpop.f32.mrf.mxu0
      %v5010 = vadd.f32 %v3130, %v5009
      %v5011 = vpop.f32.mrf.mxu0
      %v5012 = vadd.f32 %v3126, %v5011
      %v5013 = vpop.f32.mrf.mxu0
      %v5014 = vadd.f32 %v3130, %v5013
      %5015 = vmatprep.mubr.bf16.mxu0 %v2840
      %5016 = vmatmul.mubr.bf16.gmra.mxu0 %v2839
      %v5017 = vpop.f32.mrf.mxu0
      %v5018 = vadd.f32 %v3126, %v5017
      %v5019 = vpop.f32.mrf.mxu0
      %v5020 = vadd.f32 %v3130, %v5019
      %v5021 = vpop.f32.mrf.mxu0
      %v5022 = vadd.f32 %v3126, %v5021
      %v5023 = vpop.f32.mrf.mxu0
      %v5024 = vadd.f32 %v3130, %v5023
      %5025 = vmatprep.mubr.bf16.mxu0 %v2842
      %5026 = vmatmul.mubr.bf16.gmra.mxu0 %v2841
      %v5027 = vpop.f32.mrf.mxu0
      %v5028 = vadd.f32 %v3126, %v5027
      %v5029 = vpop.f32.mrf.mxu0
      %v5030 = vadd.f32 %v3130, %v5029
      %v5031 = vpop.f32.mrf.mxu0
      %v5032 = vadd.f32 %v3126, %v5031
      %v5033 = vpop.f32.mrf.mxu0
      %v5034 = vadd.f32 %v3130, %v5033
      %5035 = vmatprep.mubr.bf16.mxu0 %v2844
      %5036 = vmatmul.mubr.bf16.gmra.mxu0 %v2843
      %v5037 = vpop.f32.mrf.mxu0
      %v5038 = vadd.f32 %v3126, %v5037
      %v5039 = vpop.f32.mrf.mxu0
      %v5040 = vadd.f32 %v3130, %v5039
      %v5041 = vpop.f32.mrf.mxu0
      %v5042 = vadd.f32 %v3126, %v5041
      %v5043 = vpop.f32.mrf.mxu0
      %v5044 = vadd.f32 %v3130, %v5043
      %5045 = vmatprep.mubr.bf16.mxu0 %v2846
      %5046 = vmatmul.mubr.bf16.gmra.mxu0 %v2845
      %v5047 = vpop.f32.mrf.mxu0
      %v5048 = vadd.f32 %v3126, %v5047
      %v5049 = vpop.f32.mrf.mxu0
      %v5050 = vadd.f32 %v3130, %v5049
      %v5051 = vpop.f32.mrf.mxu0
      %v5052 = vadd.f32 %v3126, %v5051
      %v5053 = vpop.f32.mrf.mxu0
      %v5054 = vadd.f32 %v3130, %v5053
      %5055 = vdwg.mxu0
      %v5056 = vsub.f32 0.0, %v4300
      %v5057 = vsub.f32 0.0, %v4302
      %v5058 = vsub.f32 0.0, %v4413
      %v5059 = vsub.f32 0.0, %v4415
      %v5060 = vsub.f32 0.0, %v4526
      %v5061 = vsub.f32 0.0, %v4528
      %v5062 = vsub.f32 0.0, %v4639
      %v5063 = vsub.f32 0.0, %v4641
      %v5064 = vsub.f32 0.0, %v4752
      %v5065 = vsub.f32 0.0, %v4754
      %v5066 = vsub.f32 0.0, %v4865
      %v5067 = vsub.f32 0.0, %v4867
      %v5068 = vsub.f32 0.0, %v4978
      %v5069 = vsub.f32 0.0, %v4980
      %v5070 = vsub.f32 0.0, %v4304
      %v5071 = vsub.f32 0.0, %v4306
      %v5072 = vsub.f32 0.0, %v4417
      %v5073 = vsub.f32 0.0, %v4419
      %v5074 = vsub.f32 0.0, %v4530
      %v5075 = vsub.f32 0.0, %v4532
      %v5076 = vsub.f32 0.0, %v4643
      %v5077 = vsub.f32 0.0, %v4645
      %v5078 = vsub.f32 0.0, %v4756
      %v5079 = vsub.f32 0.0, %v4758
      %v5080 = vsub.f32 0.0, %v4869
      %v5081 = vsub.f32 0.0, %v4871
      %v5082 = vsub.f32 0.0, %v4982
      %v5083 = vsub.f32 0.0, %v4984
      %v5084 = vsub.f32 0.0, %v4310
      %v5085 = vsub.f32 0.0, %v4312
      %v5086 = vsub.f32 0.0, %v4423
      %v5087 = vsub.f32 0.0, %v4425
      %v5088 = vsub.f32 0.0, %v4536
      %v5089 = vsub.f32 0.0, %v4538
      %v5090 = vsub.f32 0.0, %v4649
      %v5091 = vsub.f32 0.0, %v4651
      %v5092 = vsub.f32 0.0, %v4762
      %v5093 = vsub.f32 0.0, %v4764
      %v5094 = vsub.f32 0.0, %v4875
      %v5095 = vsub.f32 0.0, %v4877
      %v5096 = vsub.f32 0.0, %v4988
      %v5097 = vsub.f32 0.0, %v4990
      %v5098 = vsub.f32 0.0, %v4314
      %v5099 = vsub.f32 0.0, %v4316
      %v5100 = vsub.f32 0.0, %v4427
      %v5101 = vsub.f32 0.0, %v4429
      %v5102 = vsub.f32 0.0, %v4540
      %v5103 = vsub.f32 0.0, %v4542
      %v5104 = vsub.f32 0.0, %v4653
      %v5105 = vsub.f32 0.0, %v4655
      %v5106 = vsub.f32 0.0, %v4766
      %v5107 = vsub.f32 0.0, %v4768
      %v5108 = vsub.f32 0.0, %v4879
      %v5109 = vsub.f32 0.0, %v4881
      %v5110 = vsub.f32 0.0, %v4992
      %v5111 = vsub.f32 0.0, %v4994
      %v5112 = vsub.f32 0.0, %v4320
      %v5113 = vsub.f32 0.0, %v4322
      %v5114 = vsub.f32 0.0, %v4433
      %v5115 = vsub.f32 0.0, %v4435
      %v5116 = vsub.f32 0.0, %v4546
      %v5117 = vsub.f32 0.0, %v4548
      %v5118 = vsub.f32 0.0, %v4659
      %v5119 = vsub.f32 0.0, %v4661
      %v5120 = vsub.f32 0.0, %v4772
      %v5121 = vsub.f32 0.0, %v4774
      %v5122 = vsub.f32 0.0, %v4885
      %v5123 = vsub.f32 0.0, %v4887
      %v5124 = vsub.f32 0.0, %v4998
      %v5125 = vsub.f32 0.0, %v5000
      %v5126 = vsub.f32 0.0, %v4324
      %v5127 = vsub.f32 0.0, %v4326
      %v5128 = vsub.f32 0.0, %v4437
      %v5129 = vsub.f32 0.0, %v4439
      %v5130 = vsub.f32 0.0, %v4550
      %v5131 = vsub.f32 0.0, %v4552
      %v5132 = vsub.f32 0.0, %v4663
      %v5133 = vsub.f32 0.0, %v4665
      %v5134 = vsub.f32 0.0, %v4776
      %v5135 = vsub.f32 0.0, %v4778
      %v5136 = vsub.f32 0.0, %v4889
      %v5137 = vsub.f32 0.0, %v4891
      %v5138 = vsub.f32 0.0, %v5002
      %v5139 = vsub.f32 0.0, %v5004
      %v5140 = vsub.f32 0.0, %v4330
      %v5141 = vsub.f32 0.0, %v4332
      %v5142 = vsub.f32 0.0, %v4443
      %v5143 = vsub.f32 0.0, %v4445
      %v5144 = vsub.f32 0.0, %v4556
      %v5145 = vsub.f32 0.0, %v4558
      %v5146 = vsub.f32 0.0, %v4669
      %v5147 = vsub.f32 0.0, %v4671
      %v5148 = vsub.f32 0.0, %v4782
      %v5149 = vsub.f32 0.0, %v4784
      %v5150 = vsub.f32 0.0, %v4895
      %v5151 = vsub.f32 0.0, %v4897
      %v5152 = vsub.f32 0.0, %v5008
      %v5153 = vsub.f32 0.0, %v5010
      %v5154 = vsub.f32 0.0, %v4334
      %v5155 = vsub.f32 0.0, %v4336
      %v5156 = vsub.f32 0.0, %v4447
      %v5157 = vsub.f32 0.0, %v4449
      %v5158 = vsub.f32 0.0, %v4560
      %v5159 = vsub.f32 0.0, %v4562
      %v5160 = vsub.f32 0.0, %v4673
      %v5161 = vsub.f32 0.0, %v4675
      %v5162 = vsub.f32 0.0, %v4786
      %v5163 = vsub.f32 0.0, %v4788
      %v5164 = vsub.f32 0.0, %v4899
      %v5165 = vsub.f32 0.0, %v4901
      %v5166 = vsub.f32 0.0, %v5012
      %v5167 = vsub.f32 0.0, %v5014
      %v5168 = vsub.f32 0.0, %v4340
      %v5169 = vsub.f32 0.0, %v4342
      %v5170 = vsub.f32 0.0, %v4453
      %v5171 = vsub.f32 0.0, %v4455
      %v5172 = vsub.f32 0.0, %v4566
      %v5173 = vsub.f32 0.0, %v4568
      %v5174 = vsub.f32 0.0, %v4679
      %v5175 = vsub.f32 0.0, %v4681
      %v5176 = vsub.f32 0.0, %v4792
      %v5177 = vsub.f32 0.0, %v4794
      %v5178 = vsub.f32 0.0, %v4905
      %v5179 = vsub.f32 0.0, %v4907
      %v5180 = vsub.f32 0.0, %v5018
      %v5181 = vsub.f32 0.0, %v5020
      %v5182 = vsub.f32 0.0, %v4344
      %v5183 = vsub.f32 0.0, %v4346
      %v5184 = vsub.f32 0.0, %v4457
      %v5185 = vsub.f32 0.0, %v4459
      %v5186 = vsub.f32 0.0, %v4570
      %v5187 = vsub.f32 0.0, %v4572
      %v5188 = vsub.f32 0.0, %v4683
      %v5189 = vsub.f32 0.0, %v4685
      %v5190 = vsub.f32 0.0, %v4796
      %v5191 = vsub.f32 0.0, %v4798
      %v5192 = vsub.f32 0.0, %v4909
      %v5193 = vsub.f32 0.0, %v4911
      %v5194 = vsub.f32 0.0, %v5022
      %v5195 = vsub.f32 0.0, %v5024
      %v5196 = vsub.f32 0.0, %v4350
      %v5197 = vsub.f32 0.0, %v4352
      %v5198 = vsub.f32 0.0, %v4463
      %v5199 = vsub.f32 0.0, %v4465
      %v5200 = vsub.f32 0.0, %v4576
      %v5201 = vsub.f32 0.0, %v4578
      %v5202 = vsub.f32 0.0, %v4689
      %v5203 = vsub.f32 0.0, %v4691
      %v5204 = vsub.f32 0.0, %v4802
      %v5205 = vsub.f32 0.0, %v4804
      %v5206 = vsub.f32 0.0, %v4915
      %v5207 = vsub.f32 0.0, %v4917
      %v5208 = vsub.f32 0.0, %v5028
      %v5209 = vsub.f32 0.0, %v5030
      %v5210 = vsub.f32 0.0, %v4354
      %v5211 = vsub.f32 0.0, %v4356
      %v5212 = vsub.f32 0.0, %v4467
      %v5213 = vsub.f32 0.0, %v4469
      %v5214 = vsub.f32 0.0, %v4580
      %v5215 = vsub.f32 0.0, %v4582
      %v5216 = vsub.f32 0.0, %v4693
      %v5217 = vsub.f32 0.0, %v4695
      %v5218 = vsub.f32 0.0, %v4806
      %v5219 = vsub.f32 0.0, %v4808
      %v5220 = vsub.f32 0.0, %v4919
      %v5221 = vsub.f32 0.0, %v4921
      %v5222 = vsub.f32 0.0, %v5032
      %v5223 = vsub.f32 0.0, %v5034
      %v5224 = vsub.f32 0.0, %v4360
      %v5225 = vsub.f32 0.0, %v4362
      %v5226 = vsub.f32 0.0, %v4473
      %v5227 = vsub.f32 0.0, %v4475
      %v5228 = vsub.f32 0.0, %v4586
      %v5229 = vsub.f32 0.0, %v4588
      %v5230 = vsub.f32 0.0, %v4699
      %v5231 = vsub.f32 0.0, %v4701
      %v5232 = vsub.f32 0.0, %v4812
      %v5233 = vsub.f32 0.0, %v4814
      %v5234 = vsub.f32 0.0, %v4925
      %v5235 = vsub.f32 0.0, %v4927
      %v5236 = vsub.f32 0.0, %v5038
      %v5237 = vsub.f32 0.0, %v5040
      %v5238 = vsub.f32 0.0, %v4364
      %v5239 = vsub.f32 0.0, %v4366
      %v5240 = vsub.f32 0.0, %v4477
      %v5241 = vsub.f32 0.0, %v4479
      %v5242 = vsub.f32 0.0, %v4590
      %v5243 = vsub.f32 0.0, %v4592
      %v5244 = vsub.f32 0.0, %v4703
      %v5245 = vsub.f32 0.0, %v4705
      %v5246 = vsub.f32 0.0, %v4816
      %v5247 = vsub.f32 0.0, %v4818
      %v5248 = vsub.f32 0.0, %v4929
      %v5249 = vsub.f32 0.0, %v4931
      %v5250 = vsub.f32 0.0, %v5042
      %v5251 = vsub.f32 0.0, %v5044
      %v5252 = vsub.f32 0.0, %v4370
      %v5253 = vsub.f32 0.0, %v4372
      %v5254 = vsub.f32 0.0, %v4483
      %v5255 = vsub.f32 0.0, %v4485
      %v5256 = vsub.f32 0.0, %v4596
      %v5257 = vsub.f32 0.0, %v4598
      %v5258 = vsub.f32 0.0, %v4709
      %v5259 = vsub.f32 0.0, %v4711
      %v5260 = vsub.f32 0.0, %v4822
      %v5261 = vsub.f32 0.0, %v4824
      %v5262 = vsub.f32 0.0, %v4935
      %v5263 = vsub.f32 0.0, %v4937
      %v5264 = vsub.f32 0.0, %v5048
      %v5265 = vsub.f32 0.0, %v5050
      %v5266 = vsub.f32 0.0, %v4374
      %v5267 = vsub.f32 0.0, %v4376
      %v5268 = vsub.f32 0.0, %v4487
      %v5269 = vsub.f32 0.0, %v4489
      %v5270 = vsub.f32 0.0, %v4600
      %v5271 = vsub.f32 0.0, %v4602
      %v5272 = vsub.f32 0.0, %v4713
      %v5273 = vsub.f32 0.0, %v4715
      %v5274 = vsub.f32 0.0, %v4826
      %v5275 = vsub.f32 0.0, %v4828
      %v5276 = vsub.f32 0.0, %v4939
      %v5277 = vsub.f32 0.0, %v4941
      %v5278 = vsub.f32 0.0, %v5052
      %v5279 = vsub.f32 0.0, %v5054
      %v5280 = vmul.f32 %v5056, 1.442695
      %v5281 = vpow.pop %v5280
      %v5282 = vmul.f32 %v5057, 1.442695
      %v5283 = vpow.pop %v5282
      %v5284 = vmul.f32 %v5058, 1.442695
      %v5285 = vpow.pop %v5284
      %v5286 = vmul.f32 %v5059, 1.442695
      %v5287 = vpow.pop %v5286
      %v5288 = vmul.f32 %v5060, 1.442695
      %v5289 = vpow.pop %v5288
      %v5290 = vmul.f32 %v5061, 1.442695
      %v5291 = vpow.pop %v5290
      %v5292 = vmul.f32 %v5062, 1.442695
      %v5293 = vpow.pop %v5292
      %v5294 = vmul.f32 %v5063, 1.442695
      %v5295 = vpow.pop %v5294
      %v5296 = vmul.f32 %v5064, 1.442695
      %v5297 = vpow.pop %v5296
      %v5298 = vmul.f32 %v5065, 1.442695
      %v5299 = vpow.pop %v5298
      %v5300 = vmul.f32 %v5066, 1.442695
      %v5301 = vpow.pop %v5300
      %v5302 = vmul.f32 %v5067, 1.442695
      %v5303 = vpow.pop %v5302
      %v5304 = vmul.f32 %v5068, 1.442695
      %v5305 = vpow.pop %v5304
      %v5306 = vmul.f32 %v5069, 1.442695
      %v5307 = vpow.pop %v5306
      %v5308 = vmul.f32 %v5070, 1.442695
      %v5309 = vpow.pop %v5308
      %v5310 = vmul.f32 %v5071, 1.442695
      %v5311 = vpow.pop %v5310
      %v5312 = vmul.f32 %v5072, 1.442695
      %v5313 = vpow.pop %v5312
      %v5314 = vmul.f32 %v5073, 1.442695
      %v5315 = vpow.pop %v5314
      %v5316 = vmul.f32 %v5074, 1.442695
      %v5317 = vpow.pop %v5316
      %v5318 = vmul.f32 %v5075, 1.442695
      %v5319 = vpow.pop %v5318
      %v5320 = vmul.f32 %v5076, 1.442695
      %v5321 = vpow.pop %v5320
      %v5322 = vmul.f32 %v5077, 1.442695
      %v5323 = vpow.pop %v5322
      %v5324 = vmul.f32 %v5078, 1.442695
      %v5325 = vpow.pop %v5324
      %v5326 = vmul.f32 %v5079, 1.442695
      %v5327 = vpow.pop %v5326
      %v5328 = vmul.f32 %v5080, 1.442695
      %v5329 = vpow.pop %v5328
      %v5330 = vmul.f32 %v5081, 1.442695
      %v5331 = vpow.pop %v5330
      %v5332 = vmul.f32 %v5082, 1.442695
      %v5333 = vpow.pop %v5332
      %v5334 = vmul.f32 %v5083, 1.442695
      %v5335 = vpow.pop %v5334
      %v5336 = vmul.f32 %v5084, 1.442695
      %v5337 = vpow.pop %v5336
      %v5338 = vmul.f32 %v5085, 1.442695
      %v5339 = vpow.pop %v5338
      %v5340 = vmul.f32 %v5086, 1.442695
      %v5341 = vpow.pop %v5340
      %v5342 = vmul.f32 %v5087, 1.442695
      %v5343 = vpow.pop %v5342
      %v5344 = vmul.f32 %v5088, 1.442695
      %v5345 = vpow.pop %v5344
      %v5346 = vmul.f32 %v5089, 1.442695
      %v5347 = vpow.pop %v5346
      %v5348 = vmul.f32 %v5090, 1.442695
      %v5349 = vpow.pop %v5348
      %v5350 = vmul.f32 %v5091, 1.442695
      %v5351 = vpow.pop %v5350
      %v5352 = vmul.f32 %v5092, 1.442695
      %v5353 = vpow.pop %v5352
      %v5354 = vmul.f32 %v5093, 1.442695
      %v5355 = vpow.pop %v5354
      %v5356 = vmul.f32 %v5094, 1.442695
      %v5357 = vpow.pop %v5356
      %v5358 = vmul.f32 %v5095, 1.442695
      %v5359 = vpow.pop %v5358
      %v5360 = vmul.f32 %v5096, 1.442695
      %v5361 = vpow.pop %v5360
      %v5362 = vmul.f32 %v5097, 1.442695
      %v5363 = vpow.pop %v5362
      %v5364 = vmul.f32 %v5098, 1.442695
      %v5365 = vpow.pop %v5364
      %v5366 = vmul.f32 %v5099, 1.442695
      %v5367 = vpow.pop %v5366
      %v5368 = vmul.f32 %v5100, 1.442695
      %v5369 = vpow.pop %v5368
      %v5370 = vmul.f32 %v5101, 1.442695
      %v5371 = vpow.pop %v5370
      %v5372 = vmul.f32 %v5102, 1.442695
      %v5373 = vpow.pop %v5372
      %v5374 = vmul.f32 %v5103, 1.442695
      %v5375 = vpow.pop %v5374
      %v5376 = vmul.f32 %v5104, 1.442695
      %v5377 = vpow.pop %v5376
      %v5378 = vmul.f32 %v5105, 1.442695
      %v5379 = vpow.pop %v5378
      %v5380 = vmul.f32 %v5106, 1.442695
      %v5381 = vpow.pop %v5380
      %v5382 = vmul.f32 %v5107, 1.442695
      %v5383 = vpow.pop %v5382
      %v5384 = vmul.f32 %v5108, 1.442695
      %v5385 = vpow.pop %v5384
      %v5386 = vmul.f32 %v5109, 1.442695
      %v5387 = vpow.pop %v5386
      %v5388 = vmul.f32 %v5110, 1.442695
      %v5389 = vpow.pop %v5388
      %v5390 = vmul.f32 %v5111, 1.442695
      %v5391 = vpow.pop %v5390
      %v5392 = vmul.f32 %v5112, 1.442695
      %v5393 = vpow.pop %v5392
      %v5394 = vmul.f32 %v5113, 1.442695
      %v5395 = vpow.pop %v5394
      %v5396 = vmul.f32 %v5114, 1.442695
      %v5397 = vpow.pop %v5396
      %v5398 = vmul.f32 %v5115, 1.442695
      %v5399 = vpow.pop %v5398
      %v5400 = vmul.f32 %v5116, 1.442695
      %v5401 = vpow.pop %v5400
      %v5402 = vmul.f32 %v5117, 1.442695
      %v5403 = vpow.pop %v5402
      %v5404 = vmul.f32 %v5118, 1.442695
      %v5405 = vpow.pop %v5404
      %v5406 = vmul.f32 %v5119, 1.442695
      %v5407 = vpow.pop %v5406
      %v5408 = vmul.f32 %v5120, 1.442695
      %v5409 = vpow.pop %v5408
      %v5410 = vmul.f32 %v5121, 1.442695
      %v5411 = vpow.pop %v5410
      %v5412 = vmul.f32 %v5122, 1.442695
      %v5413 = vpow.pop %v5412
      %v5414 = vmul.f32 %v5123, 1.442695
      %v5415 = vpow.pop %v5414
      %v5416 = vmul.f32 %v5124, 1.442695
      %v5417 = vpow.pop %v5416
      %v5418 = vmul.f32 %v5125, 1.442695
      %v5419 = vpow.pop %v5418
      %v5420 = vmul.f32 %v5126, 1.442695
      %v5421 = vpow.pop %v5420
      %v5422 = vmul.f32 %v5127, 1.442695
      %v5423 = vpow.pop %v5422
      %v5424 = vmul.f32 %v5128, 1.442695
      %v5425 = vpow.pop %v5424
      %v5426 = vmul.f32 %v5129, 1.442695
      %v5427 = vpow.pop %v5426
      %v5428 = vmul.f32 %v5130, 1.442695
      %v5429 = vpow.pop %v5428
      %v5430 = vmul.f32 %v5131, 1.442695
      %v5431 = vpow.pop %v5430
      %v5432 = vmul.f32 %v5132, 1.442695
      %v5433 = vpow.pop %v5432
      %v5434 = vmul.f32 %v5133, 1.442695
      %v5435 = vpow.pop %v5434
      %v5436 = vmul.f32 %v5134, 1.442695
      %v5437 = vpow.pop %v5436
      %v5438 = vmul.f32 %v5135, 1.442695
      %v5439 = vpow.pop %v5438
      %v5440 = vmul.f32 %v5136, 1.442695
      %v5441 = vpow.pop %v5440
      %v5442 = vmul.f32 %v5137, 1.442695
      %v5443 = vpow.pop %v5442
      %v5444 = vmul.f32 %v5138, 1.442695
      %v5445 = vpow.pop %v5444
      %v5446 = vmul.f32 %v5139, 1.442695
      %v5447 = vpow.pop %v5446
      %v5448 = vmul.f32 %v5140, 1.442695
      %v5449 = vpow.pop %v5448
      %v5450 = vmul.f32 %v5141, 1.442695
      %v5451 = vpow.pop %v5450
      %v5452 = vmul.f32 %v5142, 1.442695
      %v5453 = vpow.pop %v5452
      %v5454 = vmul.f32 %v5143, 1.442695
      %v5455 = vpow.pop %v5454
      %v5456 = vmul.f32 %v5144, 1.442695
      %v5457 = vpow.pop %v5456
      %v5458 = vmul.f32 %v5145, 1.442695
      %v5459 = vpow.pop %v5458
      %v5460 = vmul.f32 %v5146, 1.442695
      %v5461 = vpow.pop %v5460
      %v5462 = vmul.f32 %v5147, 1.442695
      %v5463 = vpow.pop %v5462
      %v5464 = vmul.f32 %v5148, 1.442695
      %v5465 = vpow.pop %v5464
      %v5466 = vmul.f32 %v5149, 1.442695
      %v5467 = vpow.pop %v5466
      %v5468 = vmul.f32 %v5150, 1.442695
      %v5469 = vpow.pop %v5468
      %v5470 = vmul.f32 %v5151, 1.442695
      %v5471 = vpow.pop %v5470
      %v5472 = vmul.f32 %v5152, 1.442695
      %v5473 = vpow.pop %v5472
      %v5474 = vmul.f32 %v5153, 1.442695
      %v5475 = vpow.pop %v5474
      %v5476 = vmul.f32 %v5154, 1.442695
      %v5477 = vpow.pop %v5476
      %v5478 = vmul.f32 %v5155, 1.442695
      %v5479 = vpow.pop %v5478
      %v5480 = vmul.f32 %v5156, 1.442695
      %v5481 = vpow.pop %v5480
      %v5482 = vmul.f32 %v5157, 1.442695
      %v5483 = vpow.pop %v5482
      %v5484 = vmul.f32 %v5158, 1.442695
      %v5485 = vpow.pop %v5484
      %v5486 = vmul.f32 %v5159, 1.442695
      %v5487 = vpow.pop %v5486
      %v5488 = vmul.f32 %v5160, 1.442695
      %v5489 = vpow.pop %v5488
      %v5490 = vmul.f32 %v5161, 1.442695
      %v5491 = vpow.pop %v5490
      %v5492 = vmul.f32 %v5162, 1.442695
      %v5493 = vpow.pop %v5492
      %v5494 = vmul.f32 %v5163, 1.442695
      %v5495 = vpow.pop %v5494
      %v5496 = vmul.f32 %v5164, 1.442695
      %v5497 = vpow.pop %v5496
      %v5498 = vmul.f32 %v5165, 1.442695
      %v5499 = vpow.pop %v5498
      %v5500 = vmul.f32 %v5166, 1.442695
      %v5501 = vpow.pop %v5500
      %v5502 = vmul.f32 %v5167, 1.442695
      %v5503 = vpow.pop %v5502
      %v5504 = vmul.f32 %v5168, 1.442695
      %v5505 = vpow.pop %v5504
      %v5506 = vmul.f32 %v5169, 1.442695
      %v5507 = vpow.pop %v5506
      %v5508 = vmul.f32 %v5170, 1.442695
      %v5509 = vpow.pop %v5508
      %v5510 = vmul.f32 %v5171, 1.442695
      %v5511 = vpow.pop %v5510
      %v5512 = vmul.f32 %v5172, 1.442695
      %v5513 = vpow.pop %v5512
      %v5514 = vmul.f32 %v5173, 1.442695
      %v5515 = vpow.pop %v5514
      %v5516 = vmul.f32 %v5174, 1.442695
      %v5517 = vpow.pop %v5516
      %v5518 = vmul.f32 %v5175, 1.442695
      %v5519 = vpow.pop %v5518
      %v5520 = vmul.f32 %v5176, 1.442695
      %v5521 = vpow.pop %v5520
      %v5522 = vmul.f32 %v5177, 1.442695
      %v5523 = vpow.pop %v5522
      %v5524 = vmul.f32 %v5178, 1.442695
      %v5525 = vpow.pop %v5524
      %v5526 = vmul.f32 %v5179, 1.442695
      %v5527 = vpow.pop %v5526
      %v5528 = vmul.f32 %v5180, 1.442695
      %v5529 = vpow.pop %v5528
      %v5530 = vmul.f32 %v5181, 1.442695
      %v5531 = vpow.pop %v5530
      %v5532 = vmul.f32 %v5182, 1.442695
      %v5533 = vpow.pop %v5532
      %v5534 = vmul.f32 %v5183, 1.442695
      %v5535 = vpow.pop %v5534
      %v5536 = vmul.f32 %v5184, 1.442695
      %v5537 = vpow.pop %v5536
      %v5538 = vmul.f32 %v5185, 1.442695
      %v5539 = vpow.pop %v5538
      %v5540 = vmul.f32 %v5186, 1.442695
      %v5541 = vpow.pop %v5540
      %v5542 = vmul.f32 %v5187, 1.442695
      %v5543 = vpow.pop %v5542
      %v5544 = vmul.f32 %v5188, 1.442695
      %v5545 = vpow.pop %v5544
      %v5546 = vmul.f32 %v5189, 1.442695
      %v5547 = vpow.pop %v5546
      %v5548 = vmul.f32 %v5190, 1.442695
      %v5549 = vpow.pop %v5548
      %v5550 = vmul.f32 %v5191, 1.442695
      %v5551 = vpow.pop %v5550
      %v5552 = vmul.f32 %v5192, 1.442695
      %v5553 = vpow.pop %v5552
      %v5554 = vmul.f32 %v5193, 1.442695
      %v5555 = vpow.pop %v5554
      %v5556 = vmul.f32 %v5194, 1.442695
      %v5557 = vpow.pop %v5556
      %v5558 = vmul.f32 %v5195, 1.442695
      %v5559 = vpow.pop %v5558
      %v5560 = vmul.f32 %v5196, 1.442695
      %v5561 = vpow.pop %v5560
      %v5562 = vmul.f32 %v5197, 1.442695
      %v5563 = vpow.pop %v5562
      %v5564 = vmul.f32 %v5198, 1.442695
      %v5565 = vpow.pop %v5564
      %v5566 = vmul.f32 %v5199, 1.442695
      %v5567 = vpow.pop %v5566
      %v5568 = vmul.f32 %v5200, 1.442695
      %v5569 = vpow.pop %v5568
      %v5570 = vmul.f32 %v5201, 1.442695
      %v5571 = vpow.pop %v5570
      %v5572 = vmul.f32 %v5202, 1.442695
      %v5573 = vpow.pop %v5572
      %v5574 = vmul.f32 %v5203, 1.442695
      %v5575 = vpow.pop %v5574
      %v5576 = vmul.f32 %v5204, 1.442695
      %v5577 = vpow.pop %v5576
      %v5578 = vmul.f32 %v5205, 1.442695
      %v5579 = vpow.pop %v5578
      %v5580 = vmul.f32 %v5206, 1.442695
      %v5581 = vpow.pop %v5580
      %v5582 = vmul.f32 %v5207, 1.442695
      %v5583 = vpow.pop %v5582
      %v5584 = vmul.f32 %v5208, 1.442695
      %v5585 = vpow.pop %v5584
      %v5586 = vmul.f32 %v5209, 1.442695
      %v5587 = vpow.pop %v5586
      %v5588 = vmul.f32 %v5210, 1.442695
      %v5589 = vpow.pop %v5588
      %v5590 = vmul.f32 %v5211, 1.442695
      %v5591 = vpow.pop %v5590
      %v5592 = vmul.f32 %v5212, 1.442695
      %v5593 = vpow.pop %v5592
      %v5594 = vmul.f32 %v5213, 1.442695
      %v5595 = vpow.pop %v5594
      %v5596 = vmul.f32 %v5214, 1.442695
      %v5597 = vpow.pop %v5596
      %v5598 = vmul.f32 %v5215, 1.442695
      %v5599 = vpow.pop %v5598
      %v5600 = vmul.f32 %v5216, 1.442695
      %v5601 = vpow.pop %v5600
      %v5602 = vmul.f32 %v5217, 1.442695
      %v5603 = vpow.pop %v5602
      %v5604 = vmul.f32 %v5218, 1.442695
      %v5605 = vpow.pop %v5604
      %v5606 = vmul.f32 %v5219, 1.442695
      %v5607 = vpow.pop %v5606
      %v5608 = vmul.f32 %v5220, 1.442695
      %v5609 = vpow.pop %v5608
      %v5610 = vmul.f32 %v5221, 1.442695
      %v5611 = vpow.pop %v5610
      %v5612 = vmul.f32 %v5222, 1.442695
      %v5613 = vpow.pop %v5612
      %v5614 = vmul.f32 %v5223, 1.442695
      %v5615 = vpow.pop %v5614
      %v5616 = vmul.f32 %v5224, 1.442695
      %v5617 = vpow.pop %v5616
      %v5618 = vmul.f32 %v5225, 1.442695
      %v5619 = vpow.pop %v5618
      %v5620 = vmul.f32 %v5226, 1.442695
      %v5621 = vpow.pop %v5620
      %v5622 = vmul.f32 %v5227, 1.442695
      %v5623 = vpow.pop %v5622
      %v5624 = vmul.f32 %v5228, 1.442695
      %v5625 = vpow.pop %v5624
      %v5626 = vmul.f32 %v5229, 1.442695
      %v5627 = vpow.pop %v5626
      %v5628 = vmul.f32 %v5230, 1.442695
      %v5629 = vpow.pop %v5628
      %v5630 = vmul.f32 %v5231, 1.442695
      %v5631 = vpow.pop %v5630
      %v5632 = vmul.f32 %v5232, 1.442695
      %v5633 = vpow.pop %v5632
      %v5634 = vmul.f32 %v5233, 1.442695
      %v5635 = vpow.pop %v5634
      %v5636 = vmul.f32 %v5234, 1.442695
      %v5637 = vpow.pop %v5636
      %v5638 = vmul.f32 %v5235, 1.442695
      %v5639 = vpow.pop %v5638
      %v5640 = vmul.f32 %v5236, 1.442695
      %v5641 = vpow.pop %v5640
      %v5642 = vmul.f32 %v5237, 1.442695
      %v5643 = vpow.pop %v5642
      %v5644 = vmul.f32 %v5238, 1.442695
      %v5645 = vpow.pop %v5644
      %v5646 = vmul.f32 %v5239, 1.442695
      %v5647 = vpow.pop %v5646
      %v5648 = vmul.f32 %v5240, 1.442695
      %v5649 = vpow.pop %v5648
      %v5650 = vmul.f32 %v5241, 1.442695
      %v5651 = vpow.pop %v5650
      %v5652 = vmul.f32 %v5242, 1.442695
      %v5653 = vpow.pop %v5652
      %v5654 = vmul.f32 %v5243, 1.442695
      %v5655 = vpow.pop %v5654
      %v5656 = vmul.f32 %v5244, 1.442695
      %v5657 = vpow.pop %v5656
      %v5658 = vmul.f32 %v5245, 1.442695
      %v5659 = vpow.pop %v5658
      %v5660 = vmul.f32 %v5246, 1.442695
      %v5661 = vpow.pop %v5660
      %v5662 = vmul.f32 %v5247, 1.442695
      %v5663 = vpow.pop %v5662
      %v5664 = vmul.f32 %v5248, 1.442695
      %v5665 = vpow.pop %v5664
      %v5666 = vmul.f32 %v5249, 1.442695
      %v5667 = vpow.pop %v5666
      %v5668 = vmul.f32 %v5250, 1.442695
      %v5669 = vpow.pop %v5668
      %v5670 = vmul.f32 %v5251, 1.442695
      %v5671 = vpow.pop %v5670
      %v5672 = vmul.f32 %v5252, 1.442695
      %v5673 = vpow.pop %v5672
      %v5674 = vmul.f32 %v5253, 1.442695
      %v5675 = vpow.pop %v5674
      %v5676 = vmul.f32 %v5254, 1.442695
      %v5677 = vpow.pop %v5676
      %v5678 = vmul.f32 %v5255, 1.442695
      %v5679 = vpow.pop %v5678
      %v5680 = vmul.f32 %v5256, 1.442695
      %v5681 = vpow.pop %v5680
      %v5682 = vmul.f32 %v5257, 1.442695
      %v5683 = vpow.pop %v5682
      %v5684 = vmul.f32 %v5258, 1.442695
      %v5685 = vpow.pop %v5684
      %v5686 = vmul.f32 %v5259, 1.442695
      %v5687 = vpow.pop %v5686
      %v5688 = vmul.f32 %v5260, 1.442695
      %v5689 = vpow.pop %v5688
      %v5690 = vmul.f32 %v5261, 1.442695
      %v5691 = vpow.pop %v5690
      %v5692 = vmul.f32 %v5262, 1.442695
      %v5693 = vpow.pop %v5692
      %v5694 = vmul.f32 %v5263, 1.442695
      %v5695 = vpow.pop %v5694
      %v5696 = vmul.f32 %v5264, 1.442695
      %v5697 = vpow.pop %v5696
      %v5698 = vmul.f32 %v5265, 1.442695
      %v5699 = vpow.pop %v5698
      %v5700 = vmul.f32 %v5266, 1.442695
      %v5701 = vpow.pop %v5700
      %v5702 = vmul.f32 %v5267, 1.442695
      %v5703 = vpow.pop %v5702
      %v5704 = vmul.f32 %v5268, 1.442695
      %v5705 = vpow.pop %v5704
      %v5706 = vmul.f32 %v5269, 1.442695
      %v5707 = vpow.pop %v5706
      %v5708 = vmul.f32 %v5270, 1.442695
      %v5709 = vpow.pop %v5708
      %v5710 = vmul.f32 %v5271, 1.442695
      %v5711 = vpow.pop %v5710
      %v5712 = vmul.f32 %v5272, 1.442695
      %v5713 = vpow.pop %v5712
      %v5714 = vmul.f32 %v5273, 1.442695
      %v5715 = vpow.pop %v5714
      %v5716 = vmul.f32 %v5274, 1.442695
      %v5717 = vpow.pop %v5716
      %v5718 = vmul.f32 %v5275, 1.442695
      %v5719 = vpow.pop %v5718
      %v5720 = vmul.f32 %v5276, 1.442695
      %v5721 = vpow.pop %v5720
      %v5722 = vmul.f32 %v5277, 1.442695
      %v5723 = vpow.pop %v5722
      %v5724 = vmul.f32 %v5278, 1.442695
      %v5725 = vpow.pop %v5724
      %v5726 = vmul.f32 %v5279, 1.442695
      %v5727 = vpow.pop %v5726
      %v5728 = vadd.f32 %v5281, 1.0
      %v5729 = vadd.f32 %v5283, 1.0
      %v5730 = vadd.f32 %v5285, 1.0
      %v5731 = vadd.f32 %v5287, 1.0
      %v5732 = vadd.f32 %v5289, 1.0
      %v5733 = vadd.f32 %v5291, 1.0
      %v5734 = vadd.f32 %v5293, 1.0
      %v5735 = vadd.f32 %v5295, 1.0
      %v5736 = vadd.f32 %v5297, 1.0
      %v5737 = vadd.f32 %v5299, 1.0
      %v5738 = vadd.f32 %v5301, 1.0
      %v5739 = vadd.f32 %v5303, 1.0
      %v5740 = vadd.f32 %v5305, 1.0
      %v5741 = vadd.f32 %v5307, 1.0
      %v5742 = vadd.f32 %v5309, 1.0
      %v5743 = vadd.f32 %v5311, 1.0
      %v5744 = vadd.f32 %v5313, 1.0
      %v5745 = vadd.f32 %v5315, 1.0
      %v5746 = vadd.f32 %v5317, 1.0
      %v5747 = vadd.f32 %v5319, 1.0
      %v5748 = vadd.f32 %v5321, 1.0
      %v5749 = vadd.f32 %v5323, 1.0
      %v5750 = vadd.f32 %v5325, 1.0
      %v5751 = vadd.f32 %v5327, 1.0
      %v5752 = vadd.f32 %v5329, 1.0
      %v5753 = vadd.f32 %v5331, 1.0
      %v5754 = vadd.f32 %v5333, 1.0
      %v5755 = vadd.f32 %v5335, 1.0
      %v5756 = vadd.f32 %v5337, 1.0
      %v5757 = vadd.f32 %v5339, 1.0
      %v5758 = vadd.f32 %v5341, 1.0
      %v5759 = vadd.f32 %v5343, 1.0
      %v5760 = vadd.f32 %v5345, 1.0
      %v5761 = vadd.f32 %v5347, 1.0
      %v5762 = vadd.f32 %v5349, 1.0
      %v5763 = vadd.f32 %v5351, 1.0
      %v5764 = vadd.f32 %v5353, 1.0
      %v5765 = vadd.f32 %v5355, 1.0
      %v5766 = vadd.f32 %v5357, 1.0
      %v5767 = vadd.f32 %v5359, 1.0
      %v5768 = vadd.f32 %v5361, 1.0
      %v5769 = vadd.f32 %v5363, 1.0
      %v5770 = vadd.f32 %v5365, 1.0
      %v5771 = vadd.f32 %v5367, 1.0
      %v5772 = vadd.f32 %v5369, 1.0
      %v5773 = vadd.f32 %v5371, 1.0
      %v5774 = vadd.f32 %v5373, 1.0
      %v5775 = vadd.f32 %v5375, 1.0
      %v5776 = vadd.f32 %v5377, 1.0
      %v5777 = vadd.f32 %v5379, 1.0
      %v5778 = vadd.f32 %v5381, 1.0
      %v5779 = vadd.f32 %v5383, 1.0
      %v5780 = vadd.f32 %v5385, 1.0
      %v5781 = vadd.f32 %v5387, 1.0
      %v5782 = vadd.f32 %v5389, 1.0
      %v5783 = vadd.f32 %v5391, 1.0
      %v5784 = vadd.f32 %v5393, 1.0
      %v5785 = vadd.f32 %v5395, 1.0
      %v5786 = vadd.f32 %v5397, 1.0
      %v5787 = vadd.f32 %v5399, 1.0
      %v5788 = vadd.f32 %v5401, 1.0
      %v5789 = vadd.f32 %v5403, 1.0
      %v5790 = vadd.f32 %v5405, 1.0
      %v5791 = vadd.f32 %v5407, 1.0
      %v5792 = vadd.f32 %v5409, 1.0
      %v5793 = vadd.f32 %v5411, 1.0
      %v5794 = vadd.f32 %v5413, 1.0
      %v5795 = vadd.f32 %v5415, 1.0
      %v5796 = vadd.f32 %v5417, 1.0
      %v5797 = vadd.f32 %v5419, 1.0
      %v5798 = vadd.f32 %v5421, 1.0
      %v5799 = vadd.f32 %v5423, 1.0
      %v5800 = vadd.f32 %v5425, 1.0
      %v5801 = vadd.f32 %v5427, 1.0
      %v5802 = vadd.f32 %v5429, 1.0
      %v5803 = vadd.f32 %v5431, 1.0
      %v5804 = vadd.f32 %v5433, 1.0
      %v5805 = vadd.f32 %v5435, 1.0
      %v5806 = vadd.f32 %v5437, 1.0
      %v5807 = vadd.f32 %v5439, 1.0
      %v5808 = vadd.f32 %v5441, 1.0
      %v5809 = vadd.f32 %v5443, 1.0
      %v5810 = vadd.f32 %v5445, 1.0
      %v5811 = vadd.f32 %v5447, 1.0
      %v5812 = vadd.f32 %v5449, 1.0
      %v5813 = vadd.f32 %v5451, 1.0
      %v5814 = vadd.f32 %v5453, 1.0
      %v5815 = vadd.f32 %v5455, 1.0
      %v5816 = vadd.f32 %v5457, 1.0
      %v5817 = vadd.f32 %v5459, 1.0
      %v5818 = vadd.f32 %v5461, 1.0
      %v5819 = vadd.f32 %v5463, 1.0
      %v5820 = vadd.f32 %v5465, 1.0
      %v5821 = vadd.f32 %v5467, 1.0
      %v5822 = vadd.f32 %v5469, 1.0
      %v5823 = vadd.f32 %v5471, 1.0
      %v5824 = vadd.f32 %v5473, 1.0
      %v5825 = vadd.f32 %v5475, 1.0
      %v5826 = vadd.f32 %v5477, 1.0
      %v5827 = vadd.f32 %v5479, 1.0
      %v5828 = vadd.f32 %v5481, 1.0
      %v5829 = vadd.f32 %v5483, 1.0
      %v5830 = vadd.f32 %v5485, 1.0
      %v5831 = vadd.f32 %v5487, 1.0
      %v5832 = vadd.f32 %v5489, 1.0
      %v5833 = vadd.f32 %v5491, 1.0
      %v5834 = vadd.f32 %v5493, 1.0
      %v5835 = vadd.f32 %v5495, 1.0
      %v5836 = vadd.f32 %v5497, 1.0
      %v5837 = vadd.f32 %v5499, 1.0
      %v5838 = vadd.f32 %v5501, 1.0
      %v5839 = vadd.f32 %v5503, 1.0
      %v5840 = vadd.f32 %v5505, 1.0
      %v5841 = vadd.f32 %v5507, 1.0
      %v5842 = vadd.f32 %v5509, 1.0
      %v5843 = vadd.f32 %v5511, 1.0
      %v5844 = vadd.f32 %v5513, 1.0
      %v5845 = vadd.f32 %v5515, 1.0
      %v5846 = vadd.f32 %v5517, 1.0
      %v5847 = vadd.f32 %v5519, 1.0
      %v5848 = vadd.f32 %v5521, 1.0
      %v5849 = vadd.f32 %v5523, 1.0
      %v5850 = vadd.f32 %v5525, 1.0
      %v5851 = vadd.f32 %v5527, 1.0
      %v5852 = vadd.f32 %v5529, 1.0
      %v5853 = vadd.f32 %v5531, 1.0
      %v5854 = vadd.f32 %v5533, 1.0
      %v5855 = vadd.f32 %v5535, 1.0
      %v5856 = vadd.f32 %v5537, 1.0
      %v5857 = vadd.f32 %v5539, 1.0
      %v5858 = vadd.f32 %v5541, 1.0
      %v5859 = vadd.f32 %v5543, 1.0
      %v5860 = vadd.f32 %v5545, 1.0
      %v5861 = vadd.f32 %v5547, 1.0
      %v5862 = vadd.f32 %v5549, 1.0
      %v5863 = vadd.f32 %v5551, 1.0
      %v5864 = vadd.f32 %v5553, 1.0
      %v5865 = vadd.f32 %v5555, 1.0
      %v5866 = vadd.f32 %v5557, 1.0
      %v5867 = vadd.f32 %v5559, 1.0
      %v5868 = vadd.f32 %v5561, 1.0
      %v5869 = vadd.f32 %v5563, 1.0
      %v5870 = vadd.f32 %v5565, 1.0
      %v5871 = vadd.f32 %v5567, 1.0
      %v5872 = vadd.f32 %v5569, 1.0
      %v5873 = vadd.f32 %v5571, 1.0
      %v5874 = vadd.f32 %v5573, 1.0
      %v5875 = vadd.f32 %v5575, 1.0
      %v5876 = vadd.f32 %v5577, 1.0
      %v5877 = vadd.f32 %v5579, 1.0
      %v5878 = vadd.f32 %v5581, 1.0
      %v5879 = vadd.f32 %v5583, 1.0
      %v5880 = vadd.f32 %v5585, 1.0
      %v5881 = vadd.f32 %v5587, 1.0
      %v5882 = vadd.f32 %v5589, 1.0
      %v5883 = vadd.f32 %v5591, 1.0
      %v5884 = vadd.f32 %v5593, 1.0
      %v5885 = vadd.f32 %v5595, 1.0
      %v5886 = vadd.f32 %v5597, 1.0
      %v5887 = vadd.f32 %v5599, 1.0
      %v5888 = vadd.f32 %v5601, 1.0
      %v5889 = vadd.f32 %v5603, 1.0
      %v5890 = vadd.f32 %v5605, 1.0
      %v5891 = vadd.f32 %v5607, 1.0
      %v5892 = vadd.f32 %v5609, 1.0
      %v5893 = vadd.f32 %v5611, 1.0
      %v5894 = vadd.f32 %v5613, 1.0
      %v5895 = vadd.f32 %v5615, 1.0
      %v5896 = vadd.f32 %v5617, 1.0
      %v5897 = vadd.f32 %v5619, 1.0
      %v5898 = vadd.f32 %v5621, 1.0
      %v5899 = vadd.f32 %v5623, 1.0
      %v5900 = vadd.f32 %v5625, 1.0
      %v5901 = vadd.f32 %v5627, 1.0
      %v5902 = vadd.f32 %v5629, 1.0
      %v5903 = vadd.f32 %v5631, 1.0
      %v5904 = vadd.f32 %v5633, 1.0
      %v5905 = vadd.f32 %v5635, 1.0
      %v5906 = vadd.f32 %v5637, 1.0
      %v5907 = vadd.f32 %v5639, 1.0
      %v5908 = vadd.f32 %v5641, 1.0
      %v5909 = vadd.f32 %v5643, 1.0
      %v5910 = vadd.f32 %v5645, 1.0
      %v5911 = vadd.f32 %v5647, 1.0
      %v5912 = vadd.f32 %v5649, 1.0
      %v5913 = vadd.f32 %v5651, 1.0
      %v5914 = vadd.f32 %v5653, 1.0
      %v5915 = vadd.f32 %v5655, 1.0
      %v5916 = vadd.f32 %v5657, 1.0
      %v5917 = vadd.f32 %v5659, 1.0
      %v5918 = vadd.f32 %v5661, 1.0
      %v5919 = vadd.f32 %v5663, 1.0
      %v5920 = vadd.f32 %v5665, 1.0
      %v5921 = vadd.f32 %v5667, 1.0
      %v5922 = vadd.f32 %v5669, 1.0
      %v5923 = vadd.f32 %v5671, 1.0
      %v5924 = vadd.f32 %v5673, 1.0
      %v5925 = vadd.f32 %v5675, 1.0
      %v5926 = vadd.f32 %v5677, 1.0
      %v5927 = vadd.f32 %v5679, 1.0
      %v5928 = vadd.f32 %v5681, 1.0
      %v5929 = vadd.f32 %v5683, 1.0
      %v5930 = vadd.f32 %v5685, 1.0
      %v5931 = vadd.f32 %v5687, 1.0
      %v5932 = vadd.f32 %v5689, 1.0
      %v5933 = vadd.f32 %v5691, 1.0
      %v5934 = vadd.f32 %v5693, 1.0
      %v5935 = vadd.f32 %v5695, 1.0
      %v5936 = vadd.f32 %v5697, 1.0
      %v5937 = vadd.f32 %v5699, 1.0
      %v5938 = vadd.f32 %v5701, 1.0
      %v5939 = vadd.f32 %v5703, 1.0
      %v5940 = vadd.f32 %v5705, 1.0
      %v5941 = vadd.f32 %v5707, 1.0
      %v5942 = vadd.f32 %v5709, 1.0
      %v5943 = vadd.f32 %v5711, 1.0
      %v5944 = vadd.f32 %v5713, 1.0
      %v5945 = vadd.f32 %v5715, 1.0
      %v5946 = vadd.f32 %v5717, 1.0
      %v5947 = vadd.f32 %v5719, 1.0
      %v5948 = vadd.f32 %v5721, 1.0
      %v5949 = vadd.f32 %v5723, 1.0
      %v5950 = vadd.f32 %v5725, 1.0
      %v5951 = vadd.f32 %v5727, 1.0
      %v5952 = vrcp.pop %v5728
      %v5953 = vrcp.pop %v5729
      %v5954 = vrcp.pop %v5730
      %v5955 = vrcp.pop %v5731
      %v5956 = vrcp.pop %v5732
      %v5957 = vrcp.pop %v5733
      %v5958 = vrcp.pop %v5734
      %v5959 = vrcp.pop %v5735
      %v5960 = vrcp.pop %v5736
      %v5961 = vrcp.pop %v5737
      %v5962 = vrcp.pop %v5738
      %v5963 = vrcp.pop %v5739
      %v5964 = vrcp.pop %v5740
      %v5965 = vrcp.pop %v5741
      %v5966 = vrcp.pop %v5742
      %v5967 = vrcp.pop %v5743
      %v5968 = vrcp.pop %v5744
      %v5969 = vrcp.pop %v5745
      %v5970 = vrcp.pop %v5746
      %v5971 = vrcp.pop %v5747
      %v5972 = vrcp.pop %v5748
      %v5973 = vrcp.pop %v5749
      %v5974 = vrcp.pop %v5750
      %v5975 = vrcp.pop %v5751
      %v5976 = vrcp.pop %v5752
      %v5977 = vrcp.pop %v5753
      %v5978 = vrcp.pop %v5754
      %v5979 = vrcp.pop %v5755
      %v5980 = vrcp.pop %v5756
      %v5981 = vrcp.pop %v5757
      %v5982 = vrcp.pop %v5758
      %v5983 = vrcp.pop %v5759
      %v5984 = vrcp.pop %v5760
      %v5985 = vrcp.pop %v5761
      %v5986 = vrcp.pop %v5762
      %v5987 = vrcp.pop %v5763
      %v5988 = vrcp.pop %v5764
      %v5989 = vrcp.pop %v5765
      %v5990 = vrcp.pop %v5766
      %v5991 = vrcp.pop %v5767
      %v5992 = vrcp.pop %v5768
      %v5993 = vrcp.pop %v5769
      %v5994 = vrcp.pop %v5770
      %v5995 = vrcp.pop %v5771
      %v5996 = vrcp.pop %v5772
      %v5997 = vrcp.pop %v5773
      %v5998 = vrcp.pop %v5774
      %v5999 = vrcp.pop %v5775
      %v6000 = vrcp.pop %v5776
      %v6001 = vrcp.pop %v5777
      %v6002 = vrcp.pop %v5778
      %v6003 = vrcp.pop %v5779
      %v6004 = vrcp.pop %v5780
      %v6005 = vrcp.pop %v5781
      %v6006 = vrcp.pop %v5782
      %v6007 = vrcp.pop %v5783
      %v6008 = vrcp.pop %v5784
      %v6009 = vrcp.pop %v5785
      %v6010 = vrcp.pop %v5786
      %v6011 = vrcp.pop %v5787
      %v6012 = vrcp.pop %v5788
      %v6013 = vrcp.pop %v5789
      %v6014 = vrcp.pop %v5790
      %v6015 = vrcp.pop %v5791
      %v6016 = vrcp.pop %v5792
      %v6017 = vrcp.pop %v5793
      %v6018 = vrcp.pop %v5794
      %v6019 = vrcp.pop %v5795
      %v6020 = vrcp.pop %v5796
      %v6021 = vrcp.pop %v5797
      %v6022 = vrcp.pop %v5798
      %v6023 = vrcp.pop %v5799
      %v6024 = vrcp.pop %v5800
      %v6025 = vrcp.pop %v5801
      %v6026 = vrcp.pop %v5802
      %v6027 = vrcp.pop %v5803
      %v6028 = vrcp.pop %v5804
      %v6029 = vrcp.pop %v5805
      %v6030 = vrcp.pop %v5806
      %v6031 = vrcp.pop %v5807
      %v6032 = vrcp.pop %v5808
      %v6033 = vrcp.pop %v5809
      %v6034 = vrcp.pop %v5810
      %v6035 = vrcp.pop %v5811
      %v6036 = vrcp.pop %v5812
      %v6037 = vrcp.pop %v5813
      %v6038 = vrcp.pop %v5814
      %v6039 = vrcp.pop %v5815
      %v6040 = vrcp.pop %v5816
      %v6041 = vrcp.pop %v5817
      %v6042 = vrcp.pop %v5818
      %v6043 = vrcp.pop %v5819
      %v6044 = vrcp.pop %v5820
      %v6045 = vrcp.pop %v5821
      %v6046 = vrcp.pop %v5822
      %v6047 = vrcp.pop %v5823
      %v6048 = vrcp.pop %v5824
      %v6049 = vrcp.pop %v5825
      %v6050 = vrcp.pop %v5826
      %v6051 = vrcp.pop %v5827
      %v6052 = vrcp.pop %v5828
      %v6053 = vrcp.pop %v5829
      %v6054 = vrcp.pop %v5830
      %v6055 = vrcp.pop %v5831
      %v6056 = vrcp.pop %v5832
      %v6057 = vrcp.pop %v5833
      %v6058 = vrcp.pop %v5834
      %v6059 = vrcp.pop %v5835
      %v6060 = vrcp.pop %v5836
      %v6061 = vrcp.pop %v5837
      %v6062 = vrcp.pop %v5838
      %v6063 = vrcp.pop %v5839
      %v6064 = vrcp.pop %v5840
      %v6065 = vrcp.pop %v5841
      %v6066 = vrcp.pop %v5842
      %v6067 = vrcp.pop %v5843
      %v6068 = vrcp.pop %v5844
      %v6069 = vrcp.pop %v5845
      %v6070 = vrcp.pop %v5846
      %v6071 = vrcp.pop %v5847
      %v6072 = vrcp.pop %v5848
      %v6073 = vrcp.pop %v5849
      %v6074 = vrcp.pop %v5850
      %v6075 = vrcp.pop %v5851
      %v6076 = vrcp.pop %v5852
      %v6077 = vrcp.pop %v5853
      %v6078 = vrcp.pop %v5854
      %v6079 = vrcp.pop %v5855
      %v6080 = vrcp.pop %v5856
      %v6081 = vrcp.pop %v5857
      %v6082 = vrcp.pop %v5858
      %v6083 = vrcp.pop %v5859
      %v6084 = vrcp.pop %v5860
      %v6085 = vrcp.pop %v5861
      %v6086 = vrcp.pop %v5862
      %v6087 = vrcp.pop %v5863
      %v6088 = vrcp.pop %v5864
      %v6089 = vrcp.pop %v5865
      %v6090 = vrcp.pop %v5866
      %v6091 = vrcp.pop %v5867
      %v6092 = vrcp.pop %v5868
      %v6093 = vrcp.pop %v5869
      %v6094 = vrcp.pop %v5870
      %v6095 = vrcp.pop %v5871
      %v6096 = vrcp.pop %v5872
      %v6097 = vrcp.pop %v5873
      %v6098 = vrcp.pop %v5874
      %v6099 = vrcp.pop %v5875
      %v6100 = vrcp.pop %v5876
      %v6101 = vrcp.pop %v5877
      %v6102 = vrcp.pop %v5878
      %v6103 = vrcp.pop %v5879
      %v6104 = vrcp.pop %v5880
      %v6105 = vrcp.pop %v5881
      %v6106 = vrcp.pop %v5882
      %v6107 = vrcp.pop %v5883
      %v6108 = vrcp.pop %v5884
      %v6109 = vrcp.pop %v5885
      %v6110 = vrcp.pop %v5886
      %v6111 = vrcp.pop %v5887
      %v6112 = vrcp.pop %v5888
      %v6113 = vrcp.pop %v5889
      %v6114 = vrcp.pop %v5890
      %v6115 = vrcp.pop %v5891
      %v6116 = vrcp.pop %v5892
      %v6117 = vrcp.pop %v5893
      %v6118 = vrcp.pop %v5894
      %v6119 = vrcp.pop %v5895
      %v6120 = vrcp.pop %v5896
      %v6121 = vrcp.pop %v5897
      %v6122 = vrcp.pop %v5898
      %v6123 = vrcp.pop %v5899
      %v6124 = vrcp.pop %v5900
      %v6125 = vrcp.pop %v5901
      %v6126 = vrcp.pop %v5902
      %v6127 = vrcp.pop %v5903
      %v6128 = vrcp.pop %v5904
      %v6129 = vrcp.pop %v5905
      %v6130 = vrcp.pop %v5906
      %v6131 = vrcp.pop %v5907
      %v6132 = vrcp.pop %v5908
      %v6133 = vrcp.pop %v5909
      %v6134 = vrcp.pop %v5910
      %v6135 = vrcp.pop %v5911
      %v6136 = vrcp.pop %v5912
      %v6137 = vrcp.pop %v5913
      %v6138 = vrcp.pop %v5914
      %v6139 = vrcp.pop %v5915
      %v6140 = vrcp.pop %v5916
      %v6141 = vrcp.pop %v5917
      %v6142 = vrcp.pop %v5918
      %v6143 = vrcp.pop %v5919
      %v6144 = vrcp.pop %v5920
      %v6145 = vrcp.pop %v5921
      %v6146 = vrcp.pop %v5922
      %v6147 = vrcp.pop %v5923
      %v6148 = vrcp.pop %v5924
      %v6149 = vrcp.pop %v5925
      %v6150 = vrcp.pop %v5926
      %v6151 = vrcp.pop %v5927
      %v6152 = vrcp.pop %v5928
      %v6153 = vrcp.pop %v5929
      %v6154 = vrcp.pop %v5930
      %v6155 = vrcp.pop %v5931
      %v6156 = vrcp.pop %v5932
      %v6157 = vrcp.pop %v5933
      %v6158 = vrcp.pop %v5934
      %v6159 = vrcp.pop %v5935
      %v6160 = vrcp.pop %v5936
      %v6161 = vrcp.pop %v5937
      %v6162 = vrcp.pop %v5938
      %v6163 = vrcp.pop %v5939
      %v6164 = vrcp.pop %v5940
      %v6165 = vrcp.pop %v5941
      %v6166 = vrcp.pop %v5942
      %v6167 = vrcp.pop %v5943
      %v6168 = vrcp.pop %v5944
      %v6169 = vrcp.pop %v5945
      %v6170 = vrcp.pop %v5946
      %v6171 = vrcp.pop %v5947
      %v6172 = vrcp.pop %v5948
      %v6173 = vrcp.pop %v5949
      %v6174 = vrcp.pop %v5950
      %v6175 = vrcp.pop %v5951
      %6176 = vst [vmem:[%s231] sm:$0xff] %v5952
      %6177 = vst [vmem:[%s231 + $0x8] sm:$0xff] %v5953
      %6178 = vst [vmem:[%s231 + $0x10] sm:$0xff] %v5954
      %6179 = vst [vmem:[%s231 + $0x18] sm:$0xff] %v5955
      %6180 = vst [vmem:[%s231 + $0x20] sm:$0xff] %v5956
      %6181 = vst [vmem:[%s231 + $0x28] sm:$0xff] %v5957
      %6182 = vst [vmem:[%s231 + $0x30] sm:$0xff] %v5958
      %6183 = vst [vmem:[%s231 + $0x38] sm:$0xff] %v5959
      %6184 = vst [vmem:[%s231 + $0x40] sm:$0xff] %v5960
      %6185 = vst [vmem:[%s231 + $0x48] sm:$0xff] %v5961
      %6186 = vst [vmem:[%s231 + $0x50] sm:$0xff] %v5962
      %6187 = vst [vmem:[%s231 + $0x58] sm:$0xff] %v5963
      %6188 = vst [vmem:[%s231 + $0x60] sm:$0xff] %v5964
      %6189 = vst.msk [vmem:[%s231 + $0x68] sm:$0xff] %vm1848, %v5965
      %6190 = vst [vmem:[%s231 + $0x70] sm:$0xff] %v5966
      %6191 = vst [vmem:[%s231 + $0x78] sm:$0xff] %v5967
      %6192 = vst [vmem:[%s231 + $0x80] sm:$0xff] %v5968
      %6193 = vst [vmem:[%s231 + $0x88] sm:$0xff] %v5969
      %6194 = vst [vmem:[%s231 + $0x90] sm:$0xff] %v5970
      %6195 = vst [vmem:[%s231 + $0x98] sm:$0xff] %v5971
      %6196 = vst [vmem:[%s231 + $0xa0] sm:$0xff] %v5972
      %6197 = vst [vmem:[%s231 + $0xa8] sm:$0xff] %v5973
      %6198 = vst [vmem:[%s231 + $0xb0] sm:$0xff] %v5974
      %6199 = vst [vmem:[%s231 + $0xb8] sm:$0xff] %v5975
      %6200 = vst [vmem:[%s231 + $0xc0] sm:$0xff] %v5976
      %6201 = vst [vmem:[%s231 + $0xc8] sm:$0xff] %v5977
      %6202 = vst [vmem:[%s231 + $0xd0] sm:$0xff] %v5978
      %6203 = vst.msk [vmem:[%s231 + $0xd8] sm:$0xff] %vm1848, %v5979
      %6204 = vst [vmem:[%s231 + $0xe0] sm:$0xff] %v5980
      %6205 = vst [vmem:[%s231 + $0xe8] sm:$0xff] %v5981
      %6206 = vst [vmem:[%s231 + $0xf0] sm:$0xff] %v5982
      %6207 = vst [vmem:[%s231 + $0xf8] sm:$0xff] %v5983
      %6208 = vst [vmem:[%s231 + $0x100] sm:$0xff] %v5984
      %6209 = vst [vmem:[%s231 + $0x108] sm:$0xff] %v5985
      %6210 = vst [vmem:[%s231 + $0x110] sm:$0xff] %v5986
      %6211 = vst [vmem:[%s231 + $0x118] sm:$0xff] %v5987
      %6212 = vst [vmem:[%s231 + $0x120] sm:$0xff] %v5988
      %6213 = vst [vmem:[%s231 + $0x128] sm:$0xff] %v5989
      %6214 = vst [vmem:[%s231 + $0x130] sm:$0xff] %v5990
      %6215 = vst [vmem:[%s231 + $0x138] sm:$0xff] %v5991
      %6216 = vst [vmem:[%s231 + $0x140] sm:$0xff] %v5992
      %6217 = vst.msk [vmem:[%s231 + $0x148] sm:$0xff] %vm1848, %v5993
      %6218 = vst [vmem:[%s231 + $0x150] sm:$0xff] %v5994
      %6219 = vst [vmem:[%s231 + $0x158] sm:$0xff] %v5995
      %6220 = vst [vmem:[%s231 + $0x160] sm:$0xff] %v5996
      %6221 = vst [vmem:[%s231 + $0x168] sm:$0xff] %v5997
      %6222 = vst [vmem:[%s231 + $0x170] sm:$0xff] %v5998
      %6223 = vst [vmem:[%s231 + $0x178] sm:$0xff] %v5999
      %6224 = vst [vmem:[%s231 + $0x180] sm:$0xff] %v6000
      %6225 = vst [vmem:[%s231 + $0x188] sm:$0xff] %v6001
      %6226 = vst [vmem:[%s231 + $0x190] sm:$0xff] %v6002
      %6227 = vst [vmem:[%s231 + $0x198] sm:$0xff] %v6003
      %6228 = vst [vmem:[%s231 + $0x1a0] sm:$0xff] %v6004
      %6229 = vst [vmem:[%s231 + $0x1a8] sm:$0xff] %v6005
      %6230 = vst [vmem:[%s231 + $0x1b0] sm:$0xff] %v6006
      %6231 = vst.msk [vmem:[%s231 + $0x1b8] sm:$0xff] %vm1848, %v6007
      %6232 = vst [vmem:[%s231 + $0x1c0] sm:$0xff] %v6008
      %6233 = vst [vmem:[%s231 + $0x1c8] sm:$0xff] %v6009
      %6234 = vst [vmem:[%s231 + $0x1d0] sm:$0xff] %v6010
      %6235 = vst [vmem:[%s231 + $0x1d8] sm:$0xff] %v6011
      %6236 = vst [vmem:[%s231 + $0x1e0] sm:$0xff] %v6012
      %6237 = vst [vmem:[%s231 + $0x1e8] sm:$0xff] %v6013
      %6238 = vst [vmem:[%s231 + $0x1f0] sm:$0xff] %v6014
      %6239 = vst [vmem:[%s231 + $0x1f8] sm:$0xff] %v6015
      %6240 = vst [vmem:[%s231 + $0x200] sm:$0xff] %v6016
      %6241 = vst [vmem:[%s231 + $0x208] sm:$0xff] %v6017
      %6242 = vst [vmem:[%s231 + $0x210] sm:$0xff] %v6018
      %6243 = vst [vmem:[%s231 + $0x218] sm:$0xff] %v6019
      %6244 = vst [vmem:[%s231 + $0x220] sm:$0xff] %v6020
      %6245 = vst.msk [vmem:[%s231 + $0x228] sm:$0xff] %vm1848, %v6021
      %6246 = vst [vmem:[%s231 + $0x230] sm:$0xff] %v6022
      %6247 = vst [vmem:[%s231 + $0x238] sm:$0xff] %v6023
      %6248 = vst [vmem:[%s231 + $0x240] sm:$0xff] %v6024
      %6249 = vst [vmem:[%s231 + $0x248] sm:$0xff] %v6025
      %6250 = vst [vmem:[%s231 + $0x250] sm:$0xff] %v6026
      %6251 = vst [vmem:[%s231 + $0x258] sm:$0xff] %v6027
      %6252 = vst [vmem:[%s231 + $0x260] sm:$0xff] %v6028
      %6253 = vst [vmem:[%s231 + $0x268] sm:$0xff] %v6029
      %6254 = vst [vmem:[%s231 + $0x270] sm:$0xff] %v6030
      %6255 = vst [vmem:[%s231 + $0x278] sm:$0xff] %v6031
      %6256 = vst [vmem:[%s231 + $0x280] sm:$0xff] %v6032
      %6257 = vst [vmem:[%s231 + $0x288] sm:$0xff] %v6033
      %6258 = vst [vmem:[%s231 + $0x290] sm:$0xff] %v6034
      %6259 = vst.msk [vmem:[%s231 + $0x298] sm:$0xff] %vm1848, %v6035
      %6260 = vst [vmem:[%s231 + $0x2a0] sm:$0xff] %v6036
      %6261 = vst [vmem:[%s231 + $0x2a8] sm:$0xff] %v6037
      %6262 = vst [vmem:[%s231 + $0x2b0] sm:$0xff] %v6038
      %6263 = vst [vmem:[%s231 + $0x2b8] sm:$0xff] %v6039
      %6264 = vst [vmem:[%s231 + $0x2c0] sm:$0xff] %v6040
      %6265 = vst [vmem:[%s231 + $0x2c8] sm:$0xff] %v6041
      %6266 = vst [vmem:[%s231 + $0x2d0] sm:$0xff] %v6042
      %6267 = vst [vmem:[%s231 + $0x2d8] sm:$0xff] %v6043
      %6268 = vst [vmem:[%s231 + $0x2e0] sm:$0xff] %v6044
      %6269 = vst [vmem:[%s231 + $0x2e8] sm:$0xff] %v6045
      %6270 = vst [vmem:[%s231 + $0x2f0] sm:$0xff] %v6046
      %6271 = vst [vmem:[%s231 + $0x2f8] sm:$0xff] %v6047
      %6272 = vst [vmem:[%s231 + $0x300] sm:$0xff] %v6048
      %6273 = vst.msk [vmem:[%s231 + $0x308] sm:$0xff] %vm1848, %v6049
      %6274 = vst [vmem:[%s231 + $0x310] sm:$0xff] %v6050
      %6275 = vst [vmem:[%s231 + $0x318] sm:$0xff] %v6051
      %6276 = vst [vmem:[%s231 + $0x320] sm:$0xff] %v6052
      %6277 = vst [vmem:[%s231 + $0x328] sm:$0xff] %v6053
      %6278 = vst [vmem:[%s231 + $0x330] sm:$0xff] %v6054
      %6279 = vst [vmem:[%s231 + $0x338] sm:$0xff] %v6055
      %6280 = vst [vmem:[%s231 + $0x340] sm:$0xff] %v6056
      %6281 = vst [vmem:[%s231 + $0x348] sm:$0xff] %v6057
      %6282 = vst [vmem:[%s231 + $0x350] sm:$0xff] %v6058
      %6283 = vst [vmem:[%s231 + $0x358] sm:$0xff] %v6059
      %6284 = vst [vmem:[%s231 + $0x360] sm:$0xff] %v6060
      %6285 = vst [vmem:[%s231 + $0x368] sm:$0xff] %v6061
      %6286 = vst [vmem:[%s231 + $0x370] sm:$0xff] %v6062
      %6287 = vst.msk [vmem:[%s231 + $0x378] sm:$0xff] %vm1848, %v6063
      %6288 = vst [vmem:[%s231 + $0x380] sm:$0xff] %v6064
      %6289 = vst [vmem:[%s231 + $0x388] sm:$0xff] %v6065
      %6290 = vst [vmem:[%s231 + $0x390] sm:$0xff] %v6066
      %6291 = vst [vmem:[%s231 + $0x398] sm:$0xff] %v6067
      %6292 = vst [vmem:[%s231 + $0x3a0] sm:$0xff] %v6068
      %6293 = vst [vmem:[%s231 + $0x3a8] sm:$0xff] %v6069
      %6294 = vst [vmem:[%s231 + $0x3b0] sm:$0xff] %v6070
      %6295 = vst [vmem:[%s231 + $0x3b8] sm:$0xff] %v6071
      %6296 = vst [vmem:[%s231 + $0x3c0] sm:$0xff] %v6072
      %6297 = vst [vmem:[%s231 + $0x3c8] sm:$0xff] %v6073
      %6298 = vst [vmem:[%s231 + $0x3d0] sm:$0xff] %v6074
      %6299 = vst [vmem:[%s231 + $0x3d8] sm:$0xff] %v6075
      %6300 = vst [vmem:[%s231 + $0x3e0] sm:$0xff] %v6076
      %6301 = vst.msk [vmem:[%s231 + $0x3e8] sm:$0xff] %vm1848, %v6077
      %6302 = vst [vmem:[%s231 + $0x3f0] sm:$0xff] %v6078
      %6303 = vst [vmem:[%s231 + $0x3f8] sm:$0xff] %v6079
      %6304 = vst [vmem:[%s231 + $0x400] sm:$0xff] %v6080
      %6305 = vst [vmem:[%s231 + $0x408] sm:$0xff] %v6081
      %6306 = vst [vmem:[%s231 + $0x410] sm:$0xff] %v6082
      %6307 = vst [vmem:[%s231 + $0x418] sm:$0xff] %v6083
      %6308 = vst [vmem:[%s231 + $0x420] sm:$0xff] %v6084
      %6309 = vst [vmem:[%s231 + $0x428] sm:$0xff] %v6085
      %6310 = vst [vmem:[%s231 + $0x430] sm:$0xff] %v6086
      %6311 = vst [vmem:[%s231 + $0x438] sm:$0xff] %v6087
      %6312 = vst [vmem:[%s231 + $0x440] sm:$0xff] %v6088
      %6313 = vst [vmem:[%s231 + $0x448] sm:$0xff] %v6089
      %6314 = vst [vmem:[%s231 + $0x450] sm:$0xff] %v6090
      %6315 = vst.msk [vmem:[%s231 + $0x458] sm:$0xff] %vm1848, %v6091
      %6316 = vst [vmem:[%s231 + $0x460] sm:$0xff] %v6092
      %6317 = vst [vmem:[%s231 + $0x468] sm:$0xff] %v6093
      %6318 = vst [vmem:[%s231 + $0x470] sm:$0xff] %v6094
      %6319 = vst [vmem:[%s231 + $0x478] sm:$0xff] %v6095
      %6320 = vst [vmem:[%s231 + $0x480] sm:$0xff] %v6096
      %6321 = vst [vmem:[%s231 + $0x488] sm:$0xff] %v6097
      %6322 = vst [vmem:[%s231 + $0x490] sm:$0xff] %v6098
      %6323 = vst [vmem:[%s231 + $0x498] sm:$0xff] %v6099
      %6324 = vst [vmem:[%s231 + $0x4a0] sm:$0xff] %v6100
      %6325 = vst [vmem:[%s231 + $0x4a8] sm:$0xff] %v6101
      %6326 = vst [vmem:[%s231 + $0x4b0] sm:$0xff] %v6102
      %6327 = vst [vmem:[%s231 + $0x4b8] sm:$0xff] %v6103
      %6328 = vst [vmem:[%s231 + $0x4c0] sm:$0xff] %v6104
      %6329 = vst.msk [vmem:[%s231 + $0x4c8] sm:$0xff] %vm1848, %v6105
      %6330 = vst [vmem:[%s231 + $0x4d0] sm:$0xff] %v6106
      %6331 = vst [vmem:[%s231 + $0x4d8] sm:$0xff] %v6107
      %6332 = vst [vmem:[%s231 + $0x4e0] sm:$0xff] %v6108
      %6333 = vst [vmem:[%s231 + $0x4e8] sm:$0xff] %v6109
      %6334 = vst [vmem:[%s231 + $0x4f0] sm:$0xff] %v6110
      %6335 = vst [vmem:[%s231 + $0x4f8] sm:$0xff] %v6111
      %6336 = vst [vmem:[%s231 + $0x500] sm:$0xff] %v6112
      %6337 = vst [vmem:[%s231 + $0x508] sm:$0xff] %v6113
      %6338 = vst [vmem:[%s231 + $0x510] sm:$0xff] %v6114
      %6339 = vst [vmem:[%s231 + $0x518] sm:$0xff] %v6115
      %6340 = vst [vmem:[%s231 + $0x520] sm:$0xff] %v6116
      %6341 = vst [vmem:[%s231 + $0x528] sm:$0xff] %v6117
      %6342 = vst [vmem:[%s231 + $0x530] sm:$0xff] %v6118
      %6343 = vst.msk [vmem:[%s231 + $0x538] sm:$0xff] %vm1848, %v6119
      %6344 = vst [vmem:[%s231 + $0x540] sm:$0xff] %v6120
      %6345 = vst [vmem:[%s231 + $0x548] sm:$0xff] %v6121
      %6346 = vst [vmem:[%s231 + $0x550] sm:$0xff] %v6122
      %6347 = vst [vmem:[%s231 + $0x558] sm:$0xff] %v6123
      %6348 = vst [vmem:[%s231 + $0x560] sm:$0xff] %v6124
      %6349 = vst [vmem:[%s231 + $0x568] sm:$0xff] %v6125
      %6350 = vst [vmem:[%s231 + $0x570] sm:$0xff] %v6126
      %6351 = vst [vmem:[%s231 + $0x578] sm:$0xff] %v6127
      %6352 = vst [vmem:[%s231 + $0x580] sm:$0xff] %v6128
      %6353 = vst [vmem:[%s231 + $0x588] sm:$0xff] %v6129
      %6354 = vst [vmem:[%s231 + $0x590] sm:$0xff] %v6130
      %6355 = vst [vmem:[%s231 + $0x598] sm:$0xff] %v6131
      %6356 = vst [vmem:[%s231 + $0x5a0] sm:$0xff] %v6132
      %6357 = vst.msk [vmem:[%s231 + $0x5a8] sm:$0xff] %vm1848, %v6133
      %6358 = vst [vmem:[%s231 + $0x5b0] sm:$0xff] %v6134
      %6359 = vst [vmem:[%s231 + $0x5b8] sm:$0xff] %v6135
      %6360 = vst [vmem:[%s231 + $0x5c0] sm:$0xff] %v6136
      %6361 = vst [vmem:[%s231 + $0x5c8] sm:$0xff] %v6137
      %6362 = vst [vmem:[%s231 + $0x5d0] sm:$0xff] %v6138
      %6363 = vst [vmem:[%s231 + $0x5d8] sm:$0xff] %v6139
      %6364 = vst [vmem:[%s231 + $0x5e0] sm:$0xff] %v6140
      %6365 = vst [vmem:[%s231 + $0x5e8] sm:$0xff] %v6141
      %6366 = vst [vmem:[%s231 + $0x5f0] sm:$0xff] %v6142
      %6367 = vst [vmem:[%s231 + $0x5f8] sm:$0xff] %v6143
      %6368 = vst [vmem:[%s231 + $0x600] sm:$0xff] %v6144
      %6369 = vst [vmem:[%s231 + $0x608] sm:$0xff] %v6145
      %6370 = vst [vmem:[%s231 + $0x610] sm:$0xff] %v6146
      %6371 = vst.msk [vmem:[%s231 + $0x618] sm:$0xff] %vm1848, %v6147
      %6372 = vst [vmem:[%s231 + $0x620] sm:$0xff] %v6148
      %6373 = vst [vmem:[%s231 + $0x628] sm:$0xff] %v6149
      %6374 = vst [vmem:[%s231 + $0x630] sm:$0xff] %v6150
      %6375 = vst [vmem:[%s231 + $0x638] sm:$0xff] %v6151
      %6376 = vst [vmem:[%s231 + $0x640] sm:$0xff] %v6152
      %6377 = vst [vmem:[%s231 + $0x648] sm:$0xff] %v6153
      %6378 = vst [vmem:[%s231 + $0x650] sm:$0xff] %v6154
      %6379 = vst [vmem:[%s231 + $0x658] sm:$0xff] %v6155
      %6380 = vst [vmem:[%s231 + $0x660] sm:$0xff] %v6156
      %6381 = vst [vmem:[%s231 + $0x668] sm:$0xff] %v6157
      %6382 = vst [vmem:[%s231 + $0x670] sm:$0xff] %v6158
      %6383 = vst [vmem:[%s231 + $0x678] sm:$0xff] %v6159
      %6384 = vst [vmem:[%s231 + $0x680] sm:$0xff] %v6160
      %6385 = vst.msk [vmem:[%s231 + $0x688] sm:$0xff] %vm1848, %v6161
      %6386 = vst [vmem:[%s231 + $0x690] sm:$0xff] %v6162
      %6387 = vst [vmem:[%s231 + $0x698] sm:$0xff] %v6163
      %6388 = vst [vmem:[%s231 + $0x6a0] sm:$0xff] %v6164
      %6389 = vst [vmem:[%s231 + $0x6a8] sm:$0xff] %v6165
      %6390 = vst [vmem:[%s231 + $0x6b0] sm:$0xff] %v6166
      %6391 = vst [vmem:[%s231 + $0x6b8] sm:$0xff] %v6167
      %6392 = vst [vmem:[%s231 + $0x6c0] sm:$0xff] %v6168
      %6393 = vst [vmem:[%s231 + $0x6c8] sm:$0xff] %v6169
      %6394 = vst [vmem:[%s231 + $0x6d0] sm:$0xff] %v6170
      %6395 = vst [vmem:[%s231 + $0x6d8] sm:$0xff] %v6171
      %6396 = vst [vmem:[%s231 + $0x6e0] sm:$0xff] %v6172
      %6397 = vst [vmem:[%s231 + $0x6e8] sm:$0xff] %v6173
      %6398 = vst [vmem:[%s231 + $0x6f0] sm:$0xff] %v6174
      %6399 = vst.msk [vmem:[%s231 + $0x6f8] sm:$0xff] %vm1848, %v6175
      %s6400 = smul.u32 16, %s16
      %p6401 = scmp.lt.s32.totalorder %s6400, 63
      %s6402 = scalar_select %p6401, %s6400, 63
      %s6403 = smul.addr %s6402, 14
      %s6404 = smul.addr %s6403, 8
      %s6405 = scalar_lea.vmem %s5, %s6404
      // Predicated region
      $region41: #{tpu_custom_call.1} parent=39 // pred_check
        %p6406 = pneg %p144
      $region42: #{tpu_custom_call.1} parent=39 // pred_check_branch
        %6408 = sbr.rel (%p6406) target = $region44
      $region43: #{tpu_custom_call.1} parent=39 // pred_region
        %s6409 = smul.u32 16, %s16
      $region44: #{tpu_custom_call.1} parent=39 // pred_fallthru
        _
    $region40: #{tpu_custom_call.1} parent=5 // pred_fallthru
      _
    %p6410 = scmp.le.s32.totalorder 2, %s11
    // Predicated region
    $region45: #{tpu_custom_call.1} parent=5 // pred_check
      %p6411 = pneg %p6410
    $region46: #{tpu_custom_call.1} parent=5 // pred_check_branch
      %6413 = sbr.rel (%p6411) target = $region48
    $region47: #{tpu_custom_call.1} parent=5 // pred_region
      %s6414 = ssub.s32 %s11, 2
      // Predicated region
      $region49: #{tpu_custom_call.1} parent=47 // pred_check
        %p6415 = pneg %p150
      $region50: #{tpu_custom_call.1} parent=47 // pred_check_branch
        %6417 = sbr.rel (%p6415) target = $region52
      $region51: #{tpu_custom_call.1} parent=47 // pred_region
        %s6418 = smul.u32 16, %s17
        %p6419 = scmp.lt.s32.totalorder %s6418, 63
        %s6420 = scalar_select %p6419, %s6418, 63
        %s6421 = smul.addr %s6420, 14
        %s6422 = smul.addr %s6421, 8
        %s6423 = scalar_lea.vmem %s5, %s6422
      $region52: #{tpu_custom_call.1} parent=47 // pred_fallthru
        _
    $region48: #{tpu_custom_call.1} parent=5 // pred_fallthru
      _
  $region6: #{tpu_custom_call.1} parent=0 // loop_footer
    %s15 = sadd.s32 1, %s11
  $region7: #{tpu_custom_call.1} parent=0 // loop_footer_branch
    %10 = sbr.rel target = $region3
  $region8: #{tpu_custom_call.1} parent=0 // loop_exit
    _

</llo_original>
